<compile_context>
chip_gen: v5e
topology: v5e:2x2
jax: 0.10.0
libtpu: 0.0.40
codegen_flags: <defaults>
</compile_context>

<pallas_src>
import numpy as np
import jax
import jax.numpy as jnp
from jax.experimental import pallas as pl
from jax.experimental.pallas import tpu as pltpu

_VMEM_LIMIT_BYTES = 32 * 1024 * 1024  # safe on v5e/v6e (128 MiB) and v7x (64 MiB)


def _ru(x, m):
    return ((x + m - 1) // m) * m


# ---------------------------------------------------------------------------
# Fused kernel
# ---------------------------------------------------------------------------
def _ln5_kernel(x_ref, b1_ref, sh1_ref, b2_ref, sh2_ref,
                w1_ref, t1_ref, w2_ref, t2_ref, w3_ref, b3_ref,
                o_ref, h1_ref):
    """Whole LN5 eval forward for one batch tile.

    x_ref  : (16, 2, TB, 32) bf16   padded input, H split as (hh, parity), W on lanes
    b1_ref : (5, 32, 256)    bf16   conv1 banded weights (lanes = oj*6+co, 0.25+BN folded)
    sh1_ref: (1, 256)        f32    conv1 folded shift (0.25*BN/bias), tiled per oj
    b2_ref : (5, 256, 256)   bf16   conv2 banded weights (pool1 cols folded into rows)
    sh2_ref: (1, 256)        f32    conv2 folded shift
    w1_ref : (5, 256, 128)   bf16   fc1 weights (pool2 cols + NCHW flatten + BN folded)
    t1/t2/b3: (1, 128)       f32    fc shifts / bias
    w2/w3  : (128, 128)      bf16   fc2 / fc3 weights
    o_ref  : (TB, 128)       f32    logits (first 10 lanes valid)
    h1_ref : (7, 2, TB, 256) bf16   scratch: row-pooled conv1 activations
    """
    tb = o_ref.shape[0]
    f32 = jnp.float32

    # ---- conv1 + BN + ReLU + AvgPool2x2 (rows here, cols folded downstream) ----
    sh1 = sh1_ref[...]
    # one (14*tb, 32) LHS per distinct input-row offset r = parity + tap (0..5)
    lhs1 = [x_ref[pl.ds(r // 2, 14), r % 2, :, :].reshape(14 * tb, 32)
            for r in range(6)]
    y1 = []
    for p in (0, 1):
        acc = jnp.zeros((14 * tb, 256), f32)
        for a in range(5):
            acc = acc + jnp.dot(lhs1[p + a], b1_ref[a], preferred_element_type=f32)
        y1.append(jnp.maximum(acc + sh1, 0.0))
    # row pair of the 2x2 pool summed here; 1/4 factor already inside b1/sh1.
    h1_ref[...] = (y1[0] + y1[1]).reshape(7, 2, tb, 256).astype(jnp.bfloat16)

    # ---- conv2 + BN + ReLU + AvgPool2x2 ----------------------------------------
    sh2 = sh2_ref[...]
    lhs2 = [h1_ref[pl.ds(r // 2, 5), r % 2, :, :].reshape(5 * tb, 256)
            for r in range(6)]
    y2 = []
    for p in (0, 1):
        acc = jnp.zeros((5 * tb, 256), f32)
        for a in range(5):
            acc = acc + jnp.dot(lhs2[p + a], b2_ref[a], preferred_element_type=f32)
        y2.append(jnp.maximum(acc + sh2, 0.0))
    h2 = y2[0] + y2[1]                      # (5*tb, 256): rows = (pool-row h, n)

    # ---- FC stack: Dropout=id; pool2 cols + flatten + BN folded into w1_ref ----
    acc = jnp.zeros((tb, 128), f32)
    for h in range(5):
        acc = acc + jnp.dot(h2[h * tb:(h + 1) * tb, :].astype(jnp.bfloat16),
                            w1_ref[h], preferred_element_type=f32)
    a1 = jnp.maximum(acc + t1_ref[...], 0.0)
    a2 = jnp.dot(a1.astype(jnp.bfloat16), w2_ref[...], preferred_element_type=f32)
    a2 = jnp.maximum(a2 + t2_ref[...], 0.0)
    a3 = jnp.dot(a2.astype(jnp.bfloat16), w3_ref[...], preferred_element_type=f32)
    o_ref[...] = a3 + b3_ref[...]


# ---------------------------------------------------------------------------
# Wrapper-side weight folding / banded-weight construction
# ---------------------------------------------------------------------------
def _fold_bn(bias, gamma, beta, mean, var, eps=1e-5):
    scale = gamma / jnp.sqrt(var + eps)
    shift = (bias - mean) * scale + beta
    return scale, shift


def _pad2d(a, rows, cols, dtype):
    return jnp.pad(a, ((0, rows - a.shape[0]), (0, cols - a.shape[1]))).astype(dtype)


def _tiled_shift(shift, reps, width):
    v = jnp.tile(shift, reps)
    return jnp.pad(v, (0, width - v.shape[0])).reshape(1, width).astype(jnp.float32)


def _build_conv1_band(conv_w, scale):
    """(5,32,256): B[a, j, oj*6+co] = 0.25*scale[co]*w[co,0,a,j-oj] for 0<=j-oj<=4."""
    wq = conv_w[:, 0] * scale[:, None, None] * 0.25                 # (6,5,5) [co,a,b]
    a_i, co_i, oj_i, b_i = np.meshgrid(np.arange(5), np.arange(6),
                                       np.arange(28), np.arange(5), indexing="ij")
    band = jnp.zeros((5, 32, 256), jnp.float32)
    band = band.at[a_i, oj_i + b_i, oj_i * 6 + co_i].set(wq[co_i, a_i, b_i])
    return band.astype(jnp.bfloat16)


def _build_conv2_band(conv_w, scale):
    """(5,256,256): B[a, oj*6+ci, oj2*16+co] = 0.25*scale[co]*w[co,ci,a,oj//2-oj2]
    (conv1 pool column-pairing folded into the rows)."""
    wq = conv_w * scale[:, None, None, None] * 0.25                 # (16,6,5,5) [co,ci,a,b]
    a_i, ci_i, co_i, oj_i, b_i = np.meshgrid(np.arange(5), np.arange(6), np.arange(16),
                                             np.arange(28), np.arange(5), indexing="ij")
    oj2_i = oj_i // 2 - b_i
    keep = (oj2_i >= 0) & (oj2_i <= 9)
    a_i, ci_i, co_i, oj_i, b_i, oj2_i = (t[keep] for t in (a_i, ci_i, co_i, oj_i, b_i, oj2_i))
    band = jnp.zeros((5, 256, 256), jnp.float32)
    band = band.at[a_i, oj_i * 6 + ci_i, oj2_i * 16 + co_i].set(wq[co_i, ci_i, a_i, b_i])
    return band.astype(jnp.bfloat16)


def _build_fc1_w(fc1_w, scale):
    """(5,256,128): W[h, oj2*16+co, f] = scale[f]*fc1_w[f, co*25 + h*5 + oj2//2]
    (conv2 pool column-pairing + torch NCHW flatten + BN1d scale folded in)."""
    h_i, oj2_i, co_i, f_i = np.meshgrid(np.arange(5), np.arange(10),
                                        np.arange(16), np.arange(120), indexing="ij")
    w = jnp.zeros((5, 256, 128), jnp.float32)
    w = w.at[h_i, oj2_i * 16 + co_i, f_i].set(
        fc1_w[f_i, co_i * 25 + h_i * 5 + oj2_i // 2] * scale[f_i])
    return w.astype(jnp.bfloat16)


# ---------------------------------------------------------------------------
# Forward
# ---------------------------------------------------------------------------
def ln5_forward(x_nchw, p):
    """x_nchw: (N, 1, 28, 28) f32 -> (N, 10) f32 (eval-mode forward)."""
    N = x_nchw.shape[0]
    # batch tile: multiple of 16 (bf16 sublanes), >=2 grid steps when batch allows
    # (megacore on v7x), capped so per-step VMEM stays small on all generations.
    TB = max(16, min(64, _ru(-(-N // 2), 16)))
    N_pad = _ru(N, TB)

    # input: NCHW f32 -> spatially padded (conv1 padding=2), H-major layout with
    # the H axis split into (hh, parity) so the kernel never needs strided loads.
    x = x_nchw[:, 0]                                          # (N, 28, 28)
    x = jnp.pad(x, ((0, N_pad - N), (2, 2), (2, 2)))          # (N_pad, 32, 32)
    x = jnp.transpose(x, (1, 0, 2))                           # (32, N_pad, 32)
    x = x.reshape(16, 2, N_pad, 32).astype(jnp.bfloat16)

    # fold BN (eval running stats) + bias + 0.25 pool factor into weights/shifts
    s1, t1 = _fold_bn(p["conv1_b"], p["bn1_gamma"], p["bn1_beta"], p["bn1_mean"], p["bn1_var"])
    s2, t2 = _fold_bn(p["conv2_b"], p["bn2_gamma"], p["bn2_beta"], p["bn2_mean"], p["bn2_var"])
    sf1, tf1 = _fold_bn(p["fc1_b"], p["bnf1_gamma"], p["bnf1_beta"], p["bnf1_mean"], p["bnf1_var"])
    sf2, tf2 = _fold_bn(p["fc2_b"], p["bnf2_gamma"], p["bnf2_beta"], p["bnf2_mean"], p["bnf2_var"])

    B1 = _build_conv1_band(p["conv1_w"], s1)                   # (5, 32, 256) bf16
    sh1 = _tiled_shift(t1 * 0.25, 28, 256)                     # (1, 256) f32
    B2 = _build_conv2_band(p["conv2_w"], s2)                   # (5, 256, 256) bf16
    sh2 = _tiled_shift(t2 * 0.25, 10, 256)                     # (1, 256) f32
    W1 = _build_fc1_w(p["fc1_w"], sf1)                         # (5, 256, 128) bf16
    t1p = _pad2d(tf1.reshape(1, -1), 1, 128, jnp.float32)
    W2 = _pad2d(p["fc2_w"].T * sf2[None, :], 128, 128, jnp.bfloat16)
    t2p = _pad2d(tf2.reshape(1, -1), 1, 128, jnp.float32)
    W3 = _pad2d(p["fc3_w"].T, 128, 128, jnp.bfloat16)
    b3p = _pad2d(p["fc3_b"].reshape(1, -1), 1, 128, jnp.float32)

    const3 = lambda i: (0, 0, 0)
    const2 = lambda i: (0, 0)
    out = pl.pallas_call(
        _ln5_kernel,
        out_shape=jax.ShapeDtypeStruct((N_pad, 128), jnp.float32),
        grid=(N_pad // TB,),
        in_specs=[
            pl.BlockSpec((16, 2, TB, 32), lambda i: (0, 0, i, 0)),
            pl.BlockSpec((5, 32, 256), const3),
            pl.BlockSpec((1, 256), const2),
            pl.BlockSpec((5, 256, 256), const3),
            pl.BlockSpec((1, 256), const2),
            pl.BlockSpec((5, 256, 128), const3),
            pl.BlockSpec((1, 128), const2),
            pl.BlockSpec((128, 128), const2),
            pl.BlockSpec((1, 128), const2),
            pl.BlockSpec((128, 128), const2),
            pl.BlockSpec((1, 128), const2),
        ],
        out_specs=pl.BlockSpec((TB, 128), lambda i: (i, 0)),
        scratch_shapes=[pltpu.VMEM((7, 2, TB, 256), jnp.bfloat16)],
        compiler_params=pltpu.CompilerParams(
            dimension_semantics=("parallel",),
            vmem_limit_bytes=_VMEM_LIMIT_BYTES,
        ),
    )(x, B1, sh1, B2, sh2, W1, t1p, W2, t2p, W3, b3p)

    return out[:N, :10]


# ---------------------------------------------------------------------------
# Parameters
# ---------------------------------------------------------------------------
def init_params(key):
    ks = jax.random.split(key, 10)

    def uni(k, shape, fan_in):
        bound = 1.0 / jnp.sqrt(float(fan_in))
        return jax.random.uniform(k, shape, jnp.float32, -bound, bound)

    p = {}
    p["conv1_w"] = uni(ks[0], (6, 1, 5, 5), 1 * 5 * 5)
    p["conv1_b"] = uni(ks[1], (6,), 1 * 5 * 5)
    p["bn1_gamma"], p["bn1_beta"] = jnp.ones(6), jnp.zeros(6)
    p["bn1_mean"], p["bn1_var"] = jnp.zeros(6), jnp.ones(6)

    p["conv2_w"] = uni(ks[2], (16, 6, 5, 5), 6 * 5 * 5)
    p["conv2_b"] = uni(ks[3], (16,), 6 * 5 * 5)
    p["bn2_gamma"], p["bn2_beta"] = jnp.ones(16), jnp.zeros(16)
    p["bn2_mean"], p["bn2_var"] = jnp.zeros(16), jnp.ones(16)

    p["fc1_w"] = uni(ks[4], (120, 400), 400)
    p["fc1_b"] = uni(ks[5], (120,), 400)
    p["bnf1_gamma"], p["bnf1_beta"] = jnp.ones(120), jnp.zeros(120)
    p["bnf1_mean"], p["bnf1_var"] = jnp.zeros(120), jnp.ones(120)

    p["fc2_w"] = uni(ks[6], (84, 120), 120)
    p["fc2_b"] = uni(ks[7], (84,), 120)
    p["bnf2_gamma"], p["bnf2_beta"] = jnp.ones(84), jnp.zeros(84)
    p["bnf2_mean"], p["bnf2_var"] = jnp.zeros(84), jnp.ones(84)

    p["fc3_w"] = uni(ks[8], (10, 84), 84)
    p["fc3_b"] = uni(ks[9], (10,), 84)
    return p


if __name__ == "__main__":
    key = jax.random.PRNGKey(0)
    k_x, k_p = jax.random.split(key)
    # Linear(400,120) after two 2x2 pools and a valid 5x5 conv implies 28x28 input.
    x = jax.random.normal(k_x, (2, 1, 28, 28), jnp.float32)
    params = init_params(k_p)

    out = jax.jit(ln5_forward)(x, params)
    out = jax.block_until_ready(out)
    assert out.shape == (2, 10) and out.dtype == jnp.float32
    assert bool(jnp.all(jnp.isfinite(out)))
    print("KERNEL_OK")
</pallas_src>

<mosaic_0001>
module attributes {stable_mosaic.version = 11 : i64} {
  func.func @_ln5_kernel(%arg0: i32, %arg1: memref<16x2x16x32xbf16, #tpu.memory_space<vmem>>, %arg2: memref<5x32x256xbf16, #tpu.memory_space<vmem>>, %arg3: memref<1x256xf32, #tpu.memory_space<vmem>>, %arg4: memref<5x256x256xbf16, #tpu.memory_space<vmem>>, %arg5: memref<1x256xf32, #tpu.memory_space<vmem>>, %arg6: memref<5x256x128xbf16, #tpu.memory_space<vmem>>, %arg7: memref<1x128xf32, #tpu.memory_space<vmem>>, %arg8: memref<128x128xbf16, #tpu.memory_space<vmem>>, %arg9: memref<1x128xf32, #tpu.memory_space<vmem>>, %arg10: memref<128x128xbf16, #tpu.memory_space<vmem>>, %arg11: memref<1x128xf32, #tpu.memory_space<vmem>>, %arg12: memref<16x128xf32, #tpu.memory_space<vmem>>, %arg13: memref<7x2x16x256xbf16, #tpu.memory_space<vmem>>) attributes {dimension_semantics = [#tpu.dimension_semantics<parallel>], iteration_bounds = array<i64: 1>, scalar_prefetch = 0 : i64, scratch_operands = 1 : i64, tpu.core_type = #tpu.core_type<tc>, window_params = [{transform_indices = @transform_0, window_bounds = array<i64: 16, 2, 16, 32>}, {pipeline_mode = #tpu.pipeline_mode<synchronous>, transform_indices = @transform_1, window_bounds = array<i64: 5, 32, 256>}, {pipeline_mode = #tpu.pipeline_mode<synchronous>, transform_indices = @transform_2, window_bounds = array<i64: 1, 256>}, {pipeline_mode = #tpu.pipeline_mode<synchronous>, transform_indices = @transform_3, window_bounds = array<i64: 5, 256, 256>}, {pipeline_mode = #tpu.pipeline_mode<synchronous>, transform_indices = @transform_4, window_bounds = array<i64: 1, 256>}, {pipeline_mode = #tpu.pipeline_mode<synchronous>, transform_indices = @transform_5, window_bounds = array<i64: 5, 256, 128>}, {pipeline_mode = #tpu.pipeline_mode<synchronous>, transform_indices = @transform_6, window_bounds = array<i64: 1, 128>}, {pipeline_mode = #tpu.pipeline_mode<synchronous>, transform_indices = @transform_7, window_bounds = array<i64: 128, 128>}, {pipeline_mode = #tpu.pipeline_mode<synchronous>, transform_indices = @transform_8, window_bounds = array<i64: 1, 128>}, {pipeline_mode = #tpu.pipeline_mode<synchronous>, transform_indices = @transform_9, window_bounds = array<i64: 128, 128>}, {pipeline_mode = #tpu.pipeline_mode<synchronous>, transform_indices = @transform_10, window_bounds = array<i64: 1, 128>}, {transform_indices = @transform_11, window_bounds = array<i64: 16, 128>}]} {
    %c0 = arith.constant 0 : index
    %c0_0 = arith.constant 0 : index
    %0 = vector.load %arg3[%c0, %c0_0] : memref<1x256xf32, #tpu.memory_space<vmem>>, vector<1x256xf32>
    %c0_1 = arith.constant 0 : index
    %c0_2 = arith.constant 0 : index
    %c0_3 = arith.constant 0 : index
    %c0_4 = arith.constant 0 : index
    %1 = vector.load %arg1[%c0_1, %c0_2, %c0_3, %c0_4] : memref<16x2x16x32xbf16, #tpu.memory_space<vmem>>, vector<14x1x16x32xbf16>
    %2 = vector.shape_cast %1 : vector<14x1x16x32xbf16> to vector<14x16x32xbf16>
    %3 = vector.shape_cast %2 : vector<14x16x32xbf16> to vector<224x32xbf16>
    %c0_5 = arith.constant 0 : index
    %c1 = arith.constant 1 : index
    %c0_6 = arith.constant 0 : index
    %c0_7 = arith.constant 0 : index
    %4 = vector.load %arg1[%c0_5, %c1, %c0_6, %c0_7] : memref<16x2x16x32xbf16, #tpu.memory_space<vmem>>, vector<14x1x16x32xbf16>
    %5 = vector.shape_cast %4 : vector<14x1x16x32xbf16> to vector<14x16x32xbf16>
    %6 = vector.shape_cast %5 : vector<14x16x32xbf16> to vector<224x32xbf16>
    %c1_8 = arith.constant 1 : index
    %c0_9 = arith.constant 0 : index
    %c0_10 = arith.constant 0 : index
    %c0_11 = arith.constant 0 : index
    %7 = vector.load %arg1[%c1_8, %c0_9, %c0_10, %c0_11] : memref<16x2x16x32xbf16, #tpu.memory_space<vmem>>, vector<14x1x16x32xbf16>
    %8 = vector.shape_cast %7 : vector<14x1x16x32xbf16> to vector<14x16x32xbf16>
    %9 = vector.shape_cast %8 : vector<14x16x32xbf16> to vector<224x32xbf16>
    %c1_12 = arith.constant 1 : index
    %c1_13 = arith.constant 1 : index
    %c0_14 = arith.constant 0 : index
    %c0_15 = arith.constant 0 : index
    %10 = vector.load %arg1[%c1_12, %c1_13, %c0_14, %c0_15] : memref<16x2x16x32xbf16, #tpu.memory_space<vmem>>, vector<14x1x16x32xbf16>
    %11 = vector.shape_cast %10 : vector<14x1x16x32xbf16> to vector<14x16x32xbf16>
    %12 = vector.shape_cast %11 : vector<14x16x32xbf16> to vector<224x32xbf16>
    %c2 = arith.constant 2 : index
    %c0_16 = arith.constant 0 : index
    %c0_17 = arith.constant 0 : index
    %c0_18 = arith.constant 0 : index
    %13 = vector.load %arg1[%c2, %c0_16, %c0_17, %c0_18] : memref<16x2x16x32xbf16, #tpu.memory_space<vmem>>, vector<14x1x16x32xbf16>
    %14 = vector.shape_cast %13 : vector<14x1x16x32xbf16> to vector<14x16x32xbf16>
    %15 = vector.shape_cast %14 : vector<14x16x32xbf16> to vector<224x32xbf16>
    %c2_19 = arith.constant 2 : index
    %c1_20 = arith.constant 1 : index
    %c0_21 = arith.constant 0 : index
    %c0_22 = arith.constant 0 : index
    %16 = vector.load %arg1[%c2_19, %c1_20, %c0_21, %c0_22] : memref<16x2x16x32xbf16, #tpu.memory_space<vmem>>, vector<14x1x16x32xbf16>
    %17 = vector.shape_cast %16 : vector<14x1x16x32xbf16> to vector<14x16x32xbf16>
    %18 = vector.shape_cast %17 : vector<14x16x32xbf16> to vector<224x32xbf16>
    %cst = arith.constant 0.000000e+00 : f32
    %19 = vector.broadcast %cst : f32 to vector<224x256xf32>
    %c0_23 = arith.constant 0 : index
    %c0_24 = arith.constant 0 : index
    %c0_25 = arith.constant 0 : index
    %20 = vector.load %arg2[%c0_23, %c0_24, %c0_25] : memref<5x32x256xbf16, #tpu.memory_space<vmem>>, vector<1x32x256xbf16>
    %21 = vector.shape_cast %20 : vector<1x32x256xbf16> to vector<32x256xbf16>
    %cst_26 = arith.constant dense<0.000000e+00> : vector<224x256xf32>
    %22 = tpu.matmul %3, %21, %cst_26 {dimension_numbers = #tpu.dot_dimension_numbers<[1], [0], [0], [1], [0, 0, 1, 1], [], []>} : vector<224x32xbf16>, vector<32x256xbf16>, vector<224x256xf32> -> vector<224x256xf32>
    %23 = arith.addf %19, %22 : vector<224x256xf32>
    %c1_27 = arith.constant 1 : index
    %c0_28 = arith.constant 0 : index
    %c0_29 = arith.constant 0 : index
    %24 = vector.load %arg2[%c1_27, %c0_28, %c0_29] : memref<5x32x256xbf16, #tpu.memory_space<vmem>>, vector<1x32x256xbf16>
    %25 = vector.shape_cast %24 : vector<1x32x256xbf16> to vector<32x256xbf16>
    %cst_30 = arith.constant dense<0.000000e+00> : vector<224x256xf32>
    %26 = tpu.matmul %6, %25, %cst_30 {dimension_numbers = #tpu.dot_dimension_numbers<[1], [0], [0], [1], [0, 0, 1, 1], [], []>} : vector<224x32xbf16>, vector<32x256xbf16>, vector<224x256xf32> -> vector<224x256xf32>
    %27 = arith.addf %23, %26 : vector<224x256xf32>
    %c2_31 = arith.constant 2 : index
    %c0_32 = arith.constant 0 : index
    %c0_33 = arith.constant 0 : index
    %28 = vector.load %arg2[%c2_31, %c0_32, %c0_33] : memref<5x32x256xbf16, #tpu.memory_space<vmem>>, vector<1x32x256xbf16>
    %29 = vector.shape_cast %28 : vector<1x32x256xbf16> to vector<32x256xbf16>
    %cst_34 = arith.constant dense<0.000000e+00> : vector<224x256xf32>
    %30 = tpu.matmul %9, %29, %cst_34 {dimension_numbers = #tpu.dot_dimension_numbers<[1], [0], [0], [1], [0, 0, 1, 1], [], []>} : vector<224x32xbf16>, vector<32x256xbf16>, vector<224x256xf32> -> vector<224x256xf32>
    %31 = arith.addf %27, %30 : vector<224x256xf32>
    %c3 = arith.constant 3 : index
    %c0_35 = arith.constant 0 : index
    %c0_36 = arith.constant 0 : index
    %32 = vector.load %arg2[%c3, %c0_35, %c0_36] : memref<5x32x256xbf16, #tpu.memory_space<vmem>>, vector<1x32x256xbf16>
    %33 = vector.shape_cast %32 : vector<1x32x256xbf16> to vector<32x256xbf16>
    %cst_37 = arith.constant dense<0.000000e+00> : vector<224x256xf32>
    %34 = tpu.matmul %12, %33, %cst_37 {dimension_numbers = #tpu.dot_dimension_numbers<[1], [0], [0], [1], [0, 0, 1, 1], [], []>} : vector<224x32xbf16>, vector<32x256xbf16>, vector<224x256xf32> -> vector<224x256xf32>
    %35 = arith.addf %31, %34 : vector<224x256xf32>
    %c4 = arith.constant 4 : index
    %c0_38 = arith.constant 0 : index
    %c0_39 = arith.constant 0 : index
    %36 = vector.load %arg2[%c4, %c0_38, %c0_39] : memref<5x32x256xbf16, #tpu.memory_space<vmem>>, vector<1x32x256xbf16>
    %37 = vector.shape_cast %36 : vector<1x32x256xbf16> to vector<32x256xbf16>
    %cst_40 = arith.constant dense<0.000000e+00> : vector<224x256xf32>
    %38 = tpu.matmul %15, %37, %cst_40 {dimension_numbers = #tpu.dot_dimension_numbers<[1], [0], [0], [1], [0, 0, 1, 1], [], []>} : vector<224x32xbf16>, vector<32x256xbf16>, vector<224x256xf32> -> vector<224x256xf32>
    %39 = arith.addf %35, %38 : vector<224x256xf32>
    %40 = vector.broadcast %0 : vector<1x256xf32> to vector<224x256xf32>
    %41 = arith.addf %39, %40 : vector<224x256xf32>
    %cst_41 = arith.constant 0.000000e+00 : f32
    %42 = vector.broadcast %cst_41 : f32 to vector<224x256xf32>
    %43 = arith.maximumf %41, %42 : vector<224x256xf32>
    %cst_42 = arith.constant 0.000000e+00 : f32
    %44 = vector.broadcast %cst_42 : f32 to vector<224x256xf32>
    %c0_43 = arith.constant 0 : index
    %c0_44 = arith.constant 0 : index
    %c0_45 = arith.constant 0 : index
    %45 = vector.load %arg2[%c0_43, %c0_44, %c0_45] : memref<5x32x256xbf16, #tpu.memory_space<vmem>>, vector<1x32x256xbf16>
    %46 = vector.shape_cast %45 : vector<1x32x256xbf16> to vector<32x256xbf16>
    %cst_46 = arith.constant dense<0.000000e+00> : vector<224x256xf32>
    %47 = tpu.matmul %6, %46, %cst_46 {dimension_numbers = #tpu.dot_dimension_numbers<[1], [0], [0], [1], [0, 0, 1, 1], [], []>} : vector<224x32xbf16>, vector<32x256xbf16>, vector<224x256xf32> -> vector<224x256xf32>
    %48 = arith.addf %44, %47 : vector<224x256xf32>
    %c1_47 = arith.constant 1 : index
    %c0_48 = arith.constant 0 : index
    %c0_49 = arith.constant 0 : index
    %49 = vector.load %arg2[%c1_47, %c0_48, %c0_49] : memref<5x32x256xbf16, #tpu.memory_space<vmem>>, vector<1x32x256xbf16>
    %50 = vector.shape_cast %49 : vector<1x32x256xbf16> to vector<32x256xbf16>
    %cst_50 = arith.constant dense<0.000000e+00> : vector<224x256xf32>
    %51 = tpu.matmul %9, %50, %cst_50 {dimension_numbers = #tpu.dot_dimension_numbers<[1], [0], [0], [1], [0, 0, 1, 1], [], []>} : vector<224x32xbf16>, vector<32x256xbf16>, vector<224x256xf32> -> vector<224x256xf32>
    %52 = arith.addf %48, %51 : vector<224x256xf32>
    %c2_51 = arith.constant 2 : index
    %c0_52 = arith.constant 0 : index
    %c0_53 = arith.constant 0 : index
    %53 = vector.load %arg2[%c2_51, %c0_52, %c0_53] : memref<5x32x256xbf16, #tpu.memory_space<vmem>>, vector<1x32x256xbf16>
    %54 = vector.shape_cast %53 : vector<1x32x256xbf16> to vector<32x256xbf16>
    %cst_54 = arith.constant dense<0.000000e+00> : vector<224x256xf32>
    %55 = tpu.matmul %12, %54, %cst_54 {dimension_numbers = #tpu.dot_dimension_numbers<[1], [0], [0], [1], [0, 0, 1, 1], [], []>} : vector<224x32xbf16>, vector<32x256xbf16>, vector<224x256xf32> -> vector<224x256xf32>
    %56 = arith.addf %52, %55 : vector<224x256xf32>
    %c3_55 = arith.constant 3 : index
    %c0_56 = arith.constant 0 : index
    %c0_57 = arith.constant 0 : index
    %57 = vector.load %arg2[%c3_55, %c0_56, %c0_57] : memref<5x32x256xbf16, #tpu.memory_space<vmem>>, vector<1x32x256xbf16>
    %58 = vector.shape_cast %57 : vector<1x32x256xbf16> to vector<32x256xbf16>
    %cst_58 = arith.constant dense<0.000000e+00> : vector<224x256xf32>
    %59 = tpu.matmul %15, %58, %cst_58 {dimension_numbers = #tpu.dot_dimension_numbers<[1], [0], [0], [1], [0, 0, 1, 1], [], []>} : vector<224x32xbf16>, vector<32x256xbf16>, vector<224x256xf32> -> vector<224x256xf32>
    %60 = arith.addf %56, %59 : vector<224x256xf32>
    %c4_59 = arith.constant 4 : index
    %c0_60 = arith.constant 0 : index
    %c0_61 = arith.constant 0 : index
    %61 = vector.load %arg2[%c4_59, %c0_60, %c0_61] : memref<5x32x256xbf16, #tpu.memory_space<vmem>>, vector<1x32x256xbf16>
    %62 = vector.shape_cast %61 : vector<1x32x256xbf16> to vector<32x256xbf16>
    %cst_62 = arith.constant dense<0.000000e+00> : vector<224x256xf32>
    %63 = tpu.matmul %18, %62, %cst_62 {dimension_numbers = #tpu.dot_dimension_numbers<[1], [0], [0], [1], [0, 0, 1, 1], [], []>} : vector<224x32xbf16>, vector<32x256xbf16>, vector<224x256xf32> -> vector<224x256xf32>
    %64 = arith.addf %60, %63 : vector<224x256xf32>
    %65 = vector.broadcast %0 : vector<1x256xf32> to vector<224x256xf32>
    %66 = arith.addf %64, %65 : vector<224x256xf32>
    %cst_63 = arith.constant 0.000000e+00 : f32
    %67 = vector.broadcast %cst_63 : f32 to vector<224x256xf32>
    %68 = arith.maximumf %66, %67 : vector<224x256xf32>
    %69 = arith.addf %43, %68 : vector<224x256xf32>
    %70 = vector.shape_cast %69 : vector<224x256xf32> to vector<7x2x16x256xf32>
    %71 = arith.truncf %70 : vector<7x2x16x256xf32> to vector<7x2x16x256xbf16>
    %c0_64 = arith.constant 0 : index
    %c0_65 = arith.constant 0 : index
    %c0_66 = arith.constant 0 : index
    %c0_67 = arith.constant 0 : index
    %72 = vector.load %arg13[%c0_64, %c0_65, %c0_66, %c0_67] : memref<7x2x16x256xbf16, #tpu.memory_space<vmem>>, vector<7x2x16x256xbf16>
    tpu.vector_store %arg13[%c0_64, %c0_65, %c0_66, %c0_67], %71 {strides = array<i32>} : memref<7x2x16x256xbf16, #tpu.memory_space<vmem>>, vector<7x2x16x256xbf16>,
    %c0_68 = arith.constant 0 : index
    %c0_69 = arith.constant 0 : index
    %73 = vector.load %arg5[%c0_68, %c0_69] : memref<1x256xf32, #tpu.memory_space<vmem>>, vector<1x256xf32>
    %c0_70 = arith.constant 0 : index
    %c0_71 = arith.constant 0 : index
    %c0_72 = arith.constant 0 : index
    %c0_73 = arith.constant 0 : index
    %74 = vector.load %arg13[%c0_70, %c0_71, %c0_72, %c0_73] : memref<7x2x16x256xbf16, #tpu.memory_space<vmem>>, vector<5x1x16x256xbf16>
    %75 = vector.shape_cast %74 : vector<5x1x16x256xbf16> to vector<5x16x256xbf16>
    %76 = vector.shape_cast %75 : vector<5x16x256xbf16> to vector<80x256xbf16>
    %c0_74 = arith.constant 0 : index
    %c1_75 = arith.constant 1 : index
    %c0_76 = arith.constant 0 : index
    %c0_77 = arith.constant 0 : index
    %77 = vector.load %arg13[%c0_74, %c1_75, %c0_76, %c0_77] : memref<7x2x16x256xbf16, #tpu.memory_space<vmem>>, vector<5x1x16x256xbf16>
    %78 = vector.shape_cast %77 : vector<5x1x16x256xbf16> to vector<5x16x256xbf16>
    %79 = vector.shape_cast %78 : vector<5x16x256xbf16> to vector<80x256xbf16>
    %c1_78 = arith.constant 1 : index
    %c0_79 = arith.constant 0 : index
    %c0_80 = arith.constant 0 : index
    %c0_81 = arith.constant 0 : index
    %80 = vector.load %arg13[%c1_78, %c0_79, %c0_80, %c0_81] : memref<7x2x16x256xbf16, #tpu.memory_space<vmem>>, vector<5x1x16x256xbf16>
    %81 = vector.shape_cast %80 : vector<5x1x16x256xbf16> to vector<5x16x256xbf16>
    %82 = vector.shape_cast %81 : vector<5x16x256xbf16> to vector<80x256xbf16>
    %c1_82 = arith.constant 1 : index
    %c1_83 = arith.constant 1 : index
    %c0_84 = arith.constant 0 : index
    %c0_85 = arith.constant 0 : index
    %83 = vector.load %arg13[%c1_82, %c1_83, %c0_84, %c0_85] : memref<7x2x16x256xbf16, #tpu.memory_space<vmem>>, vector<5x1x16x256xbf16>
    %84 = vector.shape_cast %83 : vector<5x1x16x256xbf16> to vector<5x16x256xbf16>
    %85 = vector.shape_cast %84 : vector<5x16x256xbf16> to vector<80x256xbf16>
    %c2_86 = arith.constant 2 : index
    %c0_87 = arith.constant 0 : index
    %c0_88 = arith.constant 0 : index
    %c0_89 = arith.constant 0 : index
    %86 = vector.load %arg13[%c2_86, %c0_87, %c0_88, %c0_89] : memref<7x2x16x256xbf16, #tpu.memory_space<vmem>>, vector<5x1x16x256xbf16>
    %87 = vector.shape_cast %86 : vector<5x1x16x256xbf16> to vector<5x16x256xbf16>
    %88 = vector.shape_cast %87 : vector<5x16x256xbf16> to vector<80x256xbf16>
    %c2_90 = arith.constant 2 : index
    %c1_91 = arith.constant 1 : index
    %c0_92 = arith.constant 0 : index
    %c0_93 = arith.constant 0 : index
    %89 = vector.load %arg13[%c2_90, %c1_91, %c0_92, %c0_93] : memref<7x2x16x256xbf16, #tpu.memory_space<vmem>>, vector<5x1x16x256xbf16>
    %90 = vector.shape_cast %89 : vector<5x1x16x256xbf16> to vector<5x16x256xbf16>
    %91 = vector.shape_cast %90 : vector<5x16x256xbf16> to vector<80x256xbf16>
    %cst_94 = arith.constant 0.000000e+00 : f32
    %92 = vector.broadcast %cst_94 : f32 to vector<80x256xf32>
    %c0_95 = arith.constant 0 : index
    %c0_96 = arith.constant 0 : index
    %c0_97 = arith.constant 0 : index
    %93 = vector.load %arg4[%c0_95, %c0_96, %c0_97] : memref<5x256x256xbf16, #tpu.memory_space<vmem>>, vector<1x256x256xbf16>
    %94 = vector.shape_cast %93 : vector<1x256x256xbf16> to vector<256x256xbf16>
    %cst_98 = arith.constant dense<0.000000e+00> : vector<80x256xf32>
    %95 = tpu.matmul %76, %94, %cst_98 {dimension_numbers = #tpu.dot_dimension_numbers<[1], [0], [0], [1], [0, 0, 1, 1], [], []>} : vector<80x256xbf16>, vector<256x256xbf16>, vector<80x256xf32> -> vector<80x256xf32>
    %96 = arith.addf %92, %95 : vector<80x256xf32>
    %c1_99 = arith.constant 1 : index
    %c0_100 = arith.constant 0 : index
    %c0_101 = arith.constant 0 : index
    %97 = vector.load %arg4[%c1_99, %c0_100, %c0_101] : memref<5x256x256xbf16, #tpu.memory_space<vmem>>, vector<1x256x256xbf16>
    %98 = vector.shape_cast %97 : vector<1x256x256xbf16> to vector<256x256xbf16>
    %cst_102 = arith.constant dense<0.000000e+00> : vector<80x256xf32>
    %99 = tpu.matmul %79, %98, %cst_102 {dimension_numbers = #tpu.dot_dimension_numbers<[1], [0], [0], [1], [0, 0, 1, 1], [], []>} : vector<80x256xbf16>, vector<256x256xbf16>, vector<80x256xf32> -> vector<80x256xf32>
    %100 = arith.addf %96, %99 : vector<80x256xf32>
    %c2_103 = arith.constant 2 : index
    %c0_104 = arith.constant 0 : index
    %c0_105 = arith.constant 0 : index
    %101 = vector.load %arg4[%c2_103, %c0_104, %c0_105] : memref<5x256x256xbf16, #tpu.memory_space<vmem>>, vector<1x256x256xbf16>
    %102 = vector.shape_cast %101 : vector<1x256x256xbf16> to vector<256x256xbf16>
    %cst_106 = arith.constant dense<0.000000e+00> : vector<80x256xf32>
    %103 = tpu.matmul %82, %102, %cst_106 {dimension_numbers = #tpu.dot_dimension_numbers<[1], [0], [0], [1], [0, 0, 1, 1], [], []>} : vector<80x256xbf16>, vector<256x256xbf16>, vector<80x256xf32> -> vector<80x256xf32>
    %104 = arith.addf %100, %103 : vector<80x256xf32>
    %c3_107 = arith.constant 3 : index
    %c0_108 = arith.constant 0 : index
    %c0_109 = arith.constant 0 : index
    %105 = vector.load %arg4[%c3_107, %c0_108, %c0_109] : memref<5x256x256xbf16, #tpu.memory_space<vmem>>, vector<1x256x256xbf16>
    %106 = vector.shape_cast %105 : vector<1x256x256xbf16> to vector<256x256xbf16>
    %cst_110 = arith.constant dense<0.000000e+00> : vector<80x256xf32>
    %107 = tpu.matmul %85, %106, %cst_110 {dimension_numbers = #tpu.dot_dimension_numbers<[1], [0], [0], [1], [0, 0, 1, 1], [], []>} : vector<80x256xbf16>, vector<256x256xbf16>, vector<80x256xf32> -> vector<80x256xf32>
    %108 = arith.addf %104, %107 : vector<80x256xf32>
    %c4_111 = arith.constant 4 : index
    %c0_112 = arith.constant 0 : index
    %c0_113 = arith.constant 0 : index
    %109 = vector.load %arg4[%c4_111, %c0_112, %c0_113] : memref<5x256x256xbf16, #tpu.memory_space<vmem>>, vector<1x256x256xbf16>
    %110 = vector.shape_cast %109 : vector<1x256x256xbf16> to vector<256x256xbf16>
    %cst_114 = arith.constant dense<0.000000e+00> : vector<80x256xf32>
    %111 = tpu.matmul %88, %110, %cst_114 {dimension_numbers = #tpu.dot_dimension_numbers<[1], [0], [0], [1], [0, 0, 1, 1], [], []>} : vector<80x256xbf16>, vector<256x256xbf16>, vector<80x256xf32> -> vector<80x256xf32>
    %112 = arith.addf %108, %111 : vector<80x256xf32>
    %113 = vector.broadcast %73 : vector<1x256xf32> to vector<80x256xf32>
    %114 = arith.addf %112, %113 : vector<80x256xf32>
    %cst_115 = arith.constant 0.000000e+00 : f32
    %115 = vector.broadcast %cst_115 : f32 to vector<80x256xf32>
    %116 = arith.maximumf %114, %115 : vector<80x256xf32>
    %cst_116 = arith.constant 0.000000e+00 : f32
    %117 = vector.broadcast %cst_116 : f32 to vector<80x256xf32>
    %c0_117 = arith.constant 0 : index
    %c0_118 = arith.constant 0 : index
    %c0_119 = arith.constant 0 : index
    %118 = vector.load %arg4[%c0_117, %c0_118, %c0_119] : memref<5x256x256xbf16, #tpu.memory_space<vmem>>, vector<1x256x256xbf16>
    %119 = vector.shape_cast %118 : vector<1x256x256xbf16> to vector<256x256xbf16>
    %cst_120 = arith.constant dense<0.000000e+00> : vector<80x256xf32>
    %120 = tpu.matmul %79, %119, %cst_120 {dimension_numbers = #tpu.dot_dimension_numbers<[1], [0], [0], [1], [0, 0, 1, 1], [], []>} : vector<80x256xbf16>, vector<256x256xbf16>, vector<80x256xf32> -> vector<80x256xf32>
    %121 = arith.addf %117, %120 : vector<80x256xf32>
    %c1_121 = arith.constant 1 : index
    %c0_122 = arith.constant 0 : index
    %c0_123 = arith.constant 0 : index
    %122 = vector.load %arg4[%c1_121, %c0_122, %c0_123] : memref<5x256x256xbf16, #tpu.memory_space<vmem>>, vector<1x256x256xbf16>
    %123 = vector.shape_cast %122 : vector<1x256x256xbf16> to vector<256x256xbf16>
    %cst_124 = arith.constant dense<0.000000e+00> : vector<80x256xf32>
    %124 = tpu.matmul %82, %123, %cst_124 {dimension_numbers = #tpu.dot_dimension_numbers<[1], [0], [0], [1], [0, 0, 1, 1], [], []>} : vector<80x256xbf16>, vector<256x256xbf16>, vector<80x256xf32> -> vector<80x256xf32>
    %125 = arith.addf %121, %124 : vector<80x256xf32>
    %c2_125 = arith.constant 2 : index
    %c0_126 = arith.constant 0 : index
    %c0_127 = arith.constant 0 : index
    %126 = vector.load %arg4[%c2_125, %c0_126, %c0_127] : memref<5x256x256xbf16, #tpu.memory_space<vmem>>, vector<1x256x256xbf16>
    %127 = vector.shape_cast %126 : vector<1x256x256xbf16> to vector<256x256xbf16>
    %cst_128 = arith.constant dense<0.000000e+00> : vector<80x256xf32>
    %128 = tpu.matmul %85, %127, %cst_128 {dimension_numbers = #tpu.dot_dimension_numbers<[1], [0], [0], [1], [0, 0, 1, 1], [], []>} : vector<80x256xbf16>, vector<256x256xbf16>, vector<80x256xf32> -> vector<80x256xf32>
    %129 = arith.addf %125, %128 : vector<80x256xf32>
    %c3_129 = arith.constant 3 : index
    %c0_130 = arith.constant 0 : index
    %c0_131 = arith.constant 0 : index
    %130 = vector.load %arg4[%c3_129, %c0_130, %c0_131] : memref<5x256x256xbf16, #tpu.memory_space<vmem>>, vector<1x256x256xbf16>
    %131 = vector.shape_cast %130 : vector<1x256x256xbf16> to vector<256x256xbf16>
    %cst_132 = arith.constant dense<0.000000e+00> : vector<80x256xf32>
    %132 = tpu.matmul %88, %131, %cst_132 {dimension_numbers = #tpu.dot_dimension_numbers<[1], [0], [0], [1], [0, 0, 1, 1], [], []>} : vector<80x256xbf16>, vector<256x256xbf16>, vector<80x256xf32> -> vector<80x256xf32>
    %133 = arith.addf %129, %132 : vector<80x256xf32>
    %c4_133 = arith.constant 4 : index
    %c0_134 = arith.constant 0 : index
    %c0_135 = arith.constant 0 : index
    %134 = vector.load %arg4[%c4_133, %c0_134, %c0_135] : memref<5x256x256xbf16, #tpu.memory_space<vmem>>, vector<1x256x256xbf16>
    %135 = vector.shape_cast %134 : vector<1x256x256xbf16> to vector<256x256xbf16>
    %cst_136 = arith.constant dense<0.000000e+00> : vector<80x256xf32>
    %136 = tpu.matmul %91, %135, %cst_136 {dimension_numbers = #tpu.dot_dimension_numbers<[1], [0], [0], [1], [0, 0, 1, 1], [], []>} : vector<80x256xbf16>, vector<256x256xbf16>, vector<80x256xf32> -> vector<80x256xf32>
    %137 = arith.addf %133, %136 : vector<80x256xf32>
    %138 = vector.broadcast %73 : vector<1x256xf32> to vector<80x256xf32>
    %139 = arith.addf %137, %138 : vector<80x256xf32>
    %cst_137 = arith.constant 0.000000e+00 : f32
    %140 = vector.broadcast %cst_137 : f32 to vector<80x256xf32>
    %141 = arith.maximumf %139, %140 : vector<80x256xf32>
    %142 = arith.addf %116, %141 : vector<80x256xf32>
    %cst_138 = arith.constant 0.000000e+00 : f32
    %143 = vector.broadcast %cst_138 : f32 to vector<16x128xf32>
    %144 = vector.extract_strided_slice %142 {offsets = [0, 0], sizes = [16, 256], strides = [1, 1]} : vector<80x256xf32> to vector<16x256xf32>
    %145 = arith.truncf %144 : vector<16x256xf32> to vector<16x256xbf16>
    %c0_139 = arith.constant 0 : index
    %c0_140 = arith.constant 0 : index
    %c0_141 = arith.constant 0 : index
    %146 = vector.load %arg6[%c0_139, %c0_140, %c0_141] : memref<5x256x128xbf16, #tpu.memory_space<vmem>>, vector<1x256x128xbf16>
    %147 = vector.shape_cast %146 : vector<1x256x128xbf16> to vector<256x128xbf16>
    %cst_142 = arith.constant dense<0.000000e+00> : vector<16x128xf32>
    %148 = tpu.matmul %145, %147, %cst_142 {dimension_numbers = #tpu.dot_dimension_numbers<[1], [0], [0], [1], [0, 0, 1, 1], [], []>} : vector<16x256xbf16>, vector<256x128xbf16>, vector<16x128xf32> -> vector<16x128xf32>
    %149 = arith.addf %143, %148 : vector<16x128xf32>
    %150 = vector.extract_strided_slice %142 {offsets = [16, 0], sizes = [16, 256], strides = [1, 1]} : vector<80x256xf32> to vector<16x256xf32>
    %151 = arith.truncf %150 : vector<16x256xf32> to vector<16x256xbf16>
    %c1_143 = arith.constant 1 : index
    %c0_144 = arith.constant 0 : index
    %c0_145 = arith.constant 0 : index
    %152 = vector.load %arg6[%c1_143, %c0_144, %c0_145] : memref<5x256x128xbf16, #tpu.memory_space<vmem>>, vector<1x256x128xbf16>
    %153 = vector.shape_cast %152 : vector<1x256x128xbf16> to vector<256x128xbf16>
    %cst_146 = arith.constant dense<0.000000e+00> : vector<16x128xf32>
    %154 = tpu.matmul %151, %153, %cst_146 {dimension_numbers = #tpu.dot_dimension_numbers<[1], [0], [0], [1], [0, 0, 1, 1], [], []>} : vector<16x256xbf16>, vector<256x128xbf16>, vector<16x128xf32> -> vector<16x128xf32>
    %155 = arith.addf %149, %154 : vector<16x128xf32>
    %156 = vector.extract_strided_slice %142 {offsets = [32, 0], sizes = [16, 256], strides = [1, 1]} : vector<80x256xf32> to vector<16x256xf32>
    %157 = arith.truncf %156 : vector<16x256xf32> to vector<16x256xbf16>
    %c2_147 = arith.constant 2 : index
    %c0_148 = arith.constant 0 : index
    %c0_149 = arith.constant 0 : index
    %158 = vector.load %arg6[%c2_147, %c0_148, %c0_149] : memref<5x256x128xbf16, #tpu.memory_space<vmem>>, vector<1x256x128xbf16>
    %159 = vector.shape_cast %158 : vector<1x256x128xbf16> to vector<256x128xbf16>
    %cst_150 = arith.constant dense<0.000000e+00> : vector<16x128xf32>
    %160 = tpu.matmul %157, %159, %cst_150 {dimension_numbers = #tpu.dot_dimension_numbers<[1], [0], [0], [1], [0, 0, 1, 1], [], []>} : vector<16x256xbf16>, vector<256x128xbf16>, vector<16x128xf32> -> vector<16x128xf32>
    %161 = arith.addf %155, %160 : vector<16x128xf32>
    %162 = vector.extract_strided_slice %142 {offsets = [48, 0], sizes = [16, 256], strides = [1, 1]} : vector<80x256xf32> to vector<16x256xf32>
    %163 = arith.truncf %162 : vector<16x256xf32> to vector<16x256xbf16>
    %c3_151 = arith.constant 3 : index
    %c0_152 = arith.constant 0 : index
    %c0_153 = arith.constant 0 : index
    %164 = vector.load %arg6[%c3_151, %c0_152, %c0_153] : memref<5x256x128xbf16, #tpu.memory_space<vmem>>, vector<1x256x128xbf16>
    %165 = vector.shape_cast %164 : vector<1x256x128xbf16> to vector<256x128xbf16>
    %cst_154 = arith.constant dense<0.000000e+00> : vector<16x128xf32>
    %166 = tpu.matmul %163, %165, %cst_154 {dimension_numbers = #tpu.dot_dimension_numbers<[1], [0], [0], [1], [0, 0, 1, 1], [], []>} : vector<16x256xbf16>, vector<256x128xbf16>, vector<16x128xf32> -> vector<16x128xf32>
    %167 = arith.addf %161, %166 : vector<16x128xf32>
    %168 = vector.extract_strided_slice %142 {offsets = [64, 0], sizes = [16, 256], strides = [1, 1]} : vector<80x256xf32> to vector<16x256xf32>
    %169 = arith.truncf %168 : vector<16x256xf32> to vector<16x256xbf16>
    %c4_155 = arith.constant 4 : index
    %c0_156 = arith.constant 0 : index
    %c0_157 = arith.constant 0 : index
    %170 = vector.load %arg6[%c4_155, %c0_156, %c0_157] : memref<5x256x128xbf16, #tpu.memory_space<vmem>>, vector<1x256x128xbf16>
    %171 = vector.shape_cast %170 : vector<1x256x128xbf16> to vector<256x128xbf16>
    %cst_158 = arith.constant dense<0.000000e+00> : vector<16x128xf32>
    %172 = tpu.matmul %169, %171, %cst_158 {dimension_numbers = #tpu.dot_dimension_numbers<[1], [0], [0], [1], [0, 0, 1, 1], [], []>} : vector<16x256xbf16>, vector<256x128xbf16>, vector<16x128xf32> -> vector<16x128xf32>
    %173 = arith.addf %167, %172 : vector<16x128xf32>
    %c0_159 = arith.constant 0 : index
    %c0_160 = arith.constant 0 : index
    %174 = vector.load %arg7[%c0_159, %c0_160] : memref<1x128xf32, #tpu.memory_space<vmem>>, vector<1x128xf32>
    %175 = vector.broadcast %174 : vector<1x128xf32> to vector<16x128xf32>
    %176 = arith.addf %173, %175 : vector<16x128xf32>
    %cst_161 = arith.constant 0.000000e+00 : f32
    %177 = vector.broadcast %cst_161 : f32 to vector<16x128xf32>
    %178 = arith.maximumf %176, %177 : vector<16x128xf32>
    %179 = arith.truncf %178 : vector<16x128xf32> to vector<16x128xbf16>
    %c0_162 = arith.constant 0 : index
    %c0_163 = arith.constant 0 : index
    %180 = vector.load %arg8[%c0_162, %c0_163] : memref<128x128xbf16, #tpu.memory_space<vmem>>, vector<128x128xbf16>
    %cst_164 = arith.constant dense<0.000000e+00> : vector<16x128xf32>
    %181 = tpu.matmul %179, %180, %cst_164 {dimension_numbers = #tpu.dot_dimension_numbers<[1], [0], [0], [1], [0, 0, 1, 1], [], []>} : vector<16x128xbf16>, vector<128x128xbf16>, vector<16x128xf32> -> vector<16x128xf32>
    %c0_165 = arith.constant 0 : index
    %c0_166 = arith.constant 0 : index
    %182 = vector.load %arg9[%c0_165, %c0_166] : memref<1x128xf32, #tpu.memory_space<vmem>>, vector<1x128xf32>
    %183 = vector.broadcast %182 : vector<1x128xf32> to vector<16x128xf32>
    %184 = arith.addf %181, %183 : vector<16x128xf32>
    %cst_167 = arith.constant 0.000000e+00 : f32
    %185 = vector.broadcast %cst_167 : f32 to vector<16x128xf32>
    %186 = arith.maximumf %184, %185 : vector<16x128xf32>
    %187 = arith.truncf %186 : vector<16x128xf32> to vector<16x128xbf16>
    %c0_168 = arith.constant 0 : index
    %c0_169 = arith.constant 0 : index
    %188 = vector.load %arg10[%c0_168, %c0_169] : memref<128x128xbf16, #tpu.memory_space<vmem>>, vector<128x128xbf16>
    %cst_170 = arith.constant dense<0.000000e+00> : vector<16x128xf32>
    %189 = tpu.matmul %187, %188, %cst_170 {dimension_numbers = #tpu.dot_dimension_numbers<[1], [0], [0], [1], [0, 0, 1, 1], [], []>} : vector<16x128xbf16>, vector<128x128xbf16>, vector<16x128xf32> -> vector<16x128xf32>
    %c0_171 = arith.constant 0 : index
    %c0_172 = arith.constant 0 : index
    %190 = vector.load %arg11[%c0_171, %c0_172] : memref<1x128xf32, #tpu.memory_space<vmem>>, vector<1x128xf32>
    %191 = vector.broadcast %190 : vector<1x128xf32> to vector<16x128xf32>
    %192 = arith.addf %189, %191 : vector<16x128xf32>
    %c0_173 = arith.constant 0 : index
    %c0_174 = arith.constant 0 : index
    %193 = vector.load %arg12[%c0_173, %c0_174] : memref<16x128xf32, #tpu.memory_space<vmem>>, vector<16x128xf32>
    tpu.vector_store %arg12[%c0_173, %c0_174], %192 {strides = array<i32>} : memref<16x128xf32, #tpu.memory_space<vmem>>, vector<16x128xf32>,
    return
  }
  func.func @transform_0(%arg0: i32) -> (i32, i32, i32, i32) {
    %c0_i32 = arith.constant 0 : i32
    %c0_i32_0 = arith.constant 0 : i32
    %c0_i32_1 = arith.constant 0 : i32
    %c0_i32_2 = arith.constant 0 : i32
    return %c0_i32, %c0_i32_0, %arg0, %c0_i32_1 : i32, i32, i32, i32
  }
  func.func @transform_1(%arg0: i32) -> (i32, i32, i32) {
    %c0_i32 = arith.constant 0 : i32
    %c0_i32_0 = arith.constant 0 : i32
    %c0_i32_1 = arith.constant 0 : i32
    %c0_i32_2 = arith.constant 0 : i32
    return %c0_i32, %c0_i32_0, %c0_i32_1 : i32, i32, i32
  }
  func.func @transform_2(%arg0: i32) -> (i32, i32) {
    %c0_i32 = arith.constant 0 : i32
    %c0_i32_0 = arith.constant 0 : i32
    %c0_i32_1 = arith.constant 0 : i32
    return %c0_i32, %c0_i32_0 : i32, i32
  }
  func.func @transform_3(%arg0: i32) -> (i32, i32, i32) {
    %c0_i32 = arith.constant 0 : i32
    %c0_i32_0 = arith.constant 0 : i32
    %c0_i32_1 = arith.constant 0 : i32
    %c0_i32_2 = arith.constant 0 : i32
    return %c0_i32, %c0_i32_0, %c0_i32_1 : i32, i32, i32
  }
  func.func @transform_4(%arg0: i32) -> (i32, i32) {
    %c0_i32 = arith.constant 0 : i32
    %c0_i32_0 = arith.constant 0 : i32
    %c0_i32_1 = arith.constant 0 : i32
    return %c0_i32, %c0_i32_0 : i32, i32
  }
  func.func @transform_5(%arg0: i32) -> (i32, i32, i32) {
    %c0_i32 = arith.constant 0 : i32
    %c0_i32_0 = arith.constant 0 : i32
    %c0_i32_1 = arith.constant 0 : i32
    %c0_i32_2 = arith.constant 0 : i32
    return %c0_i32, %c0_i32_0, %c0_i32_1 : i32, i32, i32
  }
  func.func @transform_6(%arg0: i32) -> (i32, i32) {
    %c0_i32 = arith.constant 0 : i32
    %c0_i32_0 = arith.constant 0 : i32
    %c0_i32_1 = arith.constant 0 : i32
    return %c0_i32, %c0_i32_0 : i32, i32
  }
  func.func @transform_7(%arg0: i32) -> (i32, i32) {
    %c0_i32 = arith.constant 0 : i32
    %c0_i32_0 = arith.constant 0 : i32
    %c0_i32_1 = arith.constant 0 : i32
    return %c0_i32, %c0_i32_0 : i32, i32
  }
  func.func @transform_8(%arg0: i32) -> (i32, i32) {
    %c0_i32 = arith.constant 0 : i32
    %c0_i32_0 = arith.constant 0 : i32
    %c0_i32_1 = arith.constant 0 : i32
    return %c0_i32, %c0_i32_0 : i32, i32
  }
  func.func @transform_9(%arg0: i32) -> (i32, i32) {
    %c0_i32 = arith.constant 0 : i32
    %c0_i32_0 = arith.constant 0 : i32
    %c0_i32_1 = arith.constant 0 : i32
    return %c0_i32, %c0_i32_0 : i32, i32
  }
  func.func @transform_10(%arg0: i32) -> (i32, i32) {
    %c0_i32 = arith.constant 0 : i32
    %c0_i32_0 = arith.constant 0 : i32
    %c0_i32_1 = arith.constant 0 : i32
    return %c0_i32, %c0_i32_0 : i32, i32
  }
  func.func @transform_11(%arg0: i32) -> (i32, i32) {
    %c0_i32 = arith.constant 0 : i32
    %c0_i32_0 = arith.constant 0 : i32
    return %arg0, %c0_i32 : i32, i32
  }
}

</mosaic_0001>

<llo_original>
// kernel: mul.1
$region0: #{mul.1}
  #allocation0 [shape = 's32[1]{0}', space=sflag, size = 0x4, scoped, tag = 'scoped memory for mul.1']
  %s0 = inlined_call_operand.vmem [shape: f32[96000], index: 0, kind: input, shape index: {}]
  %s1 = inlined_call_operand.vmem [shape: f32[96000], index: 1, kind: input, shape index: {}]
  %s2 = inlined_call_operand.vmem [shape: f32[96000], index: 2, kind: output, shape index: {}]
  %v3 = vld [vmem:[%s0] sm:$0xff]
  %v4 = vld [vmem:[%s1] sm:$0xff]
  %5 = xla_tuple %v3, %v4
  %6 = xla_tuple %5
  %v7 = vmul.f32 %v3, %v4
  %8 = xla_tuple %v7
  %9 = vst [vmem:[%s2] sm:$0xff] %v7
  %s10 = scalar_lea.vmem %s0, 8
  %v11 = vld [vmem:[%s10] sm:$0xff]
  %s12 = scalar_lea.vmem %s1, 8
  %v13 = vld [vmem:[%s12] sm:$0xff]
  %14 = xla_tuple %v11, %v13
  %15 = xla_tuple %14
  %v16 = vmul.f32 %v11, %v13
  %17 = xla_tuple %v16
  %s18 = scalar_lea.vmem %s2, 8
  %19 = vst [vmem:[%s18] sm:$0xff] %v16
  %s20 = scalar_lea.vmem %s0, 16
  %v21 = vld [vmem:[%s20] sm:$0xff]
  %s22 = scalar_lea.vmem %s1, 16
  %v23 = vld [vmem:[%s22] sm:$0xff]
  %24 = xla_tuple %v21, %v23
  %25 = xla_tuple %24
  %v26 = vmul.f32 %v21, %v23
  %27 = xla_tuple %v26
  %s28 = scalar_lea.vmem %s2, 16
  %29 = vst [vmem:[%s28] sm:$0xff] %v26
  %s30 = scalar_lea.vmem %s0, 24
  %v31 = vld [vmem:[%s30] sm:$0xff]
  %s32 = scalar_lea.vmem %s1, 24
  %v33 = vld [vmem:[%s32] sm:$0xff]
  %34 = xla_tuple %v31, %v33
  %35 = xla_tuple %34
  %v36 = vmul.f32 %v31, %v33
  %37 = xla_tuple %v36
  %s38 = scalar_lea.vmem %s2, 24
  %39 = vst [vmem:[%s38] sm:$0xff] %v36
  %s40 = scalar_lea.vmem %s0, 32
  %v41 = vld [vmem:[%s40] sm:$0xff]
  %s42 = scalar_lea.vmem %s1, 32
  %v43 = vld [vmem:[%s42] sm:$0xff]
  %44 = xla_tuple %v41, %v43
  %45 = xla_tuple %44
  %v46 = vmul.f32 %v41, %v43
  %47 = xla_tuple %v46
  %s48 = scalar_lea.vmem %s2, 32
  %49 = vst [vmem:[%s48] sm:$0xff] %v46
  %s50 = scalar_lea.vmem %s0, 40
  %v51 = vld [vmem:[%s50] sm:$0xff]
  %s52 = scalar_lea.vmem %s1, 40
  %v53 = vld [vmem:[%s52] sm:$0xff]
  %54 = xla_tuple %v51, %v53
  %55 = xla_tuple %54
  %v56 = vmul.f32 %v51, %v53
  %57 = xla_tuple %v56
  %s58 = scalar_lea.vmem %s2, 40
  %59 = vst [vmem:[%s58] sm:$0xff] %v56
  %s60 = scalar_lea.vmem %s0, 48
  %v61 = vld [vmem:[%s60] sm:$0xff]
  %s62 = scalar_lea.vmem %s1, 48
  %v63 = vld [vmem:[%s62] sm:$0xff]
  %64 = xla_tuple %v61, %v63
  %65 = xla_tuple %64
  %v66 = vmul.f32 %v61, %v63
  %67 = xla_tuple %v66
  %s68 = scalar_lea.vmem %s2, 48
  %69 = vst [vmem:[%s68] sm:$0xff] %v66
  %s70 = scalar_lea.vmem %s0, 56
  %v71 = vld [vmem:[%s70] sm:$0xff]
  %s72 = scalar_lea.vmem %s1, 56
  %v73 = vld [vmem:[%s72] sm:$0xff]
  %74 = xla_tuple %v71, %v73
  %75 = xla_tuple %74
  %v76 = vmul.f32 %v71, %v73
  %77 = xla_tuple %v76
  %s78 = scalar_lea.vmem %s2, 56
  %79 = vst [vmem:[%s78] sm:$0xff] %v76
  %s80 = scalar_lea.vmem %s0, 64
  %v81 = vld [vmem:[%s80] sm:$0xff]
  %s82 = scalar_lea.vmem %s1, 64
  %v83 = vld [vmem:[%s82] sm:$0xff]
  %84 = xla_tuple %v81, %v83
  %85 = xla_tuple %84
  %v86 = vmul.f32 %v81, %v83
  %87 = xla_tuple %v86
  %s88 = scalar_lea.vmem %s2, 64
  %89 = vst [vmem:[%s88] sm:$0xff] %v86
  %s90 = scalar_lea.vmem %s0, 72
  %v91 = vld [vmem:[%s90] sm:$0xff]
  %s92 = scalar_lea.vmem %s1, 72
  %v93 = vld [vmem:[%s92] sm:$0xff]
  %94 = xla_tuple %v91, %v93
  %95 = xla_tuple %94
  %v96 = vmul.f32 %v91, %v93
  %97 = xla_tuple %v96
  %s98 = scalar_lea.vmem %s2, 72
  %99 = vst [vmem:[%s98] sm:$0xff] %v96
  %s100 = scalar_lea.vmem %s0, 80
  %v101 = vld [vmem:[%s100] sm:$0xff]
  %s102 = scalar_lea.vmem %s1, 80
  %v103 = vld [vmem:[%s102] sm:$0xff]
  %104 = xla_tuple %v101, %v103
  %105 = xla_tuple %104
  %v106 = vmul.f32 %v101, %v103
  %107 = xla_tuple %v106
  %s108 = scalar_lea.vmem %s2, 80
  %109 = vst [vmem:[%s108] sm:$0xff] %v106
  %s110 = scalar_lea.vmem %s0, 88
  %v111 = vld [vmem:[%s110] sm:$0xff]
  %s112 = scalar_lea.vmem %s1, 88
  %v113 = vld [vmem:[%s112] sm:$0xff]
  %114 = xla_tuple %v111, %v113
  %115 = xla_tuple %114
  %v116 = vmul.f32 %v111, %v113
  %117 = xla_tuple %v116
  %s118 = scalar_lea.vmem %s2, 88
  %119 = vst [vmem:[%s118] sm:$0xff] %v116
  %s120 = scalar_lea.vmem %s0, 96
  %v121 = vld [vmem:[%s120] sm:$0xff]
  %s122 = scalar_lea.vmem %s1, 96
  %v123 = vld [vmem:[%s122] sm:$0xff]
  %124 = xla_tuple %v121, %v123
  %125 = xla_tuple %124
  %v126 = vmul.f32 %v121, %v123
  %127 = xla_tuple %v126
  %s128 = scalar_lea.vmem %s2, 96
  %129 = vst [vmem:[%s128] sm:$0xff] %v126
  %s130 = scalar_lea.vmem %s0, 104
  %v131 = vld [vmem:[%s130] sm:$0xff]
  %s132 = scalar_lea.vmem %s1, 104
  %v133 = vld [vmem:[%s132] sm:$0xff]
  %134 = xla_tuple %v131, %v133
  %135 = xla_tuple %134
  %v136 = vmul.f32 %v131, %v133
  %137 = xla_tuple %v136
  %s138 = scalar_lea.vmem %s2, 104
  %139 = vst [vmem:[%s138] sm:$0xff] %v136
  %s140 = scalar_lea.vmem %s0, 112
  %v141 = vld [vmem:[%s140] sm:$0xff]
  %s142 = scalar_lea.vmem %s1, 112
  %v143 = vld [vmem:[%s142] sm:$0xff]
  %144 = xla_tuple %v141, %v143
  %145 = xla_tuple %144
  %v146 = vmul.f32 %v141, %v143
  %147 = xla_tuple %v146
  %s148 = scalar_lea.vmem %s2, 112
  %149 = vst [vmem:[%s148] sm:$0xff] %v146
  %s150 = scalar_lea.vmem %s0, 120
  %v151 = vld [vmem:[%s150] sm:$0xff]
  %s152 = scalar_lea.vmem %s1, 120
  %v153 = vld [vmem:[%s152] sm:$0xff]
  %154 = xla_tuple %v151, %v153
  %155 = xla_tuple %154
  %v156 = vmul.f32 %v151, %v153
  %157 = xla_tuple %v156
  %s158 = scalar_lea.vmem %s2, 120
  %159 = vst [vmem:[%s158] sm:$0xff] %v156
  %s160 = scalar_lea.vmem %s0, 128
  %v161 = vld [vmem:[%s160] sm:$0xff]
  %s162 = scalar_lea.vmem %s1, 128
  %v163 = vld [vmem:[%s162] sm:$0xff]
  %164 = xla_tuple %v161, %v163
  %165 = xla_tuple %164
  %v166 = vmul.f32 %v161, %v163
  %167 = xla_tuple %v166
  %s168 = scalar_lea.vmem %s2, 128
  %169 = vst [vmem:[%s168] sm:$0xff] %v166
  %s170 = scalar_lea.vmem %s0, 136
  %v171 = vld [vmem:[%s170] sm:$0xff]
  %s172 = scalar_lea.vmem %s1, 136
  %v173 = vld [vmem:[%s172] sm:$0xff]
  %174 = xla_tuple %v171, %v173
  %175 = xla_tuple %174
  %v176 = vmul.f32 %v171, %v173
  %177 = xla_tuple %v176
  %s178 = scalar_lea.vmem %s2, 136
  %179 = vst [vmem:[%s178] sm:$0xff] %v176
  %s180 = scalar_lea.vmem %s0, 144
  %v181 = vld [vmem:[%s180] sm:$0xff]
  %s182 = scalar_lea.vmem %s1, 144
  %v183 = vld [vmem:[%s182] sm:$0xff]
  %184 = xla_tuple %v181, %v183
  %185 = xla_tuple %184
  %v186 = vmul.f32 %v181, %v183
  %187 = xla_tuple %v186
  %s188 = scalar_lea.vmem %s2, 144
  %189 = vst [vmem:[%s188] sm:$0xff] %v186
  %s190 = scalar_lea.vmem %s0, 152
  %v191 = vld [vmem:[%s190] sm:$0xff]
  %s192 = scalar_lea.vmem %s1, 152
  %v193 = vld [vmem:[%s192] sm:$0xff]
  %194 = xla_tuple %v191, %v193
  %195 = xla_tuple %194
  %v196 = vmul.f32 %v191, %v193
  %197 = xla_tuple %v196
  %s198 = scalar_lea.vmem %s2, 152
  %199 = vst [vmem:[%s198] sm:$0xff] %v196
  %s200 = scalar_lea.vmem %s0, 160
  %v201 = vld [vmem:[%s200] sm:$0xff]
  %s202 = scalar_lea.vmem %s1, 160
  %v203 = vld [vmem:[%s202] sm:$0xff]
  %204 = xla_tuple %v201, %v203
  %205 = xla_tuple %204
  %v206 = vmul.f32 %v201, %v203
  %207 = xla_tuple %v206
  %s208 = scalar_lea.vmem %s2, 160
  %209 = vst [vmem:[%s208] sm:$0xff] %v206
  %s210 = scalar_lea.vmem %s0, 168
  %v211 = vld [vmem:[%s210] sm:$0xff]
  %s212 = scalar_lea.vmem %s1, 168
  %v213 = vld [vmem:[%s212] sm:$0xff]
  %214 = xla_tuple %v211, %v213
  %215 = xla_tuple %214
  %v216 = vmul.f32 %v211, %v213
  %217 = xla_tuple %v216
  %s218 = scalar_lea.vmem %s2, 168
  %219 = vst [vmem:[%s218] sm:$0xff] %v216
  %s220 = scalar_lea.vmem %s0, 176
  %v221 = vld [vmem:[%s220] sm:$0xff]
  %s222 = scalar_lea.vmem %s1, 176
  %v223 = vld [vmem:[%s222] sm:$0xff]
  %224 = xla_tuple %v221, %v223
  %225 = xla_tuple %224
  %v226 = vmul.f32 %v221, %v223
  %227 = xla_tuple %v226
  %s228 = scalar_lea.vmem %s2, 176
  %229 = vst [vmem:[%s228] sm:$0xff] %v226
  %s230 = scalar_lea.vmem %s0, 184
  %v231 = vld [vmem:[%s230] sm:$0xff]
  %s232 = scalar_lea.vmem %s1, 184
  %v233 = vld [vmem:[%s232] sm:$0xff]
  %234 = xla_tuple %v231, %v233
  %235 = xla_tuple %234
  %v236 = vmul.f32 %v231, %v233
  %237 = xla_tuple %v236
  %s238 = scalar_lea.vmem %s2, 184
  %239 = vst [vmem:[%s238] sm:$0xff] %v236
  %s240 = scalar_lea.vmem %s0, 192
  %v241 = vld [vmem:[%s240] sm:$0xff]
  %s242 = scalar_lea.vmem %s1, 192
  %v243 = vld [vmem:[%s242] sm:$0xff]
  %244 = xla_tuple %v241, %v243
  %245 = xla_tuple %244
  %v246 = vmul.f32 %v241, %v243
  %247 = xla_tuple %v246
  %s248 = scalar_lea.vmem %s2, 192
  %249 = vst [vmem:[%s248] sm:$0xff] %v246
  %s250 = scalar_lea.vmem %s0, 200
  %v251 = vld [vmem:[%s250] sm:$0xff]
  %s252 = scalar_lea.vmem %s1, 200
  %v253 = vld [vmem:[%s252] sm:$0xff]
  %254 = xla_tuple %v251, %v253
  %255 = xla_tuple %254
  %v256 = vmul.f32 %v251, %v253
  %257 = xla_tuple %v256
  %s258 = scalar_lea.vmem %s2, 200
  %259 = vst [vmem:[%s258] sm:$0xff] %v256
  %s260 = scalar_lea.vmem %s0, 208
  %v261 = vld [vmem:[%s260] sm:$0xff]
  %s262 = scalar_lea.vmem %s1, 208
  %v263 = vld [vmem:[%s262] sm:$0xff]
  %264 = xla_tuple %v261, %v263
  %265 = xla_tuple %264
  %v266 = vmul.f32 %v261, %v263
  %267 = xla_tuple %v266
  %s268 = scalar_lea.vmem %s2, 208
  %269 = vst [vmem:[%s268] sm:$0xff] %v266
  %s270 = scalar_lea.vmem %s0, 216
  %v271 = vld [vmem:[%s270] sm:$0xff]
  %s272 = scalar_lea.vmem %s1, 216
  %v273 = vld [vmem:[%s272] sm:$0xff]
  %274 = xla_tuple %v271, %v273
  %275 = xla_tuple %274
  %v276 = vmul.f32 %v271, %v273
  %277 = xla_tuple %v276
  %s278 = scalar_lea.vmem %s2, 216
  %279 = vst [vmem:[%s278] sm:$0xff] %v276
  %s280 = scalar_lea.vmem %s0, 224
  %v281 = vld [vmem:[%s280] sm:$0xff]
  %s282 = scalar_lea.vmem %s1, 224
  %v283 = vld [vmem:[%s282] sm:$0xff]
  %284 = xla_tuple %v281, %v283
  %285 = xla_tuple %284
  %v286 = vmul.f32 %v281, %v283
  %287 = xla_tuple %v286
  %s288 = scalar_lea.vmem %s2, 224
  %289 = vst [vmem:[%s288] sm:$0xff] %v286
  %s290 = scalar_lea.vmem %s0, 232
  %v291 = vld [vmem:[%s290] sm:$0xff]
  %s292 = scalar_lea.vmem %s1, 232
  %v293 = vld [vmem:[%s292] sm:$0xff]
  %294 = xla_tuple %v291, %v293
  %295 = xla_tuple %294
  %v296 = vmul.f32 %v291, %v293
  %297 = xla_tuple %v296
  %s298 = scalar_lea.vmem %s2, 232
  %299 = vst [vmem:[%s298] sm:$0xff] %v296
  %s300 = scalar_lea.vmem %s0, 240
  %v301 = vld [vmem:[%s300] sm:$0xff]
  %s302 = scalar_lea.vmem %s1, 240
  %v303 = vld [vmem:[%s302] sm:$0xff]
  %304 = xla_tuple %v301, %v303
  %305 = xla_tuple %304
  %v306 = vmul.f32 %v301, %v303
  %307 = xla_tuple %v306
  %s308 = scalar_lea.vmem %s2, 240
  %309 = vst [vmem:[%s308] sm:$0xff] %v306
  %s310 = scalar_lea.vmem %s0, 248
  %v311 = vld [vmem:[%s310] sm:$0xff]
  %s312 = scalar_lea.vmem %s1, 248
  %v313 = vld [vmem:[%s312] sm:$0xff]
  %314 = xla_tuple %v311, %v313
  %315 = xla_tuple %314
  %v316 = vmul.f32 %v311, %v313
  %317 = xla_tuple %v316
  %s318 = scalar_lea.vmem %s2, 248
  %319 = vst [vmem:[%s318] sm:$0xff] %v316
  %s320 = scalar_lea.vmem %s0, 256
  %v321 = vld [vmem:[%s320] sm:$0xff]
  %s322 = scalar_lea.vmem %s1, 256
  %v323 = vld [vmem:[%s322] sm:$0xff]
  %324 = xla_tuple %v321, %v323
  %325 = xla_tuple %324
  %v326 = vmul.f32 %v321, %v323
  %327 = xla_tuple %v326
  %s328 = scalar_lea.vmem %s2, 256
  %329 = vst [vmem:[%s328] sm:$0xff] %v326
  %s330 = scalar_lea.vmem %s0, 264
  %v331 = vld [vmem:[%s330] sm:$0xff]
  %s332 = scalar_lea.vmem %s1, 264
  %v333 = vld [vmem:[%s332] sm:$0xff]
  %334 = xla_tuple %v331, %v333
  %335 = xla_tuple %334
  %v336 = vmul.f32 %v331, %v333
  %337 = xla_tuple %v336
  %s338 = scalar_lea.vmem %s2, 264
  %339 = vst [vmem:[%s338] sm:$0xff] %v336
  %s340 = scalar_lea.vmem %s0, 272
  %v341 = vld [vmem:[%s340] sm:$0xff]
  %s342 = scalar_lea.vmem %s1, 272
  %v343 = vld [vmem:[%s342] sm:$0xff]
  %344 = xla_tuple %v341, %v343
  %345 = xla_tuple %344
  %v346 = vmul.f32 %v341, %v343
  %347 = xla_tuple %v346
  %s348 = scalar_lea.vmem %s2, 272
  %349 = vst [vmem:[%s348] sm:$0xff] %v346
  %s350 = scalar_lea.vmem %s0, 280
  %v351 = vld [vmem:[%s350] sm:$0xff]
  %s352 = scalar_lea.vmem %s1, 280
  %v353 = vld [vmem:[%s352] sm:$0xff]
  %354 = xla_tuple %v351, %v353
  %355 = xla_tuple %354
  %v356 = vmul.f32 %v351, %v353
  %357 = xla_tuple %v356
  %s358 = scalar_lea.vmem %s2, 280
  %359 = vst [vmem:[%s358] sm:$0xff] %v356
  %s360 = scalar_lea.vmem %s0, 288
  %v361 = vld [vmem:[%s360] sm:$0xff]
  %s362 = scalar_lea.vmem %s1, 288
  %v363 = vld [vmem:[%s362] sm:$0xff]
  %364 = xla_tuple %v361, %v363
  %365 = xla_tuple %364
  %v366 = vmul.f32 %v361, %v363
  %367 = xla_tuple %v366
  %s368 = scalar_lea.vmem %s2, 288
  %369 = vst [vmem:[%s368] sm:$0xff] %v366
  %s370 = scalar_lea.vmem %s0, 296
  %v371 = vld [vmem:[%s370] sm:$0xff]
  %s372 = scalar_lea.vmem %s1, 296
  %v373 = vld [vmem:[%s372] sm:$0xff]
  %374 = xla_tuple %v371, %v373
  %375 = xla_tuple %374
  %v376 = vmul.f32 %v371, %v373
  %377 = xla_tuple %v376
  %s378 = scalar_lea.vmem %s2, 296
  %379 = vst [vmem:[%s378] sm:$0xff] %v376
  %s380 = scalar_lea.vmem %s0, 304
  %v381 = vld [vmem:[%s380] sm:$0xff]
  %s382 = scalar_lea.vmem %s1, 304
  %v383 = vld [vmem:[%s382] sm:$0xff]
  %384 = xla_tuple %v381, %v383
  %385 = xla_tuple %384
  %v386 = vmul.f32 %v381, %v383
  %387 = xla_tuple %v386
  %s388 = scalar_lea.vmem %s2, 304
  %389 = vst [vmem:[%s388] sm:$0xff] %v386
  %s390 = scalar_lea.vmem %s0, 312
  %v391 = vld [vmem:[%s390] sm:$0xff]
  %s392 = scalar_lea.vmem %s1, 312
  %v393 = vld [vmem:[%s392] sm:$0xff]
  %394 = xla_tuple %v391, %v393
  %395 = xla_tuple %394
  %v396 = vmul.f32 %v391, %v393
  %397 = xla_tuple %v396
  %s398 = scalar_lea.vmem %s2, 312
  %399 = vst [vmem:[%s398] sm:$0xff] %v396
  %s400 = scalar_lea.vmem %s0, 320
  %v401 = vld [vmem:[%s400] sm:$0xff]
  %s402 = scalar_lea.vmem %s1, 320
  %v403 = vld [vmem:[%s402] sm:$0xff]
  %404 = xla_tuple %v401, %v403
  %405 = xla_tuple %404
  %v406 = vmul.f32 %v401, %v403
  %407 = xla_tuple %v406
  %s408 = scalar_lea.vmem %s2, 320
  %409 = vst [vmem:[%s408] sm:$0xff] %v406
  %s410 = scalar_lea.vmem %s0, 328
  %v411 = vld [vmem:[%s410] sm:$0xff]
  %s412 = scalar_lea.vmem %s1, 328
  %v413 = vld [vmem:[%s412] sm:$0xff]
  %414 = xla_tuple %v411, %v413
  %415 = xla_tuple %414
  %v416 = vmul.f32 %v411, %v413
  %417 = xla_tuple %v416
  %s418 = scalar_lea.vmem %s2, 328
  %419 = vst [vmem:[%s418] sm:$0xff] %v416
  %s420 = scalar_lea.vmem %s0, 336
  %v421 = vld [vmem:[%s420] sm:$0xff]
  %s422 = scalar_lea.vmem %s1, 336
  %v423 = vld [vmem:[%s422] sm:$0xff]
  %424 = xla_tuple %v421, %v423
  %425 = xla_tuple %424
  %v426 = vmul.f32 %v421, %v423
  %427 = xla_tuple %v426
  %s428 = scalar_lea.vmem %s2, 336
  %429 = vst [vmem:[%s428] sm:$0xff] %v426
  %s430 = scalar_lea.vmem %s0, 344
  %v431 = vld [vmem:[%s430] sm:$0xff]
  %s432 = scalar_lea.vmem %s1, 344
  %v433 = vld [vmem:[%s432] sm:$0xff]
  %434 = xla_tuple %v431, %v433
  %435 = xla_tuple %434
  %v436 = vmul.f32 %v431, %v433
  %437 = xla_tuple %v436
  %s438 = scalar_lea.vmem %s2, 344
  %439 = vst [vmem:[%s438] sm:$0xff] %v436
  %s440 = scalar_lea.vmem %s0, 352
  %v441 = vld [vmem:[%s440] sm:$0xff]
  %s442 = scalar_lea.vmem %s1, 352
  %v443 = vld [vmem:[%s442] sm:$0xff]
  %444 = xla_tuple %v441, %v443
  %445 = xla_tuple %444
  %v446 = vmul.f32 %v441, %v443
  %447 = xla_tuple %v446
  %s448 = scalar_lea.vmem %s2, 352
  %449 = vst [vmem:[%s448] sm:$0xff] %v446
  %s450 = scalar_lea.vmem %s0, 360
  %v451 = vld [vmem:[%s450] sm:$0xff]
  %s452 = scalar_lea.vmem %s1, 360
  %v453 = vld [vmem:[%s452] sm:$0xff]
  %454 = xla_tuple %v451, %v453
  %455 = xla_tuple %454
  %v456 = vmul.f32 %v451, %v453
  %457 = xla_tuple %v456
  %s458 = scalar_lea.vmem %s2, 360
  %459 = vst [vmem:[%s458] sm:$0xff] %v456
  %s460 = scalar_lea.vmem %s0, 368
  %v461 = vld [vmem:[%s460] sm:$0xff]
  %s462 = scalar_lea.vmem %s1, 368
  %v463 = vld [vmem:[%s462] sm:$0xff]
  %464 = xla_tuple %v461, %v463
  %465 = xla_tuple %464
  %v466 = vmul.f32 %v461, %v463
  %467 = xla_tuple %v466
  %s468 = scalar_lea.vmem %s2, 368
  %469 = vst [vmem:[%s468] sm:$0xff] %v466
  %s470 = scalar_lea.vmem %s0, 376
  %v471 = vld [vmem:[%s470] sm:$0xff]
  %s472 = scalar_lea.vmem %s1, 376
  %v473 = vld [vmem:[%s472] sm:$0xff]
  %474 = xla_tuple %v471, %v473
  %475 = xla_tuple %474
  %v476 = vmul.f32 %v471, %v473
  %477 = xla_tuple %v476
  %s478 = scalar_lea.vmem %s2, 376
  %479 = vst [vmem:[%s478] sm:$0xff] %v476
  %s480 = scalar_lea.vmem %s0, 384
  %v481 = vld [vmem:[%s480] sm:$0xff]
  %s482 = scalar_lea.vmem %s1, 384
  %v483 = vld [vmem:[%s482] sm:$0xff]
  %484 = xla_tuple %v481, %v483
  %485 = xla_tuple %484
  %v486 = vmul.f32 %v481, %v483
  %487 = xla_tuple %v486
  %s488 = scalar_lea.vmem %s2, 384
  %489 = vst [vmem:[%s488] sm:$0xff] %v486
  %s490 = scalar_lea.vmem %s0, 392
  %v491 = vld [vmem:[%s490] sm:$0xff]
  %s492 = scalar_lea.vmem %s1, 392
  %v493 = vld [vmem:[%s492] sm:$0xff]
  %494 = xla_tuple %v491, %v493
  %495 = xla_tuple %494
  %v496 = vmul.f32 %v491, %v493
  %497 = xla_tuple %v496
  %s498 = scalar_lea.vmem %s2, 392
  %499 = vst [vmem:[%s498] sm:$0xff] %v496
  %s500 = scalar_lea.vmem %s0, 400
  %v501 = vld [vmem:[%s500] sm:$0xff]
  %s502 = scalar_lea.vmem %s1, 400
  %v503 = vld [vmem:[%s502] sm:$0xff]
  %504 = xla_tuple %v501, %v503
  %505 = xla_tuple %504
  %v506 = vmul.f32 %v501, %v503
  %507 = xla_tuple %v506
  %s508 = scalar_lea.vmem %s2, 400
  %509 = vst [vmem:[%s508] sm:$0xff] %v506
  %s510 = scalar_lea.vmem %s0, 408
  %v511 = vld [vmem:[%s510] sm:$0xff]
  %s512 = scalar_lea.vmem %s1, 408
  %v513 = vld [vmem:[%s512] sm:$0xff]
  %514 = xla_tuple %v511, %v513
  %515 = xla_tuple %514
  %v516 = vmul.f32 %v511, %v513
  %517 = xla_tuple %v516
  %s518 = scalar_lea.vmem %s2, 408
  %519 = vst [vmem:[%s518] sm:$0xff] %v516
  %s520 = scalar_lea.vmem %s0, 416
  %v521 = vld [vmem:[%s520] sm:$0xff]
  %s522 = scalar_lea.vmem %s1, 416
  %v523 = vld [vmem:[%s522] sm:$0xff]
  %524 = xla_tuple %v521, %v523
  %525 = xla_tuple %524
  %v526 = vmul.f32 %v521, %v523
  %527 = xla_tuple %v526
  %s528 = scalar_lea.vmem %s2, 416
  %529 = vst [vmem:[%s528] sm:$0xff] %v526
  %s530 = scalar_lea.vmem %s0, 424
  %v531 = vld [vmem:[%s530] sm:$0xff]
  %s532 = scalar_lea.vmem %s1, 424
  %v533 = vld [vmem:[%s532] sm:$0xff]
  %534 = xla_tuple %v531, %v533
  %535 = xla_tuple %534
  %v536 = vmul.f32 %v531, %v533
  %537 = xla_tuple %v536
  %s538 = scalar_lea.vmem %s2, 424
  %539 = vst [vmem:[%s538] sm:$0xff] %v536
  %s540 = scalar_lea.vmem %s0, 432
  %v541 = vld [vmem:[%s540] sm:$0xff]
  %s542 = scalar_lea.vmem %s1, 432
  %v543 = vld [vmem:[%s542] sm:$0xff]
  %544 = xla_tuple %v541, %v543
  %545 = xla_tuple %544
  %v546 = vmul.f32 %v541, %v543
  %547 = xla_tuple %v546
  %s548 = scalar_lea.vmem %s2, 432
  %549 = vst [vmem:[%s548] sm:$0xff] %v546
  %s550 = scalar_lea.vmem %s0, 440
  %v551 = vld [vmem:[%s550] sm:$0xff]
  %s552 = scalar_lea.vmem %s1, 440
  %v553 = vld [vmem:[%s552] sm:$0xff]
  %554 = xla_tuple %v551, %v553
  %555 = xla_tuple %554
  %v556 = vmul.f32 %v551, %v553
  %557 = xla_tuple %v556
  %s558 = scalar_lea.vmem %s2, 440
  %559 = vst [vmem:[%s558] sm:$0xff] %v556
  %s560 = scalar_lea.vmem %s0, 448
  %v561 = vld [vmem:[%s560] sm:$0xff]
  %s562 = scalar_lea.vmem %s1, 448
  %v563 = vld [vmem:[%s562] sm:$0xff]
  %564 = xla_tuple %v561, %v563
  %565 = xla_tuple %564
  %v566 = vmul.f32 %v561, %v563
  %567 = xla_tuple %v566
  %s568 = scalar_lea.vmem %s2, 448
  %569 = vst [vmem:[%s568] sm:$0xff] %v566
  %s570 = scalar_lea.vmem %s0, 456
  %v571 = vld [vmem:[%s570] sm:$0xff]
  %s572 = scalar_lea.vmem %s1, 456
  %v573 = vld [vmem:[%s572] sm:$0xff]
  %574 = xla_tuple %v571, %v573
  %575 = xla_tuple %574
  %v576 = vmul.f32 %v571, %v573
  %577 = xla_tuple %v576
  %s578 = scalar_lea.vmem %s2, 456
  %579 = vst [vmem:[%s578] sm:$0xff] %v576
  %s580 = scalar_lea.vmem %s0, 464
  %v581 = vld [vmem:[%s580] sm:$0xff]
  %s582 = scalar_lea.vmem %s1, 464
  %v583 = vld [vmem:[%s582] sm:$0xff]
  %584 = xla_tuple %v581, %v583
  %585 = xla_tuple %584
  %v586 = vmul.f32 %v581, %v583
  %587 = xla_tuple %v586
  %s588 = scalar_lea.vmem %s2, 464
  %589 = vst [vmem:[%s588] sm:$0xff] %v586
  %s590 = scalar_lea.vmem %s0, 472
  %v591 = vld [vmem:[%s590] sm:$0xff]
  %s592 = scalar_lea.vmem %s1, 472
  %v593 = vld [vmem:[%s592] sm:$0xff]
  %594 = xla_tuple %v591, %v593
  %595 = xla_tuple %594
  %v596 = vmul.f32 %v591, %v593
  %597 = xla_tuple %v596
  %s598 = scalar_lea.vmem %s2, 472
  %599 = vst [vmem:[%s598] sm:$0xff] %v596
  %s600 = scalar_lea.vmem %s0, 480
  %v601 = vld [vmem:[%s600] sm:$0xff]
  %s602 = scalar_lea.vmem %s1, 480
  %v603 = vld [vmem:[%s602] sm:$0xff]
  %604 = xla_tuple %v601, %v603
  %605 = xla_tuple %604
  %v606 = vmul.f32 %v601, %v603
  %607 = xla_tuple %v606
  %s608 = scalar_lea.vmem %s2, 480
  %609 = vst [vmem:[%s608] sm:$0xff] %v606
  %s610 = scalar_lea.vmem %s0, 488
  %v611 = vld [vmem:[%s610] sm:$0xff]
  %s612 = scalar_lea.vmem %s1, 488
  %v613 = vld [vmem:[%s612] sm:$0xff]
  %614 = xla_tuple %v611, %v613
  %615 = xla_tuple %614
  %v616 = vmul.f32 %v611, %v613
  %617 = xla_tuple %v616
  %s618 = scalar_lea.vmem %s2, 488
  %619 = vst [vmem:[%s618] sm:$0xff] %v616
  %s620 = scalar_lea.vmem %s0, 496
  %v621 = vld [vmem:[%s620] sm:$0xff]
  %s622 = scalar_lea.vmem %s1, 496
  %v623 = vld [vmem:[%s622] sm:$0xff]
  %624 = xla_tuple %v621, %v623
  %625 = xla_tuple %624
  %v626 = vmul.f32 %v621, %v623
  %627 = xla_tuple %v626
  %s628 = scalar_lea.vmem %s2, 496
  %629 = vst [vmem:[%s628] sm:$0xff] %v626
  %s630 = scalar_lea.vmem %s0, 504
  %v631 = vld [vmem:[%s630] sm:$0xff]
  %s632 = scalar_lea.vmem %s1, 504
  %v633 = vld [vmem:[%s632] sm:$0xff]
  %634 = xla_tuple %v631, %v633
  %635 = xla_tuple %634
  %v636 = vmul.f32 %v631, %v633
  %637 = xla_tuple %v636
  %s638 = scalar_lea.vmem %s2, 504
  %639 = vst [vmem:[%s638] sm:$0xff] %v636
  %s640 = scalar_lea.vmem %s0, 512
  %v641 = vld [vmem:[%s640] sm:$0xff]
  %s642 = scalar_lea.vmem %s1, 512
  %v643 = vld [vmem:[%s642] sm:$0xff]
  %644 = xla_tuple %v641, %v643
  %645 = xla_tuple %644
  %v646 = vmul.f32 %v641, %v643
  %647 = xla_tuple %v646
  %s648 = scalar_lea.vmem %s2, 512
  %649 = vst [vmem:[%s648] sm:$0xff] %v646
  %s650 = scalar_lea.vmem %s0, 520
  %v651 = vld [vmem:[%s650] sm:$0xff]
  %s652 = scalar_lea.vmem %s1, 520
  %v653 = vld [vmem:[%s652] sm:$0xff]
  %654 = xla_tuple %v651, %v653
  %655 = xla_tuple %654
  %v656 = vmul.f32 %v651, %v653
  %657 = xla_tuple %v656
  %s658 = scalar_lea.vmem %s2, 520
  %659 = vst [vmem:[%s658] sm:$0xff] %v656
  %s660 = scalar_lea.vmem %s0, 528
  %v661 = vld [vmem:[%s660] sm:$0xff]
  %s662 = scalar_lea.vmem %s1, 528
  %v663 = vld [vmem:[%s662] sm:$0xff]
  %664 = xla_tuple %v661, %v663
  %665 = xla_tuple %664
  %v666 = vmul.f32 %v661, %v663
  %667 = xla_tuple %v666
  %s668 = scalar_lea.vmem %s2, 528
  %669 = vst [vmem:[%s668] sm:$0xff] %v666
  %s670 = scalar_lea.vmem %s0, 536
  %v671 = vld [vmem:[%s670] sm:$0xff]
  %s672 = scalar_lea.vmem %s1, 536
  %v673 = vld [vmem:[%s672] sm:$0xff]
  %674 = xla_tuple %v671, %v673
  %675 = xla_tuple %674
  %v676 = vmul.f32 %v671, %v673
  %677 = xla_tuple %v676
  %s678 = scalar_lea.vmem %s2, 536
  %679 = vst [vmem:[%s678] sm:$0xff] %v676
  %s680 = scalar_lea.vmem %s0, 544
  %v681 = vld [vmem:[%s680] sm:$0xff]
  %s682 = scalar_lea.vmem %s1, 544
  %v683 = vld [vmem:[%s682] sm:$0xff]
  %684 = xla_tuple %v681, %v683
  %685 = xla_tuple %684
  %v686 = vmul.f32 %v681, %v683
  %687 = xla_tuple %v686
  %s688 = scalar_lea.vmem %s2, 544
  %689 = vst [vmem:[%s688] sm:$0xff] %v686
  %s690 = scalar_lea.vmem %s0, 552
  %v691 = vld [vmem:[%s690] sm:$0xff]
  %s692 = scalar_lea.vmem %s1, 552
  %v693 = vld [vmem:[%s692] sm:$0xff]
  %694 = xla_tuple %v691, %v693
  %695 = xla_tuple %694
  %v696 = vmul.f32 %v691, %v693
  %697 = xla_tuple %v696
  %s698 = scalar_lea.vmem %s2, 552
  %699 = vst [vmem:[%s698] sm:$0xff] %v696
  %s700 = scalar_lea.vmem %s0, 560
  %v701 = vld [vmem:[%s700] sm:$0xff]
  %s702 = scalar_lea.vmem %s1, 560
  %v703 = vld [vmem:[%s702] sm:$0xff]
  %704 = xla_tuple %v701, %v703
  %705 = xla_tuple %704
  %v706 = vmul.f32 %v701, %v703
  %707 = xla_tuple %v706
  %s708 = scalar_lea.vmem %s2, 560
  %709 = vst [vmem:[%s708] sm:$0xff] %v706
  %s710 = scalar_lea.vmem %s0, 568
  %v711 = vld [vmem:[%s710] sm:$0xff]
  %s712 = scalar_lea.vmem %s1, 568
  %v713 = vld [vmem:[%s712] sm:$0xff]
  %714 = xla_tuple %v711, %v713
  %715 = xla_tuple %714
  %v716 = vmul.f32 %v711, %v713
  %717 = xla_tuple %v716
  %s718 = scalar_lea.vmem %s2, 568
  %719 = vst [vmem:[%s718] sm:$0xff] %v716
  %s720 = scalar_lea.vmem %s0, 576
  %v721 = vld [vmem:[%s720] sm:$0xff]
  %s722 = scalar_lea.vmem %s1, 576
  %v723 = vld [vmem:[%s722] sm:$0xff]
  %724 = xla_tuple %v721, %v723
  %725 = xla_tuple %724
  %v726 = vmul.f32 %v721, %v723
  %727 = xla_tuple %v726
  %s728 = scalar_lea.vmem %s2, 576
  %729 = vst [vmem:[%s728] sm:$0xff] %v726
  %s730 = scalar_lea.vmem %s0, 584
  %v731 = vld [vmem:[%s730] sm:$0xff]
  %s732 = scalar_lea.vmem %s1, 584
  %v733 = vld [vmem:[%s732] sm:$0xff]
  %734 = xla_tuple %v731, %v733
  %735 = xla_tuple %734
  %v736 = vmul.f32 %v731, %v733
  %737 = xla_tuple %v736
  %s738 = scalar_lea.vmem %s2, 584
  %739 = vst [vmem:[%s738] sm:$0xff] %v736
  %s740 = scalar_lea.vmem %s0, 592
  %v741 = vld [vmem:[%s740] sm:$0xff]
  %s742 = scalar_lea.vmem %s1, 592
  %v743 = vld [vmem:[%s742] sm:$0xff]
  %744 = xla_tuple %v741, %v743
  %745 = xla_tuple %744
  %v746 = vmul.f32 %v741, %v743
  %747 = xla_tuple %v746
  %s748 = scalar_lea.vmem %s2, 592
  %749 = vst [vmem:[%s748] sm:$0xff] %v746
  %s750 = scalar_lea.vmem %s0, 600
  %v751 = vld [vmem:[%s750] sm:$0xff]
  %s752 = scalar_lea.vmem %s1, 600
  %v753 = vld [vmem:[%s752] sm:$0xff]
  %754 = xla_tuple %v751, %v753
  %755 = xla_tuple %754
  %v756 = vmul.f32 %v751, %v753
  %757 = xla_tuple %v756
  %s758 = scalar_lea.vmem %s2, 600
  %759 = vst [vmem:[%s758] sm:$0xff] %v756
  %s760 = scalar_lea.vmem %s0, 608
  %v761 = vld [vmem:[%s760] sm:$0xff]
  %s762 = scalar_lea.vmem %s1, 608
  %v763 = vld [vmem:[%s762] sm:$0xff]
  %764 = xla_tuple %v761, %v763
  %765 = xla_tuple %764
  %v766 = vmul.f32 %v761, %v763
  %767 = xla_tuple %v766
  %s768 = scalar_lea.vmem %s2, 608
  %769 = vst [vmem:[%s768] sm:$0xff] %v766
  %s770 = scalar_lea.vmem %s0, 616
  %v771 = vld [vmem:[%s770] sm:$0xff]
  %s772 = scalar_lea.vmem %s1, 616
  %v773 = vld [vmem:[%s772] sm:$0xff]
  %774 = xla_tuple %v771, %v773
  %775 = xla_tuple %774
  %v776 = vmul.f32 %v771, %v773
  %777 = xla_tuple %v776
  %s778 = scalar_lea.vmem %s2, 616
  %779 = vst [vmem:[%s778] sm:$0xff] %v776
  %s780 = scalar_lea.vmem %s0, 624
  %v781 = vld [vmem:[%s780] sm:$0xff]
  %s782 = scalar_lea.vmem %s1, 624
  %v783 = vld [vmem:[%s782] sm:$0xff]
  %784 = xla_tuple %v781, %v783
  %785 = xla_tuple %784
  %v786 = vmul.f32 %v781, %v783
  %787 = xla_tuple %v786
  %s788 = scalar_lea.vmem %s2, 624
  %789 = vst [vmem:[%s788] sm:$0xff] %v786
  %s790 = scalar_lea.vmem %s0, 632
  %v791 = vld [vmem:[%s790] sm:$0xff]
  %s792 = scalar_lea.vmem %s1, 632
  %v793 = vld [vmem:[%s792] sm:$0xff]
  %794 = xla_tuple %v791, %v793
  %795 = xla_tuple %794
  %v796 = vmul.f32 %v791, %v793
  %797 = xla_tuple %v796
  %s798 = scalar_lea.vmem %s2, 632
  %799 = vst [vmem:[%s798] sm:$0xff] %v796
  %s800 = scalar_lea.vmem %s0, 640
  %v801 = vld [vmem:[%s800] sm:$0xff]
  %s802 = scalar_lea.vmem %s1, 640
  %v803 = vld [vmem:[%s802] sm:$0xff]
  %804 = xla_tuple %v801, %v803
  %805 = xla_tuple %804
  %v806 = vmul.f32 %v801, %v803
  %807 = xla_tuple %v806
  %s808 = scalar_lea.vmem %s2, 640
  %809 = vst [vmem:[%s808] sm:$0xff] %v806
  %s810 = scalar_lea.vmem %s0, 648
  %v811 = vld [vmem:[%s810] sm:$0xff]
  %s812 = scalar_lea.vmem %s1, 648
  %v813 = vld [vmem:[%s812] sm:$0xff]
  %814 = xla_tuple %v811, %v813
  %815 = xla_tuple %814
  %v816 = vmul.f32 %v811, %v813
  %817 = xla_tuple %v816
  %s818 = scalar_lea.vmem %s2, 648
  %819 = vst [vmem:[%s818] sm:$0xff] %v816
  %s820 = scalar_lea.vmem %s0, 656
  %v821 = vld [vmem:[%s820] sm:$0xff]
  %s822 = scalar_lea.vmem %s1, 656
  %v823 = vld [vmem:[%s822] sm:$0xff]
  %824 = xla_tuple %v821, %v823
  %825 = xla_tuple %824
  %v826 = vmul.f32 %v821, %v823
  %827 = xla_tuple %v826
  %s828 = scalar_lea.vmem %s2, 656
  %829 = vst [vmem:[%s828] sm:$0xff] %v826
  %s830 = scalar_lea.vmem %s0, 664
  %v831 = vld [vmem:[%s830] sm:$0xff]
  %s832 = scalar_lea.vmem %s1, 664
  %v833 = vld [vmem:[%s832] sm:$0xff]
  %834 = xla_tuple %v831, %v833
  %835 = xla_tuple %834
  %v836 = vmul.f32 %v831, %v833
  %837 = xla_tuple %v836
  %s838 = scalar_lea.vmem %s2, 664
  %839 = vst [vmem:[%s838] sm:$0xff] %v836
  %s840 = scalar_lea.vmem %s0, 672
  %v841 = vld [vmem:[%s840] sm:$0xff]
  %s842 = scalar_lea.vmem %s1, 672
  %v843 = vld [vmem:[%s842] sm:$0xff]
  %844 = xla_tuple %v841, %v843
  %845 = xla_tuple %844
  %v846 = vmul.f32 %v841, %v843
  %847 = xla_tuple %v846
  %s848 = scalar_lea.vmem %s2, 672
  %849 = vst [vmem:[%s848] sm:$0xff] %v846
  %s850 = scalar_lea.vmem %s0, 680
  %v851 = vld [vmem:[%s850] sm:$0xff]
  %s852 = scalar_lea.vmem %s1, 680
  %v853 = vld [vmem:[%s852] sm:$0xff]
  %854 = xla_tuple %v851, %v853
  %855 = xla_tuple %854
  %v856 = vmul.f32 %v851, %v853
  %857 = xla_tuple %v856
  %s858 = scalar_lea.vmem %s2, 680
  %859 = vst [vmem:[%s858] sm:$0xff] %v856
  %s860 = scalar_lea.vmem %s0, 688
  %v861 = vld [vmem:[%s860] sm:$0xff]
  %s862 = scalar_lea.vmem %s1, 688
  %v863 = vld [vmem:[%s862] sm:$0xff]
  %864 = xla_tuple %v861, %v863
  %865 = xla_tuple %864
  %v866 = vmul.f32 %v861, %v863
  %867 = xla_tuple %v866
  %s868 = scalar_lea.vmem %s2, 688
  %869 = vst [vmem:[%s868] sm:$0xff] %v866
  %s870 = scalar_lea.vmem %s0, 696
  %v871 = vld [vmem:[%s870] sm:$0xff]
  %s872 = scalar_lea.vmem %s1, 696
  %v873 = vld [vmem:[%s872] sm:$0xff]
  %874 = xla_tuple %v871, %v873
  %875 = xla_tuple %874
  %v876 = vmul.f32 %v871, %v873
  %877 = xla_tuple %v876
  %s878 = scalar_lea.vmem %s2, 696
  %879 = vst [vmem:[%s878] sm:$0xff] %v876
  %s880 = scalar_lea.vmem %s0, 704
  %v881 = vld [vmem:[%s880] sm:$0xff]
  %s882 = scalar_lea.vmem %s1, 704
  %v883 = vld [vmem:[%s882] sm:$0xff]
  %884 = xla_tuple %v881, %v883
  %885 = xla_tuple %884
  %v886 = vmul.f32 %v881, %v883
  %887 = xla_tuple %v886
  %s888 = scalar_lea.vmem %s2, 704
  %889 = vst [vmem:[%s888] sm:$0xff] %v886
  %s890 = scalar_lea.vmem %s0, 712
  %v891 = vld [vmem:[%s890] sm:$0xff]
  %s892 = scalar_lea.vmem %s1, 712
  %v893 = vld [vmem:[%s892] sm:$0xff]
  %894 = xla_tuple %v891, %v893
  %895 = xla_tuple %894
  %v896 = vmul.f32 %v891, %v893
  %897 = xla_tuple %v896
  %s898 = scalar_lea.vmem %s2, 712
  %899 = vst [vmem:[%s898] sm:$0xff] %v896
  %s900 = scalar_lea.vmem %s0, 720
  %v901 = vld [vmem:[%s900] sm:$0xff]
  %s902 = scalar_lea.vmem %s1, 720
  %v903 = vld [vmem:[%s902] sm:$0xff]
  %904 = xla_tuple %v901, %v903
  %905 = xla_tuple %904
  %v906 = vmul.f32 %v901, %v903
  %907 = xla_tuple %v906
  %s908 = scalar_lea.vmem %s2, 720
  %909 = vst [vmem:[%s908] sm:$0xff] %v906
  %s910 = scalar_lea.vmem %s0, 728
  %v911 = vld [vmem:[%s910] sm:$0xff]
  %s912 = scalar_lea.vmem %s1, 728
  %v913 = vld [vmem:[%s912] sm:$0xff]
  %914 = xla_tuple %v911, %v913
  %915 = xla_tuple %914
  %v916 = vmul.f32 %v911, %v913
  %917 = xla_tuple %v916
  %s918 = scalar_lea.vmem %s2, 728
  %919 = vst [vmem:[%s918] sm:$0xff] %v916
  %s920 = scalar_lea.vmem %s0, 736
  %v921 = vld [vmem:[%s920] sm:$0xff]
  %s922 = scalar_lea.vmem %s1, 736
  %v923 = vld [vmem:[%s922] sm:$0xff]
  %924 = xla_tuple %v921, %v923
  %925 = xla_tuple %924
  %v926 = vmul.f32 %v921, %v923
  %927 = xla_tuple %v926
  %s928 = scalar_lea.vmem %s2, 736
  %929 = vst [vmem:[%s928] sm:$0xff] %v926
  %s930 = scalar_lea.vmem %s0, 744
  %v931 = vld [vmem:[%s930] sm:$0xff]
  %s932 = scalar_lea.vmem %s1, 744
  %v933 = vld [vmem:[%s932] sm:$0xff]
  %934 = xla_tuple %v931, %v933
  %935 = xla_tuple %934
  %v936 = vmul.f32 %v931, %v933
  %937 = xla_tuple %v936
  %s938 = scalar_lea.vmem %s2, 744
  %939 = vst [vmem:[%s938] sm:$0xff] %v936

// kernel: tile.13
$region0: #{tile.13}
  #allocation0 [shape = 's32[1]{0}', space=sflag, size = 0x4, scoped, tag = 'scoped memory for tile.13']
  %s0 = inlined_call_operand.vmem [shape: f32[6], index: 0, kind: input, shape index: {}]
  %s1 = inlined_call_operand.vmem [shape: f32[28,6], index: 1, kind: output, shape index: {}]
  // Predicated region
  $region2: #{tile.13} parent=0 // pred_check
    _
  $region3: #{tile.13} parent=0 // pred_check_branch
    %3 = sbr.rel (0) target = $region5
  $region4: #{tile.13} parent=0 // pred_region
    _
  $region5: #{tile.13} parent=0 // pred_fallthru
    _
  %v4 = vld [vmem:[%s0] ss:$0 sm:$0xff]
  %5 = vst [vmem:[%s1] sm:$0xff] %v4
  %s6 = scalar_lea.vmem %s1, 8
  %7 = vst [vmem:[%s6] sm:$0xff] %v4
  %s8 = scalar_lea.vmem %s1, 16
  %9 = vst [vmem:[%s8] sm:$0xff] %v4
  %s10 = scalar_lea.vmem %s1, 24
  %11 = vst [vmem:[%s10] sm:$0xff] %v4

// kernel: tile.14
$region0: #{tile.14}
  %s0 = inlined_call_operand.vmem [shape: f32[28,6], index: 0, kind: input, shape index: {}]
  %s1 = inlined_call_operand.vmem [shape: f32[168], index: 1, kind: output, shape index: {}]
  $region1: #{tile.14} parent=0
    #allocation0 [shape = 'u8[4096]{0}', space=vmem, size = 0x1000, scoped, tag = 'scoped mem for output reshape']
    %v2 = vld [vmem:[%s0] sm:$0x1]
    %vm3 = vcmask 48128
    %4 = vst.msk [vmem:[#allocation0] sm:$0x1] %vm3, %v2
    %s5 = scalar_lea.vmem %s0, 21
    %v6 = vld [vmem:[%s5] sm:$0x1]
    %s7 = scalar_lea.vmem %s0, 21
    %v8 = vld [vmem:[%s7] sm:$0x1]
    %vm9 = vcmask 15360
    %v10 = vsel %vm9, %v8, %v6
    %11 = vrot.lane.b32.xlu0 %v10, 126
    %v12 = vpop.permute.xlu0 %11
    %vm13 = vcmask 31744
    %s14 = scalar_lea.vmem [#allocation0], 1
    %15 = vst.msk [vmem:[%s14] sm:$0x1] %vm13, %v12
    %vm16 = vcmask 1048560
    %17 = vst.msk [vmem:[#allocation0] sm:$0x1] %vm16, %v12
    %s18 = scalar_lea.vmem %s0, 20
    %v19 = vld [vmem:[%s18] sm:$0x1]
    %20 = vrot.lane.b32.xlu0 %v19, 120
    %v21 = vpop.permute.xlu0 %20
    %vm22 = vcmask 1032128
    %23 = vst.msk [vmem:[#allocation0] sm:$0x1] %vm22, %v21
    %s24 = scalar_lea.vmem %s0, 19
    %v25 = vld [vmem:[%s24] sm:$0x1]
    %26 = vrot.lane.b32.xlu0 %v25, 114
    %v27 = vpop.permute.xlu0 %26
    %vm28 = vcmask 982928
    %29 = vst.msk [vmem:[#allocation0] sm:$0x1] %vm28, %v27
    %s30 = scalar_lea.vmem %s0, 18
    %v31 = vld [vmem:[%s30] sm:$0x1]
    %32 = vrot.lane.b32.xlu0 %v31, 108
    %v33 = vpop.permute.xlu0 %32
    %vm34 = vcmask 933728
    %35 = vst.msk [vmem:[#allocation0] sm:$0x1] %vm34, %v33
    %s36 = scalar_lea.vmem %s0, 17
    %v37 = vld [vmem:[%s36] sm:$0x1]
    %38 = vrot.lane.b32.xlu0 %v37, 102
    %v39 = vpop.permute.xlu0 %38
    %vm40 = vcmask 884528
    %41 = vst.msk [vmem:[#allocation0] sm:$0x1] %vm40, %v39
    %s42 = scalar_lea.vmem %s0, 16
    %v43 = vld [vmem:[%s42] sm:$0x1]
    %44 = vrot.lane.b32.xlu0 %v43, 96
    %v45 = vpop.permute.xlu0 %44
    %vm46 = vcmask 835328
    %47 = vst.msk [vmem:[#allocation0] sm:$0x1] %vm46, %v45
    %s48 = scalar_lea.vmem %s0, 15
    %v49 = vld [vmem:[%s48] sm:$0x1]
    %50 = vrot.lane.b32.xlu0 %v49, 90
    %v51 = vpop.permute.xlu0 %50
    %vm52 = vcmask 786128
    %53 = vst.msk [vmem:[#allocation0] sm:$0x1] %vm52, %v51
    %s54 = scalar_lea.vmem %s0, 14
    %v55 = vld [vmem:[%s54] sm:$0x1]
    %56 = vrot.lane.b32.xlu0 %v55, 84
    %v57 = vpop.permute.xlu0 %56
    %vm58 = vcmask 736928
    %59 = vst.msk [vmem:[#allocation0] sm:$0x1] %vm58, %v57
    %s60 = scalar_lea.vmem %s0, 13
    %v61 = vld [vmem:[%s60] sm:$0x1]
    %62 = vrot.lane.b32.xlu0 %v61, 78
    %v63 = vpop.permute.xlu0 %62
    %vm64 = vcmask 687728
    %65 = vst.msk [vmem:[#allocation0] sm:$0x1] %vm64, %v63
    %s66 = scalar_lea.vmem %s0, 12
    %v67 = vld [vmem:[%s66] sm:$0x1]
    %68 = vrot.lane.b32.xlu0 %v67, 72
    %v69 = vpop.permute.xlu0 %68
    %vm70 = vcmask 638528
    %71 = vst.msk [vmem:[#allocation0] sm:$0x1] %vm70, %v69
    %s72 = scalar_lea.vmem %s0, 11
    %v73 = vld [vmem:[%s72] sm:$0x1]
    %74 = vrot.lane.b32.xlu0 %v73, 66
    %v75 = vpop.permute.xlu0 %74
    %vm76 = vcmask 589328
    %77 = vst.msk [vmem:[#allocation0] sm:$0x1] %vm76, %v75
    %s78 = scalar_lea.vmem %s0, 10
    %v79 = vld [vmem:[%s78] sm:$0x1]
    %80 = vrot.lane.b32.xlu0 %v79, 60
    %v81 = vpop.permute.xlu0 %80
    %vm82 = vcmask 540128
    %83 = vst.msk [vmem:[#allocation0] sm:$0x1] %vm82, %v81
    %s84 = scalar_lea.vmem %s0, 9
    %v85 = vld [vmem:[%s84] sm:$0x1]
    %86 = vrot.lane.b32.xlu0 %v85, 54
    %v87 = vpop.permute.xlu0 %86
    %vm88 = vcmask 490928
    %89 = vst.msk [vmem:[#allocation0] sm:$0x1] %vm88, %v87
    %s90 = scalar_lea.vmem %s0, 8
    %v91 = vld [vmem:[%s90] sm:$0x1]
    %92 = vrot.lane.b32.xlu0 %v91, 48
    %v93 = vpop.permute.xlu0 %92
    %vm94 = vcmask 441728
    %95 = vst.msk [vmem:[#allocation0] sm:$0x1] %vm94, %v93
    %s96 = scalar_lea.vmem %s0, 7
    %v97 = vld [vmem:[%s96] sm:$0x1]
    %98 = vrot.lane.b32.xlu0 %v97, 42
    %v99 = vpop.permute.xlu0 %98
    %vm100 = vcmask 392528
    %101 = vst.msk [vmem:[#allocation0] sm:$0x1] %vm100, %v99
    %s102 = scalar_lea.vmem %s0, 6
    %v103 = vld [vmem:[%s102] sm:$0x1]
    %104 = vrot.lane.b32.xlu0 %v103, 36
    %v105 = vpop.permute.xlu0 %104
    %vm106 = vcmask 343328
    %107 = vst.msk [vmem:[#allocation0] sm:$0x1] %vm106, %v105
    %s108 = scalar_lea.vmem %s0, 27
    %v109 = vld [vmem:[%s108] sm:$0x1]
    %110 = vrot.lane.b32.xlu0 %v109, 34
    %v111 = vpop.permute.xlu0 %110
    %vm112 = vcmask 326928
    %s113 = scalar_lea.vmem [#allocation0], 1
    %114 = vst.msk [vmem:[%s113] sm:$0x1] %vm112, %v111
    %s115 = scalar_lea.vmem %s0, 5
    %v116 = vld [vmem:[%s115] sm:$0x1]
    %117 = vrot.lane.b32.xlu0 %v116, 30
    %v118 = vpop.permute.xlu0 %117
    %vm119 = vcmask 294128
    %120 = vst.msk [vmem:[#allocation0] sm:$0x1] %vm119, %v118
    %s121 = scalar_lea.vmem %s0, 26
    %v122 = vld [vmem:[%s121] sm:$0x1]
    %123 = vrot.lane.b32.xlu0 %v122, 28
    %v124 = vpop.permute.xlu0 %123
    %vm125 = vcmask 277728
    %s126 = scalar_lea.vmem [#allocation0], 1
    %127 = vst.msk [vmem:[%s126] sm:$0x1] %vm125, %v124
    %s128 = scalar_lea.vmem %s0, 4
    %v129 = vld [vmem:[%s128] sm:$0x1]
    %130 = vrot.lane.b32.xlu0 %v129, 24
    %v131 = vpop.permute.xlu0 %130
    %vm132 = vcmask 244928
    %133 = vst.msk [vmem:[#allocation0] sm:$0x1] %vm132, %v131
    %s134 = scalar_lea.vmem %s0, 25
    %v135 = vld [vmem:[%s134] sm:$0x1]
    %136 = vrot.lane.b32.xlu0 %v135, 22
    %v137 = vpop.permute.xlu0 %136
    %vm138 = vcmask 228528
    %s139 = scalar_lea.vmem [#allocation0], 1
    %140 = vst.msk [vmem:[%s139] sm:$0x1] %vm138, %v137
    %s141 = scalar_lea.vmem %s0, 3
    %v142 = vld [vmem:[%s141] sm:$0x1]
    %143 = vrot.lane.b32.xlu0 %v142, 18
    %v144 = vpop.permute.xlu0 %143
    %vm145 = vcmask 195728
    %146 = vst.msk [vmem:[#allocation0] sm:$0x1] %vm145, %v144
    %s147 = scalar_lea.vmem %s0, 24
    %v148 = vld [vmem:[%s147] sm:$0x1]
    %149 = vrot.lane.b32.xlu0 %v148, 16
    %v150 = vpop.permute.xlu0 %149
    %vm151 = vcmask 179328
    %s152 = scalar_lea.vmem [#allocation0], 1
    %153 = vst.msk [vmem:[%s152] sm:$0x1] %vm151, %v150
    %s154 = scalar_lea.vmem %s0, 2
    %v155 = vld [vmem:[%s154] sm:$0x1]
    %156 = vrot.lane.b32.xlu0 %v155, 12
    %v157 = vpop.permute.xlu0 %156
    %vm158 = vcmask 146528
    %159 = vst.msk [vmem:[#allocation0] sm:$0x1] %vm158, %v157
    %s160 = scalar_lea.vmem %s0, 23
    %v161 = vld [vmem:[%s160] sm:$0x1]
    %162 = vrot.lane.b32.xlu0 %v161, 10
    %v163 = vpop.permute.xlu0 %162
    %vm164 = vcmask 130128
    %s165 = scalar_lea.vmem [#allocation0], 1
    %166 = vst.msk [vmem:[%s165] sm:$0x1] %vm164, %v163
    %s167 = scalar_lea.vmem %s0, 1
    %v168 = vld [vmem:[%s167] sm:$0x1]
    %169 = vrot.lane.b32.xlu0 %v168, 6
    %v170 = vpop.permute.xlu0 %169
    %vm171 = vcmask 97328
    %172 = vst.msk [vmem:[#allocation0] sm:$0x1] %vm171, %v170
    %s173 = scalar_lea.vmem %s0, 22
    %v174 = vld [vmem:[%s173] sm:$0x1]
    %175 = vrot.lane.b32.xlu0 %v174, 4
    %v176 = vpop.permute.xlu0 %175
    %vm177 = vcmask 80928
    %s178 = scalar_lea.vmem [#allocation0], 1
    %179 = vst.msk [vmem:[%s178] sm:$0x1] %vm177, %v176
    %s181 = ssub.s32 4, 1
    %v182 = vld [vmem:[#allocation0] sm:%s181]
    %s184 = ssub.s32 4, 1
    %185 = vst [vmem:[%s1] sm:%s184] %v182

// kernel: tile.18
$region0: #{tile.18}
  #allocation0 [shape = 's32[1]{0}', space=sflag, size = 0x4, scoped, tag = 'scoped memory for tile.18']
  %s0 = inlined_call_operand.vmem [shape: f32[16], index: 0, kind: input, shape index: {}]
  %s1 = inlined_call_operand.vmem [shape: f32[10,16], index: 1, kind: output, shape index: {}]
  // Predicated region
  $region2: #{tile.18} parent=0 // pred_check
    _
  $region3: #{tile.18} parent=0 // pred_check_branch
    %3 = sbr.rel (0) target = $region5
  $region4: #{tile.18} parent=0 // pred_region
    _
  $region5: #{tile.18} parent=0 // pred_fallthru
    _
  %v4 = vld [vmem:[%s0] ss:$0 sm:$0xff]
  %5 = vst [vmem:[%s1] sm:$0xff] %v4
  %s6 = scalar_lea.vmem %s1, 8
  %7 = vst [vmem:[%s6] sm:$0xff] %v4

// kernel: tile.19
$region0: #{tile.19}
  %s0 = inlined_call_operand.vmem [shape: f32[10,16], index: 0, kind: input, shape index: {}]
  %s1 = inlined_call_operand.vmem [shape: f32[160], index: 1, kind: output, shape index: {}]
  $region1: #{tile.19} parent=0
    #allocation0 [shape = 'u8[4096]{0}', space=vmem, size = 0x1000, scoped, tag = 'scoped mem for output reshape']
    %s2 = smov 3
    %v3 = vld [vmem:[%s0] ss:$8 sm:%s2]
    %vm4 = vcmask 130048
    %5 = vst.msk [vmem:[#allocation0] sm:$0x3] %vm4, %v3
    %s6 = scalar_lea.vmem %s0, 7
    %v7 = vld [vmem:[%s6] sm:$0x1]
    %8 = vrot.lane.b32.xlu0 %v7, 112
    %v9 = vpop.permute.xlu0 %8
    %vm10 = vcmask 1048448
    %11 = vst.msk [vmem:[#allocation0] sm:$0x1] %vm10, %v9
    %s12 = scalar_lea.vmem %s0, 6
    %v13 = vld [vmem:[%s12] sm:$0x1]
    %14 = vrot.lane.b32.xlu0 %v13, 96
    %v15 = vpop.permute.xlu0 %14
    %vm16 = vcmask 917248
    %17 = vst.msk [vmem:[#allocation0] sm:$0x1] %vm16, %v15
    %s18 = scalar_lea.vmem %s0, 5
    %v19 = vld [vmem:[%s18] sm:$0x1]
    %20 = vrot.lane.b32.xlu0 %v19, 80
    %v21 = vpop.permute.xlu0 %20
    %vm22 = vcmask 786048
    %23 = vst.msk [vmem:[#allocation0] sm:$0x1] %vm22, %v21
    %s24 = scalar_lea.vmem %s0, 4
    %v25 = vld [vmem:[%s24] sm:$0x1]
    %26 = vrot.lane.b32.xlu0 %v25, 64
    %v27 = vpop.permute.xlu0 %26
    %vm28 = vcmask 654848
    %29 = vst.msk [vmem:[#allocation0] sm:$0x1] %vm28, %v27
    %s30 = scalar_lea.vmem %s0, 3
    %v31 = vld [vmem:[%s30] sm:$0x1]
    %32 = vrot.lane.b32.xlu0 %v31, 48
    %v33 = vpop.permute.xlu0 %32
    %vm34 = vcmask 523648
    %35 = vst.msk [vmem:[#allocation0] sm:$0x1] %vm34, %v33
    %s36 = scalar_lea.vmem %s0, 2
    %v37 = vld [vmem:[%s36] sm:$0x1]
    %38 = vrot.lane.b32.xlu0 %v37, 32
    %v39 = vpop.permute.xlu0 %38
    %vm40 = vcmask 392448
    %41 = vst.msk [vmem:[#allocation0] sm:$0x1] %vm40, %v39
    %s42 = scalar_lea.vmem %s0, 1
    %s43 = smov 3
    %v44 = vld [vmem:[%s42] ss:$8 sm:%s43]
    %45 = vrot.lane.b32.xlu0 %v44, 16
    %v46 = vpop.permute.xlu0 %45
    %vm47 = vcmask 261248
    %48 = vst.msk [vmem:[#allocation0] sm:$0x3] %vm47, %v46
    %s50 = ssub.s32 4, 1
    %v51 = vld [vmem:[#allocation0] sm:%s50]
    %s53 = ssub.s32 4, 1
    %54 = vst [vmem:[%s1] sm:%s53] %v51

// kernel: ln5_forward.1
$region0: #{ln5_forward.1}
  #allocation0 [shape = 'u32[]', space=smem, size = 0x4, offset = 0x4, fixed_abs, tag = 'smem constant byte address 0x4 - core index']
  #allocation1 [shape = 'u32[72,128]{1,0:T(1,128)}', space=vmem, size = 0x9000, scoped, tag = 'internal scratch']
  #allocation2 [shape = 'bf16[7,2,16,256]{3,2,1,0:T(8,128)(2,1)}', space=vmem, size = 0x1c000, scoped, tag = 'scratch operand']
  %s0 = inlined_call_operand.vmem [shape: bf16[16,2,16,32], index: 0, kind: input, shape index: {}]
  %s1 = inlined_call_operand.vmem [shape: bf16[5,32,256], index: 1, kind: input, shape index: {}]
  %s2 = inlined_call_operand.vmem [shape: f32[1,256], index: 2, kind: input, shape index: {}]
  %s3 = inlined_call_operand.vmem [shape: bf16[5,256,256], index: 3, kind: input, shape index: {}]
  %s4 = inlined_call_operand.vmem [shape: f32[1,256], index: 4, kind: input, shape index: {}]
  %s5 = inlined_call_operand.vmem [shape: bf16[5,256,128], index: 5, kind: input, shape index: {}]
  %s6 = inlined_call_operand.vmem [shape: f32[1,128], index: 6, kind: input, shape index: {}]
  %s7 = inlined_call_operand.vmem [shape: bf16[128,128], index: 7, kind: input, shape index: {}]
  %s8 = inlined_call_operand.vmem [shape: f32[1,128], index: 8, kind: input, shape index: {}]
  %s9 = inlined_call_operand.vmem [shape: bf16[128,128], index: 9, kind: input, shape index: {}]
  %s10 = inlined_call_operand.vmem [shape: f32[1,128], index: 10, kind: input, shape index: {}]
  %s11 = inlined_call_operand.vmem [shape: f32[16,128], index: 11, kind: output, shape index: {}]
  %s12 = sld [smem:[#allocation0]]
  $region54: #{ln5_forward.1} parent=0
    _
  %s14 = ssub.s32 1, %s12
  %s15 = scalar_select 0, %s14, %s12
  // Predicated region
  $region2: #{ln5_forward.1} parent=0 // pred_check
    _
  $region3: #{ln5_forward.1} parent=0 // pred_check_branch
    %17 = sbr.rel (0) target = $region5
  $region4: #{ln5_forward.1} parent=0 // pred_region
    _
  $region5: #{ln5_forward.1} parent=0 // pred_fallthru
    _
  // Predicated region
  $region6: #{ln5_forward.1} parent=0 // pred_check
    _
  $region7: #{ln5_forward.1} parent=0 // pred_check_branch
    %19 = sbr.rel (0) target = $region9
  $region8: #{ln5_forward.1} parent=0 // pred_region
    _
  $region9: #{ln5_forward.1} parent=0 // pred_fallthru
    _
  // Predicated region
  $region10: #{ln5_forward.1} parent=0 // pred_check
    _
  $region11: #{ln5_forward.1} parent=0 // pred_check_branch
    %21 = sbr.rel (0) target = $region13
  $region12: #{ln5_forward.1} parent=0 // pred_region
    _
  $region13: #{ln5_forward.1} parent=0 // pred_fallthru
    _
  // Predicated region
  $region14: #{ln5_forward.1} parent=0 // pred_check
    _
  $region15: #{ln5_forward.1} parent=0 // pred_check_branch
    %23 = sbr.rel (0) target = $region17
  $region16: #{ln5_forward.1} parent=0 // pred_region
    _
  $region17: #{ln5_forward.1} parent=0 // pred_fallthru
    _
  // Predicated region
  $region18: #{ln5_forward.1} parent=0 // pred_check
    _
  $region19: #{ln5_forward.1} parent=0 // pred_check_branch
    %25 = sbr.rel (0) target = $region21
  $region20: #{ln5_forward.1} parent=0 // pred_region
    _
  $region21: #{ln5_forward.1} parent=0 // pred_fallthru
    _
  // Predicated region
  $region22: #{ln5_forward.1} parent=0 // pred_check
    _
  $region23: #{ln5_forward.1} parent=0 // pred_check_branch
    %27 = sbr.rel (0) target = $region25
  $region24: #{ln5_forward.1} parent=0 // pred_region
    _
  $region25: #{ln5_forward.1} parent=0 // pred_fallthru
    _
  // Predicated region
  $region26: #{ln5_forward.1} parent=0 // pred_check
    _
  $region27: #{ln5_forward.1} parent=0 // pred_check_branch
    %29 = sbr.rel (0) target = $region29
  $region28: #{ln5_forward.1} parent=0 // pred_region
    _
  $region29: #{ln5_forward.1} parent=0 // pred_fallthru
    _
  // Predicated region
  $region30: #{ln5_forward.1} parent=0 // pred_check
    _
  $region31: #{ln5_forward.1} parent=0 // pred_check_branch
    %31 = sbr.rel (0) target = $region33
  $region32: #{ln5_forward.1} parent=0 // pred_region
    _
  $region33: #{ln5_forward.1} parent=0 // pred_fallthru
    _
  // Predicated region
  $region34: #{ln5_forward.1} parent=0 // pred_check
    _
  $region35: #{ln5_forward.1} parent=0 // pred_check_branch
    %33 = sbr.rel (0) target = $region37
  $region36: #{ln5_forward.1} parent=0 // pred_region
    _
  $region37: #{ln5_forward.1} parent=0 // pred_fallthru
    _
  // Predicated region
  $region38: #{ln5_forward.1} parent=0 // pred_check
    _
  $region39: #{ln5_forward.1} parent=0 // pred_check_branch
    %35 = sbr.rel (0) target = $region41
  $region40: #{ln5_forward.1} parent=0 // pred_region
    _
  $region41: #{ln5_forward.1} parent=0 // pred_fallthru
    _
  // Predicated region
  $region42: #{ln5_forward.1} parent=0 // pred_check
    _
  $region43: #{ln5_forward.1} parent=0 // pred_check_branch
    %37 = sbr.rel (0) target = $region45
  $region44: #{ln5_forward.1} parent=0 // pred_region
    _
  $region45: #{ln5_forward.1} parent=0 // pred_fallthru
    _
  %v39 = vld [vmem:[%s2] sm:$0x3]
  %v40 = vld [vmem:[%s0] sm:$0xf]
  %v41 = vld [vmem:[%s0 + $0x4] sm:$0xf]
  %v42 = vld [vmem:[%s0 + $0x10] sm:$0xf]
  %v43 = vld [vmem:[%s0 + $0x14] sm:$0xf]
  %v44 = vld [vmem:[%s0 + $0x20] sm:$0xf]
  %v45 = vld [vmem:[%s0 + $0x24] sm:$0xf]
  %v46 = vld [vmem:[%s0 + $0x30] sm:$0xf]
  %v47 = vld [vmem:[%s0 + $0x34] sm:$0xf]
  %v48 = vld [vmem:[%s0 + $0x40] sm:$0xf]
  %v49 = vld [vmem:[%s0 + $0x44] sm:$0xf]
  %v50 = vld [vmem:[%s0 + $0x50] sm:$0xf]
  %v51 = vld [vmem:[%s0 + $0x54] sm:$0xf]
  %v52 = vld [vmem:[%s0 + $0x60] sm:$0xf]
  %v53 = vld [vmem:[%s0 + $0x64] sm:$0xf]
  %v54 = vld [vmem:[%s0 + $0x70] sm:$0xf]
  %v55 = vld [vmem:[%s0 + $0x74] sm:$0xf]
  %v56 = vld [vmem:[%s0 + $0x80] sm:$0xf]
  %v57 = vld [vmem:[%s0 + $0x84] sm:$0xf]
  %v58 = vld [vmem:[%s0 + $0x90] sm:$0xf]
  %v59 = vld [vmem:[%s0 + $0x94] sm:$0xf]
  %v60 = vld [vmem:[%s0 + $0xa0] sm:$0xf]
  %v61 = vld [vmem:[%s0 + $0xa4] sm:$0xf]
  %v62 = vld [vmem:[%s0 + $0xb0] sm:$0xf]
  %v63 = vld [vmem:[%s0 + $0xb4] sm:$0xf]
  %v64 = vld [vmem:[%s0 + $0xc0] sm:$0xf]
  %v65 = vld [vmem:[%s0 + $0xc4] sm:$0xf]
  %v66 = vld [vmem:[%s0 + $0xd0] sm:$0xf]
  %v67 = vld [vmem:[%s0 + $0xd4] sm:$0xf]
  %s68 = scalar_lea.vmem %s0, 8
  %v69 = vld [vmem:[%s68] sm:$0xf]
  %v70 = vld [vmem:[%s68 + $0x4] sm:$0xf]
  %v71 = vld [vmem:[%s68 + $0x10] sm:$0xf]
  %v72 = vld [vmem:[%s68 + $0x14] sm:$0xf]
  %v73 = vld [vmem:[%s68 + $0x20] sm:$0xf]
  %v74 = vld [vmem:[%s68 + $0x24] sm:$0xf]
  %v75 = vld [vmem:[%s68 + $0x30] sm:$0xf]
  %v76 = vld [vmem:[%s68 + $0x34] sm:$0xf]
  %v77 = vld [vmem:[%s68 + $0x40] sm:$0xf]
  %v78 = vld [vmem:[%s68 + $0x44] sm:$0xf]
  %v79 = vld [vmem:[%s68 + $0x50] sm:$0xf]
  %v80 = vld [vmem:[%s68 + $0x54] sm:$0xf]
  %v81 = vld [vmem:[%s68 + $0x60] sm:$0xf]
  %v82 = vld [vmem:[%s68 + $0x64] sm:$0xf]
  %v83 = vld [vmem:[%s68 + $0x70] sm:$0xf]
  %v84 = vld [vmem:[%s68 + $0x74] sm:$0xf]
  %v85 = vld [vmem:[%s68 + $0x80] sm:$0xf]
  %v86 = vld [vmem:[%s68 + $0x84] sm:$0xf]
  %v87 = vld [vmem:[%s68 + $0x90] sm:$0xf]
  %v88 = vld [vmem:[%s68 + $0x94] sm:$0xf]
  %v89 = vld [vmem:[%s68 + $0xa0] sm:$0xf]
  %v90 = vld [vmem:[%s68 + $0xa4] sm:$0xf]
  %v91 = vld [vmem:[%s68 + $0xb0] sm:$0xf]
  %v92 = vld [vmem:[%s68 + $0xb4] sm:$0xf]
  %v93 = vld [vmem:[%s68 + $0xc0] sm:$0xf]
  %v94 = vld [vmem:[%s68 + $0xc4] sm:$0xf]
  %v95 = vld [vmem:[%s68 + $0xd0] sm:$0xf]
  %v96 = vld [vmem:[%s68 + $0xd4] sm:$0xf]
  %s97 = scalar_lea.vmem %s0, 16
  %v98 = vld [vmem:[%s97] sm:$0xf]
  %v99 = vld [vmem:[%s97 + $0x4] sm:$0xf]
  %v100 = vld [vmem:[%s97 + $0x10] sm:$0xf]
  %v101 = vld [vmem:[%s97 + $0x14] sm:$0xf]
  %v102 = vld [vmem:[%s97 + $0x20] sm:$0xf]
  %v103 = vld [vmem:[%s97 + $0x24] sm:$0xf]
  %v104 = vld [vmem:[%s97 + $0x30] sm:$0xf]
  %v105 = vld [vmem:[%s97 + $0x34] sm:$0xf]
  %v106 = vld [vmem:[%s97 + $0x40] sm:$0xf]
  %v107 = vld [vmem:[%s97 + $0x44] sm:$0xf]
  %v108 = vld [vmem:[%s97 + $0x50] sm:$0xf]
  %v109 = vld [vmem:[%s97 + $0x54] sm:$0xf]
  %v110 = vld [vmem:[%s97 + $0x60] sm:$0xf]
  %v111 = vld [vmem:[%s97 + $0x64] sm:$0xf]
  %v112 = vld [vmem:[%s97 + $0x70] sm:$0xf]
  %v113 = vld [vmem:[%s97 + $0x74] sm:$0xf]
  %v114 = vld [vmem:[%s97 + $0x80] sm:$0xf]
  %v115 = vld [vmem:[%s97 + $0x84] sm:$0xf]
  %v116 = vld [vmem:[%s97 + $0x90] sm:$0xf]
  %v117 = vld [vmem:[%s97 + $0x94] sm:$0xf]
  %v118 = vld [vmem:[%s97 + $0xa0] sm:$0xf]
  %v119 = vld [vmem:[%s97 + $0xa4] sm:$0xf]
  %v120 = vld [vmem:[%s97 + $0xb0] sm:$0xf]
  %v121 = vld [vmem:[%s97 + $0xb4] sm:$0xf]
  %v122 = vld [vmem:[%s97 + $0xc0] sm:$0xf]
  %v123 = vld [vmem:[%s97 + $0xc4] sm:$0xf]
  %v124 = vld [vmem:[%s97 + $0xd0] sm:$0xf]
  %v125 = vld [vmem:[%s97 + $0xd4] sm:$0xf]
  %s126 = scalar_lea.vmem %s0, 24
  %v127 = vld [vmem:[%s126] sm:$0xf]
  %v128 = vld [vmem:[%s126 + $0x4] sm:$0xf]
  %v129 = vld [vmem:[%s126 + $0x10] sm:$0xf]
  %v130 = vld [vmem:[%s126 + $0x14] sm:$0xf]
  %v131 = vld [vmem:[%s126 + $0x20] sm:$0xf]
  %v132 = vld [vmem:[%s126 + $0x24] sm:$0xf]
  %v133 = vld [vmem:[%s126 + $0x30] sm:$0xf]
  %v134 = vld [vmem:[%s126 + $0x34] sm:$0xf]
  %v135 = vld [vmem:[%s126 + $0x40] sm:$0xf]
  %v136 = vld [vmem:[%s126 + $0x44] sm:$0xf]
  %v137 = vld [vmem:[%s126 + $0x50] sm:$0xf]
  %v138 = vld [vmem:[%s126 + $0x54] sm:$0xf]
  %v139 = vld [vmem:[%s126 + $0x60] sm:$0xf]
  %v140 = vld [vmem:[%s126 + $0x64] sm:$0xf]
  %v141 = vld [vmem:[%s126 + $0x70] sm:$0xf]
  %v142 = vld [vmem:[%s126 + $0x74] sm:$0xf]
  %v143 = vld [vmem:[%s126 + $0x80] sm:$0xf]
  %v144 = vld [vmem:[%s126 + $0x84] sm:$0xf]
  %v145 = vld [vmem:[%s126 + $0x90] sm:$0xf]
  %v146 = vld [vmem:[%s126 + $0x94] sm:$0xf]
  %v147 = vld [vmem:[%s126 + $0xa0] sm:$0xf]
  %v148 = vld [vmem:[%s126 + $0xa4] sm:$0xf]
  %v149 = vld [vmem:[%s126 + $0xb0] sm:$0xf]
  %v150 = vld [vmem:[%s126 + $0xb4] sm:$0xf]
  %v151 = vld [vmem:[%s126 + $0xc0] sm:$0xf]
  %v152 = vld [vmem:[%s126 + $0xc4] sm:$0xf]
  %v153 = vld [vmem:[%s126 + $0xd0] sm:$0xf]
  %v154 = vld [vmem:[%s126 + $0xd4] sm:$0xf]
  %s155 = scalar_lea.vmem %s0, 32
  %v156 = vld [vmem:[%s155] sm:$0xf]
  %v157 = vld [vmem:[%s155 + $0x4] sm:$0xf]
  %v158 = vld [vmem:[%s155 + $0x10] sm:$0xf]
  %v159 = vld [vmem:[%s155 + $0x14] sm:$0xf]
  %v160 = vld [vmem:[%s155 + $0x20] sm:$0xf]
  %v161 = vld [vmem:[%s155 + $0x24] sm:$0xf]
  %v162 = vld [vmem:[%s155 + $0x30] sm:$0xf]
  %v163 = vld [vmem:[%s155 + $0x34] sm:$0xf]
  %v164 = vld [vmem:[%s155 + $0x40] sm:$0xf]
  %v165 = vld [vmem:[%s155 + $0x44] sm:$0xf]
  %v166 = vld [vmem:[%s155 + $0x50] sm:$0xf]
  %v167 = vld [vmem:[%s155 + $0x54] sm:$0xf]
  %v168 = vld [vmem:[%s155 + $0x60] sm:$0xf]
  %v169 = vld [vmem:[%s155 + $0x64] sm:$0xf]
  %v170 = vld [vmem:[%s155 + $0x70] sm:$0xf]
  %v171 = vld [vmem:[%s155 + $0x74] sm:$0xf]
  %v172 = vld [vmem:[%s155 + $0x80] sm:$0xf]
  %v173 = vld [vmem:[%s155 + $0x84] sm:$0xf]
  %v174 = vld [vmem:[%s155 + $0x90] sm:$0xf]
  %v175 = vld [vmem:[%s155 + $0x94] sm:$0xf]
  %v176 = vld [vmem:[%s155 + $0xa0] sm:$0xf]
  %v177 = vld [vmem:[%s155 + $0xa4] sm:$0xf]
  %v178 = vld [vmem:[%s155 + $0xb0] sm:$0xf]
  %v179 = vld [vmem:[%s155 + $0xb4] sm:$0xf]
  %v180 = vld [vmem:[%s155 + $0xc0] sm:$0xf]
  %v181 = vld [vmem:[%s155 + $0xc4] sm:$0xf]
  %v182 = vld [vmem:[%s155 + $0xd0] sm:$0xf]
  %v183 = vld [vmem:[%s155 + $0xd4] sm:$0xf]
  %s184 = scalar_lea.vmem %s0, 40
  %v185 = vld [vmem:[%s184] sm:$0xf]
  %v186 = vld [vmem:[%s184 + $0x4] sm:$0xf]
  %v187 = vld [vmem:[%s184 + $0x10] sm:$0xf]
  %v188 = vld [vmem:[%s184 + $0x14] sm:$0xf]
  %v189 = vld [vmem:[%s184 + $0x20] sm:$0xf]
  %v190 = vld [vmem:[%s184 + $0x24] sm:$0xf]
  %v191 = vld [vmem:[%s184 + $0x30] sm:$0xf]
  %v192 = vld [vmem:[%s184 + $0x34] sm:$0xf]
  %v193 = vld [vmem:[%s184 + $0x40] sm:$0xf]
  %v194 = vld [vmem:[%s184 + $0x44] sm:$0xf]
  %v195 = vld [vmem:[%s184 + $0x50] sm:$0xf]
  %v196 = vld [vmem:[%s184 + $0x54] sm:$0xf]
  %v197 = vld [vmem:[%s184 + $0x60] sm:$0xf]
  %v198 = vld [vmem:[%s184 + $0x64] sm:$0xf]
  %v199 = vld [vmem:[%s184 + $0x70] sm:$0xf]
  %v200 = vld [vmem:[%s184 + $0x74] sm:$0xf]
  %v201 = vld [vmem:[%s184 + $0x80] sm:$0xf]
  %v202 = vld [vmem:[%s184 + $0x84] sm:$0xf]
  %v203 = vld [vmem:[%s184 + $0x90] sm:$0xf]
  %v204 = vld [vmem:[%s184 + $0x94] sm:$0xf]
  %v205 = vld [vmem:[%s184 + $0xa0] sm:$0xf]
  %v206 = vld [vmem:[%s184 + $0xa4] sm:$0xf]
  %v207 = vld [vmem:[%s184 + $0xb0] sm:$0xf]
  %v208 = vld [vmem:[%s184 + $0xb4] sm:$0xf]
  %v209 = vld [vmem:[%s184 + $0xc0] sm:$0xf]
  %v210 = vld [vmem:[%s184 + $0xc4] sm:$0xf]
  %v211 = vld [vmem:[%s184 + $0xd0] sm:$0xf]
  %v212 = vld [vmem:[%s184 + $0xd4] sm:$0xf]
  %v213 = vld [vmem:[%s1] sm:$0xff]
  %v214 = vld [vmem:[%s1 + $0x8] sm:$0xff]
  %v215 = vld [vmem:[%s1 + $0x10] sm:$0xff]
  %v216 = vld [vmem:[%s1 + $0x18] sm:$0xff]
  %s217 = scalar_lea.vmem %s1, 32
  %v218 = vld [vmem:[%s217] sm:$0xff]
  %v219 = vld [vmem:[%s217 + $0x8] sm:$0xff]
  %v220 = vld [vmem:[%s217 + $0x10] sm:$0xff]
  %v221 = vld [vmem:[%s217 + $0x18] sm:$0xff]
  %v250 = vunpack.c.l.b16 %v69
  %v251 = vunpack.c.l.b16 %v70
  %v252 = vunpack.c.l.b16 %v71
  %v253 = vunpack.c.l.b16 %v72
  %v254 = vunpack.c.l.b16 %v73
  %v255 = vunpack.c.l.b16 %v74
  %v256 = vunpack.c.l.b16 %v75
  %v257 = vunpack.c.l.b16 %v76
  %v258 = vunpack.c.l.b16 %v77
  %v259 = vunpack.c.l.b16 %v78
  %v260 = vunpack.c.l.b16 %v79
  %v261 = vunpack.c.l.b16 %v80
  %v262 = vunpack.c.l.b16 %v81
  %v263 = vunpack.c.l.b16 %v82
  %v264 = vunpack.c.l.b16 %v83
  %v265 = vunpack.c.l.b16 %v84
  %v266 = vunpack.c.l.b16 %v85
  %v267 = vunpack.c.l.b16 %v86
  %v268 = vunpack.c.l.b16 %v87
  %v269 = vunpack.c.l.b16 %v88
  %v270 = vunpack.c.l.b16 %v89
  %v271 = vunpack.c.l.b16 %v90
  %v272 = vunpack.c.l.b16 %v91
  %v273 = vunpack.c.l.b16 %v92
  %v274 = vunpack.c.l.b16 %v93
  %v275 = vunpack.c.l.b16 %v94
  %v276 = vunpack.c.l.b16 %v95
  %v277 = vunpack.c.l.b16 %v96
  %v278 = vpack.c.b16 %v251, %v250
  %v279 = vpack.c.b16 %v253, %v252
  %v280 = vpack.c.b16 %v255, %v254
  %v281 = vpack.c.b16 %v257, %v256
  %v282 = vpack.c.b16 %v259, %v258
  %v283 = vpack.c.b16 %v261, %v260
  %v284 = vpack.c.b16 %v263, %v262
  %v285 = vpack.c.b16 %v265, %v264
  %v286 = vpack.c.b16 %v267, %v266
  %v287 = vpack.c.b16 %v269, %v268
  %v288 = vpack.c.b16 %v271, %v270
  %v289 = vpack.c.b16 %v273, %v272
  %v290 = vpack.c.b16 %v275, %v274
  %v291 = vpack.c.b16 %v277, %v276
  %v296 = vunpack.c.l.b16 %v218
  %v297 = vunpack.c.h.b16 %v218
  %v298 = vunpack.c.l.b16 %v219
  %v299 = vunpack.c.h.b16 %v219
  %v300 = vunpack.c.l.b16 %v220
  %v301 = vunpack.c.h.b16 %v220
  %v302 = vunpack.c.l.b16 %v221
  %v303 = vunpack.c.h.b16 %v221
  %v304 = vpack.c.b16 %v298, %v296
  %v305 = vpack.c.b16 %v299, %v297
  %v306 = vpack.c.b16 %v302, %v300
  %v307 = vpack.c.b16 %v303, %v301
  %vm312 = vcmask 261120
  %v314 = vsel %vm312, %v278, 0
  %v317 = vsel %vm312, %v279, 0
  %v320 = vsel %vm312, %v280, 0
  %v323 = vsel %vm312, %v281, 0
  %v326 = vsel %vm312, %v282, 0
  %v329 = vsel %vm312, %v283, 0
  %v332 = vsel %vm312, %v284, 0
  %v335 = vsel %vm312, %v285, 0
  %v338 = vsel %vm312, %v286, 0
  %v341 = vsel %vm312, %v287, 0
  %v344 = vsel %vm312, %v288, 0
  %v347 = vsel %vm312, %v289, 0
  %v350 = vsel %vm312, %v290, 0
  %v353 = vsel %vm312, %v291, 0
  %355 = vmatpush.bf16.msra.mxu0 0
  %356 = vmatpush.bf16.msra.mxu0 0
  %357 = vmatpush.bf16.msra.mxu0 0
  %358 = vmatpush.bf16.msra.mxu0 0
  %359 = vmatpush.bf16.msra.mxu0 0
  %360 = vmatpush.bf16.msra.mxu0 0
  %361 = vmatpush.bf16.msra.mxu0 %v306
  %362 = vmatpush.bf16.msra.mxu0 %v304
  %363 = vmatmul.bf16.gmra.mxu0 %v314
  %v364 = vpop.f32.mrf.mxu0
  %v365 = vadd.f32 0.0, %v364
  %v366 = vpop.f32.mrf.mxu0
  %v367 = vadd.f32 0.0, %v366
  %368 = vmatmul.bf16.gmra.mxu0 %v317
  %v369 = vpop.f32.mrf.mxu0
  %v370 = vadd.f32 0.0, %v369
  %v371 = vpop.f32.mrf.mxu0
  %v372 = vadd.f32 0.0, %v371
  %373 = vmatmul.bf16.gmra.mxu0 %v320
  %v374 = vpop.f32.mrf.mxu0
  %v375 = vadd.f32 0.0, %v374
  %v376 = vpop.f32.mrf.mxu0
  %v377 = vadd.f32 0.0, %v376
  %378 = vmatmul.bf16.gmra.mxu0 %v323
  %v379 = vpop.f32.mrf.mxu0
  %v380 = vadd.f32 0.0, %v379
  %v381 = vpop.f32.mrf.mxu0
  %v382 = vadd.f32 0.0, %v381
  %383 = vmatmul.bf16.gmra.mxu0 %v326
  %v384 = vpop.f32.mrf.mxu0
  %v385 = vadd.f32 0.0, %v384
  %v386 = vpop.f32.mrf.mxu0
  %v387 = vadd.f32 0.0, %v386
  %388 = vmatmul.bf16.gmra.mxu0 %v329
  %v389 = vpop.f32.mrf.mxu0
  %v390 = vadd.f32 0.0, %v389
  %v391 = vpop.f32.mrf.mxu0
  %v392 = vadd.f32 0.0, %v391
  %393 = vmatmul.bf16.gmra.mxu0 %v332
  %v394 = vpop.f32.mrf.mxu0
  %v395 = vadd.f32 0.0, %v394
  %v396 = vpop.f32.mrf.mxu0
  %v397 = vadd.f32 0.0, %v396
  %398 = vmatmul.bf16.gmra.mxu0 %v335
  %v399 = vpop.f32.mrf.mxu0
  %v400 = vadd.f32 0.0, %v399
  %v401 = vpop.f32.mrf.mxu0
  %v402 = vadd.f32 0.0, %v401
  %403 = vmatmul.bf16.gmra.mxu0 %v338
  %v404 = vpop.f32.mrf.mxu0
  %v405 = vadd.f32 0.0, %v404
  %v406 = vpop.f32.mrf.mxu0
  %v407 = vadd.f32 0.0, %v406
  %408 = vmatmul.bf16.gmra.mxu0 %v341
  %v409 = vpop.f32.mrf.mxu0
  %v410 = vadd.f32 0.0, %v409
  %v411 = vpop.f32.mrf.mxu0
  %v412 = vadd.f32 0.0, %v411
  %413 = vmatmul.bf16.gmra.mxu0 %v344
  %v414 = vpop.f32.mrf.mxu0
  %v415 = vadd.f32 0.0, %v414
  %v416 = vpop.f32.mrf.mxu0
  %v417 = vadd.f32 0.0, %v416
  %418 = vmatmul.bf16.gmra.mxu0 %v347
  %v419 = vpop.f32.mrf.mxu0
  %v420 = vadd.f32 0.0, %v419
  %v421 = vpop.f32.mrf.mxu0
  %v422 = vadd.f32 0.0, %v421
  %423 = vmatmul.bf16.gmra.mxu0 %v350
  %v424 = vpop.f32.mrf.mxu0
  %v425 = vadd.f32 0.0, %v424
  %v426 = vpop.f32.mrf.mxu0
  %v427 = vadd.f32 0.0, %v426
  %428 = vmatmul.bf16.gmra.mxu0 %v353
  %v429 = vpop.f32.mrf.mxu0
  %v430 = vadd.f32 0.0, %v429
  %v431 = vpop.f32.mrf.mxu0
  %v432 = vadd.f32 0.0, %v431
  %433 = vdwg.mxu0
  %434 = vmatpush.bf16.msra.mxu0 0
  %435 = vmatpush.bf16.msra.mxu0 0
  %436 = vmatpush.bf16.msra.mxu0 0
  %437 = vmatpush.bf16.msra.mxu0 0
  %438 = vmatpush.bf16.msra.mxu0 0
  %439 = vmatpush.bf16.msra.mxu0 0
  %440 = vmatpush.bf16.msra.mxu0 %v307
  %441 = vmatpush.bf16.msra.mxu0 %v305
  %442 = vmatmul.bf16.gmra.mxu0 %v314
  %v443 = vpop.f32.mrf.mxu0
  %v444 = vadd.f32 0.0, %v443
  %v445 = vpop.f32.mrf.mxu0
  %v446 = vadd.f32 0.0, %v445
  %447 = vmatmul.bf16.gmra.mxu0 %v317
  %v448 = vpop.f32.mrf.mxu0
  %v449 = vadd.f32 0.0, %v448
  %v450 = vpop.f32.mrf.mxu0
  %v451 = vadd.f32 0.0, %v450
  %452 = vmatmul.bf16.gmra.mxu0 %v320
  %v453 = vpop.f32.mrf.mxu0
  %v454 = vadd.f32 0.0, %v453
  %v455 = vpop.f32.mrf.mxu0
  %v456 = vadd.f32 0.0, %v455
  %457 = vmatmul.bf16.gmra.mxu0 %v323
  %v458 = vpop.f32.mrf.mxu0
  %v459 = vadd.f32 0.0, %v458
  %v460 = vpop.f32.mrf.mxu0
  %v461 = vadd.f32 0.0, %v460
  %462 = vmatmul.bf16.gmra.mxu0 %v326
  %v463 = vpop.f32.mrf.mxu0
  %v464 = vadd.f32 0.0, %v463
  %v465 = vpop.f32.mrf.mxu0
  %v466 = vadd.f32 0.0, %v465
  %467 = vmatmul.bf16.gmra.mxu0 %v329
  %v468 = vpop.f32.mrf.mxu0
  %v469 = vadd.f32 0.0, %v468
  %v470 = vpop.f32.mrf.mxu0
  %v471 = vadd.f32 0.0, %v470
  %472 = vmatmul.bf16.gmra.mxu0 %v332
  %v473 = vpop.f32.mrf.mxu0
  %v474 = vadd.f32 0.0, %v473
  %v475 = vpop.f32.mrf.mxu0
  %v476 = vadd.f32 0.0, %v475
  %477 = vmatmul.bf16.gmra.mxu0 %v335
  %v478 = vpop.f32.mrf.mxu0
  %v479 = vadd.f32 0.0, %v478
  %v480 = vpop.f32.mrf.mxu0
  %v481 = vadd.f32 0.0, %v480
  %482 = vmatmul.bf16.gmra.mxu0 %v338
  %v483 = vpop.f32.mrf.mxu0
  %v484 = vadd.f32 0.0, %v483
  %v485 = vpop.f32.mrf.mxu0
  %v486 = vadd.f32 0.0, %v485
  %487 = vmatmul.bf16.gmra.mxu0 %v341
  %v488 = vpop.f32.mrf.mxu0
  %v489 = vadd.f32 0.0, %v488
  %v490 = vpop.f32.mrf.mxu0
  %v491 = vadd.f32 0.0, %v490
  %492 = vmatmul.bf16.gmra.mxu0 %v344
  %v493 = vpop.f32.mrf.mxu0
  %v494 = vadd.f32 0.0, %v493
  %v495 = vpop.f32.mrf.mxu0
  %v496 = vadd.f32 0.0, %v495
  %497 = vmatmul.bf16.gmra.mxu0 %v347
  %v498 = vpop.f32.mrf.mxu0
  %v499 = vadd.f32 0.0, %v498
  %v500 = vpop.f32.mrf.mxu0
  %v501 = vadd.f32 0.0, %v500
  %502 = vmatmul.bf16.gmra.mxu0 %v350
  %v503 = vpop.f32.mrf.mxu0
  %v504 = vadd.f32 0.0, %v503
  %v505 = vpop.f32.mrf.mxu0
  %v506 = vadd.f32 0.0, %v505
  %507 = vmatmul.bf16.gmra.mxu0 %v353
  %v508 = vpop.f32.mrf.mxu0
  %v509 = vadd.f32 0.0, %v508
  %v510 = vpop.f32.mrf.mxu0
  %v511 = vadd.f32 0.0, %v510
  %512 = vdwg.mxu0
  %v541 = vunpack.c.l.b16 %v40
  %v542 = vunpack.c.l.b16 %v41
  %v543 = vunpack.c.l.b16 %v42
  %v544 = vunpack.c.l.b16 %v43
  %v545 = vunpack.c.l.b16 %v44
  %v546 = vunpack.c.l.b16 %v45
  %v547 = vunpack.c.l.b16 %v46
  %v548 = vunpack.c.l.b16 %v47
  %v549 = vunpack.c.l.b16 %v48
  %v550 = vunpack.c.l.b16 %v49
  %v551 = vunpack.c.l.b16 %v50
  %v552 = vunpack.c.l.b16 %v51
  %v553 = vunpack.c.l.b16 %v52
  %v554 = vunpack.c.l.b16 %v53
  %v555 = vunpack.c.l.b16 %v54
  %v556 = vunpack.c.l.b16 %v55
  %v557 = vunpack.c.l.b16 %v56
  %v558 = vunpack.c.l.b16 %v57
  %v559 = vunpack.c.l.b16 %v58
  %v560 = vunpack.c.l.b16 %v59
  %v561 = vunpack.c.l.b16 %v60
  %v562 = vunpack.c.l.b16 %v61
  %v563 = vunpack.c.l.b16 %v62
  %v564 = vunpack.c.l.b16 %v63
  %v565 = vunpack.c.l.b16 %v64
  %v566 = vunpack.c.l.b16 %v65
  %v567 = vunpack.c.l.b16 %v66
  %v568 = vunpack.c.l.b16 %v67
  %v569 = vpack.c.b16 %v542, %v541
  %v570 = vpack.c.b16 %v544, %v543
  %v571 = vpack.c.b16 %v546, %v545
  %v572 = vpack.c.b16 %v548, %v547
  %v573 = vpack.c.b16 %v550, %v549
  %v574 = vpack.c.b16 %v552, %v551
  %v575 = vpack.c.b16 %v554, %v553
  %v576 = vpack.c.b16 %v556, %v555
  %v577 = vpack.c.b16 %v558, %v557
  %v578 = vpack.c.b16 %v560, %v559
  %v579 = vpack.c.b16 %v562, %v561
  %v580 = vpack.c.b16 %v564, %v563
  %v581 = vpack.c.b16 %v566, %v565
  %v582 = vpack.c.b16 %v568, %v567
  %v587 = vunpack.c.l.b16 %v213
  %v588 = vunpack.c.h.b16 %v213
  %v589 = vunpack.c.l.b16 %v214
  %v590 = vunpack.c.h.b16 %v214
  %v591 = vunpack.c.l.b16 %v215
  %v592 = vunpack.c.h.b16 %v215
  %v593 = vunpack.c.l.b16 %v216
  %v594 = vunpack.c.h.b16 %v216
  %v595 = vpack.c.b16 %v589, %v587
  %v596 = vpack.c.b16 %v590, %v588
  %v597 = vpack.c.b16 %v593, %v591
  %v598 = vpack.c.b16 %v594, %v592
  %v604 = vsel %vm312, %v569, 0
  %v607 = vsel %vm312, %v570, 0
  %v610 = vsel %vm312, %v571, 0
  %v613 = vsel %vm312, %v572, 0
  %v616 = vsel %vm312, %v573, 0
  %v619 = vsel %vm312, %v574, 0
  %v622 = vsel %vm312, %v575, 0
  %v625 = vsel %vm312, %v576, 0
  %v628 = vsel %vm312, %v577, 0
  %v631 = vsel %vm312, %v578, 0
  %v634 = vsel %vm312, %v579, 0
  %v637 = vsel %vm312, %v580, 0
  %v640 = vsel %vm312, %v581, 0
  %v643 = vsel %vm312, %v582, 0
  %645 = vmatpush.bf16.msra.mxu0 0
  %646 = vmatpush.bf16.msra.mxu0 0
  %647 = vmatpush.bf16.msra.mxu0 0
  %648 = vmatpush.bf16.msra.mxu0 0
  %649 = vmatpush.bf16.msra.mxu0 0
  %650 = vmatpush.bf16.msra.mxu0 0
  %651 = vmatpush.bf16.msra.mxu0 %v597
  %652 = vmatpush.bf16.msra.mxu0 %v595
  %653 = vmatmul.bf16.gmra.mxu0 %v604
  %v654 = vpop.f32.mrf.mxu0
  %v655 = vadd.f32 %v365, %v654
  %v656 = vpop.f32.mrf.mxu0
  %v657 = vadd.f32 %v367, %v656
  %658 = vmatmul.bf16.gmra.mxu0 %v607
  %v659 = vpop.f32.mrf.mxu0
  %v660 = vadd.f32 %v370, %v659
  %v661 = vpop.f32.mrf.mxu0
  %v662 = vadd.f32 %v372, %v661
  %663 = vmatmul.bf16.gmra.mxu0 %v610
  %v664 = vpop.f32.mrf.mxu0
  %v665 = vadd.f32 %v375, %v664
  %v666 = vpop.f32.mrf.mxu0
  %v667 = vadd.f32 %v377, %v666
  %668 = vmatmul.bf16.gmra.mxu0 %v613
  %v669 = vpop.f32.mrf.mxu0
  %v670 = vadd.f32 %v380, %v669
  %v671 = vpop.f32.mrf.mxu0
  %v672 = vadd.f32 %v382, %v671
  %673 = vmatmul.bf16.gmra.mxu0 %v616
  %v674 = vpop.f32.mrf.mxu0
  %v675 = vadd.f32 %v385, %v674
  %v676 = vpop.f32.mrf.mxu0
  %v677 = vadd.f32 %v387, %v676
  %678 = vmatmul.bf16.gmra.mxu0 %v619
  %v679 = vpop.f32.mrf.mxu0
  %v680 = vadd.f32 %v390, %v679
  %v681 = vpop.f32.mrf.mxu0
  %v682 = vadd.f32 %v392, %v681
  %683 = vmatmul.bf16.gmra.mxu0 %v622
  %v684 = vpop.f32.mrf.mxu0
  %v685 = vadd.f32 %v395, %v684
  %v686 = vpop.f32.mrf.mxu0
  %v687 = vadd.f32 %v397, %v686
  %688 = vmatmul.bf16.gmra.mxu0 %v625
  %v689 = vpop.f32.mrf.mxu0
  %v690 = vadd.f32 %v400, %v689
  %v691 = vpop.f32.mrf.mxu0
  %v692 = vadd.f32 %v402, %v691
  %693 = vmatmul.bf16.gmra.mxu0 %v628
  %v694 = vpop.f32.mrf.mxu0
  %v695 = vadd.f32 %v405, %v694
  %v696 = vpop.f32.mrf.mxu0
  %v697 = vadd.f32 %v407, %v696
  %698 = vmatmul.bf16.gmra.mxu0 %v631
  %v699 = vpop.f32.mrf.mxu0
  %v700 = vadd.f32 %v410, %v699
  %v701 = vpop.f32.mrf.mxu0
  %v702 = vadd.f32 %v412, %v701
  %703 = vmatmul.bf16.gmra.mxu0 %v634
  %v704 = vpop.f32.mrf.mxu0
  %v705 = vadd.f32 %v415, %v704
  %v706 = vpop.f32.mrf.mxu0
  %v707 = vadd.f32 %v417, %v706
  %708 = vmatmul.bf16.gmra.mxu0 %v637
  %v709 = vpop.f32.mrf.mxu0
  %v710 = vadd.f32 %v420, %v709
  %v711 = vpop.f32.mrf.mxu0
  %v712 = vadd.f32 %v422, %v711
  %713 = vmatmul.bf16.gmra.mxu0 %v640
  %v714 = vpop.f32.mrf.mxu0
  %v715 = vadd.f32 %v425, %v714
  %v716 = vpop.f32.mrf.mxu0
  %v717 = vadd.f32 %v427, %v716
  %718 = vmatmul.bf16.gmra.mxu0 %v643
  %v719 = vpop.f32.mrf.mxu0
  %v720 = vadd.f32 %v430, %v719
  %v721 = vpop.f32.mrf.mxu0
  %v722 = vadd.f32 %v432, %v721
  %723 = vdwg.mxu0
  %724 = vmatpush.bf16.msra.mxu0 0
  %725 = vmatpush.bf16.msra.mxu0 0
  %726 = vmatpush.bf16.msra.mxu0 0
  %727 = vmatpush.bf16.msra.mxu0 0
  %728 = vmatpush.bf16.msra.mxu0 0
  %729 = vmatpush.bf16.msra.mxu0 0
  %730 = vmatpush.bf16.msra.mxu0 %v598
  %731 = vmatpush.bf16.msra.mxu0 %v596
  %732 = vmatmul.bf16.gmra.mxu0 %v604
  %v733 = vpop.f32.mrf.mxu0
  %v734 = vadd.f32 %v444, %v733
  %v735 = vpop.f32.mrf.mxu0
  %v736 = vadd.f32 %v446, %v735
  %737 = vmatmul.bf16.gmra.mxu0 %v607
  %v738 = vpop.f32.mrf.mxu0
  %v739 = vadd.f32 %v449, %v738
  %v740 = vpop.f32.mrf.mxu0
  %v741 = vadd.f32 %v451, %v740
  %742 = vmatmul.bf16.gmra.mxu0 %v610
  %v743 = vpop.f32.mrf.mxu0
  %v744 = vadd.f32 %v454, %v743
  %v745 = vpop.f32.mrf.mxu0
  %v746 = vadd.f32 %v456, %v745
  %747 = vmatmul.bf16.gmra.mxu0 %v613
  %v748 = vpop.f32.mrf.mxu0
  %v749 = vadd.f32 %v459, %v748
  %v750 = vpop.f32.mrf.mxu0
  %v751 = vadd.f32 %v461, %v750
  %752 = vmatmul.bf16.gmra.mxu0 %v616
  %v753 = vpop.f32.mrf.mxu0
  %v754 = vadd.f32 %v464, %v753
  %v755 = vpop.f32.mrf.mxu0
  %v756 = vadd.f32 %v466, %v755
  %757 = vmatmul.bf16.gmra.mxu0 %v619
  %v758 = vpop.f32.mrf.mxu0
  %v759 = vadd.f32 %v469, %v758
  %v760 = vpop.f32.mrf.mxu0
  %v761 = vadd.f32 %v471, %v760
  %762 = vmatmul.bf16.gmra.mxu0 %v622
  %v763 = vpop.f32.mrf.mxu0
  %v764 = vadd.f32 %v474, %v763
  %v765 = vpop.f32.mrf.mxu0
  %v766 = vadd.f32 %v476, %v765
  %767 = vmatmul.bf16.gmra.mxu0 %v625
  %v768 = vpop.f32.mrf.mxu0
  %v769 = vadd.f32 %v479, %v768
  %v770 = vpop.f32.mrf.mxu0
  %v771 = vadd.f32 %v481, %v770
  %772 = vmatmul.bf16.gmra.mxu0 %v628
  %v773 = vpop.f32.mrf.mxu0
  %v774 = vadd.f32 %v484, %v773
  %v775 = vpop.f32.mrf.mxu0
  %v776 = vadd.f32 %v486, %v775
  %777 = vmatmul.bf16.gmra.mxu0 %v631
  %v778 = vpop.f32.mrf.mxu0
  %v779 = vadd.f32 %v489, %v778
  %v780 = vpop.f32.mrf.mxu0
  %v781 = vadd.f32 %v491, %v780
  %782 = vmatmul.bf16.gmra.mxu0 %v634
  %v783 = vpop.f32.mrf.mxu0
  %v784 = vadd.f32 %v494, %v783
  %v785 = vpop.f32.mrf.mxu0
  %v786 = vadd.f32 %v496, %v785
  %787 = vmatmul.bf16.gmra.mxu0 %v637
  %v788 = vpop.f32.mrf.mxu0
  %v789 = vadd.f32 %v499, %v788
  %v790 = vpop.f32.mrf.mxu0
  %v791 = vadd.f32 %v501, %v790
  %792 = vmatmul.bf16.gmra.mxu0 %v640
  %v793 = vpop.f32.mrf.mxu0
  %v794 = vadd.f32 %v504, %v793
  %v795 = vpop.f32.mrf.mxu0
  %v796 = vadd.f32 %v506, %v795
  %797 = vmatmul.bf16.gmra.mxu0 %v643
  %v798 = vpop.f32.mrf.mxu0
  %v799 = vadd.f32 %v509, %v798
  %v800 = vpop.f32.mrf.mxu0
  %v801 = vadd.f32 %v511, %v800
  %802 = vdwg.mxu0
  %s803 = scalar_lea.vmem %s1, 64
  %v804 = vld [vmem:[%s803] sm:$0xff]
  %v805 = vld [vmem:[%s803 + $0x8] sm:$0xff]
  %v806 = vld [vmem:[%s803 + $0x10] sm:$0xff]
  %v807 = vld [vmem:[%s803 + $0x18] sm:$0xff]
  %v836 = vunpack.c.l.b16 %v98
  %v837 = vunpack.c.l.b16 %v99
  %v838 = vunpack.c.l.b16 %v100
  %v839 = vunpack.c.l.b16 %v101
  %v840 = vunpack.c.l.b16 %v102
  %v841 = vunpack.c.l.b16 %v103
  %v842 = vunpack.c.l.b16 %v104
  %v843 = vunpack.c.l.b16 %v105
  %v844 = vunpack.c.l.b16 %v106
  %v845 = vunpack.c.l.b16 %v107
  %v846 = vunpack.c.l.b16 %v108
  %v847 = vunpack.c.l.b16 %v109
  %v848 = vunpack.c.l.b16 %v110
  %v849 = vunpack.c.l.b16 %v111
  %v850 = vunpack.c.l.b16 %v112
  %v851 = vunpack.c.l.b16 %v113
  %v852 = vunpack.c.l.b16 %v114
  %v853 = vunpack.c.l.b16 %v115
  %v854 = vunpack.c.l.b16 %v116
  %v855 = vunpack.c.l.b16 %v117
  %v856 = vunpack.c.l.b16 %v118
  %v857 = vunpack.c.l.b16 %v119
  %v858 = vunpack.c.l.b16 %v120
  %v859 = vunpack.c.l.b16 %v121
  %v860 = vunpack.c.l.b16 %v122
  %v861 = vunpack.c.l.b16 %v123
  %v862 = vunpack.c.l.b16 %v124
  %v863 = vunpack.c.l.b16 %v125
  %v864 = vpack.c.b16 %v837, %v836
  %v865 = vpack.c.b16 %v839, %v838
  %v866 = vpack.c.b16 %v841, %v840
  %v867 = vpack.c.b16 %v843, %v842
  %v868 = vpack.c.b16 %v845, %v844
  %v869 = vpack.c.b16 %v847, %v846
  %v870 = vpack.c.b16 %v849, %v848
  %v871 = vpack.c.b16 %v851, %v850
  %v872 = vpack.c.b16 %v853, %v852
  %v873 = vpack.c.b16 %v855, %v854
  %v874 = vpack.c.b16 %v857, %v856
  %v875 = vpack.c.b16 %v859, %v858
  %v876 = vpack.c.b16 %v861, %v860
  %v877 = vpack.c.b16 %v863, %v862
  %v882 = vunpack.c.l.b16 %v804
  %v883 = vunpack.c.h.b16 %v804
  %v884 = vunpack.c.l.b16 %v805
  %v885 = vunpack.c.h.b16 %v805
  %v886 = vunpack.c.l.b16 %v806
  %v887 = vunpack.c.h.b16 %v806
  %v888 = vunpack.c.l.b16 %v807
  %v889 = vunpack.c.h.b16 %v807
  %v890 = vpack.c.b16 %v884, %v882
  %v891 = vpack.c.b16 %v885, %v883
  %v892 = vpack.c.b16 %v888, %v886
  %v893 = vpack.c.b16 %v889, %v887
  %v899 = vsel %vm312, %v864, 0
  %v902 = vsel %vm312, %v865, 0
  %v905 = vsel %vm312, %v866, 0
  %v908 = vsel %vm312, %v867, 0
  %v911 = vsel %vm312, %v868, 0
  %v914 = vsel %vm312, %v869, 0
  %v917 = vsel %vm312, %v870, 0
  %v920 = vsel %vm312, %v871, 0
  %v923 = vsel %vm312, %v872, 0
  %v926 = vsel %vm312, %v873, 0
  %v929 = vsel %vm312, %v874, 0
  %v932 = vsel %vm312, %v875, 0
  %v935 = vsel %vm312, %v876, 0
  %v938 = vsel %vm312, %v877, 0
  %940 = vmatpush.bf16.msra.mxu0 0
  %941 = vmatpush.bf16.msra.mxu0 0
  %942 = vmatpush.bf16.msra.mxu0 0
  %943 = vmatpush.bf16.msra.mxu0 0
  %944 = vmatpush.bf16.msra.mxu0 0
  %945 = vmatpush.bf16.msra.mxu0 0
  %946 = vmatpush.bf16.msra.mxu0 %v892
  %947 = vmatpush.bf16.msra.mxu0 %v890
  %948 = vmatmul.bf16.gmra.mxu0 %v899
  %v949 = vpop.f32.mrf.mxu0
  %v950 = vadd.f32 0.0, %v949
  %v951 = vpop.f32.mrf.mxu0
  %v952 = vadd.f32 0.0, %v951
  %953 = vmatmul.bf16.gmra.mxu0 %v902
  %v954 = vpop.f32.mrf.mxu0
  %v955 = vadd.f32 0.0, %v954
  %v956 = vpop.f32.mrf.mxu0
  %v957 = vadd.f32 0.0, %v956
  %958 = vmatmul.bf16.gmra.mxu0 %v905
  %v959 = vpop.f32.mrf.mxu0
  %v960 = vadd.f32 0.0, %v959
  %v961 = vpop.f32.mrf.mxu0
  %v962 = vadd.f32 0.0, %v961
  %963 = vmatmul.bf16.gmra.mxu0 %v908
  %v964 = vpop.f32.mrf.mxu0
  %v965 = vadd.f32 0.0, %v964
  %v966 = vpop.f32.mrf.mxu0
  %v967 = vadd.f32 0.0, %v966
  %968 = vmatmul.bf16.gmra.mxu0 %v911
  %v969 = vpop.f32.mrf.mxu0
  %v970 = vadd.f32 0.0, %v969
  %v971 = vpop.f32.mrf.mxu0
  %v972 = vadd.f32 0.0, %v971
  %973 = vmatmul.bf16.gmra.mxu0 %v914
  %v974 = vpop.f32.mrf.mxu0
  %v975 = vadd.f32 0.0, %v974
  %v976 = vpop.f32.mrf.mxu0
  %v977 = vadd.f32 0.0, %v976
  %978 = vmatmul.bf16.gmra.mxu0 %v917
  %v979 = vpop.f32.mrf.mxu0
  %v980 = vadd.f32 0.0, %v979
  %v981 = vpop.f32.mrf.mxu0
  %v982 = vadd.f32 0.0, %v981
  %983 = vmatmul.bf16.gmra.mxu0 %v920
  %v984 = vpop.f32.mrf.mxu0
  %v985 = vadd.f32 0.0, %v984
  %v986 = vpop.f32.mrf.mxu0
  %v987 = vadd.f32 0.0, %v986
  %988 = vmatmul.bf16.gmra.mxu0 %v923
  %v989 = vpop.f32.mrf.mxu0
  %v990 = vadd.f32 0.0, %v989
  %v991 = vpop.f32.mrf.mxu0
  %v992 = vadd.f32 0.0, %v991
  %993 = vmatmul.bf16.gmra.mxu0 %v926
  %v994 = vpop.f32.mrf.mxu0
  %v995 = vadd.f32 0.0, %v994
  %v996 = vpop.f32.mrf.mxu0
  %v997 = vadd.f32 0.0, %v996
  %998 = vmatmul.bf16.gmra.mxu0 %v929
  %v999 = vpop.f32.mrf.mxu0
  %v1000 = vadd.f32 0.0, %v999
  %v1001 = vpop.f32.mrf.mxu0
  %v1002 = vadd.f32 0.0, %v1001
  %1003 = vmatmul.bf16.gmra.mxu0 %v932
  %v1004 = vpop.f32.mrf.mxu0
  %v1005 = vadd.f32 0.0, %v1004
  %v1006 = vpop.f32.mrf.mxu0
  %v1007 = vadd.f32 0.0, %v1006
  %1008 = vmatmul.bf16.gmra.mxu0 %v935
  %v1009 = vpop.f32.mrf.mxu0
  %v1010 = vadd.f32 0.0, %v1009
  %v1011 = vpop.f32.mrf.mxu0
  %v1012 = vadd.f32 0.0, %v1011
  %1013 = vmatmul.bf16.gmra.mxu0 %v938
  %v1014 = vpop.f32.mrf.mxu0
  %v1015 = vadd.f32 0.0, %v1014
  %v1016 = vpop.f32.mrf.mxu0
  %v1017 = vadd.f32 0.0, %v1016
  %1018 = vdwg.mxu0
  %1019 = vmatpush.bf16.msra.mxu0 0
  %1020 = vmatpush.bf16.msra.mxu0 0
  %1021 = vmatpush.bf16.msra.mxu0 0
  %1022 = vmatpush.bf16.msra.mxu0 0
  %1023 = vmatpush.bf16.msra.mxu0 0
  %1024 = vmatpush.bf16.msra.mxu0 0
  %1025 = vmatpush.bf16.msra.mxu0 %v893
  %1026 = vmatpush.bf16.msra.mxu0 %v891
  %1027 = vmatmul.bf16.gmra.mxu0 %v899
  %v1028 = vpop.f32.mrf.mxu0
  %v1029 = vadd.f32 0.0, %v1028
  %v1030 = vpop.f32.mrf.mxu0
  %v1031 = vadd.f32 0.0, %v1030
  %1032 = vmatmul.bf16.gmra.mxu0 %v902
  %v1033 = vpop.f32.mrf.mxu0
  %v1034 = vadd.f32 0.0, %v1033
  %v1035 = vpop.f32.mrf.mxu0
  %v1036 = vadd.f32 0.0, %v1035
  %1037 = vmatmul.bf16.gmra.mxu0 %v905
  %v1038 = vpop.f32.mrf.mxu0
  %v1039 = vadd.f32 0.0, %v1038
  %v1040 = vpop.f32.mrf.mxu0
  %v1041 = vadd.f32 0.0, %v1040
  %1042 = vmatmul.bf16.gmra.mxu0 %v908
  %v1043 = vpop.f32.mrf.mxu0
  %v1044 = vadd.f32 0.0, %v1043
  %v1045 = vpop.f32.mrf.mxu0
  %v1046 = vadd.f32 0.0, %v1045
  %1047 = vmatmul.bf16.gmra.mxu0 %v911
  %v1048 = vpop.f32.mrf.mxu0
  %v1049 = vadd.f32 0.0, %v1048
  %v1050 = vpop.f32.mrf.mxu0
  %v1051 = vadd.f32 0.0, %v1050
  %1052 = vmatmul.bf16.gmra.mxu0 %v914
  %v1053 = vpop.f32.mrf.mxu0
  %v1054 = vadd.f32 0.0, %v1053
  %v1055 = vpop.f32.mrf.mxu0
  %v1056 = vadd.f32 0.0, %v1055
  %1057 = vmatmul.bf16.gmra.mxu0 %v917
  %v1058 = vpop.f32.mrf.mxu0
  %v1059 = vadd.f32 0.0, %v1058
  %v1060 = vpop.f32.mrf.mxu0
  %v1061 = vadd.f32 0.0, %v1060
  %1062 = vmatmul.bf16.gmra.mxu0 %v920
  %v1063 = vpop.f32.mrf.mxu0
  %v1064 = vadd.f32 0.0, %v1063
  %v1065 = vpop.f32.mrf.mxu0
  %v1066 = vadd.f32 0.0, %v1065
  %1067 = vmatmul.bf16.gmra.mxu0 %v923
  %v1068 = vpop.f32.mrf.mxu0
  %v1069 = vadd.f32 0.0, %v1068
  %v1070 = vpop.f32.mrf.mxu0
  %v1071 = vadd.f32 0.0, %v1070
  %1072 = vmatmul.bf16.gmra.mxu0 %v926
  %v1073 = vpop.f32.mrf.mxu0
  %v1074 = vadd.f32 0.0, %v1073
  %v1075 = vpop.f32.mrf.mxu0
  %v1076 = vadd.f32 0.0, %v1075
  %1077 = vmatmul.bf16.gmra.mxu0 %v929
  %v1078 = vpop.f32.mrf.mxu0
  %v1079 = vadd.f32 0.0, %v1078
  %v1080 = vpop.f32.mrf.mxu0
  %v1081 = vadd.f32 0.0, %v1080
  %1082 = vmatmul.bf16.gmra.mxu0 %v932
  %v1083 = vpop.f32.mrf.mxu0
  %v1084 = vadd.f32 0.0, %v1083
  %v1085 = vpop.f32.mrf.mxu0
  %v1086 = vadd.f32 0.0, %v1085
  %1087 = vmatmul.bf16.gmra.mxu0 %v935
  %v1088 = vpop.f32.mrf.mxu0
  %v1089 = vadd.f32 0.0, %v1088
  %v1090 = vpop.f32.mrf.mxu0
  %v1091 = vadd.f32 0.0, %v1090
  %1092 = vmatmul.bf16.gmra.mxu0 %v938
  %v1093 = vpop.f32.mrf.mxu0
  %v1094 = vadd.f32 0.0, %v1093
  %v1095 = vpop.f32.mrf.mxu0
  %v1096 = vadd.f32 0.0, %v1095
  %1097 = vdwg.mxu0
  %v1098 = vadd.f32 %v655, %v950
  %v1099 = vadd.f32 %v734, %v1029
  %v1100 = vadd.f32 %v657, %v952
  %v1101 = vadd.f32 %v736, %v1031
  %v1102 = vadd.f32 %v660, %v955
  %v1103 = vadd.f32 %v739, %v1034
  %v1104 = vadd.f32 %v662, %v957
  %v1105 = vadd.f32 %v741, %v1036
  %v1106 = vadd.f32 %v665, %v960
  %v1107 = vadd.f32 %v744, %v1039
  %v1108 = vadd.f32 %v667, %v962
  %v1109 = vadd.f32 %v746, %v1041
  %v1110 = vadd.f32 %v670, %v965
  %v1111 = vadd.f32 %v749, %v1044
  %v1112 = vadd.f32 %v672, %v967
  %v1113 = vadd.f32 %v751, %v1046
  %v1114 = vadd.f32 %v675, %v970
  %v1115 = vadd.f32 %v754, %v1049
  %v1116 = vadd.f32 %v677, %v972
  %v1117 = vadd.f32 %v756, %v1051
  %v1118 = vadd.f32 %v680, %v975
  %v1119 = vadd.f32 %v759, %v1054
  %v1120 = vadd.f32 %v682, %v977
  %v1121 = vadd.f32 %v761, %v1056
  %v1122 = vadd.f32 %v685, %v980
  %v1123 = vadd.f32 %v764, %v1059
  %v1124 = vadd.f32 %v687, %v982
  %v1125 = vadd.f32 %v766, %v1061
  %v1126 = vadd.f32 %v690, %v985
  %v1127 = vadd.f32 %v769, %v1064
  %v1128 = vadd.f32 %v692, %v987
  %v1129 = vadd.f32 %v771, %v1066
  %v1130 = vadd.f32 %v695, %v990
  %v1131 = vadd.f32 %v774, %v1069
  %v1132 = vadd.f32 %v697, %v992
  %v1133 = vadd.f32 %v776, %v1071
  %v1134 = vadd.f32 %v700, %v995
  %v1135 = vadd.f32 %v779, %v1074
  %v1136 = vadd.f32 %v702, %v997
  %v1137 = vadd.f32 %v781, %v1076
  %v1138 = vadd.f32 %v705, %v1000
  %v1139 = vadd.f32 %v784, %v1079
  %v1140 = vadd.f32 %v707, %v1002
  %v1141 = vadd.f32 %v786, %v1081
  %v1142 = vadd.f32 %v710, %v1005
  %v1143 = vadd.f32 %v789, %v1084
  %v1144 = vadd.f32 %v712, %v1007
  %v1145 = vadd.f32 %v791, %v1086
  %v1146 = vadd.f32 %v715, %v1010
  %v1147 = vadd.f32 %v794, %v1089
  %v1148 = vadd.f32 %v717, %v1012
  %v1149 = vadd.f32 %v796, %v1091
  %v1150 = vadd.f32 %v720, %v1015
  %v1151 = vadd.f32 %v799, %v1094
  %v1152 = vadd.f32 %v722, %v1017
  %v1153 = vadd.f32 %v801, %v1096
  %s1154 = scalar_lea.vmem %s1, 96
  %v1155 = vld [vmem:[%s1154] sm:$0xff]
  %v1156 = vld [vmem:[%s1154 + $0x8] sm:$0xff]
  %v1157 = vld [vmem:[%s1154 + $0x10] sm:$0xff]
  %v1158 = vld [vmem:[%s1154 + $0x18] sm:$0xff]
  %v1187 = vunpack.c.l.b16 %v127
  %v1188 = vunpack.c.l.b16 %v128
  %v1189 = vunpack.c.l.b16 %v129
  %v1190 = vunpack.c.l.b16 %v130
  %v1191 = vunpack.c.l.b16 %v131
  %v1192 = vunpack.c.l.b16 %v132
  %v1193 = vunpack.c.l.b16 %v133
  %v1194 = vunpack.c.l.b16 %v134
  %v1195 = vunpack.c.l.b16 %v135
  %v1196 = vunpack.c.l.b16 %v136
  %v1197 = vunpack.c.l.b16 %v137
  %v1198 = vunpack.c.l.b16 %v138
  %v1199 = vunpack.c.l.b16 %v139
  %v1200 = vunpack.c.l.b16 %v140
  %v1201 = vunpack.c.l.b16 %v141
  %v1202 = vunpack.c.l.b16 %v142
  %v1203 = vunpack.c.l.b16 %v143
  %v1204 = vunpack.c.l.b16 %v144
  %v1205 = vunpack.c.l.b16 %v145
  %v1206 = vunpack.c.l.b16 %v146
  %v1207 = vunpack.c.l.b16 %v147
  %v1208 = vunpack.c.l.b16 %v148
  %v1209 = vunpack.c.l.b16 %v149
  %v1210 = vunpack.c.l.b16 %v150
  %v1211 = vunpack.c.l.b16 %v151
  %v1212 = vunpack.c.l.b16 %v152
  %v1213 = vunpack.c.l.b16 %v153
  %v1214 = vunpack.c.l.b16 %v154
  %v1215 = vpack.c.b16 %v1188, %v1187
  %v1216 = vpack.c.b16 %v1190, %v1189
  %v1217 = vpack.c.b16 %v1192, %v1191
  %v1218 = vpack.c.b16 %v1194, %v1193
  %v1219 = vpack.c.b16 %v1196, %v1195
  %v1220 = vpack.c.b16 %v1198, %v1197
  %v1221 = vpack.c.b16 %v1200, %v1199
  %v1222 = vpack.c.b16 %v1202, %v1201
  %v1223 = vpack.c.b16 %v1204, %v1203
  %v1224 = vpack.c.b16 %v1206, %v1205
  %v1225 = vpack.c.b16 %v1208, %v1207
  %v1226 = vpack.c.b16 %v1210, %v1209
  %v1227 = vpack.c.b16 %v1212, %v1211
  %v1228 = vpack.c.b16 %v1214, %v1213
  %v1233 = vunpack.c.l.b16 %v1155
  %v1234 = vunpack.c.h.b16 %v1155
  %v1235 = vunpack.c.l.b16 %v1156
  %v1236 = vunpack.c.h.b16 %v1156
  %v1237 = vunpack.c.l.b16 %v1157
  %v1238 = vunpack.c.h.b16 %v1157
  %v1239 = vunpack.c.l.b16 %v1158
  %v1240 = vunpack.c.h.b16 %v1158
  %v1241 = vpack.c.b16 %v1235, %v1233
  %v1242 = vpack.c.b16 %v1236, %v1234
  %v1243 = vpack.c.b16 %v1239, %v1237
  %v1244 = vpack.c.b16 %v1240, %v1238
  %v1250 = vsel %vm312, %v1215, 0
  %v1253 = vsel %vm312, %v1216, 0
  %v1256 = vsel %vm312, %v1217, 0
  %v1259 = vsel %vm312, %v1218, 0
  %v1262 = vsel %vm312, %v1219, 0
  %v1265 = vsel %vm312, %v1220, 0
  %v1268 = vsel %vm312, %v1221, 0
  %v1271 = vsel %vm312, %v1222, 0
  %v1274 = vsel %vm312, %v1223, 0
  %v1277 = vsel %vm312, %v1224, 0
  %v1280 = vsel %vm312, %v1225, 0
  %v1283 = vsel %vm312, %v1226, 0
  %v1286 = vsel %vm312, %v1227, 0
  %v1289 = vsel %vm312, %v1228, 0
  %1291 = vmatpush.bf16.msra.mxu0 0
  %1292 = vmatpush.bf16.msra.mxu0 0
  %1293 = vmatpush.bf16.msra.mxu0 0
  %1294 = vmatpush.bf16.msra.mxu0 0
  %1295 = vmatpush.bf16.msra.mxu0 0
  %1296 = vmatpush.bf16.msra.mxu0 0
  %1297 = vmatpush.bf16.msra.mxu0 %v1243
  %1298 = vmatpush.bf16.msra.mxu0 %v1241
  %1299 = vmatmul.bf16.gmra.mxu0 %v1250
  %v1300 = vpop.f32.mrf.mxu0
  %v1301 = vadd.f32 0.0, %v1300
  %v1302 = vpop.f32.mrf.mxu0
  %v1303 = vadd.f32 0.0, %v1302
  %1304 = vmatmul.bf16.gmra.mxu0 %v1253
  %v1305 = vpop.f32.mrf.mxu0
  %v1306 = vadd.f32 0.0, %v1305
  %v1307 = vpop.f32.mrf.mxu0
  %v1308 = vadd.f32 0.0, %v1307
  %1309 = vmatmul.bf16.gmra.mxu0 %v1256
  %v1310 = vpop.f32.mrf.mxu0
  %v1311 = vadd.f32 0.0, %v1310
  %v1312 = vpop.f32.mrf.mxu0
  %v1313 = vadd.f32 0.0, %v1312
  %1314 = vmatmul.bf16.gmra.mxu0 %v1259
  %v1315 = vpop.f32.mrf.mxu0
  %v1316 = vadd.f32 0.0, %v1315
  %v1317 = vpop.f32.mrf.mxu0
  %v1318 = vadd.f32 0.0, %v1317
  %1319 = vmatmul.bf16.gmra.mxu0 %v1262
  %v1320 = vpop.f32.mrf.mxu0
  %v1321 = vadd.f32 0.0, %v1320
  %v1322 = vpop.f32.mrf.mxu0
  %v1323 = vadd.f32 0.0, %v1322
  %1324 = vmatmul.bf16.gmra.mxu0 %v1265
  %v1325 = vpop.f32.mrf.mxu0
  %v1326 = vadd.f32 0.0, %v1325
  %v1327 = vpop.f32.mrf.mxu0
  %v1328 = vadd.f32 0.0, %v1327
  %1329 = vmatmul.bf16.gmra.mxu0 %v1268
  %v1330 = vpop.f32.mrf.mxu0
  %v1331 = vadd.f32 0.0, %v1330
  %v1332 = vpop.f32.mrf.mxu0
  %v1333 = vadd.f32 0.0, %v1332
  %1334 = vmatmul.bf16.gmra.mxu0 %v1271
  %v1335 = vpop.f32.mrf.mxu0
  %v1336 = vadd.f32 0.0, %v1335
  %v1337 = vpop.f32.mrf.mxu0
  %v1338 = vadd.f32 0.0, %v1337
  %1339 = vmatmul.bf16.gmra.mxu0 %v1274
  %v1340 = vpop.f32.mrf.mxu0
  %v1341 = vadd.f32 0.0, %v1340
  %v1342 = vpop.f32.mrf.mxu0
  %v1343 = vadd.f32 0.0, %v1342
  %1344 = vmatmul.bf16.gmra.mxu0 %v1277
  %v1345 = vpop.f32.mrf.mxu0
  %v1346 = vadd.f32 0.0, %v1345
  %v1347 = vpop.f32.mrf.mxu0
  %v1348 = vadd.f32 0.0, %v1347
  %1349 = vmatmul.bf16.gmra.mxu0 %v1280
  %v1350 = vpop.f32.mrf.mxu0
  %v1351 = vadd.f32 0.0, %v1350
  %v1352 = vpop.f32.mrf.mxu0
  %v1353 = vadd.f32 0.0, %v1352
  %1354 = vmatmul.bf16.gmra.mxu0 %v1283
  %v1355 = vpop.f32.mrf.mxu0
  %v1356 = vadd.f32 0.0, %v1355
  %v1357 = vpop.f32.mrf.mxu0
  %v1358 = vadd.f32 0.0, %v1357
  %1359 = vmatmul.bf16.gmra.mxu0 %v1286
  %v1360 = vpop.f32.mrf.mxu0
  %v1361 = vadd.f32 0.0, %v1360
  %v1362 = vpop.f32.mrf.mxu0
  %v1363 = vadd.f32 0.0, %v1362
  %1364 = vmatmul.bf16.gmra.mxu0 %v1289
  %v1365 = vpop.f32.mrf.mxu0
  %v1366 = vadd.f32 0.0, %v1365
  %v1367 = vpop.f32.mrf.mxu0
  %v1368 = vadd.f32 0.0, %v1367
  %1369 = vdwg.mxu0
  %1370 = vmatpush.bf16.msra.mxu0 0
  %1371 = vmatpush.bf16.msra.mxu0 0
  %1372 = vmatpush.bf16.msra.mxu0 0
  %1373 = vmatpush.bf16.msra.mxu0 0
  %1374 = vmatpush.bf16.msra.mxu0 0
  %1375 = vmatpush.bf16.msra.mxu0 0
  %1376 = vmatpush.bf16.msra.mxu0 %v1244
  %1377 = vmatpush.bf16.msra.mxu0 %v1242
  %1378 = vmatmul.bf16.gmra.mxu0 %v1250
  %v1379 = vpop.f32.mrf.mxu0
  %v1380 = vadd.f32 0.0, %v1379
  %v1381 = vpop.f32.mrf.mxu0
  %v1382 = vadd.f32 0.0, %v1381
  %1383 = vmatmul.bf16.gmra.mxu0 %v1253
  %v1384 = vpop.f32.mrf.mxu0
  %v1385 = vadd.f32 0.0, %v1384
  %v1386 = vpop.f32.mrf.mxu0
  %v1387 = vadd.f32 0.0, %v1386
  %1388 = vmatmul.bf16.gmra.mxu0 %v1256
  %v1389 = vpop.f32.mrf.mxu0
  %v1390 = vadd.f32 0.0, %v1389
  %v1391 = vpop.f32.mrf.mxu0
  %v1392 = vadd.f32 0.0, %v1391
  %1393 = vmatmul.bf16.gmra.mxu0 %v1259
  %v1394 = vpop.f32.mrf.mxu0
  %v1395 = vadd.f32 0.0, %v1394
  %v1396 = vpop.f32.mrf.mxu0
  %v1397 = vadd.f32 0.0, %v1396
  %1398 = vmatmul.bf16.gmra.mxu0 %v1262
  %v1399 = vpop.f32.mrf.mxu0
  %v1400 = vadd.f32 0.0, %v1399
  %v1401 = vpop.f32.mrf.mxu0
  %v1402 = vadd.f32 0.0, %v1401
  %1403 = vmatmul.bf16.gmra.mxu0 %v1265
  %v1404 = vpop.f32.mrf.mxu0
  %v1405 = vadd.f32 0.0, %v1404
  %v1406 = vpop.f32.mrf.mxu0
  %v1407 = vadd.f32 0.0, %v1406
  %1408 = vmatmul.bf16.gmra.mxu0 %v1268
  %v1409 = vpop.f32.mrf.mxu0
  %v1410 = vadd.f32 0.0, %v1409
  %v1411 = vpop.f32.mrf.mxu0
  %v1412 = vadd.f32 0.0, %v1411
  %1413 = vmatmul.bf16.gmra.mxu0 %v1271
  %v1414 = vpop.f32.mrf.mxu0
  %v1415 = vadd.f32 0.0, %v1414
  %v1416 = vpop.f32.mrf.mxu0
  %v1417 = vadd.f32 0.0, %v1416
  %1418 = vmatmul.bf16.gmra.mxu0 %v1274
  %v1419 = vpop.f32.mrf.mxu0
  %v1420 = vadd.f32 0.0, %v1419
  %v1421 = vpop.f32.mrf.mxu0
  %v1422 = vadd.f32 0.0, %v1421
  %1423 = vmatmul.bf16.gmra.mxu0 %v1277
  %v1424 = vpop.f32.mrf.mxu0
  %v1425 = vadd.f32 0.0, %v1424
  %v1426 = vpop.f32.mrf.mxu0
  %v1427 = vadd.f32 0.0, %v1426
  %1428 = vmatmul.bf16.gmra.mxu0 %v1280
  %v1429 = vpop.f32.mrf.mxu0
  %v1430 = vadd.f32 0.0, %v1429
  %v1431 = vpop.f32.mrf.mxu0
  %v1432 = vadd.f32 0.0, %v1431
  %1433 = vmatmul.bf16.gmra.mxu0 %v1283
  %v1434 = vpop.f32.mrf.mxu0
  %v1435 = vadd.f32 0.0, %v1434
  %v1436 = vpop.f32.mrf.mxu0
  %v1437 = vadd.f32 0.0, %v1436
  %1438 = vmatmul.bf16.gmra.mxu0 %v1286
  %v1439 = vpop.f32.mrf.mxu0
  %v1440 = vadd.f32 0.0, %v1439
  %v1441 = vpop.f32.mrf.mxu0
  %v1442 = vadd.f32 0.0, %v1441
  %1443 = vmatmul.bf16.gmra.mxu0 %v1289
  %v1444 = vpop.f32.mrf.mxu0
  %v1445 = vadd.f32 0.0, %v1444
  %v1446 = vpop.f32.mrf.mxu0
  %v1447 = vadd.f32 0.0, %v1446
  %1448 = vdwg.mxu0
  %v1449 = vadd.f32 %v1098, %v1301
  %v1450 = vadd.f32 %v1099, %v1380
  %v1451 = vadd.f32 %v1100, %v1303
  %v1452 = vadd.f32 %v1101, %v1382
  %v1453 = vadd.f32 %v1102, %v1306
  %v1454 = vadd.f32 %v1103, %v1385
  %v1455 = vadd.f32 %v1104, %v1308
  %v1456 = vadd.f32 %v1105, %v1387
  %v1457 = vadd.f32 %v1106, %v1311
  %v1458 = vadd.f32 %v1107, %v1390
  %v1459 = vadd.f32 %v1108, %v1313
  %v1460 = vadd.f32 %v1109, %v1392
  %v1461 = vadd.f32 %v1110, %v1316
  %v1462 = vadd.f32 %v1111, %v1395
  %v1463 = vadd.f32 %v1112, %v1318
  %v1464 = vadd.f32 %v1113, %v1397
  %v1465 = vadd.f32 %v1114, %v1321
  %v1466 = vadd.f32 %v1115, %v1400
  %v1467 = vadd.f32 %v1116, %v1323
  %v1468 = vadd.f32 %v1117, %v1402
  %v1469 = vadd.f32 %v1118, %v1326
  %v1470 = vadd.f32 %v1119, %v1405
  %v1471 = vadd.f32 %v1120, %v1328
  %v1472 = vadd.f32 %v1121, %v1407
  %v1473 = vadd.f32 %v1122, %v1331
  %v1474 = vadd.f32 %v1123, %v1410
  %v1475 = vadd.f32 %v1124, %v1333
  %v1476 = vadd.f32 %v1125, %v1412
  %v1477 = vadd.f32 %v1126, %v1336
  %v1478 = vadd.f32 %v1127, %v1415
  %v1479 = vadd.f32 %v1128, %v1338
  %v1480 = vadd.f32 %v1129, %v1417
  %v1481 = vadd.f32 %v1130, %v1341
  %v1482 = vadd.f32 %v1131, %v1420
  %v1483 = vadd.f32 %v1132, %v1343
  %v1484 = vadd.f32 %v1133, %v1422
  %v1485 = vadd.f32 %v1134, %v1346
  %v1486 = vadd.f32 %v1135, %v1425
  %v1487 = vadd.f32 %v1136, %v1348
  %v1488 = vadd.f32 %v1137, %v1427
  %v1489 = vadd.f32 %v1138, %v1351
  %v1490 = vadd.f32 %v1139, %v1430
  %v1491 = vadd.f32 %v1140, %v1353
  %v1492 = vadd.f32 %v1141, %v1432
  %v1493 = vadd.f32 %v1142, %v1356
  %v1494 = vadd.f32 %v1143, %v1435
  %v1495 = vadd.f32 %v1144, %v1358
  %v1496 = vadd.f32 %v1145, %v1437
  %v1497 = vadd.f32 %v1146, %v1361
  %v1498 = vadd.f32 %v1147, %v1440
  %v1499 = vadd.f32 %v1148, %v1363
  %v1500 = vadd.f32 %v1149, %v1442
  %v1501 = vadd.f32 %v1150, %v1366
  %v1502 = vadd.f32 %v1151, %v1445
  %v1503 = vadd.f32 %v1152, %v1368
  %v1504 = vadd.f32 %v1153, %v1447
  %s1505 = scalar_lea.vmem %s1, 128
  %v1506 = vld [vmem:[%s1505] sm:$0xff]
  %v1507 = vld [vmem:[%s1505 + $0x8] sm:$0xff]
  %v1508 = vld [vmem:[%s1505 + $0x10] sm:$0xff]
  %v1509 = vld [vmem:[%s1505 + $0x18] sm:$0xff]
  %v1538 = vunpack.c.l.b16 %v156
  %v1539 = vunpack.c.l.b16 %v157
  %v1540 = vunpack.c.l.b16 %v158
  %v1541 = vunpack.c.l.b16 %v159
  %v1542 = vunpack.c.l.b16 %v160
  %v1543 = vunpack.c.l.b16 %v161
  %v1544 = vunpack.c.l.b16 %v162
  %v1545 = vunpack.c.l.b16 %v163
  %v1546 = vunpack.c.l.b16 %v164
  %v1547 = vunpack.c.l.b16 %v165
  %v1548 = vunpack.c.l.b16 %v166
  %v1549 = vunpack.c.l.b16 %v167
  %v1550 = vunpack.c.l.b16 %v168
  %v1551 = vunpack.c.l.b16 %v169
  %v1552 = vunpack.c.l.b16 %v170
  %v1553 = vunpack.c.l.b16 %v171
  %v1554 = vunpack.c.l.b16 %v172
  %v1555 = vunpack.c.l.b16 %v173
  %v1556 = vunpack.c.l.b16 %v174
  %v1557 = vunpack.c.l.b16 %v175
  %v1558 = vunpack.c.l.b16 %v176
  %v1559 = vunpack.c.l.b16 %v177
  %v1560 = vunpack.c.l.b16 %v178
  %v1561 = vunpack.c.l.b16 %v179
  %v1562 = vunpack.c.l.b16 %v180
  %v1563 = vunpack.c.l.b16 %v181
  %v1564 = vunpack.c.l.b16 %v182
  %v1565 = vunpack.c.l.b16 %v183
  %v1566 = vpack.c.b16 %v1539, %v1538
  %v1567 = vpack.c.b16 %v1541, %v1540
  %v1568 = vpack.c.b16 %v1543, %v1542
  %v1569 = vpack.c.b16 %v1545, %v1544
  %v1570 = vpack.c.b16 %v1547, %v1546
  %v1571 = vpack.c.b16 %v1549, %v1548
  %v1572 = vpack.c.b16 %v1551, %v1550
  %v1573 = vpack.c.b16 %v1553, %v1552
  %v1574 = vpack.c.b16 %v1555, %v1554
  %v1575 = vpack.c.b16 %v1557, %v1556
  %v1576 = vpack.c.b16 %v1559, %v1558
  %v1577 = vpack.c.b16 %v1561, %v1560
  %v1578 = vpack.c.b16 %v1563, %v1562
  %v1579 = vpack.c.b16 %v1565, %v1564
  %v1584 = vunpack.c.l.b16 %v1506
  %v1585 = vunpack.c.h.b16 %v1506
  %v1586 = vunpack.c.l.b16 %v1507
  %v1587 = vunpack.c.h.b16 %v1507
  %v1588 = vunpack.c.l.b16 %v1508
  %v1589 = vunpack.c.h.b16 %v1508
  %v1590 = vunpack.c.l.b16 %v1509
  %v1591 = vunpack.c.h.b16 %v1509
  %v1592 = vpack.c.b16 %v1586, %v1584
  %v1593 = vpack.c.b16 %v1587, %v1585
  %v1594 = vpack.c.b16 %v1590, %v1588
  %v1595 = vpack.c.b16 %v1591, %v1589
  %v1601 = vsel %vm312, %v1566, 0
  %v1604 = vsel %vm312, %v1567, 0
  %v1607 = vsel %vm312, %v1568, 0
  %v1610 = vsel %vm312, %v1569, 0
  %v1613 = vsel %vm312, %v1570, 0
  %v1616 = vsel %vm312, %v1571, 0
  %v1619 = vsel %vm312, %v1572, 0
  %v1622 = vsel %vm312, %v1573, 0
  %v1625 = vsel %vm312, %v1574, 0
  %v1628 = vsel %vm312, %v1575, 0
  %v1631 = vsel %vm312, %v1576, 0
  %v1634 = vsel %vm312, %v1577, 0
  %v1637 = vsel %vm312, %v1578, 0
  %v1640 = vsel %vm312, %v1579, 0
  %1642 = vmatpush.bf16.msra.mxu0 0
  %1643 = vmatpush.bf16.msra.mxu0 0
  %1644 = vmatpush.bf16.msra.mxu0 0
  %1645 = vmatpush.bf16.msra.mxu0 0
  %1646 = vmatpush.bf16.msra.mxu0 0
  %1647 = vmatpush.bf16.msra.mxu0 0
  %1648 = vmatpush.bf16.msra.mxu0 %v1594
  %1649 = vmatpush.bf16.msra.mxu0 %v1592
  %1650 = vmatmul.bf16.gmra.mxu0 %v1601
  %v1651 = vpop.f32.mrf.mxu0
  %v1652 = vadd.f32 0.0, %v1651
  %v1653 = vpop.f32.mrf.mxu0
  %v1654 = vadd.f32 0.0, %v1653
  %1655 = vmatmul.bf16.gmra.mxu0 %v1604
  %v1656 = vpop.f32.mrf.mxu0
  %v1657 = vadd.f32 0.0, %v1656
  %v1658 = vpop.f32.mrf.mxu0
  %v1659 = vadd.f32 0.0, %v1658
  %1660 = vmatmul.bf16.gmra.mxu0 %v1607
  %v1661 = vpop.f32.mrf.mxu0
  %v1662 = vadd.f32 0.0, %v1661
  %v1663 = vpop.f32.mrf.mxu0
  %v1664 = vadd.f32 0.0, %v1663
  %1665 = vmatmul.bf16.gmra.mxu0 %v1610
  %v1666 = vpop.f32.mrf.mxu0
  %v1667 = vadd.f32 0.0, %v1666
  %v1668 = vpop.f32.mrf.mxu0
  %v1669 = vadd.f32 0.0, %v1668
  %1670 = vmatmul.bf16.gmra.mxu0 %v1613
  %v1671 = vpop.f32.mrf.mxu0
  %v1672 = vadd.f32 0.0, %v1671
  %v1673 = vpop.f32.mrf.mxu0
  %v1674 = vadd.f32 0.0, %v1673
  %1675 = vmatmul.bf16.gmra.mxu0 %v1616
  %v1676 = vpop.f32.mrf.mxu0
  %v1677 = vadd.f32 0.0, %v1676
  %v1678 = vpop.f32.mrf.mxu0
  %v1679 = vadd.f32 0.0, %v1678
  %1680 = vmatmul.bf16.gmra.mxu0 %v1619
  %v1681 = vpop.f32.mrf.mxu0
  %v1682 = vadd.f32 0.0, %v1681
  %v1683 = vpop.f32.mrf.mxu0
  %v1684 = vadd.f32 0.0, %v1683
  %1685 = vmatmul.bf16.gmra.mxu0 %v1622
  %v1686 = vpop.f32.mrf.mxu0
  %v1687 = vadd.f32 0.0, %v1686
  %v1688 = vpop.f32.mrf.mxu0
  %v1689 = vadd.f32 0.0, %v1688
  %1690 = vmatmul.bf16.gmra.mxu0 %v1625
  %v1691 = vpop.f32.mrf.mxu0
  %v1692 = vadd.f32 0.0, %v1691
  %v1693 = vpop.f32.mrf.mxu0
  %v1694 = vadd.f32 0.0, %v1693
  %1695 = vmatmul.bf16.gmra.mxu0 %v1628
  %v1696 = vpop.f32.mrf.mxu0
  %v1697 = vadd.f32 0.0, %v1696
  %v1698 = vpop.f32.mrf.mxu0
  %v1699 = vadd.f32 0.0, %v1698
  %1700 = vmatmul.bf16.gmra.mxu0 %v1631
  %v1701 = vpop.f32.mrf.mxu0
  %v1702 = vadd.f32 0.0, %v1701
  %v1703 = vpop.f32.mrf.mxu0
  %v1704 = vadd.f32 0.0, %v1703
  %1705 = vmatmul.bf16.gmra.mxu0 %v1634
  %v1706 = vpop.f32.mrf.mxu0
  %v1707 = vadd.f32 0.0, %v1706
  %v1708 = vpop.f32.mrf.mxu0
  %v1709 = vadd.f32 0.0, %v1708
  %1710 = vmatmul.bf16.gmra.mxu0 %v1637
  %v1711 = vpop.f32.mrf.mxu0
  %v1712 = vadd.f32 0.0, %v1711
  %v1713 = vpop.f32.mrf.mxu0
  %v1714 = vadd.f32 0.0, %v1713
  %1715 = vmatmul.bf16.gmra.mxu0 %v1640
  %v1716 = vpop.f32.mrf.mxu0
  %v1717 = vadd.f32 0.0, %v1716
  %v1718 = vpop.f32.mrf.mxu0
  %v1719 = vadd.f32 0.0, %v1718
  %1720 = vdwg.mxu0
  %1721 = vmatpush.bf16.msra.mxu0 0
  %1722 = vmatpush.bf16.msra.mxu0 0
  %1723 = vmatpush.bf16.msra.mxu0 0
  %1724 = vmatpush.bf16.msra.mxu0 0
  %1725 = vmatpush.bf16.msra.mxu0 0
  %1726 = vmatpush.bf16.msra.mxu0 0
  %1727 = vmatpush.bf16.msra.mxu0 %v1595
  %1728 = vmatpush.bf16.msra.mxu0 %v1593
  %1729 = vmatmul.bf16.gmra.mxu0 %v1601
  %v1730 = vpop.f32.mrf.mxu0
  %v1731 = vadd.f32 0.0, %v1730
  %v1732 = vpop.f32.mrf.mxu0
  %v1733 = vadd.f32 0.0, %v1732
  %1734 = vmatmul.bf16.gmra.mxu0 %v1604
  %v1735 = vpop.f32.mrf.mxu0
  %v1736 = vadd.f32 0.0, %v1735
  %v1737 = vpop.f32.mrf.mxu0
  %v1738 = vadd.f32 0.0, %v1737
  %1739 = vmatmul.bf16.gmra.mxu0 %v1607
  %v1740 = vpop.f32.mrf.mxu0
  %v1741 = vadd.f32 0.0, %v1740
  %v1742 = vpop.f32.mrf.mxu0
  %v1743 = vadd.f32 0.0, %v1742
  %1744 = vmatmul.bf16.gmra.mxu0 %v1610
  %v1745 = vpop.f32.mrf.mxu0
  %v1746 = vadd.f32 0.0, %v1745
  %v1747 = vpop.f32.mrf.mxu0
  %v1748 = vadd.f32 0.0, %v1747
  %1749 = vmatmul.bf16.gmra.mxu0 %v1613
  %v1750 = vpop.f32.mrf.mxu0
  %v1751 = vadd.f32 0.0, %v1750
  %v1752 = vpop.f32.mrf.mxu0
  %v1753 = vadd.f32 0.0, %v1752
  %1754 = vmatmul.bf16.gmra.mxu0 %v1616
  %v1755 = vpop.f32.mrf.mxu0
  %v1756 = vadd.f32 0.0, %v1755
  %v1757 = vpop.f32.mrf.mxu0
  %v1758 = vadd.f32 0.0, %v1757
  %1759 = vmatmul.bf16.gmra.mxu0 %v1619
  %v1760 = vpop.f32.mrf.mxu0
  %v1761 = vadd.f32 0.0, %v1760
  %v1762 = vpop.f32.mrf.mxu0
  %v1763 = vadd.f32 0.0, %v1762
  %1764 = vmatmul.bf16.gmra.mxu0 %v1622
  %v1765 = vpop.f32.mrf.mxu0
  %v1766 = vadd.f32 0.0, %v1765
  %v1767 = vpop.f32.mrf.mxu0
  %v1768 = vadd.f32 0.0, %v1767
  %1769 = vmatmul.bf16.gmra.mxu0 %v1625
  %v1770 = vpop.f32.mrf.mxu0
  %v1771 = vadd.f32 0.0, %v1770
  %v1772 = vpop.f32.mrf.mxu0
  %v1773 = vadd.f32 0.0, %v1772
  %1774 = vmatmul.bf16.gmra.mxu0 %v1628
  %v1775 = vpop.f32.mrf.mxu0
  %v1776 = vadd.f32 0.0, %v1775
  %v1777 = vpop.f32.mrf.mxu0
  %v1778 = vadd.f32 0.0, %v1777
  %1779 = vmatmul.bf16.gmra.mxu0 %v1631
  %v1780 = vpop.f32.mrf.mxu0
  %v1781 = vadd.f32 0.0, %v1780
  %v1782 = vpop.f32.mrf.mxu0
  %v1783 = vadd.f32 0.0, %v1782
  %1784 = vmatmul.bf16.gmra.mxu0 %v1634
  %v1785 = vpop.f32.mrf.mxu0
  %v1786 = vadd.f32 0.0, %v1785
  %v1787 = vpop.f32.mrf.mxu0
  %v1788 = vadd.f32 0.0, %v1787
  %1789 = vmatmul.bf16.gmra.mxu0 %v1637
  %v1790 = vpop.f32.mrf.mxu0
  %v1791 = vadd.f32 0.0, %v1790
  %v1792 = vpop.f32.mrf.mxu0
  %v1793 = vadd.f32 0.0, %v1792
  %1794 = vmatmul.bf16.gmra.mxu0 %v1640
  %v1795 = vpop.f32.mrf.mxu0
  %v1796 = vadd.f32 0.0, %v1795
  %v1797 = vpop.f32.mrf.mxu0
  %v1798 = vadd.f32 0.0, %v1797
  %1799 = vdwg.mxu0
  %v1800 = vadd.f32 %v1449, %v1652
  %v1801 = vadd.f32 %v1450, %v1731
  %v1802 = vadd.f32 %v1451, %v1654
  %v1803 = vadd.f32 %v1452, %v1733
  %v1804 = vadd.f32 %v1453, %v1657
  %v1805 = vadd.f32 %v1454, %v1736
  %v1806 = vadd.f32 %v1455, %v1659
  %v1807 = vadd.f32 %v1456, %v1738
  %v1808 = vadd.f32 %v1457, %v1662
  %v1809 = vadd.f32 %v1458, %v1741
  %v1810 = vadd.f32 %v1459, %v1664
  %v1811 = vadd.f32 %v1460, %v1743
  %v1812 = vadd.f32 %v1461, %v1667
  %v1813 = vadd.f32 %v1462, %v1746
  %v1814 = vadd.f32 %v1463, %v1669
  %v1815 = vadd.f32 %v1464, %v1748
  %v1816 = vadd.f32 %v1465, %v1672
  %v1817 = vadd.f32 %v1466, %v1751
  %v1818 = vadd.f32 %v1467, %v1674
  %v1819 = vadd.f32 %v1468, %v1753
  %v1820 = vadd.f32 %v1469, %v1677
  %v1821 = vadd.f32 %v1470, %v1756
  %v1822 = vadd.f32 %v1471, %v1679
  %v1823 = vadd.f32 %v1472, %v1758
  %v1824 = vadd.f32 %v1473, %v1682
  %v1825 = vadd.f32 %v1474, %v1761
  %v1826 = vadd.f32 %v1475, %v1684
  %v1827 = vadd.f32 %v1476, %v1763
  %v1828 = vadd.f32 %v1477, %v1687
  %v1829 = vadd.f32 %v1478, %v1766
  %v1830 = vadd.f32 %v1479, %v1689
  %v1831 = vadd.f32 %v1480, %v1768
  %v1832 = vadd.f32 %v1481, %v1692
  %v1833 = vadd.f32 %v1482, %v1771
  %v1834 = vadd.f32 %v1483, %v1694
  %v1835 = vadd.f32 %v1484, %v1773
  %v1836 = vadd.f32 %v1485, %v1697
  %v1837 = vadd.f32 %v1486, %v1776
  %v1838 = vadd.f32 %v1487, %v1699
  %v1839 = vadd.f32 %v1488, %v1778
  %v1840 = vadd.f32 %v1489, %v1702
  %v1841 = vadd.f32 %v1490, %v1781
  %v1842 = vadd.f32 %v1491, %v1704
  %v1843 = vadd.f32 %v1492, %v1783
  %v1844 = vadd.f32 %v1493, %v1707
  %v1845 = vadd.f32 %v1494, %v1786
  %v1846 = vadd.f32 %v1495, %v1709
  %v1847 = vadd.f32 %v1496, %v1788
  %v1848 = vadd.f32 %v1497, %v1712
  %v1849 = vadd.f32 %v1498, %v1791
  %v1850 = vadd.f32 %v1499, %v1714
  %v1851 = vadd.f32 %v1500, %v1793
  %v1852 = vadd.f32 %v1501, %v1717
  %v1853 = vadd.f32 %v1502, %v1796
  %v1854 = vadd.f32 %v1503, %v1719
  %v1855 = vadd.f32 %v1504, %v1798
  %v1857 = vperm.slane %v39, 0
  %v1858 = vperm.slane %v39, 1
  %v1861 = vadd.f32 %v1800, %v1857
  %v1862 = vadd.f32 %v1801, %v1858
  %v1863 = vadd.f32 %v1802, %v1857
  %v1864 = vadd.f32 %v1803, %v1858
  %v1865 = vadd.f32 %v1804, %v1857
  %v1866 = vadd.f32 %v1805, %v1858
  %v1867 = vadd.f32 %v1806, %v1857
  %v1868 = vadd.f32 %v1807, %v1858
  %v1869 = vadd.f32 %v1808, %v1857
  %v1870 = vadd.f32 %v1809, %v1858
  %v1871 = vadd.f32 %v1810, %v1857
  %v1872 = vadd.f32 %v1811, %v1858
  %v1873 = vadd.f32 %v1812, %v1857
  %v1874 = vadd.f32 %v1813, %v1858
  %v1875 = vadd.f32 %v1814, %v1857
  %v1876 = vadd.f32 %v1815, %v1858
  %v1877 = vadd.f32 %v1816, %v1857
  %v1878 = vadd.f32 %v1817, %v1858
  %v1879 = vadd.f32 %v1818, %v1857
  %v1880 = vadd.f32 %v1819, %v1858
  %v1881 = vadd.f32 %v1820, %v1857
  %v1882 = vadd.f32 %v1821, %v1858
  %v1883 = vadd.f32 %v1822, %v1857
  %v1884 = vadd.f32 %v1823, %v1858
  %v1885 = vadd.f32 %v1824, %v1857
  %v1886 = vadd.f32 %v1825, %v1858
  %v1887 = vadd.f32 %v1826, %v1857
  %v1888 = vadd.f32 %v1827, %v1858
  %v1889 = vadd.f32 %v1828, %v1857
  %v1890 = vadd.f32 %v1829, %v1858
  %v1891 = vadd.f32 %v1830, %v1857
  %v1892 = vadd.f32 %v1831, %v1858
  %v1893 = vadd.f32 %v1832, %v1857
  %v1894 = vadd.f32 %v1833, %v1858
  %v1895 = vadd.f32 %v1834, %v1857
  %v1896 = vadd.f32 %v1835, %v1858
  %v1897 = vadd.f32 %v1836, %v1857
  %v1898 = vadd.f32 %v1837, %v1858
  %v1899 = vadd.f32 %v1838, %v1857
  %v1900 = vadd.f32 %v1839, %v1858
  %v1901 = vadd.f32 %v1840, %v1857
  %v1902 = vadd.f32 %v1841, %v1858
  %v1903 = vadd.f32 %v1842, %v1857
  %v1904 = vadd.f32 %v1843, %v1858
  %v1905 = vadd.f32 %v1844, %v1857
  %v1906 = vadd.f32 %v1845, %v1858
  %v1907 = vadd.f32 %v1846, %v1857
  %v1908 = vadd.f32 %v1847, %v1858
  %v1909 = vadd.f32 %v1848, %v1857
  %v1910 = vadd.f32 %v1849, %v1858
  %v1911 = vadd.f32 %v1850, %v1857
  %v1912 = vadd.f32 %v1851, %v1858
  %v1913 = vadd.f32 %v1852, %v1857
  %v1914 = vadd.f32 %v1853, %v1858
  %v1915 = vadd.f32 %v1854, %v1857
  %v1916 = vadd.f32 %v1855, %v1858
  %v1917 = vmax.f32 %v1861, 0.0
  %v1918 = vmax.f32 %v1862, 0.0
  %v1919 = vmax.f32 %v1863, 0.0
  %v1920 = vmax.f32 %v1864, 0.0
  %v1921 = vmax.f32 %v1865, 0.0
  %v1922 = vmax.f32 %v1866, 0.0
  %v1923 = vmax.f32 %v1867, 0.0
  %v1924 = vmax.f32 %v1868, 0.0
  %v1925 = vmax.f32 %v1869, 0.0
  %v1926 = vmax.f32 %v1870, 0.0
  %v1927 = vmax.f32 %v1871, 0.0
  %v1928 = vmax.f32 %v1872, 0.0
  %v1929 = vmax.f32 %v1873, 0.0
  %v1930 = vmax.f32 %v1874, 0.0
  %v1931 = vmax.f32 %v1875, 0.0
  %v1932 = vmax.f32 %v1876, 0.0
  %v1933 = vmax.f32 %v1877, 0.0
  %v1934 = vmax.f32 %v1878, 0.0
  %v1935 = vmax.f32 %v1879, 0.0
  %v1936 = vmax.f32 %v1880, 0.0
  %v1937 = vmax.f32 %v1881, 0.0
  %v1938 = vmax.f32 %v1882, 0.0
  %v1939 = vmax.f32 %v1883, 0.0
  %v1940 = vmax.f32 %v1884, 0.0
  %v1941 = vmax.f32 %v1885, 0.0
  %v1942 = vmax.f32 %v1886, 0.0
  %v1943 = vmax.f32 %v1887, 0.0
  %v1944 = vmax.f32 %v1888, 0.0
  %v1945 = vmax.f32 %v1889, 0.0
  %v1946 = vmax.f32 %v1890, 0.0
  %v1947 = vmax.f32 %v1891, 0.0
  %v1948 = vmax.f32 %v1892, 0.0
  %v1949 = vmax.f32 %v1893, 0.0
  %v1950 = vmax.f32 %v1894, 0.0
  %v1951 = vmax.f32 %v1895, 0.0
  %v1952 = vmax.f32 %v1896, 0.0
  %v1953 = vmax.f32 %v1897, 0.0
  %v1954 = vmax.f32 %v1898, 0.0
  %v1955 = vmax.f32 %v1899, 0.0
  %v1956 = vmax.f32 %v1900, 0.0
  %v1957 = vmax.f32 %v1901, 0.0
  %v1958 = vmax.f32 %v1902, 0.0
  %v1959 = vmax.f32 %v1903, 0.0
  %v1960 = vmax.f32 %v1904, 0.0
  %v1961 = vmax.f32 %v1905, 0.0
  %v1962 = vmax.f32 %v1906, 0.0
  %v1963 = vmax.f32 %v1907, 0.0
  %v1964 = vmax.f32 %v1908, 0.0
  %v1965 = vmax.f32 %v1909, 0.0
  %v1966 = vmax.f32 %v1910, 0.0
  %v1967 = vmax.f32 %v1911, 0.0
  %v1968 = vmax.f32 %v1912, 0.0
  %v1969 = vmax.f32 %v1913, 0.0
  %v1970 = vmax.f32 %v1914, 0.0
  %v1971 = vmax.f32 %v1915, 0.0
  %v1972 = vmax.f32 %v1916, 0.0
  %1973 = vmatpush.bf16.msra.mxu0 0
  %1974 = vmatpush.bf16.msra.mxu0 0
  %1975 = vmatpush.bf16.msra.mxu0 0
  %1976 = vmatpush.bf16.msra.mxu0 0
  %1977 = vmatpush.bf16.msra.mxu0 0
  %1978 = vmatpush.bf16.msra.mxu0 0
  %1979 = vmatpush.bf16.msra.mxu0 %v306
  %1980 = vmatpush.bf16.msra.mxu0 %v304
  %1981 = vmatmul.bf16.gmra.mxu0 %v899
  %v1982 = vpop.f32.mrf.mxu0
  %v1983 = vadd.f32 0.0, %v1982
  %v1984 = vpop.f32.mrf.mxu0
  %v1985 = vadd.f32 0.0, %v1984
  %1986 = vmatmul.bf16.gmra.mxu0 %v902
  %v1987 = vpop.f32.mrf.mxu0
  %v1988 = vadd.f32 0.0, %v1987
  %v1989 = vpop.f32.mrf.mxu0
  %v1990 = vadd.f32 0.0, %v1989
  %1991 = vmatmul.bf16.gmra.mxu0 %v905
  %v1992 = vpop.f32.mrf.mxu0
  %v1993 = vadd.f32 0.0, %v1992
  %v1994 = vpop.f32.mrf.mxu0
  %v1995 = vadd.f32 0.0, %v1994
  %1996 = vmatmul.bf16.gmra.mxu0 %v908
  %v1997 = vpop.f32.mrf.mxu0
  %v1998 = vadd.f32 0.0, %v1997
  %v1999 = vpop.f32.mrf.mxu0
  %v2000 = vadd.f32 0.0, %v1999
  %2001 = vmatmul.bf16.gmra.mxu0 %v911
  %v2002 = vpop.f32.mrf.mxu0
  %v2003 = vadd.f32 0.0, %v2002
  %v2004 = vpop.f32.mrf.mxu0
  %v2005 = vadd.f32 0.0, %v2004
  %2006 = vmatmul.bf16.gmra.mxu0 %v914
  %v2007 = vpop.f32.mrf.mxu0
  %v2008 = vadd.f32 0.0, %v2007
  %v2009 = vpop.f32.mrf.mxu0
  %v2010 = vadd.f32 0.0, %v2009
  %2011 = vmatmul.bf16.gmra.mxu0 %v917
  %v2012 = vpop.f32.mrf.mxu0
  %v2013 = vadd.f32 0.0, %v2012
  %v2014 = vpop.f32.mrf.mxu0
  %v2015 = vadd.f32 0.0, %v2014
  %2016 = vmatmul.bf16.gmra.mxu0 %v920
  %v2017 = vpop.f32.mrf.mxu0
  %v2018 = vadd.f32 0.0, %v2017
  %v2019 = vpop.f32.mrf.mxu0
  %v2020 = vadd.f32 0.0, %v2019
  %2021 = vmatmul.bf16.gmra.mxu0 %v923
  %v2022 = vpop.f32.mrf.mxu0
  %v2023 = vadd.f32 0.0, %v2022
  %v2024 = vpop.f32.mrf.mxu0
  %v2025 = vadd.f32 0.0, %v2024
  %2026 = vmatmul.bf16.gmra.mxu0 %v926
  %v2027 = vpop.f32.mrf.mxu0
  %v2028 = vadd.f32 0.0, %v2027
  %v2029 = vpop.f32.mrf.mxu0
  %v2030 = vadd.f32 0.0, %v2029
  %2031 = vmatmul.bf16.gmra.mxu0 %v929
  %v2032 = vpop.f32.mrf.mxu0
  %v2033 = vadd.f32 0.0, %v2032
  %v2034 = vpop.f32.mrf.mxu0
  %v2035 = vadd.f32 0.0, %v2034
  %2036 = vmatmul.bf16.gmra.mxu0 %v932
  %v2037 = vpop.f32.mrf.mxu0
  %v2038 = vadd.f32 0.0, %v2037
  %v2039 = vpop.f32.mrf.mxu0
  %v2040 = vadd.f32 0.0, %v2039
  %2041 = vmatmul.bf16.gmra.mxu0 %v935
  %v2042 = vpop.f32.mrf.mxu0
  %v2043 = vadd.f32 0.0, %v2042
  %v2044 = vpop.f32.mrf.mxu0
  %v2045 = vadd.f32 0.0, %v2044
  %2046 = vmatmul.bf16.gmra.mxu0 %v938
  %v2047 = vpop.f32.mrf.mxu0
  %v2048 = vadd.f32 0.0, %v2047
  %v2049 = vpop.f32.mrf.mxu0
  %v2050 = vadd.f32 0.0, %v2049
  %2051 = vdwg.mxu0
  %2052 = vmatpush.bf16.msra.mxu0 0
  %2053 = vmatpush.bf16.msra.mxu0 0
  %2054 = vmatpush.bf16.msra.mxu0 0
  %2055 = vmatpush.bf16.msra.mxu0 0
  %2056 = vmatpush.bf16.msra.mxu0 0
  %2057 = vmatpush.bf16.msra.mxu0 0
  %2058 = vmatpush.bf16.msra.mxu0 %v307
  %2059 = vmatpush.bf16.msra.mxu0 %v305
  %2060 = vmatmul.bf16.gmra.mxu0 %v899
  %v2061 = vpop.f32.mrf.mxu0
  %v2062 = vadd.f32 0.0, %v2061
  %v2063 = vpop.f32.mrf.mxu0
  %v2064 = vadd.f32 0.0, %v2063
  %2065 = vmatmul.bf16.gmra.mxu0 %v902
  %v2066 = vpop.f32.mrf.mxu0
  %v2067 = vadd.f32 0.0, %v2066
  %v2068 = vpop.f32.mrf.mxu0
  %v2069 = vadd.f32 0.0, %v2068
  %2070 = vmatmul.bf16.gmra.mxu0 %v905
  %v2071 = vpop.f32.mrf.mxu0
  %v2072 = vadd.f32 0.0, %v2071
  %v2073 = vpop.f32.mrf.mxu0
  %v2074 = vadd.f32 0.0, %v2073
  %2075 = vmatmul.bf16.gmra.mxu0 %v908
  %v2076 = vpop.f32.mrf.mxu0
  %v2077 = vadd.f32 0.0, %v2076
  %v2078 = vpop.f32.mrf.mxu0
  %v2079 = vadd.f32 0.0, %v2078
  %2080 = vmatmul.bf16.gmra.mxu0 %v911
  %v2081 = vpop.f32.mrf.mxu0
  %v2082 = vadd.f32 0.0, %v2081
  %v2083 = vpop.f32.mrf.mxu0
  %v2084 = vadd.f32 0.0, %v2083
  %2085 = vmatmul.bf16.gmra.mxu0 %v914
  %v2086 = vpop.f32.mrf.mxu0
  %v2087 = vadd.f32 0.0, %v2086
  %v2088 = vpop.f32.mrf.mxu0
  %v2089 = vadd.f32 0.0, %v2088
  %2090 = vmatmul.bf16.gmra.mxu0 %v917
  %v2091 = vpop.f32.mrf.mxu0
  %v2092 = vadd.f32 0.0, %v2091
  %v2093 = vpop.f32.mrf.mxu0
  %v2094 = vadd.f32 0.0, %v2093
  %2095 = vmatmul.bf16.gmra.mxu0 %v920
  %v2096 = vpop.f32.mrf.mxu0
  %v2097 = vadd.f32 0.0, %v2096
  %v2098 = vpop.f32.mrf.mxu0
  %v2099 = vadd.f32 0.0, %v2098
  %2100 = vmatmul.bf16.gmra.mxu0 %v923
  %v2101 = vpop.f32.mrf.mxu0
  %v2102 = vadd.f32 0.0, %v2101
  %v2103 = vpop.f32.mrf.mxu0
  %v2104 = vadd.f32 0.0, %v2103
  %2105 = vmatmul.bf16.gmra.mxu0 %v926
  %v2106 = vpop.f32.mrf.mxu0
  %v2107 = vadd.f32 0.0, %v2106
  %v2108 = vpop.f32.mrf.mxu0
  %v2109 = vadd.f32 0.0, %v2108
  %2110 = vmatmul.bf16.gmra.mxu0 %v929
  %v2111 = vpop.f32.mrf.mxu0
  %v2112 = vadd.f32 0.0, %v2111
  %v2113 = vpop.f32.mrf.mxu0
  %v2114 = vadd.f32 0.0, %v2113
  %2115 = vmatmul.bf16.gmra.mxu0 %v932
  %v2116 = vpop.f32.mrf.mxu0
  %v2117 = vadd.f32 0.0, %v2116
  %v2118 = vpop.f32.mrf.mxu0
  %v2119 = vadd.f32 0.0, %v2118
  %2120 = vmatmul.bf16.gmra.mxu0 %v935
  %v2121 = vpop.f32.mrf.mxu0
  %v2122 = vadd.f32 0.0, %v2121
  %v2123 = vpop.f32.mrf.mxu0
  %v2124 = vadd.f32 0.0, %v2123
  %2125 = vmatmul.bf16.gmra.mxu0 %v938
  %v2126 = vpop.f32.mrf.mxu0
  %v2127 = vadd.f32 0.0, %v2126
  %v2128 = vpop.f32.mrf.mxu0
  %v2129 = vadd.f32 0.0, %v2128
  %2130 = vdwg.mxu0
  %2131 = vmatpush.bf16.msra.mxu0 0
  %2132 = vmatpush.bf16.msra.mxu0 0
  %2133 = vmatpush.bf16.msra.mxu0 0
  %2134 = vmatpush.bf16.msra.mxu0 0
  %2135 = vmatpush.bf16.msra.mxu0 0
  %2136 = vmatpush.bf16.msra.mxu0 0
  %2137 = vmatpush.bf16.msra.mxu0 %v597
  %2138 = vmatpush.bf16.msra.mxu0 %v595
  %2139 = vmatmul.bf16.gmra.mxu0 %v314
  %v2140 = vpop.f32.mrf.mxu0
  %v2141 = vadd.f32 %v1983, %v2140
  %v2142 = vpop.f32.mrf.mxu0
  %v2143 = vadd.f32 %v1985, %v2142
  %2144 = vmatmul.bf16.gmra.mxu0 %v317
  %v2145 = vpop.f32.mrf.mxu0
  %v2146 = vadd.f32 %v1988, %v2145
  %v2147 = vpop.f32.mrf.mxu0
  %v2148 = vadd.f32 %v1990, %v2147
  %2149 = vmatmul.bf16.gmra.mxu0 %v320
  %v2150 = vpop.f32.mrf.mxu0
  %v2151 = vadd.f32 %v1993, %v2150
  %v2152 = vpop.f32.mrf.mxu0
  %v2153 = vadd.f32 %v1995, %v2152
  %2154 = vmatmul.bf16.gmra.mxu0 %v323
  %v2155 = vpop.f32.mrf.mxu0
  %v2156 = vadd.f32 %v1998, %v2155
  %v2157 = vpop.f32.mrf.mxu0
  %v2158 = vadd.f32 %v2000, %v2157
  %2159 = vmatmul.bf16.gmra.mxu0 %v326
  %v2160 = vpop.f32.mrf.mxu0
  %v2161 = vadd.f32 %v2003, %v2160
  %v2162 = vpop.f32.mrf.mxu0
  %v2163 = vadd.f32 %v2005, %v2162
  %2164 = vmatmul.bf16.gmra.mxu0 %v329
  %v2165 = vpop.f32.mrf.mxu0
  %v2166 = vadd.f32 %v2008, %v2165
  %v2167 = vpop.f32.mrf.mxu0
  %v2168 = vadd.f32 %v2010, %v2167
  %2169 = vmatmul.bf16.gmra.mxu0 %v332
  %v2170 = vpop.f32.mrf.mxu0
  %v2171 = vadd.f32 %v2013, %v2170
  %v2172 = vpop.f32.mrf.mxu0
  %v2173 = vadd.f32 %v2015, %v2172
  %2174 = vmatmul.bf16.gmra.mxu0 %v335
  %v2175 = vpop.f32.mrf.mxu0
  %v2176 = vadd.f32 %v2018, %v2175
  %v2177 = vpop.f32.mrf.mxu0
  %v2178 = vadd.f32 %v2020, %v2177
  %2179 = vmatmul.bf16.gmra.mxu0 %v338
  %v2180 = vpop.f32.mrf.mxu0
  %v2181 = vadd.f32 %v2023, %v2180
  %v2182 = vpop.f32.mrf.mxu0
  %v2183 = vadd.f32 %v2025, %v2182
  %2184 = vmatmul.bf16.gmra.mxu0 %v341
  %v2185 = vpop.f32.mrf.mxu0
  %v2186 = vadd.f32 %v2028, %v2185
  %v2187 = vpop.f32.mrf.mxu0
  %v2188 = vadd.f32 %v2030, %v2187
  %2189 = vmatmul.bf16.gmra.mxu0 %v344
  %v2190 = vpop.f32.mrf.mxu0
  %v2191 = vadd.f32 %v2033, %v2190
  %v2192 = vpop.f32.mrf.mxu0
  %v2193 = vadd.f32 %v2035, %v2192
  %2194 = vmatmul.bf16.gmra.mxu0 %v347
  %v2195 = vpop.f32.mrf.mxu0
  %v2196 = vadd.f32 %v2038, %v2195
  %v2197 = vpop.f32.mrf.mxu0
  %v2198 = vadd.f32 %v2040, %v2197
  %2199 = vmatmul.bf16.gmra.mxu0 %v350
  %v2200 = vpop.f32.mrf.mxu0
  %v2201 = vadd.f32 %v2043, %v2200
  %v2202 = vpop.f32.mrf.mxu0
  %v2203 = vadd.f32 %v2045, %v2202
  %2204 = vmatmul.bf16.gmra.mxu0 %v353
  %v2205 = vpop.f32.mrf.mxu0
  %v2206 = vadd.f32 %v2048, %v2205
  %v2207 = vpop.f32.mrf.mxu0
  %v2208 = vadd.f32 %v2050, %v2207
  %2209 = vdwg.mxu0
  %2210 = vmatpush.bf16.msra.mxu0 0
  %2211 = vmatpush.bf16.msra.mxu0 0
  %2212 = vmatpush.bf16.msra.mxu0 0
  %2213 = vmatpush.bf16.msra.mxu0 0
  %2214 = vmatpush.bf16.msra.mxu0 0
  %2215 = vmatpush.bf16.msra.mxu0 0
  %2216 = vmatpush.bf16.msra.mxu0 %v598
  %2217 = vmatpush.bf16.msra.mxu0 %v596
  %2218 = vmatmul.bf16.gmra.mxu0 %v314
  %v2219 = vpop.f32.mrf.mxu0
  %v2220 = vadd.f32 %v2062, %v2219
  %v2221 = vpop.f32.mrf.mxu0
  %v2222 = vadd.f32 %v2064, %v2221
  %2223 = vmatmul.bf16.gmra.mxu0 %v317
  %v2224 = vpop.f32.mrf.mxu0
  %v2225 = vadd.f32 %v2067, %v2224
  %v2226 = vpop.f32.mrf.mxu0
  %v2227 = vadd.f32 %v2069, %v2226
  %2228 = vmatmul.bf16.gmra.mxu0 %v320
  %v2229 = vpop.f32.mrf.mxu0
  %v2230 = vadd.f32 %v2072, %v2229
  %v2231 = vpop.f32.mrf.mxu0
  %v2232 = vadd.f32 %v2074, %v2231
  %2233 = vmatmul.bf16.gmra.mxu0 %v323
  %v2234 = vpop.f32.mrf.mxu0
  %v2235 = vadd.f32 %v2077, %v2234
  %v2236 = vpop.f32.mrf.mxu0
  %v2237 = vadd.f32 %v2079, %v2236
  %2238 = vmatmul.bf16.gmra.mxu0 %v326
  %v2239 = vpop.f32.mrf.mxu0
  %v2240 = vadd.f32 %v2082, %v2239
  %v2241 = vpop.f32.mrf.mxu0
  %v2242 = vadd.f32 %v2084, %v2241
  %2243 = vmatmul.bf16.gmra.mxu0 %v329
  %v2244 = vpop.f32.mrf.mxu0
  %v2245 = vadd.f32 %v2087, %v2244
  %v2246 = vpop.f32.mrf.mxu0
  %v2247 = vadd.f32 %v2089, %v2246
  %2248 = vmatmul.bf16.gmra.mxu0 %v332
  %v2249 = vpop.f32.mrf.mxu0
  %v2250 = vadd.f32 %v2092, %v2249
  %v2251 = vpop.f32.mrf.mxu0
  %v2252 = vadd.f32 %v2094, %v2251
  %2253 = vmatmul.bf16.gmra.mxu0 %v335
  %v2254 = vpop.f32.mrf.mxu0
  %v2255 = vadd.f32 %v2097, %v2254
  %v2256 = vpop.f32.mrf.mxu0
  %v2257 = vadd.f32 %v2099, %v2256
  %2258 = vmatmul.bf16.gmra.mxu0 %v338
  %v2259 = vpop.f32.mrf.mxu0
  %v2260 = vadd.f32 %v2102, %v2259
  %v2261 = vpop.f32.mrf.mxu0
  %v2262 = vadd.f32 %v2104, %v2261
  %2263 = vmatmul.bf16.gmra.mxu0 %v341
  %v2264 = vpop.f32.mrf.mxu0
  %v2265 = vadd.f32 %v2107, %v2264
  %v2266 = vpop.f32.mrf.mxu0
  %v2267 = vadd.f32 %v2109, %v2266
  %2268 = vmatmul.bf16.gmra.mxu0 %v344
  %v2269 = vpop.f32.mrf.mxu0
  %v2270 = vadd.f32 %v2112, %v2269
  %v2271 = vpop.f32.mrf.mxu0
  %v2272 = vadd.f32 %v2114, %v2271
  %2273 = vmatmul.bf16.gmra.mxu0 %v347
  %v2274 = vpop.f32.mrf.mxu0
  %v2275 = vadd.f32 %v2117, %v2274
  %v2276 = vpop.f32.mrf.mxu0
  %v2277 = vadd.f32 %v2119, %v2276
  %2278 = vmatmul.bf16.gmra.mxu0 %v350
  %v2279 = vpop.f32.mrf.mxu0
  %v2280 = vadd.f32 %v2122, %v2279
  %v2281 = vpop.f32.mrf.mxu0
  %v2282 = vadd.f32 %v2124, %v2281
  %2283 = vmatmul.bf16.gmra.mxu0 %v353
  %v2284 = vpop.f32.mrf.mxu0
  %v2285 = vadd.f32 %v2127, %v2284
  %v2286 = vpop.f32.mrf.mxu0
  %v2287 = vadd.f32 %v2129, %v2286
  %2288 = vdwg.mxu0
  %2289 = vmatpush.bf16.msra.mxu0 0
  %2290 = vmatpush.bf16.msra.mxu0 0
  %2291 = vmatpush.bf16.msra.mxu0 0
  %2292 = vmatpush.bf16.msra.mxu0 0
  %2293 = vmatpush.bf16.msra.mxu0 0
  %2294 = vmatpush.bf16.msra.mxu0 0
  %2295 = vmatpush.bf16.msra.mxu0 %v892
  %2296 = vmatpush.bf16.msra.mxu0 %v890
  %2297 = vmatmul.bf16.gmra.mxu0 %v1250
  %v2298 = vpop.f32.mrf.mxu0
  %v2299 = vadd.f32 0.0, %v2298
  %v2300 = vpop.f32.mrf.mxu0
  %v2301 = vadd.f32 0.0, %v2300
  %2302 = vmatmul.bf16.gmra.mxu0 %v1253
  %v2303 = vpop.f32.mrf.mxu0
  %v2304 = vadd.f32 0.0, %v2303
  %v2305 = vpop.f32.mrf.mxu0
  %v2306 = vadd.f32 0.0, %v2305
  %2307 = vmatmul.bf16.gmra.mxu0 %v1256
  %v2308 = vpop.f32.mrf.mxu0
  %v2309 = vadd.f32 0.0, %v2308
  %v2310 = vpop.f32.mrf.mxu0
  %v2311 = vadd.f32 0.0, %v2310
  %2312 = vmatmul.bf16.gmra.mxu0 %v1259
  %v2313 = vpop.f32.mrf.mxu0
  %v2314 = vadd.f32 0.0, %v2313
  %v2315 = vpop.f32.mrf.mxu0
  %v2316 = vadd.f32 0.0, %v2315
  %2317 = vmatmul.bf16.gmra.mxu0 %v1262
  %v2318 = vpop.f32.mrf.mxu0
  %v2319 = vadd.f32 0.0, %v2318
  %v2320 = vpop.f32.mrf.mxu0
  %v2321 = vadd.f32 0.0, %v2320
  %2322 = vmatmul.bf16.gmra.mxu0 %v1265
  %v2323 = vpop.f32.mrf.mxu0
  %v2324 = vadd.f32 0.0, %v2323
  %v2325 = vpop.f32.mrf.mxu0
  %v2326 = vadd.f32 0.0, %v2325
  %2327 = vmatmul.bf16.gmra.mxu0 %v1268
  %v2328 = vpop.f32.mrf.mxu0
  %v2329 = vadd.f32 0.0, %v2328
  %v2330 = vpop.f32.mrf.mxu0
  %v2331 = vadd.f32 0.0, %v2330
  %2332 = vmatmul.bf16.gmra.mxu0 %v1271
  %v2333 = vpop.f32.mrf.mxu0
  %v2334 = vadd.f32 0.0, %v2333
  %v2335 = vpop.f32.mrf.mxu0
  %v2336 = vadd.f32 0.0, %v2335
  %2337 = vmatmul.bf16.gmra.mxu0 %v1274
  %v2338 = vpop.f32.mrf.mxu0
  %v2339 = vadd.f32 0.0, %v2338
  %v2340 = vpop.f32.mrf.mxu0
  %v2341 = vadd.f32 0.0, %v2340
  %2342 = vmatmul.bf16.gmra.mxu0 %v1277
  %v2343 = vpop.f32.mrf.mxu0
  %v2344 = vadd.f32 0.0, %v2343
  %v2345 = vpop.f32.mrf.mxu0
  %v2346 = vadd.f32 0.0, %v2345
  %2347 = vmatmul.bf16.gmra.mxu0 %v1280
  %v2348 = vpop.f32.mrf.mxu0
  %v2349 = vadd.f32 0.0, %v2348
  %v2350 = vpop.f32.mrf.mxu0
  %v2351 = vadd.f32 0.0, %v2350
  %2352 = vmatmul.bf16.gmra.mxu0 %v1283
  %v2353 = vpop.f32.mrf.mxu0
  %v2354 = vadd.f32 0.0, %v2353
  %v2355 = vpop.f32.mrf.mxu0
  %v2356 = vadd.f32 0.0, %v2355
  %2357 = vmatmul.bf16.gmra.mxu0 %v1286
  %v2358 = vpop.f32.mrf.mxu0
  %v2359 = vadd.f32 0.0, %v2358
  %v2360 = vpop.f32.mrf.mxu0
  %v2361 = vadd.f32 0.0, %v2360
  %2362 = vmatmul.bf16.gmra.mxu0 %v1289
  %v2363 = vpop.f32.mrf.mxu0
  %v2364 = vadd.f32 0.0, %v2363
  %v2365 = vpop.f32.mrf.mxu0
  %v2366 = vadd.f32 0.0, %v2365
  %2367 = vdwg.mxu0
  %2368 = vmatpush.bf16.msra.mxu0 0
  %2369 = vmatpush.bf16.msra.mxu0 0
  %2370 = vmatpush.bf16.msra.mxu0 0
  %2371 = vmatpush.bf16.msra.mxu0 0
  %2372 = vmatpush.bf16.msra.mxu0 0
  %2373 = vmatpush.bf16.msra.mxu0 0
  %2374 = vmatpush.bf16.msra.mxu0 %v893
  %2375 = vmatpush.bf16.msra.mxu0 %v891
  %2376 = vmatmul.bf16.gmra.mxu0 %v1250
  %v2377 = vpop.f32.mrf.mxu0
  %v2378 = vadd.f32 0.0, %v2377
  %v2379 = vpop.f32.mrf.mxu0
  %v2380 = vadd.f32 0.0, %v2379
  %2381 = vmatmul.bf16.gmra.mxu0 %v1253
  %v2382 = vpop.f32.mrf.mxu0
  %v2383 = vadd.f32 0.0, %v2382
  %v2384 = vpop.f32.mrf.mxu0
  %v2385 = vadd.f32 0.0, %v2384
  %2386 = vmatmul.bf16.gmra.mxu0 %v1256
  %v2387 = vpop.f32.mrf.mxu0
  %v2388 = vadd.f32 0.0, %v2387
  %v2389 = vpop.f32.mrf.mxu0
  %v2390 = vadd.f32 0.0, %v2389
  %2391 = vmatmul.bf16.gmra.mxu0 %v1259
  %v2392 = vpop.f32.mrf.mxu0
  %v2393 = vadd.f32 0.0, %v2392
  %v2394 = vpop.f32.mrf.mxu0
  %v2395 = vadd.f32 0.0, %v2394
  %2396 = vmatmul.bf16.gmra.mxu0 %v1262
  %v2397 = vpop.f32.mrf.mxu0
  %v2398 = vadd.f32 0.0, %v2397
  %v2399 = vpop.f32.mrf.mxu0
  %v2400 = vadd.f32 0.0, %v2399
  %2401 = vmatmul.bf16.gmra.mxu0 %v1265
  %v2402 = vpop.f32.mrf.mxu0
  %v2403 = vadd.f32 0.0, %v2402
  %v2404 = vpop.f32.mrf.mxu0
  %v2405 = vadd.f32 0.0, %v2404
  %2406 = vmatmul.bf16.gmra.mxu0 %v1268
  %v2407 = vpop.f32.mrf.mxu0
  %v2408 = vadd.f32 0.0, %v2407
  %v2409 = vpop.f32.mrf.mxu0
  %v2410 = vadd.f32 0.0, %v2409
  %2411 = vmatmul.bf16.gmra.mxu0 %v1271
  %v2412 = vpop.f32.mrf.mxu0
  %v2413 = vadd.f32 0.0, %v2412
  %v2414 = vpop.f32.mrf.mxu0
  %v2415 = vadd.f32 0.0, %v2414
  %2416 = vmatmul.bf16.gmra.mxu0 %v1274
  %v2417 = vpop.f32.mrf.mxu0
  %v2418 = vadd.f32 0.0, %v2417
  %v2419 = vpop.f32.mrf.mxu0
  %v2420 = vadd.f32 0.0, %v2419
  %2421 = vmatmul.bf16.gmra.mxu0 %v1277
  %v2422 = vpop.f32.mrf.mxu0
  %v2423 = vadd.f32 0.0, %v2422
  %v2424 = vpop.f32.mrf.mxu0
  %v2425 = vadd.f32 0.0, %v2424
  %2426 = vmatmul.bf16.gmra.mxu0 %v1280
  %v2427 = vpop.f32.mrf.mxu0
  %v2428 = vadd.f32 0.0, %v2427
  %v2429 = vpop.f32.mrf.mxu0
  %v2430 = vadd.f32 0.0, %v2429
  %2431 = vmatmul.bf16.gmra.mxu0 %v1283
  %v2432 = vpop.f32.mrf.mxu0
  %v2433 = vadd.f32 0.0, %v2432
  %v2434 = vpop.f32.mrf.mxu0
  %v2435 = vadd.f32 0.0, %v2434
  %2436 = vmatmul.bf16.gmra.mxu0 %v1286
  %v2437 = vpop.f32.mrf.mxu0
  %v2438 = vadd.f32 0.0, %v2437
  %v2439 = vpop.f32.mrf.mxu0
  %v2440 = vadd.f32 0.0, %v2439
  %2441 = vmatmul.bf16.gmra.mxu0 %v1289
  %v2442 = vpop.f32.mrf.mxu0
  %v2443 = vadd.f32 0.0, %v2442
  %v2444 = vpop.f32.mrf.mxu0
  %v2445 = vadd.f32 0.0, %v2444
  %2446 = vdwg.mxu0
  %v2447 = vadd.f32 %v2141, %v2299
  %v2448 = vadd.f32 %v2220, %v2378
  %v2449 = vadd.f32 %v2143, %v2301
  %v2450 = vadd.f32 %v2222, %v2380
  %v2451 = vadd.f32 %v2146, %v2304
  %v2452 = vadd.f32 %v2225, %v2383
  %v2453 = vadd.f32 %v2148, %v2306
  %v2454 = vadd.f32 %v2227, %v2385
  %v2455 = vadd.f32 %v2151, %v2309
  %v2456 = vadd.f32 %v2230, %v2388
  %v2457 = vadd.f32 %v2153, %v2311
  %v2458 = vadd.f32 %v2232, %v2390
  %v2459 = vadd.f32 %v2156, %v2314
  %v2460 = vadd.f32 %v2235, %v2393
  %v2461 = vadd.f32 %v2158, %v2316
  %v2462 = vadd.f32 %v2237, %v2395
  %v2463 = vadd.f32 %v2161, %v2319
  %v2464 = vadd.f32 %v2240, %v2398
  %v2465 = vadd.f32 %v2163, %v2321
  %v2466 = vadd.f32 %v2242, %v2400
  %v2467 = vadd.f32 %v2166, %v2324
  %v2468 = vadd.f32 %v2245, %v2403
  %v2469 = vadd.f32 %v2168, %v2326
  %v2470 = vadd.f32 %v2247, %v2405
  %v2471 = vadd.f32 %v2171, %v2329
  %v2472 = vadd.f32 %v2250, %v2408
  %v2473 = vadd.f32 %v2173, %v2331
  %v2474 = vadd.f32 %v2252, %v2410
  %v2475 = vadd.f32 %v2176, %v2334
  %v2476 = vadd.f32 %v2255, %v2413
  %v2477 = vadd.f32 %v2178, %v2336
  %v2478 = vadd.f32 %v2257, %v2415
  %v2479 = vadd.f32 %v2181, %v2339
  %v2480 = vadd.f32 %v2260, %v2418
  %v2481 = vadd.f32 %v2183, %v2341
  %v2482 = vadd.f32 %v2262, %v2420
  %v2483 = vadd.f32 %v2186, %v2344
  %v2484 = vadd.f32 %v2265, %v2423
  %v2485 = vadd.f32 %v2188, %v2346
  %v2486 = vadd.f32 %v2267, %v2425
  %v2487 = vadd.f32 %v2191, %v2349
  %v2488 = vadd.f32 %v2270, %v2428
  %v2489 = vadd.f32 %v2193, %v2351
  %v2490 = vadd.f32 %v2272, %v2430
  %v2491 = vadd.f32 %v2196, %v2354
  %v2492 = vadd.f32 %v2275, %v2433
  %v2493 = vadd.f32 %v2198, %v2356
  %v2494 = vadd.f32 %v2277, %v2435
  %v2495 = vadd.f32 %v2201, %v2359
  %v2496 = vadd.f32 %v2280, %v2438
  %v2497 = vadd.f32 %v2203, %v2361
  %v2498 = vadd.f32 %v2282, %v2440
  %v2499 = vadd.f32 %v2206, %v2364
  %v2500 = vadd.f32 %v2285, %v2443
  %v2501 = vadd.f32 %v2208, %v2366
  %v2502 = vadd.f32 %v2287, %v2445
  %2503 = vmatpush.bf16.msra.mxu0 0
  %2504 = vmatpush.bf16.msra.mxu0 0
  %2505 = vmatpush.bf16.msra.mxu0 0
  %2506 = vmatpush.bf16.msra.mxu0 0
  %2507 = vmatpush.bf16.msra.mxu0 0
  %2508 = vmatpush.bf16.msra.mxu0 0
  %2509 = vmatpush.bf16.msra.mxu0 %v1243
  %2510 = vmatpush.bf16.msra.mxu0 %v1241
  %2511 = vmatmul.bf16.gmra.mxu0 %v1601
  %v2512 = vpop.f32.mrf.mxu0
  %v2513 = vadd.f32 0.0, %v2512
  %v2514 = vpop.f32.mrf.mxu0
  %v2515 = vadd.f32 0.0, %v2514
  %2516 = vmatmul.bf16.gmra.mxu0 %v1604
  %v2517 = vpop.f32.mrf.mxu0
  %v2518 = vadd.f32 0.0, %v2517
  %v2519 = vpop.f32.mrf.mxu0
  %v2520 = vadd.f32 0.0, %v2519
  %2521 = vmatmul.bf16.gmra.mxu0 %v1607
  %v2522 = vpop.f32.mrf.mxu0
  %v2523 = vadd.f32 0.0, %v2522
  %v2524 = vpop.f32.mrf.mxu0
  %v2525 = vadd.f32 0.0, %v2524
  %2526 = vmatmul.bf16.gmra.mxu0 %v1610
  %v2527 = vpop.f32.mrf.mxu0
  %v2528 = vadd.f32 0.0, %v2527
  %v2529 = vpop.f32.mrf.mxu0
  %v2530 = vadd.f32 0.0, %v2529
  %2531 = vmatmul.bf16.gmra.mxu0 %v1613
  %v2532 = vpop.f32.mrf.mxu0
  %v2533 = vadd.f32 0.0, %v2532
  %v2534 = vpop.f32.mrf.mxu0
  %v2535 = vadd.f32 0.0, %v2534
  %2536 = vmatmul.bf16.gmra.mxu0 %v1616
  %v2537 = vpop.f32.mrf.mxu0
  %v2538 = vadd.f32 0.0, %v2537
  %v2539 = vpop.f32.mrf.mxu0
  %v2540 = vadd.f32 0.0, %v2539
  %2541 = vmatmul.bf16.gmra.mxu0 %v1619
  %v2542 = vpop.f32.mrf.mxu0
  %v2543 = vadd.f32 0.0, %v2542
  %v2544 = vpop.f32.mrf.mxu0
  %v2545 = vadd.f32 0.0, %v2544
  %2546 = vmatmul.bf16.gmra.mxu0 %v1622
  %v2547 = vpop.f32.mrf.mxu0
  %v2548 = vadd.f32 0.0, %v2547
  %v2549 = vpop.f32.mrf.mxu0
  %v2550 = vadd.f32 0.0, %v2549
  %2551 = vmatmul.bf16.gmra.mxu0 %v1625
  %v2552 = vpop.f32.mrf.mxu0
  %v2553 = vadd.f32 0.0, %v2552
  %v2554 = vpop.f32.mrf.mxu0
  %v2555 = vadd.f32 0.0, %v2554
  %2556 = vmatmul.bf16.gmra.mxu0 %v1628
  %v2557 = vpop.f32.mrf.mxu0
  %v2558 = vadd.f32 0.0, %v2557
  %v2559 = vpop.f32.mrf.mxu0
  %v2560 = vadd.f32 0.0, %v2559
  %2561 = vmatmul.bf16.gmra.mxu0 %v1631
  %v2562 = vpop.f32.mrf.mxu0
  %v2563 = vadd.f32 0.0, %v2562
  %v2564 = vpop.f32.mrf.mxu0
  %v2565 = vadd.f32 0.0, %v2564
  %2566 = vmatmul.bf16.gmra.mxu0 %v1634
  %v2567 = vpop.f32.mrf.mxu0
  %v2568 = vadd.f32 0.0, %v2567
  %v2569 = vpop.f32.mrf.mxu0
  %v2570 = vadd.f32 0.0, %v2569
  %2571 = vmatmul.bf16.gmra.mxu0 %v1637
  %v2572 = vpop.f32.mrf.mxu0
  %v2573 = vadd.f32 0.0, %v2572
  %v2574 = vpop.f32.mrf.mxu0
  %v2575 = vadd.f32 0.0, %v2574
  %2576 = vmatmul.bf16.gmra.mxu0 %v1640
  %v2577 = vpop.f32.mrf.mxu0
  %v2578 = vadd.f32 0.0, %v2577
  %v2579 = vpop.f32.mrf.mxu0
  %v2580 = vadd.f32 0.0, %v2579
  %2581 = vdwg.mxu0
  %2582 = vmatpush.bf16.msra.mxu0 0
  %2583 = vmatpush.bf16.msra.mxu0 0
  %2584 = vmatpush.bf16.msra.mxu0 0
  %2585 = vmatpush.bf16.msra.mxu0 0
  %2586 = vmatpush.bf16.msra.mxu0 0
  %2587 = vmatpush.bf16.msra.mxu0 0
  %2588 = vmatpush.bf16.msra.mxu0 %v1244
  %2589 = vmatpush.bf16.msra.mxu0 %v1242
  %2590 = vmatmul.bf16.gmra.mxu0 %v1601
  %v2591 = vpop.f32.mrf.mxu0
  %v2592 = vadd.f32 0.0, %v2591
  %v2593 = vpop.f32.mrf.mxu0
  %v2594 = vadd.f32 0.0, %v2593
  %2595 = vmatmul.bf16.gmra.mxu0 %v1604
  %v2596 = vpop.f32.mrf.mxu0
  %v2597 = vadd.f32 0.0, %v2596
  %v2598 = vpop.f32.mrf.mxu0
  %v2599 = vadd.f32 0.0, %v2598
  %2600 = vmatmul.bf16.gmra.mxu0 %v1607
  %v2601 = vpop.f32.mrf.mxu0
  %v2602 = vadd.f32 0.0, %v2601
  %v2603 = vpop.f32.mrf.mxu0
  %v2604 = vadd.f32 0.0, %v2603
  %2605 = vmatmul.bf16.gmra.mxu0 %v1610
  %v2606 = vpop.f32.mrf.mxu0
  %v2607 = vadd.f32 0.0, %v2606
  %v2608 = vpop.f32.mrf.mxu0
  %v2609 = vadd.f32 0.0, %v2608
  %2610 = vmatmul.bf16.gmra.mxu0 %v1613
  %v2611 = vpop.f32.mrf.mxu0
  %v2612 = vadd.f32 0.0, %v2611
  %v2613 = vpop.f32.mrf.mxu0
  %v2614 = vadd.f32 0.0, %v2613
  %2615 = vmatmul.bf16.gmra.mxu0 %v1616
  %v2616 = vpop.f32.mrf.mxu0
  %v2617 = vadd.f32 0.0, %v2616
  %v2618 = vpop.f32.mrf.mxu0
  %v2619 = vadd.f32 0.0, %v2618
  %2620 = vmatmul.bf16.gmra.mxu0 %v1619
  %v2621 = vpop.f32.mrf.mxu0
  %v2622 = vadd.f32 0.0, %v2621
  %v2623 = vpop.f32.mrf.mxu0
  %v2624 = vadd.f32 0.0, %v2623
  %2625 = vmatmul.bf16.gmra.mxu0 %v1622
  %v2626 = vpop.f32.mrf.mxu0
  %v2627 = vadd.f32 0.0, %v2626
  %v2628 = vpop.f32.mrf.mxu0
  %v2629 = vadd.f32 0.0, %v2628
  %2630 = vmatmul.bf16.gmra.mxu0 %v1625
  %v2631 = vpop.f32.mrf.mxu0
  %v2632 = vadd.f32 0.0, %v2631
  %v2633 = vpop.f32.mrf.mxu0
  %v2634 = vadd.f32 0.0, %v2633
  %2635 = vmatmul.bf16.gmra.mxu0 %v1628
  %v2636 = vpop.f32.mrf.mxu0
  %v2637 = vadd.f32 0.0, %v2636
  %v2638 = vpop.f32.mrf.mxu0
  %v2639 = vadd.f32 0.0, %v2638
  %2640 = vmatmul.bf16.gmra.mxu0 %v1631
  %v2641 = vpop.f32.mrf.mxu0
  %v2642 = vadd.f32 0.0, %v2641
  %v2643 = vpop.f32.mrf.mxu0
  %v2644 = vadd.f32 0.0, %v2643
  %2645 = vmatmul.bf16.gmra.mxu0 %v1634
  %v2646 = vpop.f32.mrf.mxu0
  %v2647 = vadd.f32 0.0, %v2646
  %v2648 = vpop.f32.mrf.mxu0
  %v2649 = vadd.f32 0.0, %v2648
  %2650 = vmatmul.bf16.gmra.mxu0 %v1637
  %v2651 = vpop.f32.mrf.mxu0
  %v2652 = vadd.f32 0.0, %v2651
  %v2653 = vpop.f32.mrf.mxu0
  %v2654 = vadd.f32 0.0, %v2653
  %2655 = vmatmul.bf16.gmra.mxu0 %v1640
  %v2656 = vpop.f32.mrf.mxu0
  %v2657 = vadd.f32 0.0, %v2656
  %v2658 = vpop.f32.mrf.mxu0
  %v2659 = vadd.f32 0.0, %v2658
  %2660 = vdwg.mxu0
  %v2661 = vadd.f32 %v2447, %v2513
  %v2662 = vadd.f32 %v2448, %v2592
  %v2663 = vadd.f32 %v2449, %v2515
  %v2664 = vadd.f32 %v2450, %v2594
  %v2665 = vadd.f32 %v2451, %v2518
  %v2666 = vadd.f32 %v2452, %v2597
  %v2667 = vadd.f32 %v2453, %v2520
  %v2668 = vadd.f32 %v2454, %v2599
  %v2669 = vadd.f32 %v2455, %v2523
  %v2670 = vadd.f32 %v2456, %v2602
  %v2671 = vadd.f32 %v2457, %v2525
  %v2672 = vadd.f32 %v2458, %v2604
  %v2673 = vadd.f32 %v2459, %v2528
  %v2674 = vadd.f32 %v2460, %v2607
  %v2675 = vadd.f32 %v2461, %v2530
  %v2676 = vadd.f32 %v2462, %v2609
  %v2677 = vadd.f32 %v2463, %v2533
  %v2678 = vadd.f32 %v2464, %v2612
  %v2679 = vadd.f32 %v2465, %v2535
  %v2680 = vadd.f32 %v2466, %v2614
  %v2681 = vadd.f32 %v2467, %v2538
  %v2682 = vadd.f32 %v2468, %v2617
  %v2683 = vadd.f32 %v2469, %v2540
  %v2684 = vadd.f32 %v2470, %v2619
  %v2685 = vadd.f32 %v2471, %v2543
  %v2686 = vadd.f32 %v2472, %v2622
  %v2687 = vadd.f32 %v2473, %v2545
  %v2688 = vadd.f32 %v2474, %v2624
  %v2689 = vadd.f32 %v2475, %v2548
  %v2690 = vadd.f32 %v2476, %v2627
  %v2691 = vadd.f32 %v2477, %v2550
  %v2692 = vadd.f32 %v2478, %v2629
  %v2693 = vadd.f32 %v2479, %v2553
  %v2694 = vadd.f32 %v2480, %v2632
  %v2695 = vadd.f32 %v2481, %v2555
  %v2696 = vadd.f32 %v2482, %v2634
  %v2697 = vadd.f32 %v2483, %v2558
  %v2698 = vadd.f32 %v2484, %v2637
  %v2699 = vadd.f32 %v2485, %v2560
  %v2700 = vadd.f32 %v2486, %v2639
  %v2701 = vadd.f32 %v2487, %v2563
  %v2702 = vadd.f32 %v2488, %v2642
  %v2703 = vadd.f32 %v2489, %v2565
  %v2704 = vadd.f32 %v2490, %v2644
  %v2705 = vadd.f32 %v2491, %v2568
  %v2706 = vadd.f32 %v2492, %v2647
  %v2707 = vadd.f32 %v2493, %v2570
  %v2708 = vadd.f32 %v2494, %v2649
  %v2709 = vadd.f32 %v2495, %v2573
  %v2710 = vadd.f32 %v2496, %v2652
  %v2711 = vadd.f32 %v2497, %v2575
  %v2712 = vadd.f32 %v2498, %v2654
  %v2713 = vadd.f32 %v2499, %v2578
  %v2714 = vadd.f32 %v2500, %v2657
  %v2715 = vadd.f32 %v2501, %v2580
  %v2716 = vadd.f32 %v2502, %v2659
  %v2745 = vunpack.c.l.b16 %v185
  %v2746 = vunpack.c.l.b16 %v186
  %v2747 = vunpack.c.l.b16 %v187
  %v2748 = vunpack.c.l.b16 %v188
  %v2749 = vunpack.c.l.b16 %v189
  %v2750 = vunpack.c.l.b16 %v190
  %v2751 = vunpack.c.l.b16 %v191
  %v2752 = vunpack.c.l.b16 %v192
  %v2753 = vunpack.c.l.b16 %v193
  %v2754 = vunpack.c.l.b16 %v194
  %v2755 = vunpack.c.l.b16 %v195
  %v2756 = vunpack.c.l.b16 %v196
  %v2757 = vunpack.c.l.b16 %v197
  %v2758 = vunpack.c.l.b16 %v198
  %v2759 = vunpack.c.l.b16 %v199
  %v2760 = vunpack.c.l.b16 %v200
  %v2761 = vunpack.c.l.b16 %v201
  %v2762 = vunpack.c.l.b16 %v202
  %v2763 = vunpack.c.l.b16 %v203
  %v2764 = vunpack.c.l.b16 %v204
  %v2765 = vunpack.c.l.b16 %v205
  %v2766 = vunpack.c.l.b16 %v206
  %v2767 = vunpack.c.l.b16 %v207
  %v2768 = vunpack.c.l.b16 %v208
  %v2769 = vunpack.c.l.b16 %v209
  %v2770 = vunpack.c.l.b16 %v210
  %v2771 = vunpack.c.l.b16 %v211
  %v2772 = vunpack.c.l.b16 %v212
  %v2773 = vpack.c.b16 %v2746, %v2745
  %v2774 = vpack.c.b16 %v2748, %v2747
  %v2775 = vpack.c.b16 %v2750, %v2749
  %v2776 = vpack.c.b16 %v2752, %v2751
  %v2777 = vpack.c.b16 %v2754, %v2753
  %v2778 = vpack.c.b16 %v2756, %v2755
  %v2779 = vpack.c.b16 %v2758, %v2757
  %v2780 = vpack.c.b16 %v2760, %v2759
  %v2781 = vpack.c.b16 %v2762, %v2761
  %v2782 = vpack.c.b16 %v2764, %v2763
  %v2783 = vpack.c.b16 %v2766, %v2765
  %v2784 = vpack.c.b16 %v2768, %v2767
  %v2785 = vpack.c.b16 %v2770, %v2769
  %v2786 = vpack.c.b16 %v2772, %v2771
  %v2788 = vsel %vm312, %v2773, 0
  %v2791 = vsel %vm312, %v2774, 0
  %v2794 = vsel %vm312, %v2775, 0
  %v2797 = vsel %vm312, %v2776, 0
  %v2800 = vsel %vm312, %v2777, 0
  %v2803 = vsel %vm312, %v2778, 0
  %v2806 = vsel %vm312, %v2779, 0
  %v2809 = vsel %vm312, %v2780, 0
  %v2812 = vsel %vm312, %v2781, 0
  %v2815 = vsel %vm312, %v2782, 0
  %v2818 = vsel %vm312, %v2783, 0
  %v2821 = vsel %vm312, %v2784, 0
  %v2824 = vsel %vm312, %v2785, 0
  %v2827 = vsel %vm312, %v2786, 0
  %2829 = vmatpush.bf16.msra.mxu0 0
  %2830 = vmatpush.bf16.msra.mxu0 0
  %2831 = vmatpush.bf16.msra.mxu0 0
  %2832 = vmatpush.bf16.msra.mxu0 0
  %2833 = vmatpush.bf16.msra.mxu0 0
  %2834 = vmatpush.bf16.msra.mxu0 0
  %2835 = vmatpush.bf16.msra.mxu0 %v1594
  %2836 = vmatpush.bf16.msra.mxu0 %v1592
  %2837 = vmatmul.bf16.gmra.mxu0 %v2788
  %v2838 = vpop.f32.mrf.mxu0
  %v2839 = vadd.f32 0.0, %v2838
  %v2840 = vpop.f32.mrf.mxu0
  %v2841 = vadd.f32 0.0, %v2840
  %2842 = vmatmul.bf16.gmra.mxu0 %v2791
  %v2843 = vpop.f32.mrf.mxu0
  %v2844 = vadd.f32 0.0, %v2843
  %v2845 = vpop.f32.mrf.mxu0
  %v2846 = vadd.f32 0.0, %v2845
  %2847 = vmatmul.bf16.gmra.mxu0 %v2794
  %v2848 = vpop.f32.mrf.mxu0
  %v2849 = vadd.f32 0.0, %v2848
  %v2850 = vpop.f32.mrf.mxu0
  %v2851 = vadd.f32 0.0, %v2850
  %2852 = vmatmul.bf16.gmra.mxu0 %v2797
  %v2853 = vpop.f32.mrf.mxu0
  %v2854 = vadd.f32 0.0, %v2853
  %v2855 = vpop.f32.mrf.mxu0
  %v2856 = vadd.f32 0.0, %v2855
  %2857 = vmatmul.bf16.gmra.mxu0 %v2800
  %v2858 = vpop.f32.mrf.mxu0
  %v2859 = vadd.f32 0.0, %v2858
  %v2860 = vpop.f32.mrf.mxu0
  %v2861 = vadd.f32 0.0, %v2860
  %2862 = vmatmul.bf16.gmra.mxu0 %v2803
  %v2863 = vpop.f32.mrf.mxu0
  %v2864 = vadd.f32 0.0, %v2863
  %v2865 = vpop.f32.mrf.mxu0
  %v2866 = vadd.f32 0.0, %v2865
  %2867 = vmatmul.bf16.gmra.mxu0 %v2806
  %v2868 = vpop.f32.mrf.mxu0
  %v2869 = vadd.f32 0.0, %v2868
  %v2870 = vpop.f32.mrf.mxu0
  %v2871 = vadd.f32 0.0, %v2870
  %2872 = vmatmul.bf16.gmra.mxu0 %v2809
  %v2873 = vpop.f32.mrf.mxu0
  %v2874 = vadd.f32 0.0, %v2873
  %v2875 = vpop.f32.mrf.mxu0
  %v2876 = vadd.f32 0.0, %v2875
  %2877 = vmatmul.bf16.gmra.mxu0 %v2812
  %v2878 = vpop.f32.mrf.mxu0
  %v2879 = vadd.f32 0.0, %v2878
  %v2880 = vpop.f32.mrf.mxu0
  %v2881 = vadd.f32 0.0, %v2880
  %2882 = vmatmul.bf16.gmra.mxu0 %v2815
  %v2883 = vpop.f32.mrf.mxu0
  %v2884 = vadd.f32 0.0, %v2883
  %v2885 = vpop.f32.mrf.mxu0
  %v2886 = vadd.f32 0.0, %v2885
  %2887 = vmatmul.bf16.gmra.mxu0 %v2818
  %v2888 = vpop.f32.mrf.mxu0
  %v2889 = vadd.f32 0.0, %v2888
  %v2890 = vpop.f32.mrf.mxu0
  %v2891 = vadd.f32 0.0, %v2890
  %2892 = vmatmul.bf16.gmra.mxu0 %v2821
  %v2893 = vpop.f32.mrf.mxu0
  %v2894 = vadd.f32 0.0, %v2893
  %v2895 = vpop.f32.mrf.mxu0
  %v2896 = vadd.f32 0.0, %v2895
  %2897 = vmatmul.bf16.gmra.mxu0 %v2824
  %v2898 = vpop.f32.mrf.mxu0
  %v2899 = vadd.f32 0.0, %v2898
  %v2900 = vpop.f32.mrf.mxu0
  %v2901 = vadd.f32 0.0, %v2900
  %2902 = vmatmul.bf16.gmra.mxu0 %v2827
  %v2903 = vpop.f32.mrf.mxu0
  %v2904 = vadd.f32 0.0, %v2903
  %v2905 = vpop.f32.mrf.mxu0
  %v2906 = vadd.f32 0.0, %v2905
  %2907 = vdwg.mxu0
  %2908 = vmatpush.bf16.msra.mxu0 0
  %2909 = vmatpush.bf16.msra.mxu0 0
  %2910 = vmatpush.bf16.msra.mxu0 0
  %2911 = vmatpush.bf16.msra.mxu0 0
  %2912 = vmatpush.bf16.msra.mxu0 0
  %2913 = vmatpush.bf16.msra.mxu0 0
  %2914 = vmatpush.bf16.msra.mxu0 %v1595
  %2915 = vmatpush.bf16.msra.mxu0 %v1593
  %2916 = vmatmul.bf16.gmra.mxu0 %v2788
  %v2917 = vpop.f32.mrf.mxu0
  %v2918 = vadd.f32 0.0, %v2917
  %v2919 = vpop.f32.mrf.mxu0
  %v2920 = vadd.f32 0.0, %v2919
  %2921 = vmatmul.bf16.gmra.mxu0 %v2791
  %v2922 = vpop.f32.mrf.mxu0
  %v2923 = vadd.f32 0.0, %v2922
  %v2924 = vpop.f32.mrf.mxu0
  %v2925 = vadd.f32 0.0, %v2924
  %2926 = vmatmul.bf16.gmra.mxu0 %v2794
  %v2927 = vpop.f32.mrf.mxu0
  %v2928 = vadd.f32 0.0, %v2927
  %v2929 = vpop.f32.mrf.mxu0
  %v2930 = vadd.f32 0.0, %v2929
  %2931 = vmatmul.bf16.gmra.mxu0 %v2797
  %v2932 = vpop.f32.mrf.mxu0
  %v2933 = vadd.f32 0.0, %v2932
  %v2934 = vpop.f32.mrf.mxu0
  %v2935 = vadd.f32 0.0, %v2934
  %2936 = vmatmul.bf16.gmra.mxu0 %v2800
  %v2937 = vpop.f32.mrf.mxu0
  %v2938 = vadd.f32 0.0, %v2937
  %v2939 = vpop.f32.mrf.mxu0
  %v2940 = vadd.f32 0.0, %v2939
  %2941 = vmatmul.bf16.gmra.mxu0 %v2803
  %v2942 = vpop.f32.mrf.mxu0
  %v2943 = vadd.f32 0.0, %v2942
  %v2944 = vpop.f32.mrf.mxu0
  %v2945 = vadd.f32 0.0, %v2944
  %2946 = vmatmul.bf16.gmra.mxu0 %v2806
  %v2947 = vpop.f32.mrf.mxu0
  %v2948 = vadd.f32 0.0, %v2947
  %v2949 = vpop.f32.mrf.mxu0
  %v2950 = vadd.f32 0.0, %v2949
  %2951 = vmatmul.bf16.gmra.mxu0 %v2809
  %v2952 = vpop.f32.mrf.mxu0
  %v2953 = vadd.f32 0.0, %v2952
  %v2954 = vpop.f32.mrf.mxu0
  %v2955 = vadd.f32 0.0, %v2954
  %2956 = vmatmul.bf16.gmra.mxu0 %v2812
  %v2957 = vpop.f32.mrf.mxu0
  %v2958 = vadd.f32 0.0, %v2957
  %v2959 = vpop.f32.mrf.mxu0
  %v2960 = vadd.f32 0.0, %v2959
  %2961 = vmatmul.bf16.gmra.mxu0 %v2815
  %v2962 = vpop.f32.mrf.mxu0
  %v2963 = vadd.f32 0.0, %v2962
  %v2964 = vpop.f32.mrf.mxu0
  %v2965 = vadd.f32 0.0, %v2964
  %2966 = vmatmul.bf16.gmra.mxu0 %v2818
  %v2967 = vpop.f32.mrf.mxu0
  %v2968 = vadd.f32 0.0, %v2967
  %v2969 = vpop.f32.mrf.mxu0
  %v2970 = vadd.f32 0.0, %v2969
  %2971 = vmatmul.bf16.gmra.mxu0 %v2821
  %v2972 = vpop.f32.mrf.mxu0
  %v2973 = vadd.f32 0.0, %v2972
  %v2974 = vpop.f32.mrf.mxu0
  %v2975 = vadd.f32 0.0, %v2974
  %2976 = vmatmul.bf16.gmra.mxu0 %v2824
  %v2977 = vpop.f32.mrf.mxu0
  %v2978 = vadd.f32 0.0, %v2977
  %v2979 = vpop.f32.mrf.mxu0
  %v2980 = vadd.f32 0.0, %v2979
  %2981 = vmatmul.bf16.gmra.mxu0 %v2827
  %v2982 = vpop.f32.mrf.mxu0
  %v2983 = vadd.f32 0.0, %v2982
  %v2984 = vpop.f32.mrf.mxu0
  %v2985 = vadd.f32 0.0, %v2984
  %2986 = vdwg.mxu0
  %v2987 = vadd.f32 %v2661, %v2839
  %v2988 = vadd.f32 %v2662, %v2918
  %v2989 = vadd.f32 %v2663, %v2841
  %v2990 = vadd.f32 %v2664, %v2920
  %v2991 = vadd.f32 %v2665, %v2844
  %v2992 = vadd.f32 %v2666, %v2923
  %v2993 = vadd.f32 %v2667, %v2846
  %v2994 = vadd.f32 %v2668, %v2925
  %v2995 = vadd.f32 %v2669, %v2849
  %v2996 = vadd.f32 %v2670, %v2928
  %v2997 = vadd.f32 %v2671, %v2851
  %v2998 = vadd.f32 %v2672, %v2930
  %v2999 = vadd.f32 %v2673, %v2854
  %v3000 = vadd.f32 %v2674, %v2933
  %v3001 = vadd.f32 %v2675, %v2856
  %v3002 = vadd.f32 %v2676, %v2935
  %v3003 = vadd.f32 %v2677, %v2859
  %v3004 = vadd.f32 %v2678, %v2938
  %v3005 = vadd.f32 %v2679, %v2861
  %v3006 = vadd.f32 %v2680, %v2940
  %v3007 = vadd.f32 %v2681, %v2864
  %v3008 = vadd.f32 %v2682, %v2943
  %v3009 = vadd.f32 %v2683, %v2866
  %v3010 = vadd.f32 %v2684, %v2945
  %v3011 = vadd.f32 %v2685, %v2869
  %v3012 = vadd.f32 %v2686, %v2948
  %v3013 = vadd.f32 %v2687, %v2871
  %v3014 = vadd.f32 %v2688, %v2950
  %v3015 = vadd.f32 %v2689, %v2874
  %v3016 = vadd.f32 %v2690, %v2953
  %v3017 = vadd.f32 %v2691, %v2876
  %v3018 = vadd.f32 %v2692, %v2955
  %v3019 = vadd.f32 %v2693, %v2879
  %v3020 = vadd.f32 %v2694, %v2958
  %v3021 = vadd.f32 %v2695, %v2881
  %v3022 = vadd.f32 %v2696, %v2960
  %v3023 = vadd.f32 %v2697, %v2884
  %v3024 = vadd.f32 %v2698, %v2963
  %v3025 = vadd.f32 %v2699, %v2886
  %v3026 = vadd.f32 %v2700, %v2965
  %v3027 = vadd.f32 %v2701, %v2889
  %v3028 = vadd.f32 %v2702, %v2968
  %v3029 = vadd.f32 %v2703, %v2891
  %v3030 = vadd.f32 %v2704, %v2970
  %v3031 = vadd.f32 %v2705, %v2894
  %v3032 = vadd.f32 %v2706, %v2973
  %v3033 = vadd.f32 %v2707, %v2896
  %v3034 = vadd.f32 %v2708, %v2975
  %v3035 = vadd.f32 %v2709, %v2899
  %v3036 = vadd.f32 %v2710, %v2978
  %v3037 = vadd.f32 %v2711, %v2901
  %v3038 = vadd.f32 %v2712, %v2980
  %v3039 = vadd.f32 %v2713, %v2904
  %v3040 = vadd.f32 %v2714, %v2983
  %v3041 = vadd.f32 %v2715, %v2906
  %v3042 = vadd.f32 %v2716, %v2985
  %v3043 = vadd.f32 %v2987, %v1857
  %v3044 = vadd.f32 %v2988, %v1858
  %v3045 = vadd.f32 %v2989, %v1857
  %v3046 = vadd.f32 %v2990, %v1858
  %v3047 = vadd.f32 %v2991, %v1857
  %v3048 = vadd.f32 %v2992, %v1858
  %v3049 = vadd.f32 %v2993, %v1857
  %v3050 = vadd.f32 %v2994, %v1858
  %v3051 = vadd.f32 %v2995, %v1857
  %v3052 = vadd.f32 %v2996, %v1858
  %v3053 = vadd.f32 %v2997, %v1857
  %v3054 = vadd.f32 %v2998, %v1858
  %v3055 = vadd.f32 %v2999, %v1857
  %v3056 = vadd.f32 %v3000, %v1858
  %v3057 = vadd.f32 %v3001, %v1857
  %v3058 = vadd.f32 %v3002, %v1858
  %v3059 = vadd.f32 %v3003, %v1857
  %v3060 = vadd.f32 %v3004, %v1858
  %v3061 = vadd.f32 %v3005, %v1857
  %v3062 = vadd.f32 %v3006, %v1858
  %v3063 = vadd.f32 %v3007, %v1857
  %v3064 = vadd.f32 %v3008, %v1858
  %v3065 = vadd.f32 %v3009, %v1857
  %v3066 = vadd.f32 %v3010, %v1858
  %v3067 = vadd.f32 %v3011, %v1857
  %v3068 = vadd.f32 %v3012, %v1858
  %v3069 = vadd.f32 %v3013, %v1857
  %v3070 = vadd.f32 %v3014, %v1858
  %v3071 = vadd.f32 %v3015, %v1857
  %v3072 = vadd.f32 %v3016, %v1858
  %v3073 = vadd.f32 %v3017, %v1857
  %v3074 = vadd.f32 %v3018, %v1858
  %v3075 = vadd.f32 %v3019, %v1857
  %v3076 = vadd.f32 %v3020, %v1858
  %v3077 = vadd.f32 %v3021, %v1857
  %v3078 = vadd.f32 %v3022, %v1858
  %v3079 = vadd.f32 %v3023, %v1857
  %v3080 = vadd.f32 %v3024, %v1858
  %v3081 = vadd.f32 %v3025, %v1857
  %v3082 = vadd.f32 %v3026, %v1858
  %v3083 = vadd.f32 %v3027, %v1857
  %v3084 = vadd.f32 %v3028, %v1858
  %v3085 = vadd.f32 %v3029, %v1857
  %v3086 = vadd.f32 %v3030, %v1858
  %v3087 = vadd.f32 %v3031, %v1857
  %v3088 = vadd.f32 %v3032, %v1858
  %v3089 = vadd.f32 %v3033, %v1857
  %v3090 = vadd.f32 %v3034, %v1858
  %v3091 = vadd.f32 %v3035, %v1857
  %v3092 = vadd.f32 %v3036, %v1858
  %v3093 = vadd.f32 %v3037, %v1857
  %v3094 = vadd.f32 %v3038, %v1858
  %v3095 = vadd.f32 %v3039, %v1857
  %v3096 = vadd.f32 %v3040, %v1858
  %v3097 = vadd.f32 %v3041, %v1857
  %v3098 = vadd.f32 %v3042, %v1858
  %v3099 = vmax.f32 %v3043, 0.0
  %v3100 = vmax.f32 %v3044, 0.0
  %v3101 = vmax.f32 %v3045, 0.0
  %v3102 = vmax.f32 %v3046, 0.0
  %v3103 = vmax.f32 %v3047, 0.0
  %v3104 = vmax.f32 %v3048, 0.0
  %v3105 = vmax.f32 %v3049, 0.0
  %v3106 = vmax.f32 %v3050, 0.0
  %v3107 = vmax.f32 %v3051, 0.0
  %v3108 = vmax.f32 %v3052, 0.0
  %v3109 = vmax.f32 %v3053, 0.0
  %v3110 = vmax.f32 %v3054, 0.0
  %v3111 = vmax.f32 %v3055, 0.0
  %v3112 = vmax.f32 %v3056, 0.0
  %v3113 = vmax.f32 %v3057, 0.0
  %v3114 = vmax.f32 %v3058, 0.0
  %v3115 = vmax.f32 %v3059, 0.0
  %v3116 = vmax.f32 %v3060, 0.0
  %v3117 = vmax.f32 %v3061, 0.0
  %v3118 = vmax.f32 %v3062, 0.0
  %v3119 = vmax.f32 %v3063, 0.0
  %v3120 = vmax.f32 %v3064, 0.0
  %v3121 = vmax.f32 %v3065, 0.0
  %v3122 = vmax.f32 %v3066, 0.0
  %v3123 = vmax.f32 %v3067, 0.0
  %v3124 = vmax.f32 %v3068, 0.0
  %v3125 = vmax.f32 %v3069, 0.0
  %v3126 = vmax.f32 %v3070, 0.0
  %v3127 = vmax.f32 %v3071, 0.0
  %v3128 = vmax.f32 %v3072, 0.0
  %v3129 = vmax.f32 %v3073, 0.0
  %v3130 = vmax.f32 %v3074, 0.0
  %v3131 = vmax.f32 %v3075, 0.0
  %v3132 = vmax.f32 %v3076, 0.0
  %v3133 = vmax.f32 %v3077, 0.0
  %v3134 = vmax.f32 %v3078, 0.0
  %v3135 = vmax.f32 %v3079, 0.0
  %v3136 = vmax.f32 %v3080, 0.0
  %v3137 = vmax.f32 %v3081, 0.0
  %v3138 = vmax.f32 %v3082, 0.0
  %v3139 = vmax.f32 %v3083, 0.0
  %v3140 = vmax.f32 %v3084, 0.0
  %v3141 = vmax.f32 %v3085, 0.0
  %v3142 = vmax.f32 %v3086, 0.0
  %v3143 = vmax.f32 %v3087, 0.0
  %v3144 = vmax.f32 %v3088, 0.0
  %v3145 = vmax.f32 %v3089, 0.0
  %v3146 = vmax.f32 %v3090, 0.0
  %v3147 = vmax.f32 %v3091, 0.0
  %v3148 = vmax.f32 %v3092, 0.0
  %v3149 = vmax.f32 %v3093, 0.0
  %v3150 = vmax.f32 %v3094, 0.0
  %v3151 = vmax.f32 %v3095, 0.0
  %v3152 = vmax.f32 %v3096, 0.0
  %v3153 = vmax.f32 %v3097, 0.0
  %v3154 = vmax.f32 %v3098, 0.0
  %v3155 = vadd.f32 %v1917, %v3099
  %v3156 = vadd.f32 %v1918, %v3100
  %v3157 = vadd.f32 %v1919, %v3101
  %v3158 = vadd.f32 %v1920, %v3102
  %v3159 = vadd.f32 %v1921, %v3103
  %v3160 = vadd.f32 %v1922, %v3104
  %v3161 = vadd.f32 %v1923, %v3105
  %v3162 = vadd.f32 %v1924, %v3106
  %v3163 = vadd.f32 %v1925, %v3107
  %v3164 = vadd.f32 %v1926, %v3108
  %v3165 = vadd.f32 %v1927, %v3109
  %v3166 = vadd.f32 %v1928, %v3110
  %v3167 = vadd.f32 %v1929, %v3111
  %v3168 = vadd.f32 %v1930, %v3112
  %v3169 = vadd.f32 %v1931, %v3113
  %v3170 = vadd.f32 %v1932, %v3114
  %v3171 = vadd.f32 %v1933, %v3115
  %v3172 = vadd.f32 %v1934, %v3116
  %v3173 = vadd.f32 %v1935, %v3117
  %v3174 = vadd.f32 %v1936, %v3118
  %v3175 = vadd.f32 %v1937, %v3119
  %v3176 = vadd.f32 %v1938, %v3120
  %v3177 = vadd.f32 %v1939, %v3121
  %v3178 = vadd.f32 %v1940, %v3122
  %v3179 = vadd.f32 %v1941, %v3123
  %v3180 = vadd.f32 %v1942, %v3124
  %v3181 = vadd.f32 %v1943, %v3125
  %v3182 = vadd.f32 %v1944, %v3126
  %v3183 = vadd.f32 %v1945, %v3127
  %v3184 = vadd.f32 %v1946, %v3128
  %v3185 = vadd.f32 %v1947, %v3129
  %v3186 = vadd.f32 %v1948, %v3130
  %v3187 = vadd.f32 %v1949, %v3131
  %v3188 = vadd.f32 %v1950, %v3132
  %v3189 = vadd.f32 %v1951, %v3133
  %v3190 = vadd.f32 %v1952, %v3134
  %v3191 = vadd.f32 %v1953, %v3135
  %v3192 = vadd.f32 %v1954, %v3136
  %v3193 = vadd.f32 %v1955, %v3137
  %v3194 = vadd.f32 %v1956, %v3138
  %v3195 = vadd.f32 %v1957, %v3139
  %v3196 = vadd.f32 %v1958, %v3140
  %v3197 = vadd.f32 %v1959, %v3141
  %v3198 = vadd.f32 %v1960, %v3142
  %v3199 = vadd.f32 %v1961, %v3143
  %v3200 = vadd.f32 %v1962, %v3144
  %v3201 = vadd.f32 %v1963, %v3145
  %v3202 = vadd.f32 %v1964, %v3146
  %v3203 = vadd.f32 %v1965, %v3147
  %v3204 = vadd.f32 %v1966, %v3148
  %v3205 = vadd.f32 %v1967, %v3149
  %v3206 = vadd.f32 %v1968, %v3150
  %v3207 = vadd.f32 %v1969, %v3151
  %v3208 = vadd.f32 %v1970, %v3152
  %v3209 = vadd.f32 %v1971, %v3153
  %v3210 = vadd.f32 %v1972, %v3154
  %v3211 = vpack.c.bf16 %v3156, %v3155
  %v3212 = vpack.c.bf16 %v3158, %v3157
  %v3213 = vpack.c.bf16 %v3160, %v3159
  %v3214 = vpack.c.bf16 %v3162, %v3161
  %v3215 = vpack.c.bf16 %v3164, %v3163
  %v3216 = vpack.c.bf16 %v3166, %v3165
  %v3217 = vpack.c.bf16 %v3168, %v3167
  %v3218 = vpack.c.bf16 %v3170, %v3169
  %v3219 = vpack.c.bf16 %v3172, %v3171
  %v3220 = vpack.c.bf16 %v3174, %v3173
  %v3221 = vpack.c.bf16 %v3176, %v3175
  %v3222 = vpack.c.bf16 %v3178, %v3177
  %v3223 = vpack.c.bf16 %v3180, %v3179
  %v3224 = vpack.c.bf16 %v3182, %v3181
  %v3225 = vpack.c.bf16 %v3184, %v3183
  %v3226 = vpack.c.bf16 %v3186, %v3185
  %v3227 = vpack.c.bf16 %v3188, %v3187
  %v3228 = vpack.c.bf16 %v3190, %v3189
  %v3229 = vpack.c.bf16 %v3192, %v3191
  %v3230 = vpack.c.bf16 %v3194, %v3193
  %v3231 = vpack.c.bf16 %v3196, %v3195
  %v3232 = vpack.c.bf16 %v3198, %v3197
  %v3233 = vpack.c.bf16 %v3200, %v3199
  %v3234 = vpack.c.bf16 %v3202, %v3201
  %v3235 = vpack.c.bf16 %v3204, %v3203
  %v3236 = vpack.c.bf16 %v3206, %v3205
  %v3237 = vpack.c.bf16 %v3208, %v3207
  %v3238 = vpack.c.bf16 %v3210, %v3209
  %3239 = vst [vmem:[#allocation2] sm:$0xff] %v3211
  %3240 = vst [vmem:[#allocation2 + $0x8] sm:$0xff] %v3212
  %3241 = vst [vmem:[#allocation2 + $0x10] sm:$0xff] %v3213
  %3242 = vst [vmem:[#allocation2 + $0x18] sm:$0xff] %v3214
  %3243 = vst [vmem:[#allocation2 + $0x20] sm:$0xff] %v3215
  %3244 = vst [vmem:[#allocation2 + $0x28] sm:$0xff] %v3216
  %3245 = vst [vmem:[#allocation2 + $0x30] sm:$0xff] %v3217
  %3246 = vst [vmem:[#allocation2 + $0x38] sm:$0xff] %v3218
  %3247 = vst [vmem:[#allocation2 + $0x40] sm:$0xff] %v3219
  %3248 = vst [vmem:[#allocation2 + $0x48] sm:$0xff] %v3220
  %3249 = vst [vmem:[#allocation2 + $0x50] sm:$0xff] %v3221
  %3250 = vst [vmem:[#allocation2 + $0x58] sm:$0xff] %v3222
  %3251 = vst [vmem:[#allocation2 + $0x60] sm:$0xff] %v3223
  %3252 = vst [vmem:[#allocation2 + $0x68] sm:$0xff] %v3224
  %3253 = vst [vmem:[#allocation2 + $0x70] sm:$0xff] %v3225
  %3254 = vst [vmem:[#allocation2 + $0x78] sm:$0xff] %v3226
  %3255 = vst [vmem:[#allocation2 + $0x80] sm:$0xff] %v3227
  %3256 = vst [vmem:[#allocation2 + $0x88] sm:$0xff] %v3228
  %3257 = vst [vmem:[#allocation2 + $0x90] sm:$0xff] %v3229
  %3258 = vst [vmem:[#allocation2 + $0x98] sm:$0xff] %v3230
  %3259 = vst [vmem:[#allocation2 + $0xa0] sm:$0xff] %v3231
  %3260 = vst [vmem:[#allocation2 + $0xa8] sm:$0xff] %v3232
  %3261 = vst [vmem:[#allocation2 + $0xb0] sm:$0xff] %v3233
  %3262 = vst [vmem:[#allocation2 + $0xb8] sm:$0xff] %v3234
  %3263 = vst [vmem:[#allocation2 + $0xc0] sm:$0xff] %v3235
  %3264 = vst [vmem:[#allocation2 + $0xc8] sm:$0xff] %v3236
  %3265 = vst [vmem:[#allocation2 + $0xd0] sm:$0xff] %v3237
  %3266 = vst [vmem:[#allocation2 + $0xd8] sm:$0xff] %v3238
  %v3267 = vld [vmem:[%s4] sm:$0x3]
  %v3268 = vld [vmem:[#allocation2] sm:$0xff]
  %v3269 = vld [vmem:[#allocation2 + $0x8] sm:$0xff]
  %v3270 = vld [vmem:[#allocation2 + $0x20] sm:$0xff]
  %v3271 = vld [vmem:[#allocation2 + $0x28] sm:$0xff]
  %v3272 = vld [vmem:[#allocation2 + $0x40] sm:$0xff]
  %v3273 = vld [vmem:[#allocation2 + $0x48] sm:$0xff]
  %v3274 = vld [vmem:[#allocation2 + $0x60] sm:$0xff]
  %v3275 = vld [vmem:[#allocation2 + $0x68] sm:$0xff]
  %v3276 = vld [vmem:[#allocation2 + $0x80] sm:$0xff]
  %v3277 = vld [vmem:[#allocation2 + $0x88] sm:$0xff]
  %s3278 = scalar_lea.vmem [#allocation2], 16
  %v3279 = vld [vmem:[%s3278] sm:$0xff]
  %v3280 = vld [vmem:[%s3278 + $0x8] sm:$0xff]
  %v3281 = vld [vmem:[%s3278 + $0x20] sm:$0xff]
  %v3282 = vld [vmem:[%s3278 + $0x28] sm:$0xff]
  %v3283 = vld [vmem:[%s3278 + $0x40] sm:$0xff]
  %v3284 = vld [vmem:[%s3278 + $0x48] sm:$0xff]
  %v3285 = vld [vmem:[%s3278 + $0x60] sm:$0xff]
  %v3286 = vld [vmem:[%s3278 + $0x68] sm:$0xff]
  %v3287 = vld [vmem:[%s3278 + $0x80] sm:$0xff]
  %v3288 = vld [vmem:[%s3278 + $0x88] sm:$0xff]
  %s3289 = scalar_lea.vmem [#allocation2], 32
  %v3290 = vld [vmem:[%s3289] sm:$0xff]
  %v3291 = vld [vmem:[%s3289 + $0x8] sm:$0xff]
  %v3292 = vld [vmem:[%s3289 + $0x20] sm:$0xff]
  %v3293 = vld [vmem:[%s3289 + $0x28] sm:$0xff]
  %v3294 = vld [vmem:[%s3289 + $0x40] sm:$0xff]
  %v3295 = vld [vmem:[%s3289 + $0x48] sm:$0xff]
  %v3296 = vld [vmem:[%s3289 + $0x60] sm:$0xff]
  %v3297 = vld [vmem:[%s3289 + $0x68] sm:$0xff]
  %v3298 = vld [vmem:[%s3289 + $0x80] sm:$0xff]
  %v3299 = vld [vmem:[%s3289 + $0x88] sm:$0xff]
  %s3300 = scalar_lea.vmem [#allocation2], 48
  %v3301 = vld [vmem:[%s3300] sm:$0xff]
  %v3302 = vld [vmem:[%s3300 + $0x8] sm:$0xff]
  %v3303 = vld [vmem:[%s3300 + $0x20] sm:$0xff]
  %v3304 = vld [vmem:[%s3300 + $0x28] sm:$0xff]
  %v3305 = vld [vmem:[%s3300 + $0x40] sm:$0xff]
  %v3306 = vld [vmem:[%s3300 + $0x48] sm:$0xff]
  %v3307 = vld [vmem:[%s3300 + $0x60] sm:$0xff]
  %v3308 = vld [vmem:[%s3300 + $0x68] sm:$0xff]
  %v3309 = vld [vmem:[%s3300 + $0x80] sm:$0xff]
  %v3310 = vld [vmem:[%s3300 + $0x88] sm:$0xff]
  %s3311 = scalar_lea.vmem [#allocation2], 64
  %v3312 = vld [vmem:[%s3311] sm:$0xff]
  %v3313 = vld [vmem:[%s3311 + $0x8] sm:$0xff]
  %v3314 = vld [vmem:[%s3311 + $0x20] sm:$0xff]
  %v3315 = vld [vmem:[%s3311 + $0x28] sm:$0xff]
  %v3316 = vld [vmem:[%s3311 + $0x40] sm:$0xff]
  %v3317 = vld [vmem:[%s3311 + $0x48] sm:$0xff]
  %v3318 = vld [vmem:[%s3311 + $0x60] sm:$0xff]
  %v3319 = vld [vmem:[%s3311 + $0x68] sm:$0xff]
  %v3320 = vld [vmem:[%s3311 + $0x80] sm:$0xff]
  %v3321 = vld [vmem:[%s3311 + $0x88] sm:$0xff]
  %s3322 = scalar_lea.vmem [#allocation2], 80
  %v3323 = vld [vmem:[%s3322] sm:$0xff]
  %v3324 = vld [vmem:[%s3322 + $0x8] sm:$0xff]
  %v3325 = vld [vmem:[%s3322 + $0x20] sm:$0xff]
  %v3326 = vld [vmem:[%s3322 + $0x28] sm:$0xff]
  %v3327 = vld [vmem:[%s3322 + $0x40] sm:$0xff]
  %v3328 = vld [vmem:[%s3322 + $0x48] sm:$0xff]
  %v3329 = vld [vmem:[%s3322 + $0x60] sm:$0xff]
  %v3330 = vld [vmem:[%s3322 + $0x68] sm:$0xff]
  %v3331 = vld [vmem:[%s3322 + $0x80] sm:$0xff]
  %v3332 = vld [vmem:[%s3322 + $0x88] sm:$0xff]
  %v3333 = vld [vmem:[%s3] sm:$0xff]
  %v3334 = vld [vmem:[%s3 + $0x8] sm:$0xff]
  %v3335 = vld [vmem:[%s3 + $0x10] sm:$0xff]
  %v3336 = vld [vmem:[%s3 + $0x18] sm:$0xff]
  %v3337 = vld [vmem:[%s3 + $0x20] sm:$0xff]
  %v3338 = vld [vmem:[%s3 + $0x28] sm:$0xff]
  %v3339 = vld [vmem:[%s3 + $0x30] sm:$0xff]
  %v3340 = vld [vmem:[%s3 + $0x38] sm:$0xff]
  %v3341 = vld [vmem:[%s3 + $0x40] sm:$0xff]
  %v3342 = vld [vmem:[%s3 + $0x48] sm:$0xff]
  %v3343 = vld [vmem:[%s3 + $0x50] sm:$0xff]
  %v3344 = vld [vmem:[%s3 + $0x58] sm:$0xff]
  %v3345 = vld [vmem:[%s3 + $0x60] sm:$0xff]
  %v3346 = vld [vmem:[%s3 + $0x68] sm:$0xff]
  %v3347 = vld [vmem:[%s3 + $0x70] sm:$0xff]
  %v3348 = vld [vmem:[%s3 + $0x78] sm:$0xff]
  %v3349 = vld [vmem:[%s3 + $0x80] sm:$0xff]
  %v3350 = vld [vmem:[%s3 + $0x88] sm:$0xff]
  %v3351 = vld [vmem:[%s3 + $0x90] sm:$0xff]
  %v3352 = vld [vmem:[%s3 + $0x98] sm:$0xff]
  %v3353 = vld [vmem:[%s3 + $0xa0] sm:$0xff]
  %v3354 = vld [vmem:[%s3 + $0xa8] sm:$0xff]
  %v3355 = vld [vmem:[%s3 + $0xb0] sm:$0xff]
  %v3356 = vld [vmem:[%s3 + $0xb8] sm:$0xff]
  %v3357 = vld [vmem:[%s3 + $0xc0] sm:$0xff]
  %v3358 = vld [vmem:[%s3 + $0xc8] sm:$0xff]
  %v3359 = vld [vmem:[%s3 + $0xd0] sm:$0xff]
  %v3360 = vld [vmem:[%s3 + $0xd8] sm:$0xff]
  %v3361 = vld [vmem:[%s3 + $0xe0] sm:$0xff]
  %v3362 = vld [vmem:[%s3 + $0xe8] sm:$0xff]
  %v3363 = vld [vmem:[%s3 + $0xf0] sm:$0xff]
  %v3364 = vld [vmem:[%s3 + $0xf8] sm:$0xff]
  %s3365 = scalar_lea.vmem %s3, 256
  %v3366 = vld [vmem:[%s3365] sm:$0xff]
  %v3367 = vld [vmem:[%s3365 + $0x8] sm:$0xff]
  %v3368 = vld [vmem:[%s3365 + $0x10] sm:$0xff]
  %v3369 = vld [vmem:[%s3365 + $0x18] sm:$0xff]
  %v3370 = vld [vmem:[%s3365 + $0x20] sm:$0xff]
  %v3371 = vld [vmem:[%s3365 + $0x28] sm:$0xff]
  %v3372 = vld [vmem:[%s3365 + $0x30] sm:$0xff]
  %v3373 = vld [vmem:[%s3365 + $0x38] sm:$0xff]
  %v3374 = vld [vmem:[%s3365 + $0x40] sm:$0xff]
  %v3375 = vld [vmem:[%s3365 + $0x48] sm:$0xff]
  %v3376 = vld [vmem:[%s3365 + $0x50] sm:$0xff]
  %v3377 = vld [vmem:[%s3365 + $0x58] sm:$0xff]
  %v3378 = vld [vmem:[%s3365 + $0x60] sm:$0xff]
  %v3379 = vld [vmem:[%s3365 + $0x68] sm:$0xff]
  %v3380 = vld [vmem:[%s3365 + $0x70] sm:$0xff]
  %v3381 = vld [vmem:[%s3365 + $0x78] sm:$0xff]
  %v3382 = vld [vmem:[%s3365 + $0x80] sm:$0xff]
  %v3383 = vld [vmem:[%s3365 + $0x88] sm:$0xff]
  %v3384 = vld [vmem:[%s3365 + $0x90] sm:$0xff]
  %v3385 = vld [vmem:[%s3365 + $0x98] sm:$0xff]
  %v3386 = vld [vmem:[%s3365 + $0xa0] sm:$0xff]
  %v3387 = vld [vmem:[%s3365 + $0xa8] sm:$0xff]
  %v3388 = vld [vmem:[%s3365 + $0xb0] sm:$0xff]
  %v3389 = vld [vmem:[%s3365 + $0xb8] sm:$0xff]
  %v3390 = vld [vmem:[%s3365 + $0xc0] sm:$0xff]
  %v3391 = vld [vmem:[%s3365 + $0xc8] sm:$0xff]
  %v3392 = vld [vmem:[%s3365 + $0xd0] sm:$0xff]
  %v3393 = vld [vmem:[%s3365 + $0xd8] sm:$0xff]
  %v3394 = vld [vmem:[%s3365 + $0xe0] sm:$0xff]
  %v3395 = vld [vmem:[%s3365 + $0xe8] sm:$0xff]
  %v3396 = vld [vmem:[%s3365 + $0xf0] sm:$0xff]
  %v3397 = vld [vmem:[%s3365 + $0xf8] sm:$0xff]
  %v3408 = vunpack.c.l.b16 %v3279
  %v3409 = vunpack.c.h.b16 %v3279
  %v3410 = vunpack.c.l.b16 %v3280
  %v3411 = vunpack.c.h.b16 %v3280
  %v3412 = vunpack.c.l.b16 %v3281
  %v3413 = vunpack.c.h.b16 %v3281
  %v3414 = vunpack.c.l.b16 %v3282
  %v3415 = vunpack.c.h.b16 %v3282
  %v3416 = vunpack.c.l.b16 %v3283
  %v3417 = vunpack.c.h.b16 %v3283
  %v3418 = vunpack.c.l.b16 %v3284
  %v3419 = vunpack.c.h.b16 %v3284
  %v3420 = vunpack.c.l.b16 %v3285
  %v3421 = vunpack.c.h.b16 %v3285
  %v3422 = vunpack.c.l.b16 %v3286
  %v3423 = vunpack.c.h.b16 %v3286
  %v3424 = vunpack.c.l.b16 %v3287
  %v3425 = vunpack.c.h.b16 %v3287
  %v3426 = vunpack.c.l.b16 %v3288
  %v3427 = vunpack.c.h.b16 %v3288
  %v3428 = vpack.c.b16 %v3410, %v3408
  %v3429 = vpack.c.b16 %v3411, %v3409
  %v3430 = vpack.c.b16 %v3414, %v3412
  %v3431 = vpack.c.b16 %v3415, %v3413
  %v3432 = vpack.c.b16 %v3418, %v3416
  %v3433 = vpack.c.b16 %v3419, %v3417
  %v3434 = vpack.c.b16 %v3422, %v3420
  %v3435 = vpack.c.b16 %v3423, %v3421
  %v3436 = vpack.c.b16 %v3426, %v3424
  %v3437 = vpack.c.b16 %v3427, %v3425
  %v3480 = vunpack.c.l.b16 %v3366
  %v3481 = vunpack.c.h.b16 %v3366
  %v3482 = vunpack.c.l.b16 %v3367
  %v3483 = vunpack.c.h.b16 %v3367
  %v3484 = vunpack.c.l.b16 %v3368
  %v3485 = vunpack.c.h.b16 %v3368
  %v3486 = vunpack.c.l.b16 %v3369
  %v3487 = vunpack.c.h.b16 %v3369
  %v3488 = vunpack.c.l.b16 %v3370
  %v3489 = vunpack.c.h.b16 %v3370
  %v3490 = vunpack.c.l.b16 %v3371
  %v3491 = vunpack.c.h.b16 %v3371
  %v3492 = vunpack.c.l.b16 %v3372
  %v3493 = vunpack.c.h.b16 %v3372
  %v3494 = vunpack.c.l.b16 %v3373
  %v3495 = vunpack.c.h.b16 %v3373
  %v3496 = vunpack.c.l.b16 %v3374
  %v3497 = vunpack.c.h.b16 %v3374
  %v3498 = vunpack.c.l.b16 %v3375
  %v3499 = vunpack.c.h.b16 %v3375
  %v3500 = vunpack.c.l.b16 %v3376
  %v3501 = vunpack.c.h.b16 %v3376
  %v3502 = vunpack.c.l.b16 %v3377
  %v3503 = vunpack.c.h.b16 %v3377
  %v3504 = vunpack.c.l.b16 %v3378
  %v3505 = vunpack.c.h.b16 %v3378
  %v3506 = vunpack.c.l.b16 %v3379
  %v3507 = vunpack.c.h.b16 %v3379
  %v3508 = vunpack.c.l.b16 %v3380
  %v3509 = vunpack.c.h.b16 %v3380
  %v3510 = vunpack.c.l.b16 %v3381
  %v3511 = vunpack.c.h.b16 %v3381
  %v3512 = vunpack.c.l.b16 %v3382
  %v3513 = vunpack.c.h.b16 %v3382
  %v3514 = vunpack.c.l.b16 %v3383
  %v3515 = vunpack.c.h.b16 %v3383
  %v3516 = vunpack.c.l.b16 %v3384
  %v3517 = vunpack.c.h.b16 %v3384
  %v3518 = vunpack.c.l.b16 %v3385
  %v3519 = vunpack.c.h.b16 %v3385
  %v3520 = vunpack.c.l.b16 %v3386
  %v3521 = vunpack.c.h.b16 %v3386
  %v3522 = vunpack.c.l.b16 %v3387
  %v3523 = vunpack.c.h.b16 %v3387
  %v3524 = vunpack.c.l.b16 %v3388
  %v3525 = vunpack.c.h.b16 %v3388
  %v3526 = vunpack.c.l.b16 %v3389
  %v3527 = vunpack.c.h.b16 %v3389
  %v3528 = vunpack.c.l.b16 %v3390
  %v3529 = vunpack.c.h.b16 %v3390
  %v3530 = vunpack.c.l.b16 %v3391
  %v3531 = vunpack.c.h.b16 %v3391
  %v3532 = vunpack.c.l.b16 %v3392
  %v3533 = vunpack.c.h.b16 %v3392
  %v3534 = vunpack.c.l.b16 %v3393
  %v3535 = vunpack.c.h.b16 %v3393
  %v3536 = vunpack.c.l.b16 %v3394
  %v3537 = vunpack.c.h.b16 %v3394
  %v3538 = vunpack.c.l.b16 %v3395
  %v3539 = vunpack.c.h.b16 %v3395
  %v3540 = vunpack.c.l.b16 %v3396
  %v3541 = vunpack.c.h.b16 %v3396
  %v3542 = vunpack.c.l.b16 %v3397
  %v3543 = vunpack.c.h.b16 %v3397
  %v3544 = vpack.c.b16 %v3482, %v3480
  %v3545 = vpack.c.b16 %v3483, %v3481
  %v3546 = vpack.c.b16 %v3486, %v3484
  %v3547 = vpack.c.b16 %v3487, %v3485
  %v3548 = vpack.c.b16 %v3490, %v3488
  %v3549 = vpack.c.b16 %v3491, %v3489
  %v3550 = vpack.c.b16 %v3494, %v3492
  %v3551 = vpack.c.b16 %v3495, %v3493
  %v3552 = vpack.c.b16 %v3498, %v3496
  %v3553 = vpack.c.b16 %v3499, %v3497
  %v3554 = vpack.c.b16 %v3502, %v3500
  %v3555 = vpack.c.b16 %v3503, %v3501
  %v3556 = vpack.c.b16 %v3506, %v3504
  %v3557 = vpack.c.b16 %v3507, %v3505
  %v3558 = vpack.c.b16 %v3510, %v3508
  %v3559 = vpack.c.b16 %v3511, %v3509
  %v3560 = vpack.c.b16 %v3514, %v3512
  %v3561 = vpack.c.b16 %v3515, %v3513
  %v3562 = vpack.c.b16 %v3518, %v3516
  %v3563 = vpack.c.b16 %v3519, %v3517
  %v3564 = vpack.c.b16 %v3522, %v3520
  %v3565 = vpack.c.b16 %v3523, %v3521
  %v3566 = vpack.c.b16 %v3526, %v3524
  %v3567 = vpack.c.b16 %v3527, %v3525
  %v3568 = vpack.c.b16 %v3530, %v3528
  %v3569 = vpack.c.b16 %v3531, %v3529
  %v3570 = vpack.c.b16 %v3534, %v3532
  %v3571 = vpack.c.b16 %v3535, %v3533
  %v3572 = vpack.c.b16 %v3538, %v3536
  %v3573 = vpack.c.b16 %v3539, %v3537
  %v3574 = vpack.c.b16 %v3542, %v3540
  %v3575 = vpack.c.b16 %v3543, %v3541
  %3608 = vmatpush.bf16.msra.mxu0 %v3558
  %3609 = vmatpush.bf16.msra.mxu0 %v3556
  %3610 = vmatpush.bf16.msra.mxu0 %v3554
  %3611 = vmatpush.bf16.msra.mxu0 %v3552
  %3612 = vmatpush.bf16.msra.mxu0 %v3550
  %3613 = vmatpush.bf16.msra.mxu0 %v3548
  %3614 = vmatpush.bf16.msra.mxu0 %v3546
  %3615 = vmatpush.bf16.msra.mxu0 %v3544
  %3616 = vmatmul.bf16.gmra.mxu0 %v3428
  %v3617 = vpop.f32.mrf.mxu0
  %v3618 = vadd.f32 0.0, %v3617
  %v3619 = vpop.f32.mrf.mxu0
  %v3620 = vadd.f32 0.0, %v3619
  %3621 = vmatmul.bf16.gmra.mxu0 %v3430
  %v3622 = vpop.f32.mrf.mxu0
  %v3623 = vadd.f32 0.0, %v3622
  %v3624 = vpop.f32.mrf.mxu0
  %v3625 = vadd.f32 0.0, %v3624
  %3626 = vmatmul.bf16.gmra.mxu0 %v3432
  %v3627 = vpop.f32.mrf.mxu0
  %v3628 = vadd.f32 0.0, %v3627
  %v3629 = vpop.f32.mrf.mxu0
  %v3630 = vadd.f32 0.0, %v3629
  %3631 = vmatmul.bf16.gmra.mxu0 %v3434
  %v3632 = vpop.f32.mrf.mxu0
  %v3633 = vadd.f32 0.0, %v3632
  %v3634 = vpop.f32.mrf.mxu0
  %v3635 = vadd.f32 0.0, %v3634
  %3636 = vmatmul.bf16.gmra.mxu0 %v3436
  %v3637 = vpop.f32.mrf.mxu0
  %v3638 = vadd.f32 0.0, %v3637
  %v3639 = vpop.f32.mrf.mxu0
  %v3640 = vadd.f32 0.0, %v3639
  %3641 = vdwg.mxu0
  %3642 = vmatpush.bf16.msra.mxu0 %v3574
  %3643 = vmatpush.bf16.msra.mxu0 %v3572
  %3644 = vmatpush.bf16.msra.mxu0 %v3570
  %3645 = vmatpush.bf16.msra.mxu0 %v3568
  %3646 = vmatpush.bf16.msra.mxu0 %v3566
  %3647 = vmatpush.bf16.msra.mxu0 %v3564
  %3648 = vmatpush.bf16.msra.mxu0 %v3562
  %3649 = vmatpush.bf16.msra.mxu0 %v3560
  %3650 = vmatmul.bf16.gmra.mxu0 %v3429
  %v3651 = vpop.f32.mrf.mxu0
  %v3652 = vadd.f32 %v3618, %v3651
  %v3653 = vpop.f32.mrf.mxu0
  %v3654 = vadd.f32 %v3620, %v3653
  %3655 = vmatmul.bf16.gmra.mxu0 %v3431
  %v3656 = vpop.f32.mrf.mxu0
  %v3657 = vadd.f32 %v3623, %v3656
  %v3658 = vpop.f32.mrf.mxu0
  %v3659 = vadd.f32 %v3625, %v3658
  %3660 = vmatmul.bf16.gmra.mxu0 %v3433
  %v3661 = vpop.f32.mrf.mxu0
  %v3662 = vadd.f32 %v3628, %v3661
  %v3663 = vpop.f32.mrf.mxu0
  %v3664 = vadd.f32 %v3630, %v3663
  %3665 = vmatmul.bf16.gmra.mxu0 %v3435
  %v3666 = vpop.f32.mrf.mxu0
  %v3667 = vadd.f32 %v3633, %v3666
  %v3668 = vpop.f32.mrf.mxu0
  %v3669 = vadd.f32 %v3635, %v3668
  %3670 = vmatmul.bf16.gmra.mxu0 %v3437
  %v3671 = vpop.f32.mrf.mxu0
  %v3672 = vadd.f32 %v3638, %v3671
  %v3673 = vpop.f32.mrf.mxu0
  %v3674 = vadd.f32 %v3640, %v3673
  %3675 = vdwg.mxu0
  %3676 = vmatpush.bf16.msra.mxu0 %v3559
  %3677 = vmatpush.bf16.msra.mxu0 %v3557
  %3678 = vmatpush.bf16.msra.mxu0 %v3555
  %3679 = vmatpush.bf16.msra.mxu0 %v3553
  %3680 = vmatpush.bf16.msra.mxu0 %v3551
  %3681 = vmatpush.bf16.msra.mxu0 %v3549
  %3682 = vmatpush.bf16.msra.mxu0 %v3547
  %3683 = vmatpush.bf16.msra.mxu0 %v3545
  %3684 = vmatmul.bf16.gmra.mxu0 %v3428
  %v3685 = vpop.f32.mrf.mxu0
  %v3686 = vadd.f32 0.0, %v3685
  %v3687 = vpop.f32.mrf.mxu0
  %v3688 = vadd.f32 0.0, %v3687
  %3689 = vmatmul.bf16.gmra.mxu0 %v3430
  %v3690 = vpop.f32.mrf.mxu0
  %v3691 = vadd.f32 0.0, %v3690
  %v3692 = vpop.f32.mrf.mxu0
  %v3693 = vadd.f32 0.0, %v3692
  %3694 = vmatmul.bf16.gmra.mxu0 %v3432
  %v3695 = vpop.f32.mrf.mxu0
  %v3696 = vadd.f32 0.0, %v3695
  %v3697 = vpop.f32.mrf.mxu0
  %v3698 = vadd.f32 0.0, %v3697
  %3699 = vmatmul.bf16.gmra.mxu0 %v3434
  %v3700 = vpop.f32.mrf.mxu0
  %v3701 = vadd.f32 0.0, %v3700
  %v3702 = vpop.f32.mrf.mxu0
  %v3703 = vadd.f32 0.0, %v3702
  %3704 = vmatmul.bf16.gmra.mxu0 %v3436
  %v3705 = vpop.f32.mrf.mxu0
  %v3706 = vadd.f32 0.0, %v3705
  %v3707 = vpop.f32.mrf.mxu0
  %v3708 = vadd.f32 0.0, %v3707
  %3709 = vdwg.mxu0
  %3710 = vmatpush.bf16.msra.mxu0 %v3575
  %3711 = vmatpush.bf16.msra.mxu0 %v3573
  %3712 = vmatpush.bf16.msra.mxu0 %v3571
  %3713 = vmatpush.bf16.msra.mxu0 %v3569
  %3714 = vmatpush.bf16.msra.mxu0 %v3567
  %3715 = vmatpush.bf16.msra.mxu0 %v3565
  %3716 = vmatpush.bf16.msra.mxu0 %v3563
  %3717 = vmatpush.bf16.msra.mxu0 %v3561
  %3718 = vmatmul.bf16.gmra.mxu0 %v3429
  %v3719 = vpop.f32.mrf.mxu0
  %v3720 = vadd.f32 %v3686, %v3719
  %v3721 = vpop.f32.mrf.mxu0
  %v3722 = vadd.f32 %v3688, %v3721
  %3723 = vmatmul.bf16.gmra.mxu0 %v3431
  %v3724 = vpop.f32.mrf.mxu0
  %v3725 = vadd.f32 %v3691, %v3724
  %v3726 = vpop.f32.mrf.mxu0
  %v3727 = vadd.f32 %v3693, %v3726
  %3728 = vmatmul.bf16.gmra.mxu0 %v3433
  %v3729 = vpop.f32.mrf.mxu0
  %v3730 = vadd.f32 %v3696, %v3729
  %v3731 = vpop.f32.mrf.mxu0
  %v3732 = vadd.f32 %v3698, %v3731
  %3733 = vmatmul.bf16.gmra.mxu0 %v3435
  %v3734 = vpop.f32.mrf.mxu0
  %v3735 = vadd.f32 %v3701, %v3734
  %v3736 = vpop.f32.mrf.mxu0
  %v3737 = vadd.f32 %v3703, %v3736
  %3738 = vmatmul.bf16.gmra.mxu0 %v3437
  %v3739 = vpop.f32.mrf.mxu0
  %v3740 = vadd.f32 %v3706, %v3739
  %v3741 = vpop.f32.mrf.mxu0
  %v3742 = vadd.f32 %v3708, %v3741
  %3743 = vdwg.mxu0
  %v3754 = vunpack.c.l.b16 %v3268
  %v3755 = vunpack.c.h.b16 %v3268
  %v3756 = vunpack.c.l.b16 %v3269
  %v3757 = vunpack.c.h.b16 %v3269
  %v3758 = vunpack.c.l.b16 %v3270
  %v3759 = vunpack.c.h.b16 %v3270
  %v3760 = vunpack.c.l.b16 %v3271
  %v3761 = vunpack.c.h.b16 %v3271
  %v3762 = vunpack.c.l.b16 %v3272
  %v3763 = vunpack.c.h.b16 %v3272
  %v3764 = vunpack.c.l.b16 %v3273
  %v3765 = vunpack.c.h.b16 %v3273
  %v3766 = vunpack.c.l.b16 %v3274
  %v3767 = vunpack.c.h.b16 %v3274
  %v3768 = vunpack.c.l.b16 %v3275
  %v3769 = vunpack.c.h.b16 %v3275
  %v3770 = vunpack.c.l.b16 %v3276
  %v3771 = vunpack.c.h.b16 %v3276
  %v3772 = vunpack.c.l.b16 %v3277
  %v3773 = vunpack.c.h.b16 %v3277
  %v3774 = vpack.c.b16 %v3756, %v3754
  %v3775 = vpack.c.b16 %v3757, %v3755
  %v3776 = vpack.c.b16 %v3760, %v3758
  %v3777 = vpack.c.b16 %v3761, %v3759
  %v3778 = vpack.c.b16 %v3764, %v3762
  %v3779 = vpack.c.b16 %v3765, %v3763
  %v3780 = vpack.c.b16 %v3768, %v3766
  %v3781 = vpack.c.b16 %v3769, %v3767
  %v3782 = vpack.c.b16 %v3772, %v3770
  %v3783 = vpack.c.b16 %v3773, %v3771
  %v3826 = vunpack.c.l.b16 %v3333
  %v3827 = vunpack.c.h.b16 %v3333
  %v3828 = vunpack.c.l.b16 %v3334
  %v3829 = vunpack.c.h.b16 %v3334
  %v3830 = vunpack.c.l.b16 %v3335
  %v3831 = vunpack.c.h.b16 %v3335
  %v3832 = vunpack.c.l.b16 %v3336
  %v3833 = vunpack.c.h.b16 %v3336
  %v3834 = vunpack.c.l.b16 %v3337
  %v3835 = vunpack.c.h.b16 %v3337
  %v3836 = vunpack.c.l.b16 %v3338
  %v3837 = vunpack.c.h.b16 %v3338
  %v3838 = vunpack.c.l.b16 %v3339
  %v3839 = vunpack.c.h.b16 %v3339
  %v3840 = vunpack.c.l.b16 %v3340
  %v3841 = vunpack.c.h.b16 %v3340
  %v3842 = vunpack.c.l.b16 %v3341
  %v3843 = vunpack.c.h.b16 %v3341
  %v3844 = vunpack.c.l.b16 %v3342
  %v3845 = vunpack.c.h.b16 %v3342
  %v3846 = vunpack.c.l.b16 %v3343
  %v3847 = vunpack.c.h.b16 %v3343
  %v3848 = vunpack.c.l.b16 %v3344
  %v3849 = vunpack.c.h.b16 %v3344
  %v3850 = vunpack.c.l.b16 %v3345
  %v3851 = vunpack.c.h.b16 %v3345
  %v3852 = vunpack.c.l.b16 %v3346
  %v3853 = vunpack.c.h.b16 %v3346
  %v3854 = vunpack.c.l.b16 %v3347
  %v3855 = vunpack.c.h.b16 %v3347
  %v3856 = vunpack.c.l.b16 %v3348
  %v3857 = vunpack.c.h.b16 %v3348
  %v3858 = vunpack.c.l.b16 %v3349
  %v3859 = vunpack.c.h.b16 %v3349
  %v3860 = vunpack.c.l.b16 %v3350
  %v3861 = vunpack.c.h.b16 %v3350
  %v3862 = vunpack.c.l.b16 %v3351
  %v3863 = vunpack.c.h.b16 %v3351
  %v3864 = vunpack.c.l.b16 %v3352
  %v3865 = vunpack.c.h.b16 %v3352
  %v3866 = vunpack.c.l.b16 %v3353
  %v3867 = vunpack.c.h.b16 %v3353
  %v3868 = vunpack.c.l.b16 %v3354
  %v3869 = vunpack.c.h.b16 %v3354
  %v3870 = vunpack.c.l.b16 %v3355
  %v3871 = vunpack.c.h.b16 %v3355
  %v3872 = vunpack.c.l.b16 %v3356
  %v3873 = vunpack.c.h.b16 %v3356
  %v3874 = vunpack.c.l.b16 %v3357
  %v3875 = vunpack.c.h.b16 %v3357
  %v3876 = vunpack.c.l.b16 %v3358
  %v3877 = vunpack.c.h.b16 %v3358
  %v3878 = vunpack.c.l.b16 %v3359
  %v3879 = vunpack.c.h.b16 %v3359
  %v3880 = vunpack.c.l.b16 %v3360
  %v3881 = vunpack.c.h.b16 %v3360
  %v3882 = vunpack.c.l.b16 %v3361
  %v3883 = vunpack.c.h.b16 %v3361
  %v3884 = vunpack.c.l.b16 %v3362
  %v3885 = vunpack.c.h.b16 %v3362
  %v3886 = vunpack.c.l.b16 %v3363
  %v3887 = vunpack.c.h.b16 %v3363
  %v3888 = vunpack.c.l.b16 %v3364
  %v3889 = vunpack.c.h.b16 %v3364
  %v3890 = vpack.c.b16 %v3828, %v3826
  %v3891 = vpack.c.b16 %v3829, %v3827
  %v3892 = vpack.c.b16 %v3832, %v3830
  %v3893 = vpack.c.b16 %v3833, %v3831
  %v3894 = vpack.c.b16 %v3836, %v3834
  %v3895 = vpack.c.b16 %v3837, %v3835
  %v3896 = vpack.c.b16 %v3840, %v3838
  %v3897 = vpack.c.b16 %v3841, %v3839
  %v3898 = vpack.c.b16 %v3844, %v3842
  %v3899 = vpack.c.b16 %v3845, %v3843
  %v3900 = vpack.c.b16 %v3848, %v3846
  %v3901 = vpack.c.b16 %v3849, %v3847
  %v3902 = vpack.c.b16 %v3852, %v3850
  %v3903 = vpack.c.b16 %v3853, %v3851
  %v3904 = vpack.c.b16 %v3856, %v3854
  %v3905 = vpack.c.b16 %v3857, %v3855
  %v3906 = vpack.c.b16 %v3860, %v3858
  %v3907 = vpack.c.b16 %v3861, %v3859
  %v3908 = vpack.c.b16 %v3864, %v3862
  %v3909 = vpack.c.b16 %v3865, %v3863
  %v3910 = vpack.c.b16 %v3868, %v3866
  %v3911 = vpack.c.b16 %v3869, %v3867
  %v3912 = vpack.c.b16 %v3872, %v3870
  %v3913 = vpack.c.b16 %v3873, %v3871
  %v3914 = vpack.c.b16 %v3876, %v3874
  %v3915 = vpack.c.b16 %v3877, %v3875
  %v3916 = vpack.c.b16 %v3880, %v3878
  %v3917 = vpack.c.b16 %v3881, %v3879
  %v3918 = vpack.c.b16 %v3884, %v3882
  %v3919 = vpack.c.b16 %v3885, %v3883
  %v3920 = vpack.c.b16 %v3888, %v3886
  %v3921 = vpack.c.b16 %v3889, %v3887
  %3954 = vmatpush.bf16.msra.mxu0 %v3904
  %3955 = vmatpush.bf16.msra.mxu0 %v3902
  %3956 = vmatpush.bf16.msra.mxu0 %v3900
  %3957 = vmatpush.bf16.msra.mxu0 %v3898
  %3958 = vmatpush.bf16.msra.mxu0 %v3896
  %3959 = vmatpush.bf16.msra.mxu0 %v3894
  %3960 = vmatpush.bf16.msra.mxu0 %v3892
  %3961 = vmatpush.bf16.msra.mxu0 %v3890
  %3962 = vmatmul.bf16.gmra.mxu0 %v3774
  %v3963 = vpop.f32.mrf.mxu0
  %v3964 = vadd.f32 %v3652, %v3963
  %v3965 = vpop.f32.mrf.mxu0
  %v3966 = vadd.f32 %v3654, %v3965
  %3967 = vmatmul.bf16.gmra.mxu0 %v3776
  %v3968 = vpop.f32.mrf.mxu0
  %v3969 = vadd.f32 %v3657, %v3968
  %v3970 = vpop.f32.mrf.mxu0
  %v3971 = vadd.f32 %v3659, %v3970
  %3972 = vmatmul.bf16.gmra.mxu0 %v3778
  %v3973 = vpop.f32.mrf.mxu0
  %v3974 = vadd.f32 %v3662, %v3973
  %v3975 = vpop.f32.mrf.mxu0
  %v3976 = vadd.f32 %v3664, %v3975
  %3977 = vmatmul.bf16.gmra.mxu0 %v3780
  %v3978 = vpop.f32.mrf.mxu0
  %v3979 = vadd.f32 %v3667, %v3978
  %v3980 = vpop.f32.mrf.mxu0
  %v3981 = vadd.f32 %v3669, %v3980
  %3982 = vmatmul.bf16.gmra.mxu0 %v3782
  %v3983 = vpop.f32.mrf.mxu0
  %v3984 = vadd.f32 %v3672, %v3983
  %v3985 = vpop.f32.mrf.mxu0
  %v3986 = vadd.f32 %v3674, %v3985
  %3987 = vdwg.mxu0
  %3988 = vmatpush.bf16.msra.mxu0 %v3920
  %3989 = vmatpush.bf16.msra.mxu0 %v3918
  %3990 = vmatpush.bf16.msra.mxu0 %v3916
  %3991 = vmatpush.bf16.msra.mxu0 %v3914
  %3992 = vmatpush.bf16.msra.mxu0 %v3912
  %3993 = vmatpush.bf16.msra.mxu0 %v3910
  %3994 = vmatpush.bf16.msra.mxu0 %v3908
  %3995 = vmatpush.bf16.msra.mxu0 %v3906
  %3996 = vmatmul.bf16.gmra.mxu0 %v3775
  %v3997 = vpop.f32.mrf.mxu0
  %v3998 = vadd.f32 %v3964, %v3997
  %v3999 = vpop.f32.mrf.mxu0
  %v4000 = vadd.f32 %v3966, %v3999
  %4001 = vmatmul.bf16.gmra.mxu0 %v3777
  %v4002 = vpop.f32.mrf.mxu0
  %v4003 = vadd.f32 %v3969, %v4002
  %v4004 = vpop.f32.mrf.mxu0
  %v4005 = vadd.f32 %v3971, %v4004
  %4006 = vmatmul.bf16.gmra.mxu0 %v3779
  %v4007 = vpop.f32.mrf.mxu0
  %v4008 = vadd.f32 %v3974, %v4007
  %v4009 = vpop.f32.mrf.mxu0
  %v4010 = vadd.f32 %v3976, %v4009
  %4011 = vmatmul.bf16.gmra.mxu0 %v3781
  %v4012 = vpop.f32.mrf.mxu0
  %v4013 = vadd.f32 %v3979, %v4012
  %v4014 = vpop.f32.mrf.mxu0
  %v4015 = vadd.f32 %v3981, %v4014
  %4016 = vmatmul.bf16.gmra.mxu0 %v3783
  %v4017 = vpop.f32.mrf.mxu0
  %v4018 = vadd.f32 %v3984, %v4017
  %v4019 = vpop.f32.mrf.mxu0
  %v4020 = vadd.f32 %v3986, %v4019
  %4021 = vdwg.mxu0
  %4022 = vmatpush.bf16.msra.mxu0 %v3905
  %4023 = vmatpush.bf16.msra.mxu0 %v3903
  %4024 = vmatpush.bf16.msra.mxu0 %v3901
  %4025 = vmatpush.bf16.msra.mxu0 %v3899
  %4026 = vmatpush.bf16.msra.mxu0 %v3897
  %4027 = vmatpush.bf16.msra.mxu0 %v3895
  %4028 = vmatpush.bf16.msra.mxu0 %v3893
  %4029 = vmatpush.bf16.msra.mxu0 %v3891
  %4030 = vmatmul.bf16.gmra.mxu0 %v3774
  %v4031 = vpop.f32.mrf.mxu0
  %v4032 = vadd.f32 %v3720, %v4031
  %v4033 = vpop.f32.mrf.mxu0
  %v4034 = vadd.f32 %v3722, %v4033
  %4035 = vmatmul.bf16.gmra.mxu0 %v3776
  %v4036 = vpop.f32.mrf.mxu0
  %v4037 = vadd.f32 %v3725, %v4036
  %v4038 = vpop.f32.mrf.mxu0
  %v4039 = vadd.f32 %v3727, %v4038
  %4040 = vmatmul.bf16.gmra.mxu0 %v3778
  %v4041 = vpop.f32.mrf.mxu0
  %v4042 = vadd.f32 %v3730, %v4041
  %v4043 = vpop.f32.mrf.mxu0
  %v4044 = vadd.f32 %v3732, %v4043
  %4045 = vmatmul.bf16.gmra.mxu0 %v3780
  %v4046 = vpop.f32.mrf.mxu0
  %v4047 = vadd.f32 %v3735, %v4046
  %v4048 = vpop.f32.mrf.mxu0
  %v4049 = vadd.f32 %v3737, %v4048
  %4050 = vmatmul.bf16.gmra.mxu0 %v3782
  %v4051 = vpop.f32.mrf.mxu0
  %v4052 = vadd.f32 %v3740, %v4051
  %v4053 = vpop.f32.mrf.mxu0
  %v4054 = vadd.f32 %v3742, %v4053
  %4055 = vdwg.mxu0
  %4056 = vmatpush.bf16.msra.mxu0 %v3921
  %4057 = vmatpush.bf16.msra.mxu0 %v3919
  %4058 = vmatpush.bf16.msra.mxu0 %v3917
  %4059 = vmatpush.bf16.msra.mxu0 %v3915
  %4060 = vmatpush.bf16.msra.mxu0 %v3913
  %4061 = vmatpush.bf16.msra.mxu0 %v3911
  %4062 = vmatpush.bf16.msra.mxu0 %v3909
  %4063 = vmatpush.bf16.msra.mxu0 %v3907
  %4064 = vmatmul.bf16.gmra.mxu0 %v3775
  %v4065 = vpop.f32.mrf.mxu0
  %v4066 = vadd.f32 %v4032, %v4065
  %v4067 = vpop.f32.mrf.mxu0
  %v4068 = vadd.f32 %v4034, %v4067
  %4069 = vmatmul.bf16.gmra.mxu0 %v3777
  %v4070 = vpop.f32.mrf.mxu0
  %v4071 = vadd.f32 %v4037, %v4070
  %v4072 = vpop.f32.mrf.mxu0
  %v4073 = vadd.f32 %v4039, %v4072
  %4074 = vmatmul.bf16.gmra.mxu0 %v3779
  %v4075 = vpop.f32.mrf.mxu0
  %v4076 = vadd.f32 %v4042, %v4075
  %v4077 = vpop.f32.mrf.mxu0
  %v4078 = vadd.f32 %v4044, %v4077
  %4079 = vmatmul.bf16.gmra.mxu0 %v3781
  %v4080 = vpop.f32.mrf.mxu0
  %v4081 = vadd.f32 %v4047, %v4080
  %v4082 = vpop.f32.mrf.mxu0
  %v4083 = vadd.f32 %v4049, %v4082
  %4084 = vmatmul.bf16.gmra.mxu0 %v3783
  %v4085 = vpop.f32.mrf.mxu0
  %v4086 = vadd.f32 %v4052, %v4085
  %v4087 = vpop.f32.mrf.mxu0
  %v4088 = vadd.f32 %v4054, %v4087
  %4089 = vdwg.mxu0
  %s4090 = scalar_lea.vmem %s3, 512
  %v4091 = vld [vmem:[%s4090] sm:$0xff]
  %v4092 = vld [vmem:[%s4090 + $0x8] sm:$0xff]
  %v4093 = vld [vmem:[%s4090 + $0x10] sm:$0xff]
  %v4094 = vld [vmem:[%s4090 + $0x18] sm:$0xff]
  %v4095 = vld [vmem:[%s4090 + $0x20] sm:$0xff]
  %v4096 = vld [vmem:[%s4090 + $0x28] sm:$0xff]
  %v4097 = vld [vmem:[%s4090 + $0x30] sm:$0xff]
  %v4098 = vld [vmem:[%s4090 + $0x38] sm:$0xff]
  %v4099 = vld [vmem:[%s4090 + $0x40] sm:$0xff]
  %v4100 = vld [vmem:[%s4090 + $0x48] sm:$0xff]
  %v4101 = vld [vmem:[%s4090 + $0x50] sm:$0xff]
  %v4102 = vld [vmem:[%s4090 + $0x58] sm:$0xff]
  %v4103 = vld [vmem:[%s4090 + $0x60] sm:$0xff]
  %v4104 = vld [vmem:[%s4090 + $0x68] sm:$0xff]
  %v4105 = vld [vmem:[%s4090 + $0x70] sm:$0xff]
  %v4106 = vld [vmem:[%s4090 + $0x78] sm:$0xff]
  %v4107 = vld [vmem:[%s4090 + $0x80] sm:$0xff]
  %v4108 = vld [vmem:[%s4090 + $0x88] sm:$0xff]
  %v4109 = vld [vmem:[%s4090 + $0x90] sm:$0xff]
  %v4110 = vld [vmem:[%s4090 + $0x98] sm:$0xff]
  %v4111 = vld [vmem:[%s4090 + $0xa0] sm:$0xff]
  %v4112 = vld [vmem:[%s4090 + $0xa8] sm:$0xff]
  %v4113 = vld [vmem:[%s4090 + $0xb0] sm:$0xff]
  %v4114 = vld [vmem:[%s4090 + $0xb8] sm:$0xff]
  %v4115 = vld [vmem:[%s4090 + $0xc0] sm:$0xff]
  %v4116 = vld [vmem:[%s4090 + $0xc8] sm:$0xff]
  %v4117 = vld [vmem:[%s4090 + $0xd0] sm:$0xff]
  %v4118 = vld [vmem:[%s4090 + $0xd8] sm:$0xff]
  %v4119 = vld [vmem:[%s4090 + $0xe0] sm:$0xff]
  %v4120 = vld [vmem:[%s4090 + $0xe8] sm:$0xff]
  %v4121 = vld [vmem:[%s4090 + $0xf0] sm:$0xff]
  %v4122 = vld [vmem:[%s4090 + $0xf8] sm:$0xff]
  %v4133 = vunpack.c.l.b16 %v3290
  %v4134 = vunpack.c.h.b16 %v3290
  %v4135 = vunpack.c.l.b16 %v3291
  %v4136 = vunpack.c.h.b16 %v3291
  %v4137 = vunpack.c.l.b16 %v3292
  %v4138 = vunpack.c.h.b16 %v3292
  %v4139 = vunpack.c.l.b16 %v3293
  %v4140 = vunpack.c.h.b16 %v3293
  %v4141 = vunpack.c.l.b16 %v3294
  %v4142 = vunpack.c.h.b16 %v3294
  %v4143 = vunpack.c.l.b16 %v3295
  %v4144 = vunpack.c.h.b16 %v3295
  %v4145 = vunpack.c.l.b16 %v3296
  %v4146 = vunpack.c.h.b16 %v3296
  %v4147 = vunpack.c.l.b16 %v3297
  %v4148 = vunpack.c.h.b16 %v3297
  %v4149 = vunpack.c.l.b16 %v3298
  %v4150 = vunpack.c.h.b16 %v3298
  %v4151 = vunpack.c.l.b16 %v3299
  %v4152 = vunpack.c.h.b16 %v3299
  %v4153 = vpack.c.b16 %v4135, %v4133
  %v4154 = vpack.c.b16 %v4136, %v4134
  %v4155 = vpack.c.b16 %v4139, %v4137
  %v4156 = vpack.c.b16 %v4140, %v4138
  %v4157 = vpack.c.b16 %v4143, %v4141
  %v4158 = vpack.c.b16 %v4144, %v4142
  %v4159 = vpack.c.b16 %v4147, %v4145
  %v4160 = vpack.c.b16 %v4148, %v4146
  %v4161 = vpack.c.b16 %v4151, %v4149
  %v4162 = vpack.c.b16 %v4152, %v4150
  %v4205 = vunpack.c.l.b16 %v4091
  %v4206 = vunpack.c.h.b16 %v4091
  %v4207 = vunpack.c.l.b16 %v4092
  %v4208 = vunpack.c.h.b16 %v4092
  %v4209 = vunpack.c.l.b16 %v4093
  %v4210 = vunpack.c.h.b16 %v4093
  %v4211 = vunpack.c.l.b16 %v4094
  %v4212 = vunpack.c.h.b16 %v4094
  %v4213 = vunpack.c.l.b16 %v4095
  %v4214 = vunpack.c.h.b16 %v4095
  %v4215 = vunpack.c.l.b16 %v4096
  %v4216 = vunpack.c.h.b16 %v4096
  %v4217 = vunpack.c.l.b16 %v4097
  %v4218 = vunpack.c.h.b16 %v4097
  %v4219 = vunpack.c.l.b16 %v4098
  %v4220 = vunpack.c.h.b16 %v4098
  %v4221 = vunpack.c.l.b16 %v4099
  %v4222 = vunpack.c.h.b16 %v4099
  %v4223 = vunpack.c.l.b16 %v4100
  %v4224 = vunpack.c.h.b16 %v4100
  %v4225 = vunpack.c.l.b16 %v4101
  %v4226 = vunpack.c.h.b16 %v4101
  %v4227 = vunpack.c.l.b16 %v4102
  %v4228 = vunpack.c.h.b16 %v4102
  %v4229 = vunpack.c.l.b16 %v4103
  %v4230 = vunpack.c.h.b16 %v4103
  %v4231 = vunpack.c.l.b16 %v4104
  %v4232 = vunpack.c.h.b16 %v4104
  %v4233 = vunpack.c.l.b16 %v4105
  %v4234 = vunpack.c.h.b16 %v4105
  %v4235 = vunpack.c.l.b16 %v4106
  %v4236 = vunpack.c.h.b16 %v4106
  %v4237 = vunpack.c.l.b16 %v4107
  %v4238 = vunpack.c.h.b16 %v4107
  %v4239 = vunpack.c.l.b16 %v4108
  %v4240 = vunpack.c.h.b16 %v4108
  %v4241 = vunpack.c.l.b16 %v4109
  %v4242 = vunpack.c.h.b16 %v4109
  %v4243 = vunpack.c.l.b16 %v4110
  %v4244 = vunpack.c.h.b16 %v4110
  %v4245 = vunpack.c.l.b16 %v4111
  %v4246 = vunpack.c.h.b16 %v4111
  %v4247 = vunpack.c.l.b16 %v4112
  %v4248 = vunpack.c.h.b16 %v4112
  %v4249 = vunpack.c.l.b16 %v4113
  %v4250 = vunpack.c.h.b16 %v4113
  %v4251 = vunpack.c.l.b16 %v4114
  %v4252 = vunpack.c.h.b16 %v4114
  %v4253 = vunpack.c.l.b16 %v4115
  %v4254 = vunpack.c.h.b16 %v4115
  %v4255 = vunpack.c.l.b16 %v4116
  %v4256 = vunpack.c.h.b16 %v4116
  %v4257 = vunpack.c.l.b16 %v4117
  %v4258 = vunpack.c.h.b16 %v4117
  %v4259 = vunpack.c.l.b16 %v4118
  %v4260 = vunpack.c.h.b16 %v4118
  %v4261 = vunpack.c.l.b16 %v4119
  %v4262 = vunpack.c.h.b16 %v4119
  %v4263 = vunpack.c.l.b16 %v4120
  %v4264 = vunpack.c.h.b16 %v4120
  %v4265 = vunpack.c.l.b16 %v4121
  %v4266 = vunpack.c.h.b16 %v4121
  %v4267 = vunpack.c.l.b16 %v4122
  %v4268 = vunpack.c.h.b16 %v4122
  %v4269 = vpack.c.b16 %v4207, %v4205
  %v4270 = vpack.c.b16 %v4208, %v4206
  %v4271 = vpack.c.b16 %v4211, %v4209
  %v4272 = vpack.c.b16 %v4212, %v4210
  %v4273 = vpack.c.b16 %v4215, %v4213
  %v4274 = vpack.c.b16 %v4216, %v4214
  %v4275 = vpack.c.b16 %v4219, %v4217
  %v4276 = vpack.c.b16 %v4220, %v4218
  %v4277 = vpack.c.b16 %v4223, %v4221
  %v4278 = vpack.c.b16 %v4224, %v4222
  %v4279 = vpack.c.b16 %v4227, %v4225
  %v4280 = vpack.c.b16 %v4228, %v4226
  %v4281 = vpack.c.b16 %v4231, %v4229
  %v4282 = vpack.c.b16 %v4232, %v4230
  %v4283 = vpack.c.b16 %v4235, %v4233
  %v4284 = vpack.c.b16 %v4236, %v4234
  %v4285 = vpack.c.b16 %v4239, %v4237
  %v4286 = vpack.c.b16 %v4240, %v4238
  %v4287 = vpack.c.b16 %v4243, %v4241
  %v4288 = vpack.c.b16 %v4244, %v4242
  %v4289 = vpack.c.b16 %v4247, %v4245
  %v4290 = vpack.c.b16 %v4248, %v4246
  %v4291 = vpack.c.b16 %v4251, %v4249
  %v4292 = vpack.c.b16 %v4252, %v4250
  %v4293 = vpack.c.b16 %v4255, %v4253
  %v4294 = vpack.c.b16 %v4256, %v4254
  %v4295 = vpack.c.b16 %v4259, %v4257
  %v4296 = vpack.c.b16 %v4260, %v4258
  %v4297 = vpack.c.b16 %v4263, %v4261
  %v4298 = vpack.c.b16 %v4264, %v4262
  %v4299 = vpack.c.b16 %v4267, %v4265
  %v4300 = vpack.c.b16 %v4268, %v4266
  %4333 = vmatpush.bf16.msra.mxu0 %v4283
  %4334 = vmatpush.bf16.msra.mxu0 %v4281
  %4335 = vmatpush.bf16.msra.mxu0 %v4279
  %4336 = vmatpush.bf16.msra.mxu0 %v4277
  %4337 = vmatpush.bf16.msra.mxu0 %v4275
  %4338 = vmatpush.bf16.msra.mxu0 %v4273
  %4339 = vmatpush.bf16.msra.mxu0 %v4271
  %4340 = vmatpush.bf16.msra.mxu0 %v4269
  %4341 = vmatmul.bf16.gmra.mxu0 %v4153
  %v4342 = vpop.f32.mrf.mxu0
  %v4343 = vadd.f32 0.0, %v4342
  %v4344 = vpop.f32.mrf.mxu0
  %v4345 = vadd.f32 0.0, %v4344
  %4346 = vmatmul.bf16.gmra.mxu0 %v4155
  %v4347 = vpop.f32.mrf.mxu0
  %v4348 = vadd.f32 0.0, %v4347
  %v4349 = vpop.f32.mrf.mxu0
  %v4350 = vadd.f32 0.0, %v4349
  %4351 = vmatmul.bf16.gmra.mxu0 %v4157
  %v4352 = vpop.f32.mrf.mxu0
  %v4353 = vadd.f32 0.0, %v4352
  %v4354 = vpop.f32.mrf.mxu0
  %v4355 = vadd.f32 0.0, %v4354
  %4356 = vmatmul.bf16.gmra.mxu0 %v4159
  %v4357 = vpop.f32.mrf.mxu0
  %v4358 = vadd.f32 0.0, %v4357
  %v4359 = vpop.f32.mrf.mxu0
  %v4360 = vadd.f32 0.0, %v4359
  %4361 = vmatmul.bf16.gmra.mxu0 %v4161
  %v4362 = vpop.f32.mrf.mxu0
  %v4363 = vadd.f32 0.0, %v4362
  %v4364 = vpop.f32.mrf.mxu0
  %v4365 = vadd.f32 0.0, %v4364
  %4366 = vdwg.mxu0
  %4367 = vmatpush.bf16.msra.mxu0 %v4299
  %4368 = vmatpush.bf16.msra.mxu0 %v4297
  %4369 = vmatpush.bf16.msra.mxu0 %v4295
  %4370 = vmatpush.bf16.msra.mxu0 %v4293
  %4371 = vmatpush.bf16.msra.mxu0 %v4291
  %4372 = vmatpush.bf16.msra.mxu0 %v4289
  %4373 = vmatpush.bf16.msra.mxu0 %v4287
  %4374 = vmatpush.bf16.msra.mxu0 %v4285
  %4375 = vmatmul.bf16.gmra.mxu0 %v4154
  %v4376 = vpop.f32.mrf.mxu0
  %v4377 = vadd.f32 %v4343, %v4376
  %v4378 = vpop.f32.mrf.mxu0
  %v4379 = vadd.f32 %v4345, %v4378
  %4380 = vmatmul.bf16.gmra.mxu0 %v4156
  %v4381 = vpop.f32.mrf.mxu0
  %v4382 = vadd.f32 %v4348, %v4381
  %v4383 = vpop.f32.mrf.mxu0
  %v4384 = vadd.f32 %v4350, %v4383
  %4385 = vmatmul.bf16.gmra.mxu0 %v4158
  %v4386 = vpop.f32.mrf.mxu0
  %v4387 = vadd.f32 %v4353, %v4386
  %v4388 = vpop.f32.mrf.mxu0
  %v4389 = vadd.f32 %v4355, %v4388
  %4390 = vmatmul.bf16.gmra.mxu0 %v4160
  %v4391 = vpop.f32.mrf.mxu0
  %v4392 = vadd.f32 %v4358, %v4391
  %v4393 = vpop.f32.mrf.mxu0
  %v4394 = vadd.f32 %v4360, %v4393
  %4395 = vmatmul.bf16.gmra.mxu0 %v4162
  %v4396 = vpop.f32.mrf.mxu0
  %v4397 = vadd.f32 %v4363, %v4396
  %v4398 = vpop.f32.mrf.mxu0
  %v4399 = vadd.f32 %v4365, %v4398
  %4400 = vdwg.mxu0
  %4401 = vmatpush.bf16.msra.mxu0 %v4284
  %4402 = vmatpush.bf16.msra.mxu0 %v4282
  %4403 = vmatpush.bf16.msra.mxu0 %v4280
  %4404 = vmatpush.bf16.msra.mxu0 %v4278
  %4405 = vmatpush.bf16.msra.mxu0 %v4276
  %4406 = vmatpush.bf16.msra.mxu0 %v4274
  %4407 = vmatpush.bf16.msra.mxu0 %v4272
  %4408 = vmatpush.bf16.msra.mxu0 %v4270
  %4409 = vmatmul.bf16.gmra.mxu0 %v4153
  %v4410 = vpop.f32.mrf.mxu0
  %v4411 = vadd.f32 0.0, %v4410
  %v4412 = vpop.f32.mrf.mxu0
  %v4413 = vadd.f32 0.0, %v4412
  %4414 = vmatmul.bf16.gmra.mxu0 %v4155
  %v4415 = vpop.f32.mrf.mxu0
  %v4416 = vadd.f32 0.0, %v4415
  %v4417 = vpop.f32.mrf.mxu0
  %v4418 = vadd.f32 0.0, %v4417
  %4419 = vmatmul.bf16.gmra.mxu0 %v4157
  %v4420 = vpop.f32.mrf.mxu0
  %v4421 = vadd.f32 0.0, %v4420
  %v4422 = vpop.f32.mrf.mxu0
  %v4423 = vadd.f32 0.0, %v4422
  %4424 = vmatmul.bf16.gmra.mxu0 %v4159
  %v4425 = vpop.f32.mrf.mxu0
  %v4426 = vadd.f32 0.0, %v4425
  %v4427 = vpop.f32.mrf.mxu0
  %v4428 = vadd.f32 0.0, %v4427
  %4429 = vmatmul.bf16.gmra.mxu0 %v4161
  %v4430 = vpop.f32.mrf.mxu0
  %v4431 = vadd.f32 0.0, %v4430
  %v4432 = vpop.f32.mrf.mxu0
  %v4433 = vadd.f32 0.0, %v4432
  %4434 = vdwg.mxu0
  %4435 = vmatpush.bf16.msra.mxu0 %v4300
  %4436 = vmatpush.bf16.msra.mxu0 %v4298
  %4437 = vmatpush.bf16.msra.mxu0 %v4296
  %4438 = vmatpush.bf16.msra.mxu0 %v4294
  %4439 = vmatpush.bf16.msra.mxu0 %v4292
  %4440 = vmatpush.bf16.msra.mxu0 %v4290
  %4441 = vmatpush.bf16.msra.mxu0 %v4288
  %4442 = vmatpush.bf16.msra.mxu0 %v4286
  %4443 = vmatmul.bf16.gmra.mxu0 %v4154
  %v4444 = vpop.f32.mrf.mxu0
  %v4445 = vadd.f32 %v4411, %v4444
  %v4446 = vpop.f32.mrf.mxu0
  %v4447 = vadd.f32 %v4413, %v4446
  %4448 = vmatmul.bf16.gmra.mxu0 %v4156
  %v4449 = vpop.f32.mrf.mxu0
  %v4450 = vadd.f32 %v4416, %v4449
  %v4451 = vpop.f32.mrf.mxu0
  %v4452 = vadd.f32 %v4418, %v4451
  %4453 = vmatmul.bf16.gmra.mxu0 %v4158
  %v4454 = vpop.f32.mrf.mxu0
  %v4455 = vadd.f32 %v4421, %v4454
  %v4456 = vpop.f32.mrf.mxu0
  %v4457 = vadd.f32 %v4423, %v4456
  %4458 = vmatmul.bf16.gmra.mxu0 %v4160
  %v4459 = vpop.f32.mrf.mxu0
  %v4460 = vadd.f32 %v4426, %v4459
  %v4461 = vpop.f32.mrf.mxu0
  %v4462 = vadd.f32 %v4428, %v4461
  %4463 = vmatmul.bf16.gmra.mxu0 %v4162
  %v4464 = vpop.f32.mrf.mxu0
  %v4465 = vadd.f32 %v4431, %v4464
  %v4466 = vpop.f32.mrf.mxu0
  %v4467 = vadd.f32 %v4433, %v4466
  %4468 = vdwg.mxu0
  %v4469 = vadd.f32 %v3998, %v4377
  %v4470 = vadd.f32 %v4066, %v4445
  %v4471 = vadd.f32 %v4000, %v4379
  %v4472 = vadd.f32 %v4068, %v4447
  %v4473 = vadd.f32 %v4003, %v4382
  %v4474 = vadd.f32 %v4071, %v4450
  %v4475 = vadd.f32 %v4005, %v4384
  %v4476 = vadd.f32 %v4073, %v4452
  %v4477 = vadd.f32 %v4008, %v4387
  %v4478 = vadd.f32 %v4076, %v4455
  %v4479 = vadd.f32 %v4010, %v4389
  %v4480 = vadd.f32 %v4078, %v4457
  %v4481 = vadd.f32 %v4013, %v4392
  %v4482 = vadd.f32 %v4081, %v4460
  %v4483 = vadd.f32 %v4015, %v4394
  %v4484 = vadd.f32 %v4083, %v4462
  %v4485 = vadd.f32 %v4018, %v4397
  %v4486 = vadd.f32 %v4086, %v4465
  %v4487 = vadd.f32 %v4020, %v4399
  %v4488 = vadd.f32 %v4088, %v4467
  %s4489 = scalar_lea.vmem %s3, 768
  %v4490 = vld [vmem:[%s4489] sm:$0xff]
  %v4491 = vld [vmem:[%s4489 + $0x8] sm:$0xff]
  %v4492 = vld [vmem:[%s4489 + $0x10] sm:$0xff]
  %v4493 = vld [vmem:[%s4489 + $0x18] sm:$0xff]
  %v4494 = vld [vmem:[%s4489 + $0x20] sm:$0xff]
  %v4495 = vld [vmem:[%s4489 + $0x28] sm:$0xff]
  %v4496 = vld [vmem:[%s4489 + $0x30] sm:$0xff]
  %v4497 = vld [vmem:[%s4489 + $0x38] sm:$0xff]
  %v4498 = vld [vmem:[%s4489 + $0x40] sm:$0xff]
  %v4499 = vld [vmem:[%s4489 + $0x48] sm:$0xff]
  %v4500 = vld [vmem:[%s4489 + $0x50] sm:$0xff]
  %v4501 = vld [vmem:[%s4489 + $0x58] sm:$0xff]
  %v4502 = vld [vmem:[%s4489 + $0x60] sm:$0xff]
  %v4503 = vld [vmem:[%s4489 + $0x68] sm:$0xff]
  %v4504 = vld [vmem:[%s4489 + $0x70] sm:$0xff]
  %v4505 = vld [vmem:[%s4489 + $0x78] sm:$0xff]
  %v4506 = vld [vmem:[%s4489 + $0x80] sm:$0xff]
  %v4507 = vld [vmem:[%s4489 + $0x88] sm:$0xff]
  %v4508 = vld [vmem:[%s4489 + $0x90] sm:$0xff]
  %v4509 = vld [vmem:[%s4489 + $0x98] sm:$0xff]
  %v4510 = vld [vmem:[%s4489 + $0xa0] sm:$0xff]
  %v4511 = vld [vmem:[%s4489 + $0xa8] sm:$0xff]
  %v4512 = vld [vmem:[%s4489 + $0xb0] sm:$0xff]
  %v4513 = vld [vmem:[%s4489 + $0xb8] sm:$0xff]
  %v4514 = vld [vmem:[%s4489 + $0xc0] sm:$0xff]
  %v4515 = vld [vmem:[%s4489 + $0xc8] sm:$0xff]
  %v4516 = vld [vmem:[%s4489 + $0xd0] sm:$0xff]
  %v4517 = vld [vmem:[%s4489 + $0xd8] sm:$0xff]
  %v4518 = vld [vmem:[%s4489 + $0xe0] sm:$0xff]
  %v4519 = vld [vmem:[%s4489 + $0xe8] sm:$0xff]
  %v4520 = vld [vmem:[%s4489 + $0xf0] sm:$0xff]
  %v4521 = vld [vmem:[%s4489 + $0xf8] sm:$0xff]
  %v4532 = vunpack.c.l.b16 %v3301
  %v4533 = vunpack.c.h.b16 %v3301
  %v4534 = vunpack.c.l.b16 %v3302
  %v4535 = vunpack.c.h.b16 %v3302
  %v4536 = vunpack.c.l.b16 %v3303
  %v4537 = vunpack.c.h.b16 %v3303
  %v4538 = vunpack.c.l.b16 %v3304
  %v4539 = vunpack.c.h.b16 %v3304
  %v4540 = vunpack.c.l.b16 %v3305
  %v4541 = vunpack.c.h.b16 %v3305
  %v4542 = vunpack.c.l.b16 %v3306
  %v4543 = vunpack.c.h.b16 %v3306
  %v4544 = vunpack.c.l.b16 %v3307
  %v4545 = vunpack.c.h.b16 %v3307
  %v4546 = vunpack.c.l.b16 %v3308
  %v4547 = vunpack.c.h.b16 %v3308
  %v4548 = vunpack.c.l.b16 %v3309
  %v4549 = vunpack.c.h.b16 %v3309
  %v4550 = vunpack.c.l.b16 %v3310
  %v4551 = vunpack.c.h.b16 %v3310
  %v4552 = vpack.c.b16 %v4534, %v4532
  %v4553 = vpack.c.b16 %v4535, %v4533
  %v4554 = vpack.c.b16 %v4538, %v4536
  %v4555 = vpack.c.b16 %v4539, %v4537
  %v4556 = vpack.c.b16 %v4542, %v4540
  %v4557 = vpack.c.b16 %v4543, %v4541
  %v4558 = vpack.c.b16 %v4546, %v4544
  %v4559 = vpack.c.b16 %v4547, %v4545
  %v4560 = vpack.c.b16 %v4550, %v4548
  %v4561 = vpack.c.b16 %v4551, %v4549
  %v4604 = vunpack.c.l.b16 %v4490
  %v4605 = vunpack.c.h.b16 %v4490
  %v4606 = vunpack.c.l.b16 %v4491
  %v4607 = vunpack.c.h.b16 %v4491
  %v4608 = vunpack.c.l.b16 %v4492
  %v4609 = vunpack.c.h.b16 %v4492
  %v4610 = vunpack.c.l.b16 %v4493
  %v4611 = vunpack.c.h.b16 %v4493
  %v4612 = vunpack.c.l.b16 %v4494
  %v4613 = vunpack.c.h.b16 %v4494
  %v4614 = vunpack.c.l.b16 %v4495
  %v4615 = vunpack.c.h.b16 %v4495
  %v4616 = vunpack.c.l.b16 %v4496
  %v4617 = vunpack.c.h.b16 %v4496
  %v4618 = vunpack.c.l.b16 %v4497
  %v4619 = vunpack.c.h.b16 %v4497
  %v4620 = vunpack.c.l.b16 %v4498
  %v4621 = vunpack.c.h.b16 %v4498
  %v4622 = vunpack.c.l.b16 %v4499
  %v4623 = vunpack.c.h.b16 %v4499
  %v4624 = vunpack.c.l.b16 %v4500
  %v4625 = vunpack.c.h.b16 %v4500
  %v4626 = vunpack.c.l.b16 %v4501
  %v4627 = vunpack.c.h.b16 %v4501
  %v4628 = vunpack.c.l.b16 %v4502
  %v4629 = vunpack.c.h.b16 %v4502
  %v4630 = vunpack.c.l.b16 %v4503
  %v4631 = vunpack.c.h.b16 %v4503
  %v4632 = vunpack.c.l.b16 %v4504
  %v4633 = vunpack.c.h.b16 %v4504
  %v4634 = vunpack.c.l.b16 %v4505
  %v4635 = vunpack.c.h.b16 %v4505
  %v4636 = vunpack.c.l.b16 %v4506
  %v4637 = vunpack.c.h.b16 %v4506
  %v4638 = vunpack.c.l.b16 %v4507
  %v4639 = vunpack.c.h.b16 %v4507
  %v4640 = vunpack.c.l.b16 %v4508
  %v4641 = vunpack.c.h.b16 %v4508
  %v4642 = vunpack.c.l.b16 %v4509
  %v4643 = vunpack.c.h.b16 %v4509
  %v4644 = vunpack.c.l.b16 %v4510
  %v4645 = vunpack.c.h.b16 %v4510
  %v4646 = vunpack.c.l.b16 %v4511
  %v4647 = vunpack.c.h.b16 %v4511
  %v4648 = vunpack.c.l.b16 %v4512
  %v4649 = vunpack.c.h.b16 %v4512
  %v4650 = vunpack.c.l.b16 %v4513
  %v4651 = vunpack.c.h.b16 %v4513
  %v4652 = vunpack.c.l.b16 %v4514
  %v4653 = vunpack.c.h.b16 %v4514
  %v4654 = vunpack.c.l.b16 %v4515
  %v4655 = vunpack.c.h.b16 %v4515
  %v4656 = vunpack.c.l.b16 %v4516
  %v4657 = vunpack.c.h.b16 %v4516
  %v4658 = vunpack.c.l.b16 %v4517
  %v4659 = vunpack.c.h.b16 %v4517
  %v4660 = vunpack.c.l.b16 %v4518
  %v4661 = vunpack.c.h.b16 %v4518
  %v4662 = vunpack.c.l.b16 %v4519
  %v4663 = vunpack.c.h.b16 %v4519
  %v4664 = vunpack.c.l.b16 %v4520
  %v4665 = vunpack.c.h.b16 %v4520
  %v4666 = vunpack.c.l.b16 %v4521
  %v4667 = vunpack.c.h.b16 %v4521
  %v4668 = vpack.c.b16 %v4606, %v4604
  %v4669 = vpack.c.b16 %v4607, %v4605
  %v4670 = vpack.c.b16 %v4610, %v4608
  %v4671 = vpack.c.b16 %v4611, %v4609
  %v4672 = vpack.c.b16 %v4614, %v4612
  %v4673 = vpack.c.b16 %v4615, %v4613
  %v4674 = vpack.c.b16 %v4618, %v4616
  %v4675 = vpack.c.b16 %v4619, %v4617
  %v4676 = vpack.c.b16 %v4622, %v4620
  %v4677 = vpack.c.b16 %v4623, %v4621
  %v4678 = vpack.c.b16 %v4626, %v4624
  %v4679 = vpack.c.b16 %v4627, %v4625
  %v4680 = vpack.c.b16 %v4630, %v4628
  %v4681 = vpack.c.b16 %v4631, %v4629
  %v4682 = vpack.c.b16 %v4634, %v4632
  %v4683 = vpack.c.b16 %v4635, %v4633
  %v4684 = vpack.c.b16 %v4638, %v4636
  %v4685 = vpack.c.b16 %v4639, %v4637
  %v4686 = vpack.c.b16 %v4642, %v4640
  %v4687 = vpack.c.b16 %v4643, %v4641
  %v4688 = vpack.c.b16 %v4646, %v4644
  %v4689 = vpack.c.b16 %v4647, %v4645
  %v4690 = vpack.c.b16 %v4650, %v4648
  %v4691 = vpack.c.b16 %v4651, %v4649
  %v4692 = vpack.c.b16 %v4654, %v4652
  %v4693 = vpack.c.b16 %v4655, %v4653
  %v4694 = vpack.c.b16 %v4658, %v4656
  %v4695 = vpack.c.b16 %v4659, %v4657
  %v4696 = vpack.c.b16 %v4662, %v4660
  %v4697 = vpack.c.b16 %v4663, %v4661
  %v4698 = vpack.c.b16 %v4666, %v4664
  %v4699 = vpack.c.b16 %v4667, %v4665
  %4732 = vmatpush.bf16.msra.mxu0 %v4682
  %4733 = vmatpush.bf16.msra.mxu0 %v4680
  %4734 = vmatpush.bf16.msra.mxu0 %v4678
  %4735 = vmatpush.bf16.msra.mxu0 %v4676
  %4736 = vmatpush.bf16.msra.mxu0 %v4674
  %4737 = vmatpush.bf16.msra.mxu0 %v4672
  %4738 = vmatpush.bf16.msra.mxu0 %v4670
  %4739 = vmatpush.bf16.msra.mxu0 %v4668
  %4740 = vmatmul.bf16.gmra.mxu0 %v4552
  %v4741 = vpop.f32.mrf.mxu0
  %v4742 = vadd.f32 0.0, %v4741
  %v4743 = vpop.f32.mrf.mxu0
  %v4744 = vadd.f32 0.0, %v4743
  %4745 = vmatmul.bf16.gmra.mxu0 %v4554
  %v4746 = vpop.f32.mrf.mxu0
  %v4747 = vadd.f32 0.0, %v4746
  %v4748 = vpop.f32.mrf.mxu0
  %v4749 = vadd.f32 0.0, %v4748
  %4750 = vmatmul.bf16.gmra.mxu0 %v4556
  %v4751 = vpop.f32.mrf.mxu0
  %v4752 = vadd.f32 0.0, %v4751
  %v4753 = vpop.f32.mrf.mxu0
  %v4754 = vadd.f32 0.0, %v4753
  %4755 = vmatmul.bf16.gmra.mxu0 %v4558
  %v4756 = vpop.f32.mrf.mxu0
  %v4757 = vadd.f32 0.0, %v4756
  %v4758 = vpop.f32.mrf.mxu0
  %v4759 = vadd.f32 0.0, %v4758
  %4760 = vmatmul.bf16.gmra.mxu0 %v4560
  %v4761 = vpop.f32.mrf.mxu0
  %v4762 = vadd.f32 0.0, %v4761
  %v4763 = vpop.f32.mrf.mxu0
  %v4764 = vadd.f32 0.0, %v4763
  %4765 = vdwg.mxu0
  %4766 = vmatpush.bf16.msra.mxu0 %v4698
  %4767 = vmatpush.bf16.msra.mxu0 %v4696
  %4768 = vmatpush.bf16.msra.mxu0 %v4694
  %4769 = vmatpush.bf16.msra.mxu0 %v4692
  %4770 = vmatpush.bf16.msra.mxu0 %v4690
  %4771 = vmatpush.bf16.msra.mxu0 %v4688
  %4772 = vmatpush.bf16.msra.mxu0 %v4686
  %4773 = vmatpush.bf16.msra.mxu0 %v4684
  %4774 = vmatmul.bf16.gmra.mxu0 %v4553
  %v4775 = vpop.f32.mrf.mxu0
  %v4776 = vadd.f32 %v4742, %v4775
  %v4777 = vpop.f32.mrf.mxu0
  %v4778 = vadd.f32 %v4744, %v4777
  %4779 = vmatmul.bf16.gmra.mxu0 %v4555
  %v4780 = vpop.f32.mrf.mxu0
  %v4781 = vadd.f32 %v4747, %v4780
  %v4782 = vpop.f32.mrf.mxu0
  %v4783 = vadd.f32 %v4749, %v4782
  %4784 = vmatmul.bf16.gmra.mxu0 %v4557
  %v4785 = vpop.f32.mrf.mxu0
  %v4786 = vadd.f32 %v4752, %v4785
  %v4787 = vpop.f32.mrf.mxu0
  %v4788 = vadd.f32 %v4754, %v4787
  %4789 = vmatmul.bf16.gmra.mxu0 %v4559
  %v4790 = vpop.f32.mrf.mxu0
  %v4791 = vadd.f32 %v4757, %v4790
  %v4792 = vpop.f32.mrf.mxu0
  %v4793 = vadd.f32 %v4759, %v4792
  %4794 = vmatmul.bf16.gmra.mxu0 %v4561
  %v4795 = vpop.f32.mrf.mxu0
  %v4796 = vadd.f32 %v4762, %v4795
  %v4797 = vpop.f32.mrf.mxu0
  %v4798 = vadd.f32 %v4764, %v4797
  %4799 = vdwg.mxu0
  %4800 = vmatpush.bf16.msra.mxu0 %v4683
  %4801 = vmatpush.bf16.msra.mxu0 %v4681
  %4802 = vmatpush.bf16.msra.mxu0 %v4679
  %4803 = vmatpush.bf16.msra.mxu0 %v4677
  %4804 = vmatpush.bf16.msra.mxu0 %v4675
  %4805 = vmatpush.bf16.msra.mxu0 %v4673
  %4806 = vmatpush.bf16.msra.mxu0 %v4671
  %4807 = vmatpush.bf16.msra.mxu0 %v4669
  %4808 = vmatmul.bf16.gmra.mxu0 %v4552
  %v4809 = vpop.f32.mrf.mxu0
  %v4810 = vadd.f32 0.0, %v4809
  %v4811 = vpop.f32.mrf.mxu0
  %v4812 = vadd.f32 0.0, %v4811
  %4813 = vmatmul.bf16.gmra.mxu0 %v4554
  %v4814 = vpop.f32.mrf.mxu0
  %v4815 = vadd.f32 0.0, %v4814
  %v4816 = vpop.f32.mrf.mxu0
  %v4817 = vadd.f32 0.0, %v4816
  %4818 = vmatmul.bf16.gmra.mxu0 %v4556
  %v4819 = vpop.f32.mrf.mxu0
  %v4820 = vadd.f32 0.0, %v4819
  %v4821 = vpop.f32.mrf.mxu0
  %v4822 = vadd.f32 0.0, %v4821
  %4823 = vmatmul.bf16.gmra.mxu0 %v4558
  %v4824 = vpop.f32.mrf.mxu0
  %v4825 = vadd.f32 0.0, %v4824
  %v4826 = vpop.f32.mrf.mxu0
  %v4827 = vadd.f32 0.0, %v4826
  %4828 = vmatmul.bf16.gmra.mxu0 %v4560
  %v4829 = vpop.f32.mrf.mxu0
  %v4830 = vadd.f32 0.0, %v4829
  %v4831 = vpop.f32.mrf.mxu0
  %v4832 = vadd.f32 0.0, %v4831
  %4833 = vdwg.mxu0
  %4834 = vmatpush.bf16.msra.mxu0 %v4699
  %4835 = vmatpush.bf16.msra.mxu0 %v4697
  %4836 = vmatpush.bf16.msra.mxu0 %v4695
  %4837 = vmatpush.bf16.msra.mxu0 %v4693
  %4838 = vmatpush.bf16.msra.mxu0 %v4691
  %4839 = vmatpush.bf16.msra.mxu0 %v4689
  %4840 = vmatpush.bf16.msra.mxu0 %v4687
  %4841 = vmatpush.bf16.msra.mxu0 %v4685
  %4842 = vmatmul.bf16.gmra.mxu0 %v4553
  %v4843 = vpop.f32.mrf.mxu0
  %v4844 = vadd.f32 %v4810, %v4843
  %v4845 = vpop.f32.mrf.mxu0
  %v4846 = vadd.f32 %v4812, %v4845
  %4847 = vmatmul.bf16.gmra.mxu0 %v4555
  %v4848 = vpop.f32.mrf.mxu0
  %v4849 = vadd.f32 %v4815, %v4848
  %v4850 = vpop.f32.mrf.mxu0
  %v4851 = vadd.f32 %v4817, %v4850
  %4852 = vmatmul.bf16.gmra.mxu0 %v4557
  %v4853 = vpop.f32.mrf.mxu0
  %v4854 = vadd.f32 %v4820, %v4853
  %v4855 = vpop.f32.mrf.mxu0
  %v4856 = vadd.f32 %v4822, %v4855
  %4857 = vmatmul.bf16.gmra.mxu0 %v4559
  %v4858 = vpop.f32.mrf.mxu0
  %v4859 = vadd.f32 %v4825, %v4858
  %v4860 = vpop.f32.mrf.mxu0
  %v4861 = vadd.f32 %v4827, %v4860
  %4862 = vmatmul.bf16.gmra.mxu0 %v4561
  %v4863 = vpop.f32.mrf.mxu0
  %v4864 = vadd.f32 %v4830, %v4863
  %v4865 = vpop.f32.mrf.mxu0
  %v4866 = vadd.f32 %v4832, %v4865
  %4867 = vdwg.mxu0
  %v4868 = vadd.f32 %v4469, %v4776
  %v4869 = vadd.f32 %v4470, %v4844
  %v4870 = vadd.f32 %v4471, %v4778
  %v4871 = vadd.f32 %v4472, %v4846
  %v4872 = vadd.f32 %v4473, %v4781
  %v4873 = vadd.f32 %v4474, %v4849
  %v4874 = vadd.f32 %v4475, %v4783
  %v4875 = vadd.f32 %v4476, %v4851
  %v4876 = vadd.f32 %v4477, %v4786
  %v4877 = vadd.f32 %v4478, %v4854
  %v4878 = vadd.f32 %v4479, %v4788
  %v4879 = vadd.f32 %v4480, %v4856
  %v4880 = vadd.f32 %v4481, %v4791
  %v4881 = vadd.f32 %v4482, %v4859
  %v4882 = vadd.f32 %v4483, %v4793
  %v4883 = vadd.f32 %v4484, %v4861
  %v4884 = vadd.f32 %v4485, %v4796
  %v4885 = vadd.f32 %v4486, %v4864
  %v4886 = vadd.f32 %v4487, %v4798
  %v4887 = vadd.f32 %v4488, %v4866
  %s4888 = scalar_lea.vmem %s3, 1024
  %v4889 = vld [vmem:[%s4888] sm:$0xff]
  %v4890 = vld [vmem:[%s4888 + $0x8] sm:$0xff]
  %v4891 = vld [vmem:[%s4888 + $0x10] sm:$0xff]
  %v4892 = vld [vmem:[%s4888 + $0x18] sm:$0xff]
  %v4893 = vld [vmem:[%s4888 + $0x20] sm:$0xff]
  %v4894 = vld [vmem:[%s4888 + $0x28] sm:$0xff]
  %v4895 = vld [vmem:[%s4888 + $0x30] sm:$0xff]
  %v4896 = vld [vmem:[%s4888 + $0x38] sm:$0xff]
  %v4897 = vld [vmem:[%s4888 + $0x40] sm:$0xff]
  %v4898 = vld [vmem:[%s4888 + $0x48] sm:$0xff]
  %v4899 = vld [vmem:[%s4888 + $0x50] sm:$0xff]
  %v4900 = vld [vmem:[%s4888 + $0x58] sm:$0xff]
  %v4901 = vld [vmem:[%s4888 + $0x60] sm:$0xff]
  %v4902 = vld [vmem:[%s4888 + $0x68] sm:$0xff]
  %v4903 = vld [vmem:[%s4888 + $0x70] sm:$0xff]
  %v4904 = vld [vmem:[%s4888 + $0x78] sm:$0xff]
  %v4905 = vld [vmem:[%s4888 + $0x80] sm:$0xff]
  %v4906 = vld [vmem:[%s4888 + $0x88] sm:$0xff]
  %v4907 = vld [vmem:[%s4888 + $0x90] sm:$0xff]
  %v4908 = vld [vmem:[%s4888 + $0x98] sm:$0xff]
  %v4909 = vld [vmem:[%s4888 + $0xa0] sm:$0xff]
  %v4910 = vld [vmem:[%s4888 + $0xa8] sm:$0xff]
  %v4911 = vld [vmem:[%s4888 + $0xb0] sm:$0xff]
  %v4912 = vld [vmem:[%s4888 + $0xb8] sm:$0xff]
  %v4913 = vld [vmem:[%s4888 + $0xc0] sm:$0xff]
  %v4914 = vld [vmem:[%s4888 + $0xc8] sm:$0xff]
  %v4915 = vld [vmem:[%s4888 + $0xd0] sm:$0xff]
  %v4916 = vld [vmem:[%s4888 + $0xd8] sm:$0xff]
  %v4917 = vld [vmem:[%s4888 + $0xe0] sm:$0xff]
  %v4918 = vld [vmem:[%s4888 + $0xe8] sm:$0xff]
  %v4919 = vld [vmem:[%s4888 + $0xf0] sm:$0xff]
  %v4920 = vld [vmem:[%s4888 + $0xf8] sm:$0xff]
  %v4931 = vunpack.c.l.b16 %v3312
  %v4932 = vunpack.c.h.b16 %v3312
  %v4933 = vunpack.c.l.b16 %v3313
  %v4934 = vunpack.c.h.b16 %v3313
  %v4935 = vunpack.c.l.b16 %v3314
  %v4936 = vunpack.c.h.b16 %v3314
  %v4937 = vunpack.c.l.b16 %v3315
  %v4938 = vunpack.c.h.b16 %v3315
  %v4939 = vunpack.c.l.b16 %v3316
  %v4940 = vunpack.c.h.b16 %v3316
  %v4941 = vunpack.c.l.b16 %v3317
  %v4942 = vunpack.c.h.b16 %v3317
  %v4943 = vunpack.c.l.b16 %v3318
  %v4944 = vunpack.c.h.b16 %v3318
  %v4945 = vunpack.c.l.b16 %v3319
  %v4946 = vunpack.c.h.b16 %v3319
  %v4947 = vunpack.c.l.b16 %v3320
  %v4948 = vunpack.c.h.b16 %v3320
  %v4949 = vunpack.c.l.b16 %v3321
  %v4950 = vunpack.c.h.b16 %v3321
  %v4951 = vpack.c.b16 %v4933, %v4931
  %v4952 = vpack.c.b16 %v4934, %v4932
  %v4953 = vpack.c.b16 %v4937, %v4935
  %v4954 = vpack.c.b16 %v4938, %v4936
  %v4955 = vpack.c.b16 %v4941, %v4939
  %v4956 = vpack.c.b16 %v4942, %v4940
  %v4957 = vpack.c.b16 %v4945, %v4943
  %v4958 = vpack.c.b16 %v4946, %v4944
  %v4959 = vpack.c.b16 %v4949, %v4947
  %v4960 = vpack.c.b16 %v4950, %v4948
  %v5003 = vunpack.c.l.b16 %v4889
  %v5004 = vunpack.c.h.b16 %v4889
  %v5005 = vunpack.c.l.b16 %v4890
  %v5006 = vunpack.c.h.b16 %v4890
  %v5007 = vunpack.c.l.b16 %v4891
  %v5008 = vunpack.c.h.b16 %v4891
  %v5009 = vunpack.c.l.b16 %v4892
  %v5010 = vunpack.c.h.b16 %v4892
  %v5011 = vunpack.c.l.b16 %v4893
  %v5012 = vunpack.c.h.b16 %v4893
  %v5013 = vunpack.c.l.b16 %v4894
  %v5014 = vunpack.c.h.b16 %v4894
  %v5015 = vunpack.c.l.b16 %v4895
  %v5016 = vunpack.c.h.b16 %v4895
  %v5017 = vunpack.c.l.b16 %v4896
  %v5018 = vunpack.c.h.b16 %v4896
  %v5019 = vunpack.c.l.b16 %v4897
  %v5020 = vunpack.c.h.b16 %v4897
  %v5021 = vunpack.c.l.b16 %v4898
  %v5022 = vunpack.c.h.b16 %v4898
  %v5023 = vunpack.c.l.b16 %v4899
  %v5024 = vunpack.c.h.b16 %v4899
  %v5025 = vunpack.c.l.b16 %v4900
  %v5026 = vunpack.c.h.b16 %v4900
  %v5027 = vunpack.c.l.b16 %v4901
  %v5028 = vunpack.c.h.b16 %v4901
  %v5029 = vunpack.c.l.b16 %v4902
  %v5030 = vunpack.c.h.b16 %v4902
  %v5031 = vunpack.c.l.b16 %v4903
  %v5032 = vunpack.c.h.b16 %v4903
  %v5033 = vunpack.c.l.b16 %v4904
  %v5034 = vunpack.c.h.b16 %v4904
  %v5035 = vunpack.c.l.b16 %v4905
  %v5036 = vunpack.c.h.b16 %v4905
  %v5037 = vunpack.c.l.b16 %v4906
  %v5038 = vunpack.c.h.b16 %v4906
  %v5039 = vunpack.c.l.b16 %v4907
  %v5040 = vunpack.c.h.b16 %v4907
  %v5041 = vunpack.c.l.b16 %v4908
  %v5042 = vunpack.c.h.b16 %v4908
  %v5043 = vunpack.c.l.b16 %v4909
  %v5044 = vunpack.c.h.b16 %v4909
  %v5045 = vunpack.c.l.b16 %v4910
  %v5046 = vunpack.c.h.b16 %v4910
  %v5047 = vunpack.c.l.b16 %v4911
  %v5048 = vunpack.c.h.b16 %v4911
  %v5049 = vunpack.c.l.b16 %v4912
  %v5050 = vunpack.c.h.b16 %v4912
  %v5051 = vunpack.c.l.b16 %v4913
  %v5052 = vunpack.c.h.b16 %v4913
  %v5053 = vunpack.c.l.b16 %v4914
  %v5054 = vunpack.c.h.b16 %v4914
  %v5055 = vunpack.c.l.b16 %v4915
  %v5056 = vunpack.c.h.b16 %v4915
  %v5057 = vunpack.c.l.b16 %v4916
  %v5058 = vunpack.c.h.b16 %v4916
  %v5059 = vunpack.c.l.b16 %v4917
  %v5060 = vunpack.c.h.b16 %v4917
  %v5061 = vunpack.c.l.b16 %v4918
  %v5062 = vunpack.c.h.b16 %v4918
  %v5063 = vunpack.c.l.b16 %v4919
  %v5064 = vunpack.c.h.b16 %v4919
  %v5065 = vunpack.c.l.b16 %v4920
  %v5066 = vunpack.c.h.b16 %v4920
  %v5067 = vpack.c.b16 %v5005, %v5003
  %v5068 = vpack.c.b16 %v5006, %v5004
  %v5069 = vpack.c.b16 %v5009, %v5007
  %v5070 = vpack.c.b16 %v5010, %v5008
  %v5071 = vpack.c.b16 %v5013, %v5011
  %v5072 = vpack.c.b16 %v5014, %v5012
  %v5073 = vpack.c.b16 %v5017, %v5015
  %v5074 = vpack.c.b16 %v5018, %v5016
  %v5075 = vpack.c.b16 %v5021, %v5019
  %v5076 = vpack.c.b16 %v5022, %v5020
  %v5077 = vpack.c.b16 %v5025, %v5023
  %v5078 = vpack.c.b16 %v5026, %v5024
  %v5079 = vpack.c.b16 %v5029, %v5027
  %v5080 = vpack.c.b16 %v5030, %v5028
  %v5081 = vpack.c.b16 %v5033, %v5031
  %v5082 = vpack.c.b16 %v5034, %v5032
  %v5083 = vpack.c.b16 %v5037, %v5035
  %v5084 = vpack.c.b16 %v5038, %v5036
  %v5085 = vpack.c.b16 %v5041, %v5039
  %v5086 = vpack.c.b16 %v5042, %v5040
  %v5087 = vpack.c.b16 %v5045, %v5043
  %v5088 = vpack.c.b16 %v5046, %v5044
  %v5089 = vpack.c.b16 %v5049, %v5047
  %v5090 = vpack.c.b16 %v5050, %v5048
  %v5091 = vpack.c.b16 %v5053, %v5051
  %v5092 = vpack.c.b16 %v5054, %v5052
  %v5093 = vpack.c.b16 %v5057, %v5055
  %v5094 = vpack.c.b16 %v5058, %v5056
  %v5095 = vpack.c.b16 %v5061, %v5059
  %v5096 = vpack.c.b16 %v5062, %v5060
  %v5097 = vpack.c.b16 %v5065, %v5063
  %v5098 = vpack.c.b16 %v5066, %v5064
  %5131 = vmatpush.bf16.msra.mxu0 %v5081
  %5132 = vmatpush.bf16.msra.mxu0 %v5079
  %5133 = vmatpush.bf16.msra.mxu0 %v5077
  %5134 = vmatpush.bf16.msra.mxu0 %v5075
  %5135 = vmatpush.bf16.msra.mxu0 %v5073
  %5136 = vmatpush.bf16.msra.mxu0 %v5071
  %5137 = vmatpush.bf16.msra.mxu0 %v5069
  %5138 = vmatpush.bf16.msra.mxu0 %v5067
  %5139 = vmatmul.bf16.gmra.mxu0 %v4951
  %v5140 = vpop.f32.mrf.mxu0
  %v5141 = vadd.f32 0.0, %v5140
  %v5142 = vpop.f32.mrf.mxu0
  %v5143 = vadd.f32 0.0, %v5142
  %5144 = vmatmul.bf16.gmra.mxu0 %v4953
  %v5145 = vpop.f32.mrf.mxu0
  %v5146 = vadd.f32 0.0, %v5145
  %v5147 = vpop.f32.mrf.mxu0
  %v5148 = vadd.f32 0.0, %v5147
  %5149 = vmatmul.bf16.gmra.mxu0 %v4955
  %v5150 = vpop.f32.mrf.mxu0
  %v5151 = vadd.f32 0.0, %v5150
  %v5152 = vpop.f32.mrf.mxu0
  %v5153 = vadd.f32 0.0, %v5152
  %5154 = vmatmul.bf16.gmra.mxu0 %v4957
  %v5155 = vpop.f32.mrf.mxu0
  %v5156 = vadd.f32 0.0, %v5155
  %v5157 = vpop.f32.mrf.mxu0
  %v5158 = vadd.f32 0.0, %v5157
  %5159 = vmatmul.bf16.gmra.mxu0 %v4959
  %v5160 = vpop.f32.mrf.mxu0
  %v5161 = vadd.f32 0.0, %v5160
  %v5162 = vpop.f32.mrf.mxu0
  %v5163 = vadd.f32 0.0, %v5162
  %5164 = vdwg.mxu0
  %5165 = vmatpush.bf16.msra.mxu0 %v5097
  %5166 = vmatpush.bf16.msra.mxu0 %v5095
  %5167 = vmatpush.bf16.msra.mxu0 %v5093
  %5168 = vmatpush.bf16.msra.mxu0 %v5091
  %5169 = vmatpush.bf16.msra.mxu0 %v5089
  %5170 = vmatpush.bf16.msra.mxu0 %v5087
  %5171 = vmatpush.bf16.msra.mxu0 %v5085
  %5172 = vmatpush.bf16.msra.mxu0 %v5083
  %5173 = vmatmul.bf16.gmra.mxu0 %v4952
  %v5174 = vpop.f32.mrf.mxu0
  %v5175 = vadd.f32 %v5141, %v5174
  %v5176 = vpop.f32.mrf.mxu0
  %v5177 = vadd.f32 %v5143, %v5176
  %5178 = vmatmul.bf16.gmra.mxu0 %v4954
  %v5179 = vpop.f32.mrf.mxu0
  %v5180 = vadd.f32 %v5146, %v5179
  %v5181 = vpop.f32.mrf.mxu0
  %v5182 = vadd.f32 %v5148, %v5181
  %5183 = vmatmul.bf16.gmra.mxu0 %v4956
  %v5184 = vpop.f32.mrf.mxu0
  %v5185 = vadd.f32 %v5151, %v5184
  %v5186 = vpop.f32.mrf.mxu0
  %v5187 = vadd.f32 %v5153, %v5186
  %5188 = vmatmul.bf16.gmra.mxu0 %v4958
  %v5189 = vpop.f32.mrf.mxu0
  %v5190 = vadd.f32 %v5156, %v5189
  %v5191 = vpop.f32.mrf.mxu0
  %v5192 = vadd.f32 %v5158, %v5191
  %5193 = vmatmul.bf16.gmra.mxu0 %v4960
  %v5194 = vpop.f32.mrf.mxu0
  %v5195 = vadd.f32 %v5161, %v5194
  %v5196 = vpop.f32.mrf.mxu0
  %v5197 = vadd.f32 %v5163, %v5196
  %5198 = vdwg.mxu0
  %5199 = vmatpush.bf16.msra.mxu0 %v5082
  %5200 = vmatpush.bf16.msra.mxu0 %v5080
  %5201 = vmatpush.bf16.msra.mxu0 %v5078
  %5202 = vmatpush.bf16.msra.mxu0 %v5076
  %5203 = vmatpush.bf16.msra.mxu0 %v5074
  %5204 = vmatpush.bf16.msra.mxu0 %v5072
  %5205 = vmatpush.bf16.msra.mxu0 %v5070
  %5206 = vmatpush.bf16.msra.mxu0 %v5068
  %5207 = vmatmul.bf16.gmra.mxu0 %v4951
  %v5208 = vpop.f32.mrf.mxu0
  %v5209 = vadd.f32 0.0, %v5208
  %v5210 = vpop.f32.mrf.mxu0
  %v5211 = vadd.f32 0.0, %v5210
  %5212 = vmatmul.bf16.gmra.mxu0 %v4953
  %v5213 = vpop.f32.mrf.mxu0
  %v5214 = vadd.f32 0.0, %v5213
  %v5215 = vpop.f32.mrf.mxu0
  %v5216 = vadd.f32 0.0, %v5215
  %5217 = vmatmul.bf16.gmra.mxu0 %v4955
  %v5218 = vpop.f32.mrf.mxu0
  %v5219 = vadd.f32 0.0, %v5218
  %v5220 = vpop.f32.mrf.mxu0
  %v5221 = vadd.f32 0.0, %v5220
  %5222 = vmatmul.bf16.gmra.mxu0 %v4957
  %v5223 = vpop.f32.mrf.mxu0
  %v5224 = vadd.f32 0.0, %v5223
  %v5225 = vpop.f32.mrf.mxu0
  %v5226 = vadd.f32 0.0, %v5225
  %5227 = vmatmul.bf16.gmra.mxu0 %v4959
  %v5228 = vpop.f32.mrf.mxu0
  %v5229 = vadd.f32 0.0, %v5228
  %v5230 = vpop.f32.mrf.mxu0
  %v5231 = vadd.f32 0.0, %v5230
  %5232 = vdwg.mxu0
  %5233 = vmatpush.bf16.msra.mxu0 %v5098
  %5234 = vmatpush.bf16.msra.mxu0 %v5096
  %5235 = vmatpush.bf16.msra.mxu0 %v5094
  %5236 = vmatpush.bf16.msra.mxu0 %v5092
  %5237 = vmatpush.bf16.msra.mxu0 %v5090
  %5238 = vmatpush.bf16.msra.mxu0 %v5088
  %5239 = vmatpush.bf16.msra.mxu0 %v5086
  %5240 = vmatpush.bf16.msra.mxu0 %v5084
  %5241 = vmatmul.bf16.gmra.mxu0 %v4952
  %v5242 = vpop.f32.mrf.mxu0
  %v5243 = vadd.f32 %v5209, %v5242
  %v5244 = vpop.f32.mrf.mxu0
  %v5245 = vadd.f32 %v5211, %v5244
  %5246 = vmatmul.bf16.gmra.mxu0 %v4954
  %v5247 = vpop.f32.mrf.mxu0
  %v5248 = vadd.f32 %v5214, %v5247
  %v5249 = vpop.f32.mrf.mxu0
  %v5250 = vadd.f32 %v5216, %v5249
  %5251 = vmatmul.bf16.gmra.mxu0 %v4956
  %v5252 = vpop.f32.mrf.mxu0
  %v5253 = vadd.f32 %v5219, %v5252
  %v5254 = vpop.f32.mrf.mxu0
  %v5255 = vadd.f32 %v5221, %v5254
  %5256 = vmatmul.bf16.gmra.mxu0 %v4958
  %v5257 = vpop.f32.mrf.mxu0
  %v5258 = vadd.f32 %v5224, %v5257
  %v5259 = vpop.f32.mrf.mxu0
  %v5260 = vadd.f32 %v5226, %v5259
  %5261 = vmatmul.bf16.gmra.mxu0 %v4960
  %v5262 = vpop.f32.mrf.mxu0
  %v5263 = vadd.f32 %v5229, %v5262
  %v5264 = vpop.f32.mrf.mxu0
  %v5265 = vadd.f32 %v5231, %v5264
  %5266 = vdwg.mxu0
  %v5267 = vadd.f32 %v4868, %v5175
  %v5268 = vadd.f32 %v4869, %v5243
  %v5269 = vadd.f32 %v4870, %v5177
  %v5270 = vadd.f32 %v4871, %v5245
  %v5271 = vadd.f32 %v4872, %v5180
  %v5272 = vadd.f32 %v4873, %v5248
  %v5273 = vadd.f32 %v4874, %v5182
  %v5274 = vadd.f32 %v4875, %v5250
  %v5275 = vadd.f32 %v4876, %v5185
  %v5276 = vadd.f32 %v4877, %v5253
  %v5277 = vadd.f32 %v4878, %v5187
  %v5278 = vadd.f32 %v4879, %v5255
  %v5279 = vadd.f32 %v4880, %v5190
  %v5280 = vadd.f32 %v4881, %v5258
  %v5281 = vadd.f32 %v4882, %v5192
  %v5282 = vadd.f32 %v4883, %v5260
  %v5283 = vadd.f32 %v4884, %v5195
  %v5284 = vadd.f32 %v4885, %v5263
  %v5285 = vadd.f32 %v4886, %v5197
  %v5286 = vadd.f32 %v4887, %v5265
  %v5288 = vperm.slane %v3267, 0
  %v5289 = vperm.slane %v3267, 1
  %v5292 = vadd.f32 %v5267, %v5288
  %v5293 = vadd.f32 %v5268, %v5289
  %v5294 = vadd.f32 %v5269, %v5288
  %v5295 = vadd.f32 %v5270, %v5289
  %v5296 = vadd.f32 %v5271, %v5288
  %v5297 = vadd.f32 %v5272, %v5289
  %v5298 = vadd.f32 %v5273, %v5288
  %v5299 = vadd.f32 %v5274, %v5289
  %v5300 = vadd.f32 %v5275, %v5288
  %v5301 = vadd.f32 %v5276, %v5289
  %v5302 = vadd.f32 %v5277, %v5288
  %v5303 = vadd.f32 %v5278, %v5289
  %v5304 = vadd.f32 %v5279, %v5288
  %v5305 = vadd.f32 %v5280, %v5289
  %v5306 = vadd.f32 %v5281, %v5288
  %v5307 = vadd.f32 %v5282, %v5289
  %v5308 = vadd.f32 %v5283, %v5288
  %v5309 = vadd.f32 %v5284, %v5289
  %v5310 = vadd.f32 %v5285, %v5288
  %v5311 = vadd.f32 %v5286, %v5289
  %v5312 = vmax.f32 %v5292, 0.0
  %v5313 = vmax.f32 %v5293, 0.0
  %v5314 = vmax.f32 %v5294, 0.0
  %v5315 = vmax.f32 %v5295, 0.0
  %v5316 = vmax.f32 %v5296, 0.0
  %v5317 = vmax.f32 %v5297, 0.0
  %v5318 = vmax.f32 %v5298, 0.0
  %v5319 = vmax.f32 %v5299, 0.0
  %v5320 = vmax.f32 %v5300, 0.0
  %v5321 = vmax.f32 %v5301, 0.0
  %v5322 = vmax.f32 %v5302, 0.0
  %v5323 = vmax.f32 %v5303, 0.0
  %v5324 = vmax.f32 %v5304, 0.0
  %v5325 = vmax.f32 %v5305, 0.0
  %v5326 = vmax.f32 %v5306, 0.0
  %v5327 = vmax.f32 %v5307, 0.0
  %v5328 = vmax.f32 %v5308, 0.0
  %v5329 = vmax.f32 %v5309, 0.0
  %v5330 = vmax.f32 %v5310, 0.0
  %v5331 = vmax.f32 %v5311, 0.0
  %5332 = vmatpush.bf16.msra.mxu0 %v3558
  %5333 = vmatpush.bf16.msra.mxu0 %v3556
  %5334 = vmatpush.bf16.msra.mxu0 %v3554
  %5335 = vmatpush.bf16.msra.mxu0 %v3552
  %5336 = vmatpush.bf16.msra.mxu0 %v3550
  %5337 = vmatpush.bf16.msra.mxu0 %v3548
  %5338 = vmatpush.bf16.msra.mxu0 %v3546
  %5339 = vmatpush.bf16.msra.mxu0 %v3544
  %5340 = vmatmul.bf16.gmra.mxu0 %v4153
  %v5341 = vpop.f32.mrf.mxu0
  %v5342 = vadd.f32 0.0, %v5341
  %v5343 = vpop.f32.mrf.mxu0
  %v5344 = vadd.f32 0.0, %v5343
  %5345 = vmatmul.bf16.gmra.mxu0 %v4155
  %v5346 = vpop.f32.mrf.mxu0
  %v5347 = vadd.f32 0.0, %v5346
  %v5348 = vpop.f32.mrf.mxu0
  %v5349 = vadd.f32 0.0, %v5348
  %5350 = vmatmul.bf16.gmra.mxu0 %v4157
  %v5351 = vpop.f32.mrf.mxu0
  %v5352 = vadd.f32 0.0, %v5351
  %v5353 = vpop.f32.mrf.mxu0
  %v5354 = vadd.f32 0.0, %v5353
  %5355 = vmatmul.bf16.gmra.mxu0 %v4159
  %v5356 = vpop.f32.mrf.mxu0
  %v5357 = vadd.f32 0.0, %v5356
  %v5358 = vpop.f32.mrf.mxu0
  %v5359 = vadd.f32 0.0, %v5358
  %5360 = vmatmul.bf16.gmra.mxu0 %v4161
  %v5361 = vpop.f32.mrf.mxu0
  %v5362 = vadd.f32 0.0, %v5361
  %v5363 = vpop.f32.mrf.mxu0
  %v5364 = vadd.f32 0.0, %v5363
  %5365 = vdwg.mxu0
  %5366 = vmatpush.bf16.msra.mxu0 %v3574
  %5367 = vmatpush.bf16.msra.mxu0 %v3572
  %5368 = vmatpush.bf16.msra.mxu0 %v3570
  %5369 = vmatpush.bf16.msra.mxu0 %v3568
  %5370 = vmatpush.bf16.msra.mxu0 %v3566
  %5371 = vmatpush.bf16.msra.mxu0 %v3564
  %5372 = vmatpush.bf16.msra.mxu0 %v3562
  %5373 = vmatpush.bf16.msra.mxu0 %v3560
  %5374 = vmatmul.bf16.gmra.mxu0 %v4154
  %v5375 = vpop.f32.mrf.mxu0
  %v5376 = vadd.f32 %v5342, %v5375
  %v5377 = vpop.f32.mrf.mxu0
  %v5378 = vadd.f32 %v5344, %v5377
  %5379 = vmatmul.bf16.gmra.mxu0 %v4156
  %v5380 = vpop.f32.mrf.mxu0
  %v5381 = vadd.f32 %v5347, %v5380
  %v5382 = vpop.f32.mrf.mxu0
  %v5383 = vadd.f32 %v5349, %v5382
  %5384 = vmatmul.bf16.gmra.mxu0 %v4158
  %v5385 = vpop.f32.mrf.mxu0
  %v5386 = vadd.f32 %v5352, %v5385
  %v5387 = vpop.f32.mrf.mxu0
  %v5388 = vadd.f32 %v5354, %v5387
  %5389 = vmatmul.bf16.gmra.mxu0 %v4160
  %v5390 = vpop.f32.mrf.mxu0
  %v5391 = vadd.f32 %v5357, %v5390
  %v5392 = vpop.f32.mrf.mxu0
  %v5393 = vadd.f32 %v5359, %v5392
  %5394 = vmatmul.bf16.gmra.mxu0 %v4162
  %v5395 = vpop.f32.mrf.mxu0
  %v5396 = vadd.f32 %v5362, %v5395
  %v5397 = vpop.f32.mrf.mxu0
  %v5398 = vadd.f32 %v5364, %v5397
  %5399 = vdwg.mxu0
  %5400 = vmatpush.bf16.msra.mxu0 %v3559
  %5401 = vmatpush.bf16.msra.mxu0 %v3557
  %5402 = vmatpush.bf16.msra.mxu0 %v3555
  %5403 = vmatpush.bf16.msra.mxu0 %v3553
  %5404 = vmatpush.bf16.msra.mxu0 %v3551
  %5405 = vmatpush.bf16.msra.mxu0 %v3549
  %5406 = vmatpush.bf16.msra.mxu0 %v3547
  %5407 = vmatpush.bf16.msra.mxu0 %v3545
  %5408 = vmatmul.bf16.gmra.mxu0 %v4153
  %v5409 = vpop.f32.mrf.mxu0
  %v5410 = vadd.f32 0.0, %v5409
  %v5411 = vpop.f32.mrf.mxu0
  %v5412 = vadd.f32 0.0, %v5411
  %5413 = vmatmul.bf16.gmra.mxu0 %v4155
  %v5414 = vpop.f32.mrf.mxu0
  %v5415 = vadd.f32 0.0, %v5414
  %v5416 = vpop.f32.mrf.mxu0
  %v5417 = vadd.f32 0.0, %v5416
  %5418 = vmatmul.bf16.gmra.mxu0 %v4157
  %v5419 = vpop.f32.mrf.mxu0
  %v5420 = vadd.f32 0.0, %v5419
  %v5421 = vpop.f32.mrf.mxu0
  %v5422 = vadd.f32 0.0, %v5421
  %5423 = vmatmul.bf16.gmra.mxu0 %v4159
  %v5424 = vpop.f32.mrf.mxu0
  %v5425 = vadd.f32 0.0, %v5424
  %v5426 = vpop.f32.mrf.mxu0
  %v5427 = vadd.f32 0.0, %v5426
  %5428 = vmatmul.bf16.gmra.mxu0 %v4161
  %v5429 = vpop.f32.mrf.mxu0
  %v5430 = vadd.f32 0.0, %v5429
  %v5431 = vpop.f32.mrf.mxu0
  %v5432 = vadd.f32 0.0, %v5431
  %5433 = vdwg.mxu0
  %5434 = vmatpush.bf16.msra.mxu0 %v3575
  %5435 = vmatpush.bf16.msra.mxu0 %v3573
  %5436 = vmatpush.bf16.msra.mxu0 %v3571
  %5437 = vmatpush.bf16.msra.mxu0 %v3569
  %5438 = vmatpush.bf16.msra.mxu0 %v3567
  %5439 = vmatpush.bf16.msra.mxu0 %v3565
  %5440 = vmatpush.bf16.msra.mxu0 %v3563
  %5441 = vmatpush.bf16.msra.mxu0 %v3561
  %5442 = vmatmul.bf16.gmra.mxu0 %v4154
  %v5443 = vpop.f32.mrf.mxu0
  %v5444 = vadd.f32 %v5410, %v5443
  %v5445 = vpop.f32.mrf.mxu0
  %v5446 = vadd.f32 %v5412, %v5445
  %5447 = vmatmul.bf16.gmra.mxu0 %v4156
  %v5448 = vpop.f32.mrf.mxu0
  %v5449 = vadd.f32 %v5415, %v5448
  %v5450 = vpop.f32.mrf.mxu0
  %v5451 = vadd.f32 %v5417, %v5450
  %5452 = vmatmul.bf16.gmra.mxu0 %v4158
  %v5453 = vpop.f32.mrf.mxu0
  %v5454 = vadd.f32 %v5420, %v5453
  %v5455 = vpop.f32.mrf.mxu0
  %v5456 = vadd.f32 %v5422, %v5455
  %5457 = vmatmul.bf16.gmra.mxu0 %v4160
  %v5458 = vpop.f32.mrf.mxu0
  %v5459 = vadd.f32 %v5425, %v5458
  %v5460 = vpop.f32.mrf.mxu0
  %v5461 = vadd.f32 %v5427, %v5460
  %5462 = vmatmul.bf16.gmra.mxu0 %v4162
  %v5463 = vpop.f32.mrf.mxu0
  %v5464 = vadd.f32 %v5430, %v5463
  %v5465 = vpop.f32.mrf.mxu0
  %v5466 = vadd.f32 %v5432, %v5465
  %5467 = vdwg.mxu0
  %5468 = vmatpush.bf16.msra.mxu0 %v3904
  %5469 = vmatpush.bf16.msra.mxu0 %v3902
  %5470 = vmatpush.bf16.msra.mxu0 %v3900
  %5471 = vmatpush.bf16.msra.mxu0 %v3898
  %5472 = vmatpush.bf16.msra.mxu0 %v3896
  %5473 = vmatpush.bf16.msra.mxu0 %v3894
  %5474 = vmatpush.bf16.msra.mxu0 %v3892
  %5475 = vmatpush.bf16.msra.mxu0 %v3890
  %5476 = vmatmul.bf16.gmra.mxu0 %v3428
  %v5477 = vpop.f32.mrf.mxu0
  %v5478 = vadd.f32 %v5376, %v5477
  %v5479 = vpop.f32.mrf.mxu0
  %v5480 = vadd.f32 %v5378, %v5479
  %5481 = vmatmul.bf16.gmra.mxu0 %v3430
  %v5482 = vpop.f32.mrf.mxu0
  %v5483 = vadd.f32 %v5381, %v5482
  %v5484 = vpop.f32.mrf.mxu0
  %v5485 = vadd.f32 %v5383, %v5484
  %5486 = vmatmul.bf16.gmra.mxu0 %v3432
  %v5487 = vpop.f32.mrf.mxu0
  %v5488 = vadd.f32 %v5386, %v5487
  %v5489 = vpop.f32.mrf.mxu0
  %v5490 = vadd.f32 %v5388, %v5489
  %5491 = vmatmul.bf16.gmra.mxu0 %v3434
  %v5492 = vpop.f32.mrf.mxu0
  %v5493 = vadd.f32 %v5391, %v5492
  %v5494 = vpop.f32.mrf.mxu0
  %v5495 = vadd.f32 %v5393, %v5494
  %5496 = vmatmul.bf16.gmra.mxu0 %v3436
  %v5497 = vpop.f32.mrf.mxu0
  %v5498 = vadd.f32 %v5396, %v5497
  %v5499 = vpop.f32.mrf.mxu0
  %v5500 = vadd.f32 %v5398, %v5499
  %5501 = vdwg.mxu0
  %5502 = vmatpush.bf16.msra.mxu0 %v3920
  %5503 = vmatpush.bf16.msra.mxu0 %v3918
  %5504 = vmatpush.bf16.msra.mxu0 %v3916
  %5505 = vmatpush.bf16.msra.mxu0 %v3914
  %5506 = vmatpush.bf16.msra.mxu0 %v3912
  %5507 = vmatpush.bf16.msra.mxu0 %v3910
  %5508 = vmatpush.bf16.msra.mxu0 %v3908
  %5509 = vmatpush.bf16.msra.mxu0 %v3906
  %5510 = vmatmul.bf16.gmra.mxu0 %v3429
  %v5511 = vpop.f32.mrf.mxu0
  %v5512 = vadd.f32 %v5478, %v5511
  %v5513 = vpop.f32.mrf.mxu0
  %v5514 = vadd.f32 %v5480, %v5513
  %5515 = vmatmul.bf16.gmra.mxu0 %v3431
  %v5516 = vpop.f32.mrf.mxu0
  %v5517 = vadd.f32 %v5483, %v5516
  %v5518 = vpop.f32.mrf.mxu0
  %v5519 = vadd.f32 %v5485, %v5518
  %5520 = vmatmul.bf16.gmra.mxu0 %v3433
  %v5521 = vpop.f32.mrf.mxu0
  %v5522 = vadd.f32 %v5488, %v5521
  %v5523 = vpop.f32.mrf.mxu0
  %v5524 = vadd.f32 %v5490, %v5523
  %5525 = vmatmul.bf16.gmra.mxu0 %v3435
  %v5526 = vpop.f32.mrf.mxu0
  %v5527 = vadd.f32 %v5493, %v5526
  %v5528 = vpop.f32.mrf.mxu0
  %v5529 = vadd.f32 %v5495, %v5528
  %5530 = vmatmul.bf16.gmra.mxu0 %v3437
  %v5531 = vpop.f32.mrf.mxu0
  %v5532 = vadd.f32 %v5498, %v5531
  %v5533 = vpop.f32.mrf.mxu0
  %v5534 = vadd.f32 %v5500, %v5533
  %5535 = vdwg.mxu0
  %5536 = vmatpush.bf16.msra.mxu0 %v3905
  %5537 = vmatpush.bf16.msra.mxu0 %v3903
  %5538 = vmatpush.bf16.msra.mxu0 %v3901
  %5539 = vmatpush.bf16.msra.mxu0 %v3899
  %5540 = vmatpush.bf16.msra.mxu0 %v3897
  %5541 = vmatpush.bf16.msra.mxu0 %v3895
  %5542 = vmatpush.bf16.msra.mxu0 %v3893
  %5543 = vmatpush.bf16.msra.mxu0 %v3891
  %5544 = vmatmul.bf16.gmra.mxu0 %v3428
  %v5545 = vpop.f32.mrf.mxu0
  %v5546 = vadd.f32 %v5444, %v5545
  %v5547 = vpop.f32.mrf.mxu0
  %v5548 = vadd.f32 %v5446, %v5547
  %5549 = vmatmul.bf16.gmra.mxu0 %v3430
  %v5550 = vpop.f32.mrf.mxu0
  %v5551 = vadd.f32 %v5449, %v5550
  %v5552 = vpop.f32.mrf.mxu0
  %v5553 = vadd.f32 %v5451, %v5552
  %5554 = vmatmul.bf16.gmra.mxu0 %v3432
  %v5555 = vpop.f32.mrf.mxu0
  %v5556 = vadd.f32 %v5454, %v5555
  %v5557 = vpop.f32.mrf.mxu0
  %v5558 = vadd.f32 %v5456, %v5557
  %5559 = vmatmul.bf16.gmra.mxu0 %v3434
  %v5560 = vpop.f32.mrf.mxu0
  %v5561 = vadd.f32 %v5459, %v5560
  %v5562 = vpop.f32.mrf.mxu0
  %v5563 = vadd.f32 %v5461, %v5562
  %5564 = vmatmul.bf16.gmra.mxu0 %v3436
  %v5565 = vpop.f32.mrf.mxu0
  %v5566 = vadd.f32 %v5464, %v5565
  %v5567 = vpop.f32.mrf.mxu0
  %v5568 = vadd.f32 %v5466, %v5567
  %5569 = vdwg.mxu0
  %5570 = vmatpush.bf16.msra.mxu0 %v3921
  %5571 = vmatpush.bf16.msra.mxu0 %v3919
  %5572 = vmatpush.bf16.msra.mxu0 %v3917
  %5573 = vmatpush.bf16.msra.mxu0 %v3915
  %5574 = vmatpush.bf16.msra.mxu0 %v3913
  %5575 = vmatpush.bf16.msra.mxu0 %v3911
  %5576 = vmatpush.bf16.msra.mxu0 %v3909
  %5577 = vmatpush.bf16.msra.mxu0 %v3907
  %5578 = vmatmul.bf16.gmra.mxu0 %v3429
  %v5579 = vpop.f32.mrf.mxu0
  %v5580 = vadd.f32 %v5546, %v5579
  %v5581 = vpop.f32.mrf.mxu0
  %v5582 = vadd.f32 %v5548, %v5581
  %5583 = vmatmul.bf16.gmra.mxu0 %v3431
  %v5584 = vpop.f32.mrf.mxu0
  %v5585 = vadd.f32 %v5551, %v5584
  %v5586 = vpop.f32.mrf.mxu0
  %v5587 = vadd.f32 %v5553, %v5586
  %5588 = vmatmul.bf16.gmra.mxu0 %v3433
  %v5589 = vpop.f32.mrf.mxu0
  %v5590 = vadd.f32 %v5556, %v5589
  %v5591 = vpop.f32.mrf.mxu0
  %v5592 = vadd.f32 %v5558, %v5591
  %5593 = vmatmul.bf16.gmra.mxu0 %v3435
  %v5594 = vpop.f32.mrf.mxu0
  %v5595 = vadd.f32 %v5561, %v5594
  %v5596 = vpop.f32.mrf.mxu0
  %v5597 = vadd.f32 %v5563, %v5596
  %5598 = vmatmul.bf16.gmra.mxu0 %v3437
  %v5599 = vpop.f32.mrf.mxu0
  %v5600 = vadd.f32 %v5566, %v5599
  %v5601 = vpop.f32.mrf.mxu0
  %v5602 = vadd.f32 %v5568, %v5601
  %5603 = vdwg.mxu0
  %5604 = vmatpush.bf16.msra.mxu0 %v4283
  %5605 = vmatpush.bf16.msra.mxu0 %v4281
  %5606 = vmatpush.bf16.msra.mxu0 %v4279
  %5607 = vmatpush.bf16.msra.mxu0 %v4277
  %5608 = vmatpush.bf16.msra.mxu0 %v4275
  %5609 = vmatpush.bf16.msra.mxu0 %v4273
  %5610 = vmatpush.bf16.msra.mxu0 %v4271
  %5611 = vmatpush.bf16.msra.mxu0 %v4269
  %5612 = vmatmul.bf16.gmra.mxu0 %v4552
  %v5613 = vpop.f32.mrf.mxu0
  %v5614 = vadd.f32 0.0, %v5613
  %v5615 = vpop.f32.mrf.mxu0
  %v5616 = vadd.f32 0.0, %v5615
  %5617 = vmatmul.bf16.gmra.mxu0 %v4554
  %v5618 = vpop.f32.mrf.mxu0
  %v5619 = vadd.f32 0.0, %v5618
  %v5620 = vpop.f32.mrf.mxu0
  %v5621 = vadd.f32 0.0, %v5620
  %5622 = vmatmul.bf16.gmra.mxu0 %v4556
  %v5623 = vpop.f32.mrf.mxu0
  %v5624 = vadd.f32 0.0, %v5623
  %v5625 = vpop.f32.mrf.mxu0
  %v5626 = vadd.f32 0.0, %v5625
  %5627 = vmatmul.bf16.gmra.mxu0 %v4558
  %v5628 = vpop.f32.mrf.mxu0
  %v5629 = vadd.f32 0.0, %v5628
  %v5630 = vpop.f32.mrf.mxu0
  %v5631 = vadd.f32 0.0, %v5630
  %5632 = vmatmul.bf16.gmra.mxu0 %v4560
  %v5633 = vpop.f32.mrf.mxu0
  %v5634 = vadd.f32 0.0, %v5633
  %v5635 = vpop.f32.mrf.mxu0
  %v5636 = vadd.f32 0.0, %v5635
  %5637 = vdwg.mxu0
  %5638 = vmatpush.bf16.msra.mxu0 %v4299
  %5639 = vmatpush.bf16.msra.mxu0 %v4297
  %5640 = vmatpush.bf16.msra.mxu0 %v4295
  %5641 = vmatpush.bf16.msra.mxu0 %v4293
  %5642 = vmatpush.bf16.msra.mxu0 %v4291
  %5643 = vmatpush.bf16.msra.mxu0 %v4289
  %5644 = vmatpush.bf16.msra.mxu0 %v4287
  %5645 = vmatpush.bf16.msra.mxu0 %v4285
  %5646 = vmatmul.bf16.gmra.mxu0 %v4553
  %v5647 = vpop.f32.mrf.mxu0
  %v5648 = vadd.f32 %v5614, %v5647
  %v5649 = vpop.f32.mrf.mxu0
  %v5650 = vadd.f32 %v5616, %v5649
  %5651 = vmatmul.bf16.gmra.mxu0 %v4555
  %v5652 = vpop.f32.mrf.mxu0
  %v5653 = vadd.f32 %v5619, %v5652
  %v5654 = vpop.f32.mrf.mxu0
  %v5655 = vadd.f32 %v5621, %v5654
  %5656 = vmatmul.bf16.gmra.mxu0 %v4557
  %v5657 = vpop.f32.mrf.mxu0
  %v5658 = vadd.f32 %v5624, %v5657
  %v5659 = vpop.f32.mrf.mxu0
  %v5660 = vadd.f32 %v5626, %v5659
  %5661 = vmatmul.bf16.gmra.mxu0 %v4559
  %v5662 = vpop.f32.mrf.mxu0
  %v5663 = vadd.f32 %v5629, %v5662
  %v5664 = vpop.f32.mrf.mxu0
  %v5665 = vadd.f32 %v5631, %v5664
  %5666 = vmatmul.bf16.gmra.mxu0 %v4561
  %v5667 = vpop.f32.mrf.mxu0
  %v5668 = vadd.f32 %v5634, %v5667
  %v5669 = vpop.f32.mrf.mxu0
  %v5670 = vadd.f32 %v5636, %v5669
  %5671 = vdwg.mxu0
  %5672 = vmatpush.bf16.msra.mxu0 %v4284
  %5673 = vmatpush.bf16.msra.mxu0 %v4282
  %5674 = vmatpush.bf16.msra.mxu0 %v4280
  %5675 = vmatpush.bf16.msra.mxu0 %v4278
  %5676 = vmatpush.bf16.msra.mxu0 %v4276
  %5677 = vmatpush.bf16.msra.mxu0 %v4274
  %5678 = vmatpush.bf16.msra.mxu0 %v4272
  %5679 = vmatpush.bf16.msra.mxu0 %v4270
  %5680 = vmatmul.bf16.gmra.mxu0 %v4552
  %v5681 = vpop.f32.mrf.mxu0
  %v5682 = vadd.f32 0.0, %v5681
  %v5683 = vpop.f32.mrf.mxu0
  %v5684 = vadd.f32 0.0, %v5683
  %5685 = vmatmul.bf16.gmra.mxu0 %v4554
  %v5686 = vpop.f32.mrf.mxu0
  %v5687 = vadd.f32 0.0, %v5686
  %v5688 = vpop.f32.mrf.mxu0
  %v5689 = vadd.f32 0.0, %v5688
  %5690 = vmatmul.bf16.gmra.mxu0 %v4556
  %v5691 = vpop.f32.mrf.mxu0
  %v5692 = vadd.f32 0.0, %v5691
  %v5693 = vpop.f32.mrf.mxu0
  %v5694 = vadd.f32 0.0, %v5693
  %5695 = vmatmul.bf16.gmra.mxu0 %v4558
  %v5696 = vpop.f32.mrf.mxu0
  %v5697 = vadd.f32 0.0, %v5696
  %v5698 = vpop.f32.mrf.mxu0
  %v5699 = vadd.f32 0.0, %v5698
  %5700 = vmatmul.bf16.gmra.mxu0 %v4560
  %v5701 = vpop.f32.mrf.mxu0
  %v5702 = vadd.f32 0.0, %v5701
  %v5703 = vpop.f32.mrf.mxu0
  %v5704 = vadd.f32 0.0, %v5703
  %5705 = vdwg.mxu0
  %5706 = vmatpush.bf16.msra.mxu0 %v4300
  %5707 = vmatpush.bf16.msra.mxu0 %v4298
  %5708 = vmatpush.bf16.msra.mxu0 %v4296
  %5709 = vmatpush.bf16.msra.mxu0 %v4294
  %5710 = vmatpush.bf16.msra.mxu0 %v4292
  %5711 = vmatpush.bf16.msra.mxu0 %v4290
  %5712 = vmatpush.bf16.msra.mxu0 %v4288
  %5713 = vmatpush.bf16.msra.mxu0 %v4286
  %5714 = vmatmul.bf16.gmra.mxu0 %v4553
  %v5715 = vpop.f32.mrf.mxu0
  %v5716 = vadd.f32 %v5682, %v5715
  %v5717 = vpop.f32.mrf.mxu0
  %v5718 = vadd.f32 %v5684, %v5717
  %5719 = vmatmul.bf16.gmra.mxu0 %v4555
  %v5720 = vpop.f32.mrf.mxu0
  %v5721 = vadd.f32 %v5687, %v5720
  %v5722 = vpop.f32.mrf.mxu0
  %v5723 = vadd.f32 %v5689, %v5722
  %5724 = vmatmul.bf16.gmra.mxu0 %v4557
  %v5725 = vpop.f32.mrf.mxu0
  %v5726 = vadd.f32 %v5692, %v5725
  %v5727 = vpop.f32.mrf.mxu0
  %v5728 = vadd.f32 %v5694, %v5727
  %5729 = vmatmul.bf16.gmra.mxu0 %v4559
  %v5730 = vpop.f32.mrf.mxu0
  %v5731 = vadd.f32 %v5697, %v5730
  %v5732 = vpop.f32.mrf.mxu0
  %v5733 = vadd.f32 %v5699, %v5732
  %5734 = vmatmul.bf16.gmra.mxu0 %v4561
  %v5735 = vpop.f32.mrf.mxu0
  %v5736 = vadd.f32 %v5702, %v5735
  %v5737 = vpop.f32.mrf.mxu0
  %v5738 = vadd.f32 %v5704, %v5737
  %5739 = vdwg.mxu0
  %v5740 = vadd.f32 %v5512, %v5648
  %v5741 = vadd.f32 %v5580, %v5716
  %v5742 = vadd.f32 %v5514, %v5650
  %v5743 = vadd.f32 %v5582, %v5718
  %v5744 = vadd.f32 %v5517, %v5653
  %v5745 = vadd.f32 %v5585, %v5721
  %v5746 = vadd.f32 %v5519, %v5655
  %v5747 = vadd.f32 %v5587, %v5723
  %v5748 = vadd.f32 %v5522, %v5658
  %v5749 = vadd.f32 %v5590, %v5726
  %v5750 = vadd.f32 %v5524, %v5660
  %v5751 = vadd.f32 %v5592, %v5728
  %v5752 = vadd.f32 %v5527, %v5663
  %v5753 = vadd.f32 %v5595, %v5731
  %v5754 = vadd.f32 %v5529, %v5665
  %v5755 = vadd.f32 %v5597, %v5733
  %v5756 = vadd.f32 %v5532, %v5668
  %v5757 = vadd.f32 %v5600, %v5736
  %v5758 = vadd.f32 %v5534, %v5670
  %v5759 = vadd.f32 %v5602, %v5738
  %5760 = vmatpush.bf16.msra.mxu0 %v4682
  %5761 = vmatpush.bf16.msra.mxu0 %v4680
  %5762 = vmatpush.bf16.msra.mxu0 %v4678
  %5763 = vmatpush.bf16.msra.mxu0 %v4676
  %5764 = vmatpush.bf16.msra.mxu0 %v4674
  %5765 = vmatpush.bf16.msra.mxu0 %v4672
  %5766 = vmatpush.bf16.msra.mxu0 %v4670
  %5767 = vmatpush.bf16.msra.mxu0 %v4668
  %5768 = vmatmul.bf16.gmra.mxu0 %v4951
  %v5769 = vpop.f32.mrf.mxu0
  %v5770 = vadd.f32 0.0, %v5769
  %v5771 = vpop.f32.mrf.mxu0
  %v5772 = vadd.f32 0.0, %v5771
  %5773 = vmatmul.bf16.gmra.mxu0 %v4953
  %v5774 = vpop.f32.mrf.mxu0
  %v5775 = vadd.f32 0.0, %v5774
  %v5776 = vpop.f32.mrf.mxu0
  %v5777 = vadd.f32 0.0, %v5776
  %5778 = vmatmul.bf16.gmra.mxu0 %v4955
  %v5779 = vpop.f32.mrf.mxu0
  %v5780 = vadd.f32 0.0, %v5779
  %v5781 = vpop.f32.mrf.mxu0
  %v5782 = vadd.f32 0.0, %v5781
  %5783 = vmatmul.bf16.gmra.mxu0 %v4957
  %v5784 = vpop.f32.mrf.mxu0
  %v5785 = vadd.f32 0.0, %v5784
  %v5786 = vpop.f32.mrf.mxu0
  %v5787 = vadd.f32 0.0, %v5786
  %5788 = vmatmul.bf16.gmra.mxu0 %v4959
  %v5789 = vpop.f32.mrf.mxu0
  %v5790 = vadd.f32 0.0, %v5789
  %v5791 = vpop.f32.mrf.mxu0
  %v5792 = vadd.f32 0.0, %v5791
  %5793 = vdwg.mxu0
  %5794 = vmatpush.bf16.msra.mxu0 %v4698
  %5795 = vmatpush.bf16.msra.mxu0 %v4696
  %5796 = vmatpush.bf16.msra.mxu0 %v4694
  %5797 = vmatpush.bf16.msra.mxu0 %v4692
  %5798 = vmatpush.bf16.msra.mxu0 %v4690
  %5799 = vmatpush.bf16.msra.mxu0 %v4688
  %5800 = vmatpush.bf16.msra.mxu0 %v4686
  %5801 = vmatpush.bf16.msra.mxu0 %v4684
  %5802 = vmatmul.bf16.gmra.mxu0 %v4952
  %v5803 = vpop.f32.mrf.mxu0
  %v5804 = vadd.f32 %v5770, %v5803
  %v5805 = vpop.f32.mrf.mxu0
  %v5806 = vadd.f32 %v5772, %v5805
  %5807 = vmatmul.bf16.gmra.mxu0 %v4954
  %v5808 = vpop.f32.mrf.mxu0
  %v5809 = vadd.f32 %v5775, %v5808
  %v5810 = vpop.f32.mrf.mxu0
  %v5811 = vadd.f32 %v5777, %v5810
  %5812 = vmatmul.bf16.gmra.mxu0 %v4956
  %v5813 = vpop.f32.mrf.mxu0
  %v5814 = vadd.f32 %v5780, %v5813
  %v5815 = vpop.f32.mrf.mxu0
  %v5816 = vadd.f32 %v5782, %v5815
  %5817 = vmatmul.bf16.gmra.mxu0 %v4958
  %v5818 = vpop.f32.mrf.mxu0
  %v5819 = vadd.f32 %v5785, %v5818
  %v5820 = vpop.f32.mrf.mxu0
  %v5821 = vadd.f32 %v5787, %v5820
  %5822 = vmatmul.bf16.gmra.mxu0 %v4960
  %v5823 = vpop.f32.mrf.mxu0
  %v5824 = vadd.f32 %v5790, %v5823
  %v5825 = vpop.f32.mrf.mxu0
  %v5826 = vadd.f32 %v5792, %v5825
  %5827 = vdwg.mxu0
  %5828 = vmatpush.bf16.msra.mxu0 %v4683
  %5829 = vmatpush.bf16.msra.mxu0 %v4681
  %5830 = vmatpush.bf16.msra.mxu0 %v4679
  %5831 = vmatpush.bf16.msra.mxu0 %v4677
  %5832 = vmatpush.bf16.msra.mxu0 %v4675
  %5833 = vmatpush.bf16.msra.mxu0 %v4673
  %5834 = vmatpush.bf16.msra.mxu0 %v4671
  %5835 = vmatpush.bf16.msra.mxu0 %v4669
  %5836 = vmatmul.bf16.gmra.mxu0 %v4951
  %v5837 = vpop.f32.mrf.mxu0
  %v5838 = vadd.f32 0.0, %v5837
  %v5839 = vpop.f32.mrf.mxu0
  %v5840 = vadd.f32 0.0, %v5839
  %5841 = vmatmul.bf16.gmra.mxu0 %v4953
  %v5842 = vpop.f32.mrf.mxu0
  %v5843 = vadd.f32 0.0, %v5842
  %v5844 = vpop.f32.mrf.mxu0
  %v5845 = vadd.f32 0.0, %v5844
  %5846 = vmatmul.bf16.gmra.mxu0 %v4955
  %v5847 = vpop.f32.mrf.mxu0
  %v5848 = vadd.f32 0.0, %v5847
  %v5849 = vpop.f32.mrf.mxu0
  %v5850 = vadd.f32 0.0, %v5849
  %5851 = vmatmul.bf16.gmra.mxu0 %v4957
  %v5852 = vpop.f32.mrf.mxu0
  %v5853 = vadd.f32 0.0, %v5852
  %v5854 = vpop.f32.mrf.mxu0
  %v5855 = vadd.f32 0.0, %v5854
  %5856 = vmatmul.bf16.gmra.mxu0 %v4959
  %v5857 = vpop.f32.mrf.mxu0
  %v5858 = vadd.f32 0.0, %v5857
  %v5859 = vpop.f32.mrf.mxu0
  %v5860 = vadd.f32 0.0, %v5859
  %5861 = vdwg.mxu0
  %5862 = vmatpush.bf16.msra.mxu0 %v4699
  %5863 = vmatpush.bf16.msra.mxu0 %v4697
  %5864 = vmatpush.bf16.msra.mxu0 %v4695
  %5865 = vmatpush.bf16.msra.mxu0 %v4693
  %5866 = vmatpush.bf16.msra.mxu0 %v4691
  %5867 = vmatpush.bf16.msra.mxu0 %v4689
  %5868 = vmatpush.bf16.msra.mxu0 %v4687
  %5869 = vmatpush.bf16.msra.mxu0 %v4685
  %5870 = vmatmul.bf16.gmra.mxu0 %v4952
  %v5871 = vpop.f32.mrf.mxu0
  %v5872 = vadd.f32 %v5838, %v5871
  %v5873 = vpop.f32.mrf.mxu0
  %v5874 = vadd.f32 %v5840, %v5873
  %5875 = vmatmul.bf16.gmra.mxu0 %v4954
  %v5876 = vpop.f32.mrf.mxu0
  %v5877 = vadd.f32 %v5843, %v5876
  %v5878 = vpop.f32.mrf.mxu0
  %v5879 = vadd.f32 %v5845, %v5878
  %5880 = vmatmul.bf16.gmra.mxu0 %v4956
  %v5881 = vpop.f32.mrf.mxu0
  %v5882 = vadd.f32 %v5848, %v5881
  %v5883 = vpop.f32.mrf.mxu0
  %v5884 = vadd.f32 %v5850, %v5883
  %5885 = vmatmul.bf16.gmra.mxu0 %v4958
  %v5886 = vpop.f32.mrf.mxu0
  %v5887 = vadd.f32 %v5853, %v5886
  %v5888 = vpop.f32.mrf.mxu0
  %v5889 = vadd.f32 %v5855, %v5888
  %5890 = vmatmul.bf16.gmra.mxu0 %v4960
  %v5891 = vpop.f32.mrf.mxu0
  %v5892 = vadd.f32 %v5858, %v5891
  %v5893 = vpop.f32.mrf.mxu0
  %v5894 = vadd.f32 %v5860, %v5893
  %5895 = vdwg.mxu0
  %v5896 = vadd.f32 %v5740, %v5804
  %v5897 = vadd.f32 %v5741, %v5872
  %v5898 = vadd.f32 %v5742, %v5806
  %v5899 = vadd.f32 %v5743, %v5874
  %v5900 = vadd.f32 %v5744, %v5809
  %v5901 = vadd.f32 %v5745, %v5877
  %v5902 = vadd.f32 %v5746, %v5811
  %v5903 = vadd.f32 %v5747, %v5879
  %v5904 = vadd.f32 %v5748, %v5814
  %v5905 = vadd.f32 %v5749, %v5882
  %v5906 = vadd.f32 %v5750, %v5816
  %v5907 = vadd.f32 %v5751, %v5884
  %v5908 = vadd.f32 %v5752, %v5819
  %v5909 = vadd.f32 %v5753, %v5887
  %v5910 = vadd.f32 %v5754, %v5821
  %v5911 = vadd.f32 %v5755, %v5889
  %v5912 = vadd.f32 %v5756, %v5824
  %v5913 = vadd.f32 %v5757, %v5892
  %v5914 = vadd.f32 %v5758, %v5826
  %v5915 = vadd.f32 %v5759, %v5894
  %v5926 = vunpack.c.l.b16 %v3323
  %v5927 = vunpack.c.h.b16 %v3323
  %v5928 = vunpack.c.l.b16 %v3324
  %v5929 = vunpack.c.h.b16 %v3324
  %v5930 = vunpack.c.l.b16 %v3325
  %v5931 = vunpack.c.h.b16 %v3325
  %v5932 = vunpack.c.l.b16 %v3326
  %v5933 = vunpack.c.h.b16 %v3326
  %v5934 = vunpack.c.l.b16 %v3327
  %v5935 = vunpack.c.h.b16 %v3327
  %v5936 = vunpack.c.l.b16 %v3328
  %v5937 = vunpack.c.h.b16 %v3328
  %v5938 = vunpack.c.l.b16 %v3329
  %v5939 = vunpack.c.h.b16 %v3329
  %v5940 = vunpack.c.l.b16 %v3330
  %v5941 = vunpack.c.h.b16 %v3330
  %v5942 = vunpack.c.l.b16 %v3331
  %v5943 = vunpack.c.h.b16 %v3331
  %v5944 = vunpack.c.l.b16 %v3332
  %v5945 = vunpack.c.h.b16 %v3332
  %v5946 = vpack.c.b16 %v5928, %v5926
  %v5947 = vpack.c.b16 %v5929, %v5927
  %v5948 = vpack.c.b16 %v5932, %v5930
  %v5949 = vpack.c.b16 %v5933, %v5931
  %v5950 = vpack.c.b16 %v5936, %v5934
  %v5951 = vpack.c.b16 %v5937, %v5935
  %v5952 = vpack.c.b16 %v5940, %v5938
  %v5953 = vpack.c.b16 %v5941, %v5939
  %v5954 = vpack.c.b16 %v5944, %v5942
  %v5955 = vpack.c.b16 %v5945, %v5943
  %5966 = vmatpush.bf16.msra.mxu0 %v5081
  %5967 = vmatpush.bf16.msra.mxu0 %v5079
  %5968 = vmatpush.bf16.msra.mxu0 %v5077
  %5969 = vmatpush.bf16.msra.mxu0 %v5075
  %5970 = vmatpush.bf16.msra.mxu0 %v5073
  %5971 = vmatpush.bf16.msra.mxu0 %v5071
  %5972 = vmatpush.bf16.msra.mxu0 %v5069
  %5973 = vmatpush.bf16.msra.mxu0 %v5067
  %5974 = vmatmul.bf16.gmra.mxu0 %v5946
  %v5975 = vpop.f32.mrf.mxu0
  %v5976 = vadd.f32 0.0, %v5975
  %v5977 = vpop.f32.mrf.mxu0
  %v5978 = vadd.f32 0.0, %v5977
  %5979 = vmatmul.bf16.gmra.mxu0 %v5948
  %v5980 = vpop.f32.mrf.mxu0
  %v5981 = vadd.f32 0.0, %v5980
  %v5982 = vpop.f32.mrf.mxu0
  %v5983 = vadd.f32 0.0, %v5982
  %5984 = vmatmul.bf16.gmra.mxu0 %v5950
  %v5985 = vpop.f32.mrf.mxu0
  %v5986 = vadd.f32 0.0, %v5985
  %v5987 = vpop.f32.mrf.mxu0
  %v5988 = vadd.f32 0.0, %v5987
  %5989 = vmatmul.bf16.gmra.mxu0 %v5952
  %v5990 = vpop.f32.mrf.mxu0
  %v5991 = vadd.f32 0.0, %v5990
  %v5992 = vpop.f32.mrf.mxu0
  %v5993 = vadd.f32 0.0, %v5992
  %5994 = vmatmul.bf16.gmra.mxu0 %v5954
  %v5995 = vpop.f32.mrf.mxu0
  %v5996 = vadd.f32 0.0, %v5995
  %v5997 = vpop.f32.mrf.mxu0
  %v5998 = vadd.f32 0.0, %v5997
  %5999 = vdwg.mxu0
  %6000 = vmatpush.bf16.msra.mxu0 %v5097
  %6001 = vmatpush.bf16.msra.mxu0 %v5095
  %6002 = vmatpush.bf16.msra.mxu0 %v5093
  %6003 = vmatpush.bf16.msra.mxu0 %v5091
  %6004 = vmatpush.bf16.msra.mxu0 %v5089
  %6005 = vmatpush.bf16.msra.mxu0 %v5087
  %6006 = vmatpush.bf16.msra.mxu0 %v5085
  %6007 = vmatpush.bf16.msra.mxu0 %v5083
  %6008 = vmatmul.bf16.gmra.mxu0 %v5947
  %v6009 = vpop.f32.mrf.mxu0
  %v6010 = vadd.f32 %v5976, %v6009
  %v6011 = vpop.f32.mrf.mxu0
  %v6012 = vadd.f32 %v5978, %v6011
  %6013 = vmatmul.bf16.gmra.mxu0 %v5949
  %v6014 = vpop.f32.mrf.mxu0
  %v6015 = vadd.f32 %v5981, %v6014
  %v6016 = vpop.f32.mrf.mxu0
  %v6017 = vadd.f32 %v5983, %v6016
  %6018 = vmatmul.bf16.gmra.mxu0 %v5951
  %v6019 = vpop.f32.mrf.mxu0
  %v6020 = vadd.f32 %v5986, %v6019
  %v6021 = vpop.f32.mrf.mxu0
  %v6022 = vadd.f32 %v5988, %v6021
  %6023 = vmatmul.bf16.gmra.mxu0 %v5953
  %v6024 = vpop.f32.mrf.mxu0
  %v6025 = vadd.f32 %v5991, %v6024
  %v6026 = vpop.f32.mrf.mxu0
  %v6027 = vadd.f32 %v5993, %v6026
  %6028 = vmatmul.bf16.gmra.mxu0 %v5955
  %v6029 = vpop.f32.mrf.mxu0
  %v6030 = vadd.f32 %v5996, %v6029
  %v6031 = vpop.f32.mrf.mxu0
  %v6032 = vadd.f32 %v5998, %v6031
  %6033 = vdwg.mxu0
  %6034 = vmatpush.bf16.msra.mxu0 %v5082
  %6035 = vmatpush.bf16.msra.mxu0 %v5080
  %6036 = vmatpush.bf16.msra.mxu0 %v5078
  %6037 = vmatpush.bf16.msra.mxu0 %v5076
  %6038 = vmatpush.bf16.msra.mxu0 %v5074
  %6039 = vmatpush.bf16.msra.mxu0 %v5072
  %6040 = vmatpush.bf16.msra.mxu0 %v5070
  %6041 = vmatpush.bf16.msra.mxu0 %v5068
  %6042 = vmatmul.bf16.gmra.mxu0 %v5946
  %v6043 = vpop.f32.mrf.mxu0
  %v6044 = vadd.f32 0.0, %v6043
  %v6045 = vpop.f32.mrf.mxu0
  %v6046 = vadd.f32 0.0, %v6045
  %6047 = vmatmul.bf16.gmra.mxu0 %v5948
  %v6048 = vpop.f32.mrf.mxu0
  %v6049 = vadd.f32 0.0, %v6048
  %v6050 = vpop.f32.mrf.mxu0
  %v6051 = vadd.f32 0.0, %v6050
  %6052 = vmatmul.bf16.gmra.mxu0 %v5950
  %v6053 = vpop.f32.mrf.mxu0
  %v6054 = vadd.f32 0.0, %v6053
  %v6055 = vpop.f32.mrf.mxu0
  %v6056 = vadd.f32 0.0, %v6055
  %6057 = vmatmul.bf16.gmra.mxu0 %v5952
  %v6058 = vpop.f32.mrf.mxu0
  %v6059 = vadd.f32 0.0, %v6058
  %v6060 = vpop.f32.mrf.mxu0
  %v6061 = vadd.f32 0.0, %v6060
  %6062 = vmatmul.bf16.gmra.mxu0 %v5954
  %v6063 = vpop.f32.mrf.mxu0
  %v6064 = vadd.f32 0.0, %v6063
  %v6065 = vpop.f32.mrf.mxu0
  %v6066 = vadd.f32 0.0, %v6065
  %6067 = vdwg.mxu0
  %6068 = vmatpush.bf16.msra.mxu0 %v5098
  %6069 = vmatpush.bf16.msra.mxu0 %v5096
  %6070 = vmatpush.bf16.msra.mxu0 %v5094
  %6071 = vmatpush.bf16.msra.mxu0 %v5092
  %6072 = vmatpush.bf16.msra.mxu0 %v5090
  %6073 = vmatpush.bf16.msra.mxu0 %v5088
  %6074 = vmatpush.bf16.msra.mxu0 %v5086
  %6075 = vmatpush.bf16.msra.mxu0 %v5084
  %6076 = vmatmul.bf16.gmra.mxu0 %v5947
  %v6077 = vpop.f32.mrf.mxu0
  %v6078 = vadd.f32 %v6044, %v6077
  %v6079 = vpop.f32.mrf.mxu0
  %v6080 = vadd.f32 %v6046, %v6079
  %6081 = vmatmul.bf16.gmra.mxu0 %v5949
  %v6082 = vpop.f32.mrf.mxu0
  %v6083 = vadd.f32 %v6049, %v6082
  %v6084 = vpop.f32.mrf.mxu0
  %v6085 = vadd.f32 %v6051, %v6084
  %6086 = vmatmul.bf16.gmra.mxu0 %v5951
  %v6087 = vpop.f32.mrf.mxu0
  %v6088 = vadd.f32 %v6054, %v6087
  %v6089 = vpop.f32.mrf.mxu0
  %v6090 = vadd.f32 %v6056, %v6089
  %6091 = vmatmul.bf16.gmra.mxu0 %v5953
  %v6092 = vpop.f32.mrf.mxu0
  %v6093 = vadd.f32 %v6059, %v6092
  %v6094 = vpop.f32.mrf.mxu0
  %v6095 = vadd.f32 %v6061, %v6094
  %6096 = vmatmul.bf16.gmra.mxu0 %v5955
  %v6097 = vpop.f32.mrf.mxu0
  %v6098 = vadd.f32 %v6064, %v6097
  %v6099 = vpop.f32.mrf.mxu0
  %v6100 = vadd.f32 %v6066, %v6099
  %6101 = vdwg.mxu0
  %v6102 = vadd.f32 %v5896, %v6010
  %v6103 = vadd.f32 %v5897, %v6078
  %v6104 = vadd.f32 %v5898, %v6012
  %v6105 = vadd.f32 %v5899, %v6080
  %v6106 = vadd.f32 %v5900, %v6015
  %v6107 = vadd.f32 %v5901, %v6083
  %v6108 = vadd.f32 %v5902, %v6017
  %v6109 = vadd.f32 %v5903, %v6085
  %v6110 = vadd.f32 %v5904, %v6020
  %v6111 = vadd.f32 %v5905, %v6088
  %v6112 = vadd.f32 %v5906, %v6022
  %v6113 = vadd.f32 %v5907, %v6090
  %v6114 = vadd.f32 %v5908, %v6025
  %v6115 = vadd.f32 %v5909, %v6093
  %v6116 = vadd.f32 %v5910, %v6027
  %v6117 = vadd.f32 %v5911, %v6095
  %v6118 = vadd.f32 %v5912, %v6030
  %v6119 = vadd.f32 %v5913, %v6098
  %v6120 = vadd.f32 %v5914, %v6032
  %v6121 = vadd.f32 %v5915, %v6100
  %v6122 = vadd.f32 %v6102, %v5288
  %v6123 = vadd.f32 %v6103, %v5289
  %v6124 = vadd.f32 %v6104, %v5288
  %v6125 = vadd.f32 %v6105, %v5289
  %v6126 = vadd.f32 %v6106, %v5288
  %v6127 = vadd.f32 %v6107, %v5289
  %v6128 = vadd.f32 %v6108, %v5288
  %v6129 = vadd.f32 %v6109, %v5289
  %v6130 = vadd.f32 %v6110, %v5288
  %v6131 = vadd.f32 %v6111, %v5289
  %v6132 = vadd.f32 %v6112, %v5288
  %v6133 = vadd.f32 %v6113, %v5289
  %v6134 = vadd.f32 %v6114, %v5288
  %v6135 = vadd.f32 %v6115, %v5289
  %v6136 = vadd.f32 %v6116, %v5288
  %v6137 = vadd.f32 %v6117, %v5289
  %v6138 = vadd.f32 %v6118, %v5288
  %v6139 = vadd.f32 %v6119, %v5289
  %v6140 = vadd.f32 %v6120, %v5288
  %v6141 = vadd.f32 %v6121, %v5289
  %v6142 = vmax.f32 %v6122, 0.0
  %v6143 = vmax.f32 %v6123, 0.0
  %v6144 = vmax.f32 %v6124, 0.0
  %v6145 = vmax.f32 %v6125, 0.0
  %v6146 = vmax.f32 %v6126, 0.0
  %v6147 = vmax.f32 %v6127, 0.0
  %v6148 = vmax.f32 %v6128, 0.0
  %v6149 = vmax.f32 %v6129, 0.0
  %v6150 = vmax.f32 %v6130, 0.0
  %v6151 = vmax.f32 %v6131, 0.0
  %v6152 = vmax.f32 %v6132, 0.0
  %v6153 = vmax.f32 %v6133, 0.0
  %v6154 = vmax.f32 %v6134, 0.0
  %v6155 = vmax.f32 %v6135, 0.0
  %v6156 = vmax.f32 %v6136, 0.0
  %v6157 = vmax.f32 %v6137, 0.0
  %v6158 = vmax.f32 %v6138, 0.0
  %v6159 = vmax.f32 %v6139, 0.0
  %v6160 = vmax.f32 %v6140, 0.0
  %v6161 = vmax.f32 %v6141, 0.0
  %v6162 = vadd.f32 %v5312, %v6142
  %v6163 = vadd.f32 %v5313, %v6143
  %v6164 = vadd.f32 %v5314, %v6144
  %v6165 = vadd.f32 %v5315, %v6145
  %v6166 = vadd.f32 %v5316, %v6146
  %v6167 = vadd.f32 %v5317, %v6147
  %v6168 = vadd.f32 %v5318, %v6148
  %v6169 = vadd.f32 %v5319, %v6149
  %v6170 = vadd.f32 %v5320, %v6150
  %v6171 = vadd.f32 %v5321, %v6151
  %v6172 = vadd.f32 %v5322, %v6152
  %v6173 = vadd.f32 %v5323, %v6153
  %v6174 = vadd.f32 %v5324, %v6154
  %v6175 = vadd.f32 %v5325, %v6155
  %v6176 = vadd.f32 %v5326, %v6156
  %v6177 = vadd.f32 %v5327, %v6157
  %v6178 = vadd.f32 %v5328, %v6158
  %v6179 = vadd.f32 %v5329, %v6159
  %v6180 = vadd.f32 %v5330, %v6160
  %v6181 = vadd.f32 %v5331, %v6161
  %v6182 = vpack.c.bf16 %v6164, %v6162
  %v6183 = vpack.c.bf16 %v6165, %v6163
  %v6184 = vld [vmem:[%s5] sm:$0xf]
  %v6185 = vld [vmem:[%s5 + $0x4] sm:$0xf]
  %v6186 = vld [vmem:[%s5 + $0x8] sm:$0xf]
  %v6187 = vld [vmem:[%s5 + $0xc] sm:$0xf]
  %v6188 = vld [vmem:[%s5 + $0x10] sm:$0xf]
  %v6189 = vld [vmem:[%s5 + $0x14] sm:$0xf]
  %v6190 = vld [vmem:[%s5 + $0x18] sm:$0xf]
  %v6191 = vld [vmem:[%s5 + $0x1c] sm:$0xf]
  %v6192 = vld [vmem:[%s5 + $0x20] sm:$0xf]
  %v6193 = vld [vmem:[%s5 + $0x24] sm:$0xf]
  %v6194 = vld [vmem:[%s5 + $0x28] sm:$0xf]
  %v6195 = vld [vmem:[%s5 + $0x2c] sm:$0xf]
  %v6196 = vld [vmem:[%s5 + $0x30] sm:$0xf]
  %v6197 = vld [vmem:[%s5 + $0x34] sm:$0xf]
  %v6198 = vld [vmem:[%s5 + $0x38] sm:$0xf]
  %v6199 = vld [vmem:[%s5 + $0x3c] sm:$0xf]
  %v6200 = vld [vmem:[%s5 + $0x40] sm:$0xf]
  %v6201 = vld [vmem:[%s5 + $0x44] sm:$0xf]
  %v6202 = vld [vmem:[%s5 + $0x48] sm:$0xf]
  %v6203 = vld [vmem:[%s5 + $0x4c] sm:$0xf]
  %v6204 = vld [vmem:[%s5 + $0x50] sm:$0xf]
  %v6205 = vld [vmem:[%s5 + $0x54] sm:$0xf]
  %v6206 = vld [vmem:[%s5 + $0x58] sm:$0xf]
  %v6207 = vld [vmem:[%s5 + $0x5c] sm:$0xf]
  %v6208 = vld [vmem:[%s5 + $0x60] sm:$0xf]
  %v6209 = vld [vmem:[%s5 + $0x64] sm:$0xf]
  %v6210 = vld [vmem:[%s5 + $0x68] sm:$0xf]
  %v6211 = vld [vmem:[%s5 + $0x6c] sm:$0xf]
  %v6212 = vld [vmem:[%s5 + $0x70] sm:$0xf]
  %v6213 = vld [vmem:[%s5 + $0x74] sm:$0xf]
  %v6214 = vld [vmem:[%s5 + $0x78] sm:$0xf]
  %v6215 = vld [vmem:[%s5 + $0x7c] sm:$0xf]
  %v6216 = vpack.c.bf16 %v6168, %v6166
  %v6217 = vpack.c.bf16 %v6169, %v6167
  %s6218 = scalar_lea.vmem %s5, 128
  %v6219 = vld [vmem:[%s6218] sm:$0xf]
  %v6220 = vld [vmem:[%s6218 + $0x4] sm:$0xf]
  %v6221 = vld [vmem:[%s6218 + $0x8] sm:$0xf]
  %v6222 = vld [vmem:[%s6218 + $0xc] sm:$0xf]
  %v6223 = vld [vmem:[%s6218 + $0x10] sm:$0xf]
  %v6224 = vld [vmem:[%s6218 + $0x14] sm:$0xf]
  %v6225 = vld [vmem:[%s6218 + $0x18] sm:$0xf]
  %v6226 = vld [vmem:[%s6218 + $0x1c] sm:$0xf]
  %v6227 = vld [vmem:[%s6218 + $0x20] sm:$0xf]
  %v6228 = vld [vmem:[%s6218 + $0x24] sm:$0xf]
  %v6229 = vld [vmem:[%s6218 + $0x28] sm:$0xf]
  %v6230 = vld [vmem:[%s6218 + $0x2c] sm:$0xf]
  %v6231 = vld [vmem:[%s6218 + $0x30] sm:$0xf]
  %v6232 = vld [vmem:[%s6218 + $0x34] sm:$0xf]
  %v6233 = vld [vmem:[%s6218 + $0x38] sm:$0xf]
  %v6234 = vld [vmem:[%s6218 + $0x3c] sm:$0xf]
  %v6235 = vld [vmem:[%s6218 + $0x40] sm:$0xf]
  %v6236 = vld [vmem:[%s6218 + $0x44] sm:$0xf]
  %v6237 = vld [vmem:[%s6218 + $0x48] sm:$0xf]
  %v6238 = vld [vmem:[%s6218 + $0x4c] sm:$0xf]
  %v6239 = vld [vmem:[%s6218 + $0x50] sm:$0xf]
  %v6240 = vld [vmem:[%s6218 + $0x54] sm:$0xf]
  %v6241 = vld [vmem:[%s6218 + $0x58] sm:$0xf]
  %v6242 = vld [vmem:[%s6218 + $0x5c] sm:$0xf]
  %v6243 = vld [vmem:[%s6218 + $0x60] sm:$0xf]
  %v6244 = vld [vmem:[%s6218 + $0x64] sm:$0xf]
  %v6245 = vld [vmem:[%s6218 + $0x68] sm:$0xf]
  %v6246 = vld [vmem:[%s6218 + $0x6c] sm:$0xf]
  %v6247 = vld [vmem:[%s6218 + $0x70] sm:$0xf]
  %v6248 = vld [vmem:[%s6218 + $0x74] sm:$0xf]
  %v6249 = vld [vmem:[%s6218 + $0x78] sm:$0xf]
  %v6250 = vld [vmem:[%s6218 + $0x7c] sm:$0xf]
  %v6283 = vunpack.c.l.b16 %v6219
  %v6284 = vunpack.c.l.b16 %v6220
  %v6285 = vunpack.c.l.b16 %v6221
  %v6286 = vunpack.c.l.b16 %v6222
  %v6287 = vunpack.c.l.b16 %v6223
  %v6288 = vunpack.c.l.b16 %v6224
  %v6289 = vunpack.c.l.b16 %v6225
  %v6290 = vunpack.c.l.b16 %v6226
  %v6291 = vunpack.c.l.b16 %v6227
  %v6292 = vunpack.c.l.b16 %v6228
  %v6293 = vunpack.c.l.b16 %v6229
  %v6294 = vunpack.c.l.b16 %v6230
  %v6295 = vunpack.c.l.b16 %v6231
  %v6296 = vunpack.c.l.b16 %v6232
  %v6297 = vunpack.c.l.b16 %v6233
  %v6298 = vunpack.c.l.b16 %v6234
  %v6299 = vunpack.c.l.b16 %v6235
  %v6300 = vunpack.c.l.b16 %v6236
  %v6301 = vunpack.c.l.b16 %v6237
  %v6302 = vunpack.c.l.b16 %v6238
  %v6303 = vunpack.c.l.b16 %v6239
  %v6304 = vunpack.c.l.b16 %v6240
  %v6305 = vunpack.c.l.b16 %v6241
  %v6306 = vunpack.c.l.b16 %v6242
  %v6307 = vunpack.c.l.b16 %v6243
  %v6308 = vunpack.c.l.b16 %v6244
  %v6309 = vunpack.c.l.b16 %v6245
  %v6310 = vunpack.c.l.b16 %v6246
  %v6311 = vunpack.c.l.b16 %v6247
  %v6312 = vunpack.c.l.b16 %v6248
  %v6313 = vunpack.c.l.b16 %v6249
  %v6314 = vunpack.c.l.b16 %v6250
  %v6315 = vpack.c.b16 %v6284, %v6283
  %v6316 = vpack.c.b16 %v6286, %v6285
  %v6317 = vpack.c.b16 %v6288, %v6287
  %v6318 = vpack.c.b16 %v6290, %v6289
  %v6319 = vpack.c.b16 %v6292, %v6291
  %v6320 = vpack.c.b16 %v6294, %v6293
  %v6321 = vpack.c.b16 %v6296, %v6295
  %v6322 = vpack.c.b16 %v6298, %v6297
  %v6323 = vpack.c.b16 %v6300, %v6299
  %v6324 = vpack.c.b16 %v6302, %v6301
  %v6325 = vpack.c.b16 %v6304, %v6303
  %v6326 = vpack.c.b16 %v6306, %v6305
  %v6327 = vpack.c.b16 %v6308, %v6307
  %v6328 = vpack.c.b16 %v6310, %v6309
  %v6329 = vpack.c.b16 %v6312, %v6311
  %v6330 = vpack.c.b16 %v6314, %v6313
  %6347 = vmatpush.bf16.msra.mxu0 %v6322
  %6348 = vmatpush.bf16.msra.mxu0 %v6321
  %6349 = vmatpush.bf16.msra.mxu0 %v6320
  %6350 = vmatpush.bf16.msra.mxu0 %v6319
  %6351 = vmatpush.bf16.msra.mxu0 %v6318
  %6352 = vmatpush.bf16.msra.mxu0 %v6317
  %6353 = vmatpush.bf16.msra.mxu0 %v6316
  %6354 = vmatpush.bf16.msra.mxu0 %v6315
  %6355 = vmatmul.bf16.gmra.mxu0 %v6216
  %v6356 = vpop.f32.mrf.mxu0
  %v6357 = vadd.f32 0.0, %v6356
  %v6358 = vpop.f32.mrf.mxu0
  %v6359 = vadd.f32 0.0, %v6358
  %6360 = vdwg.mxu0
  %6361 = vmatpush.bf16.msra.mxu0 %v6330
  %6362 = vmatpush.bf16.msra.mxu0 %v6329
  %6363 = vmatpush.bf16.msra.mxu0 %v6328
  %6364 = vmatpush.bf16.msra.mxu0 %v6327
  %6365 = vmatpush.bf16.msra.mxu0 %v6326
  %6366 = vmatpush.bf16.msra.mxu0 %v6325
  %6367 = vmatpush.bf16.msra.mxu0 %v6324
  %6368 = vmatpush.bf16.msra.mxu0 %v6323
  %6369 = vmatmul.bf16.gmra.mxu0 %v6217
  %v6370 = vpop.f32.mrf.mxu0
  %v6371 = vadd.f32 %v6357, %v6370
  %v6372 = vpop.f32.mrf.mxu0
  %v6373 = vadd.f32 %v6359, %v6372
  %6374 = vdwg.mxu0
  %v6407 = vunpack.c.l.b16 %v6184
  %v6408 = vunpack.c.l.b16 %v6185
  %v6409 = vunpack.c.l.b16 %v6186
  %v6410 = vunpack.c.l.b16 %v6187
  %v6411 = vunpack.c.l.b16 %v6188
  %v6412 = vunpack.c.l.b16 %v6189
  %v6413 = vunpack.c.l.b16 %v6190
  %v6414 = vunpack.c.l.b16 %v6191
  %v6415 = vunpack.c.l.b16 %v6192
  %v6416 = vunpack.c.l.b16 %v6193
  %v6417 = vunpack.c.l.b16 %v6194
  %v6418 = vunpack.c.l.b16 %v6195
  %v6419 = vunpack.c.l.b16 %v6196
  %v6420 = vunpack.c.l.b16 %v6197
  %v6421 = vunpack.c.l.b16 %v6198
  %v6422 = vunpack.c.l.b16 %v6199
  %v6423 = vunpack.c.l.b16 %v6200
  %v6424 = vunpack.c.l.b16 %v6201
  %v6425 = vunpack.c.l.b16 %v6202
  %v6426 = vunpack.c.l.b16 %v6203
  %v6427 = vunpack.c.l.b16 %v6204
  %v6428 = vunpack.c.l.b16 %v6205
  %v6429 = vunpack.c.l.b16 %v6206
  %v6430 = vunpack.c.l.b16 %v6207
  %v6431 = vunpack.c.l.b16 %v6208
  %v6432 = vunpack.c.l.b16 %v6209
  %v6433 = vunpack.c.l.b16 %v6210
  %v6434 = vunpack.c.l.b16 %v6211
  %v6435 = vunpack.c.l.b16 %v6212
  %v6436 = vunpack.c.l.b16 %v6213
  %v6437 = vunpack.c.l.b16 %v6214
  %v6438 = vunpack.c.l.b16 %v6215
  %v6439 = vpack.c.b16 %v6408, %v6407
  %v6440 = vpack.c.b16 %v6410, %v6409
  %v6441 = vpack.c.b16 %v6412, %v6411
  %v6442 = vpack.c.b16 %v6414, %v6413
  %v6443 = vpack.c.b16 %v6416, %v6415
  %v6444 = vpack.c.b16 %v6418, %v6417
  %v6445 = vpack.c.b16 %v6420, %v6419
  %v6446 = vpack.c.b16 %v6422, %v6421
  %v6447 = vpack.c.b16 %v6424, %v6423
  %v6448 = vpack.c.b16 %v6426, %v6425
  %v6449 = vpack.c.b16 %v6428, %v6427
  %v6450 = vpack.c.b16 %v6430, %v6429
  %v6451 = vpack.c.b16 %v6432, %v6431
  %v6452 = vpack.c.b16 %v6434, %v6433
  %v6453 = vpack.c.b16 %v6436, %v6435
  %v6454 = vpack.c.b16 %v6438, %v6437
  %6471 = vmatpush.bf16.msra.mxu0 %v6446
  %6472 = vmatpush.bf16.msra.mxu0 %v6445
  %6473 = vmatpush.bf16.msra.mxu0 %v6444
  %6474 = vmatpush.bf16.msra.mxu0 %v6443
  %6475 = vmatpush.bf16.msra.mxu0 %v6442
  %6476 = vmatpush.bf16.msra.mxu0 %v6441
  %6477 = vmatpush.bf16.msra.mxu0 %v6440
  %6478 = vmatpush.bf16.msra.mxu0 %v6439
  %6479 = vmatmul.bf16.gmra.mxu0 %v6182
  %v6480 = vpop.f32.mrf.mxu0
  %v6481 = vadd.f32 %v6371, %v6480
  %v6482 = vpop.f32.mrf.mxu0
  %v6483 = vadd.f32 %v6373, %v6482
  %6484 = vdwg.mxu0
  %6485 = vmatpush.bf16.msra.mxu0 %v6454
  %6486 = vmatpush.bf16.msra.mxu0 %v6453
  %6487 = vmatpush.bf16.msra.mxu0 %v6452
  %6488 = vmatpush.bf16.msra.mxu0 %v6451
  %6489 = vmatpush.bf16.msra.mxu0 %v6450
  %6490 = vmatpush.bf16.msra.mxu0 %v6449
  %6491 = vmatpush.bf16.msra.mxu0 %v6448
  %6492 = vmatpush.bf16.msra.mxu0 %v6447
  %6493 = vmatmul.bf16.gmra.mxu0 %v6183
  %v6494 = vpop.f32.mrf.mxu0
  %v6495 = vadd.f32 %v6481, %v6494
  %v6496 = vpop.f32.mrf.mxu0
  %v6497 = vadd.f32 %v6483, %v6496
  %6498 = vdwg.mxu0
  %v6499 = vpack.c.bf16 %v6172, %v6170
  %v6500 = vpack.c.bf16 %v6173, %v6171
  %s6501 = scalar_lea.vmem %s5, 256
  %v6502 = vld [vmem:[%s6501] sm:$0xf]
  %v6503 = vld [vmem:[%s6501 + $0x4] sm:$0xf]
  %v6504 = vld [vmem:[%s6501 + $0x8] sm:$0xf]
  %v6505 = vld [vmem:[%s6501 + $0xc] sm:$0xf]
  %v6506 = vld [vmem:[%s6501 + $0x10] sm:$0xf]
  %v6507 = vld [vmem:[%s6501 + $0x14] sm:$0xf]
  %v6508 = vld [vmem:[%s6501 + $0x18] sm:$0xf]
  %v6509 = vld [vmem:[%s6501 + $0x1c] sm:$0xf]
  %v6510 = vld [vmem:[%s6501 + $0x20] sm:$0xf]
  %v6511 = vld [vmem:[%s6501 + $0x24] sm:$0xf]
  %v6512 = vld [vmem:[%s6501 + $0x28] sm:$0xf]
  %v6513 = vld [vmem:[%s6501 + $0x2c] sm:$0xf]
  %v6514 = vld [vmem:[%s6501 + $0x30] sm:$0xf]
  %v6515 = vld [vmem:[%s6501 + $0x34] sm:$0xf]
  %v6516 = vld [vmem:[%s6501 + $0x38] sm:$0xf]
  %v6517 = vld [vmem:[%s6501 + $0x3c] sm:$0xf]
  %v6518 = vld [vmem:[%s6501 + $0x40] sm:$0xf]
  %v6519 = vld [vmem:[%s6501 + $0x44] sm:$0xf]
  %v6520 = vld [vmem:[%s6501 + $0x48] sm:$0xf]
  %v6521 = vld [vmem:[%s6501 + $0x4c] sm:$0xf]
  %v6522 = vld [vmem:[%s6501 + $0x50] sm:$0xf]
  %v6523 = vld [vmem:[%s6501 + $0x54] sm:$0xf]
  %v6524 = vld [vmem:[%s6501 + $0x58] sm:$0xf]
  %v6525 = vld [vmem:[%s6501 + $0x5c] sm:$0xf]
  %v6526 = vld [vmem:[%s6501 + $0x60] sm:$0xf]
  %v6527 = vld [vmem:[%s6501 + $0x64] sm:$0xf]
  %v6528 = vld [vmem:[%s6501 + $0x68] sm:$0xf]
  %v6529 = vld [vmem:[%s6501 + $0x6c] sm:$0xf]
  %v6530 = vld [vmem:[%s6501 + $0x70] sm:$0xf]
  %v6531 = vld [vmem:[%s6501 + $0x74] sm:$0xf]
  %v6532 = vld [vmem:[%s6501 + $0x78] sm:$0xf]
  %v6533 = vld [vmem:[%s6501 + $0x7c] sm:$0xf]
  %v6566 = vunpack.c.l.b16 %v6502
  %v6567 = vunpack.c.l.b16 %v6503
  %v6568 = vunpack.c.l.b16 %v6504
  %v6569 = vunpack.c.l.b16 %v6505
  %v6570 = vunpack.c.l.b16 %v6506
  %v6571 = vunpack.c.l.b16 %v6507
  %v6572 = vunpack.c.l.b16 %v6508
  %v6573 = vunpack.c.l.b16 %v6509
  %v6574 = vunpack.c.l.b16 %v6510
  %v6575 = vunpack.c.l.b16 %v6511
  %v6576 = vunpack.c.l.b16 %v6512
  %v6577 = vunpack.c.l.b16 %v6513
  %v6578 = vunpack.c.l.b16 %v6514
  %v6579 = vunpack.c.l.b16 %v6515
  %v6580 = vunpack.c.l.b16 %v6516
  %v6581 = vunpack.c.l.b16 %v6517
  %v6582 = vunpack.c.l.b16 %v6518
  %v6583 = vunpack.c.l.b16 %v6519
  %v6584 = vunpack.c.l.b16 %v6520
  %v6585 = vunpack.c.l.b16 %v6521
  %v6586 = vunpack.c.l.b16 %v6522
  %v6587 = vunpack.c.l.b16 %v6523
  %v6588 = vunpack.c.l.b16 %v6524
  %v6589 = vunpack.c.l.b16 %v6525
  %v6590 = vunpack.c.l.b16 %v6526
  %v6591 = vunpack.c.l.b16 %v6527
  %v6592 = vunpack.c.l.b16 %v6528
  %v6593 = vunpack.c.l.b16 %v6529
  %v6594 = vunpack.c.l.b16 %v6530
  %v6595 = vunpack.c.l.b16 %v6531
  %v6596 = vunpack.c.l.b16 %v6532
  %v6597 = vunpack.c.l.b16 %v6533
  %v6598 = vpack.c.b16 %v6567, %v6566
  %v6599 = vpack.c.b16 %v6569, %v6568
  %v6600 = vpack.c.b16 %v6571, %v6570
  %v6601 = vpack.c.b16 %v6573, %v6572
  %v6602 = vpack.c.b16 %v6575, %v6574
  %v6603 = vpack.c.b16 %v6577, %v6576
  %v6604 = vpack.c.b16 %v6579, %v6578
  %v6605 = vpack.c.b16 %v6581, %v6580
  %v6606 = vpack.c.b16 %v6583, %v6582
  %v6607 = vpack.c.b16 %v6585, %v6584
  %v6608 = vpack.c.b16 %v6587, %v6586
  %v6609 = vpack.c.b16 %v6589, %v6588
  %v6610 = vpack.c.b16 %v6591, %v6590
  %v6611 = vpack.c.b16 %v6593, %v6592
  %v6612 = vpack.c.b16 %v6595, %v6594
  %v6613 = vpack.c.b16 %v6597, %v6596
  %6630 = vmatpush.bf16.msra.mxu0 %v6605
  %6631 = vmatpush.bf16.msra.mxu0 %v6604
  %6632 = vmatpush.bf16.msra.mxu0 %v6603
  %6633 = vmatpush.bf16.msra.mxu0 %v6602
  %6634 = vmatpush.bf16.msra.mxu0 %v6601
  %6635 = vmatpush.bf16.msra.mxu0 %v6600
  %6636 = vmatpush.bf16.msra.mxu0 %v6599
  %6637 = vmatpush.bf16.msra.mxu0 %v6598
  %6638 = vmatmul.bf16.gmra.mxu0 %v6499
  %v6639 = vpop.f32.mrf.mxu0
  %v6640 = vadd.f32 0.0, %v6639
  %v6641 = vpop.f32.mrf.mxu0
  %v6642 = vadd.f32 0.0, %v6641
  %6643 = vdwg.mxu0
  %6644 = vmatpush.bf16.msra.mxu0 %v6613
  %6645 = vmatpush.bf16.msra.mxu0 %v6612
  %6646 = vmatpush.bf16.msra.mxu0 %v6611
  %6647 = vmatpush.bf16.msra.mxu0 %v6610
  %6648 = vmatpush.bf16.msra.mxu0 %v6609
  %6649 = vmatpush.bf16.msra.mxu0 %v6608
  %6650 = vmatpush.bf16.msra.mxu0 %v6607
  %6651 = vmatpush.bf16.msra.mxu0 %v6606
  %6652 = vmatmul.bf16.gmra.mxu0 %v6500
  %v6653 = vpop.f32.mrf.mxu0
  %v6654 = vadd.f32 %v6640, %v6653
  %v6655 = vpop.f32.mrf.mxu0
  %v6656 = vadd.f32 %v6642, %v6655
  %6657 = vdwg.mxu0
  %v6658 = vadd.f32 %v6495, %v6654
  %v6659 = vadd.f32 %v6497, %v6656
  %v6660 = vpack.c.bf16 %v6176, %v6174
  %v6661 = vpack.c.bf16 %v6177, %v6175
  %s6662 = scalar_lea.vmem %s5, 384
  %v6663 = vld [vmem:[%s6662] sm:$0xf]
  %v6664 = vld [vmem:[%s6662 + $0x4] sm:$0xf]
  %v6665 = vld [vmem:[%s6662 + $0x8] sm:$0xf]
  %v6666 = vld [vmem:[%s6662 + $0xc] sm:$0xf]
  %v6667 = vld [vmem:[%s6662 + $0x10] sm:$0xf]
  %v6668 = vld [vmem:[%s6662 + $0x14] sm:$0xf]
  %v6669 = vld [vmem:[%s6662 + $0x18] sm:$0xf]
  %v6670 = vld [vmem:[%s6662 + $0x1c] sm:$0xf]
  %v6671 = vld [vmem:[%s6662 + $0x20] sm:$0xf]
  %v6672 = vld [vmem:[%s6662 + $0x24] sm:$0xf]
  %v6673 = vld [vmem:[%s6662 + $0x28] sm:$0xf]
  %v6674 = vld [vmem:[%s6662 + $0x2c] sm:$0xf]
  %v6675 = vld [vmem:[%s6662 + $0x30] sm:$0xf]
  %v6676 = vld [vmem:[%s6662 + $0x34] sm:$0xf]
  %v6677 = vld [vmem:[%s6662 + $0x38] sm:$0xf]
  %v6678 = vld [vmem:[%s6662 + $0x3c] sm:$0xf]
  %v6679 = vld [vmem:[%s6662 + $0x40] sm:$0xf]
  %v6680 = vld [vmem:[%s6662 + $0x44] sm:$0xf]
  %v6681 = vld [vmem:[%s6662 + $0x48] sm:$0xf]
  %v6682 = vld [vmem:[%s6662 + $0x4c] sm:$0xf]
  %v6683 = vld [vmem:[%s6662 + $0x50] sm:$0xf]
  %v6684 = vld [vmem:[%s6662 + $0x54] sm:$0xf]
  %v6685 = vld [vmem:[%s6662 + $0x58] sm:$0xf]
  %v6686 = vld [vmem:[%s6662 + $0x5c] sm:$0xf]
  %v6687 = vld [vmem:[%s6662 + $0x60] sm:$0xf]
  %v6688 = vld [vmem:[%s6662 + $0x64] sm:$0xf]
  %v6689 = vld [vmem:[%s6662 + $0x68] sm:$0xf]
  %v6690 = vld [vmem:[%s6662 + $0x6c] sm:$0xf]
  %v6691 = vld [vmem:[%s6662 + $0x70] sm:$0xf]
  %v6692 = vld [vmem:[%s6662 + $0x74] sm:$0xf]
  %v6693 = vld [vmem:[%s6662 + $0x78] sm:$0xf]
  %v6694 = vld [vmem:[%s6662 + $0x7c] sm:$0xf]
  %v6727 = vunpack.c.l.b16 %v6663
  %v6728 = vunpack.c.l.b16 %v6664
  %v6729 = vunpack.c.l.b16 %v6665
  %v6730 = vunpack.c.l.b16 %v6666
  %v6731 = vunpack.c.l.b16 %v6667
  %v6732 = vunpack.c.l.b16 %v6668
  %v6733 = vunpack.c.l.b16 %v6669
  %v6734 = vunpack.c.l.b16 %v6670
  %v6735 = vunpack.c.l.b16 %v6671
  %v6736 = vunpack.c.l.b16 %v6672
  %v6737 = vunpack.c.l.b16 %v6673
  %v6738 = vunpack.c.l.b16 %v6674
  %v6739 = vunpack.c.l.b16 %v6675
  %v6740 = vunpack.c.l.b16 %v6676
  %v6741 = vunpack.c.l.b16 %v6677
  %v6742 = vunpack.c.l.b16 %v6678
  %v6743 = vunpack.c.l.b16 %v6679
  %v6744 = vunpack.c.l.b16 %v6680
  %v6745 = vunpack.c.l.b16 %v6681
  %v6746 = vunpack.c.l.b16 %v6682
  %v6747 = vunpack.c.l.b16 %v6683
  %v6748 = vunpack.c.l.b16 %v6684
  %v6749 = vunpack.c.l.b16 %v6685
  %v6750 = vunpack.c.l.b16 %v6686
  %v6751 = vunpack.c.l.b16 %v6687
  %v6752 = vunpack.c.l.b16 %v6688
  %v6753 = vunpack.c.l.b16 %v6689
  %v6754 = vunpack.c.l.b16 %v6690
  %v6755 = vunpack.c.l.b16 %v6691
  %v6756 = vunpack.c.l.b16 %v6692
  %v6757 = vunpack.c.l.b16 %v6693
  %v6758 = vunpack.c.l.b16 %v6694
  %v6759 = vpack.c.b16 %v6728, %v6727
  %v6760 = vpack.c.b16 %v6730, %v6729
  %v6761 = vpack.c.b16 %v6732, %v6731
  %v6762 = vpack.c.b16 %v6734, %v6733
  %v6763 = vpack.c.b16 %v6736, %v6735
  %v6764 = vpack.c.b16 %v6738, %v6737
  %v6765 = vpack.c.b16 %v6740, %v6739
  %v6766 = vpack.c.b16 %v6742, %v6741
  %v6767 = vpack.c.b16 %v6744, %v6743
  %v6768 = vpack.c.b16 %v6746, %v6745
  %v6769 = vpack.c.b16 %v6748, %v6747
  %v6770 = vpack.c.b16 %v6750, %v6749
  %v6771 = vpack.c.b16 %v6752, %v6751
  %v6772 = vpack.c.b16 %v6754, %v6753
  %v6773 = vpack.c.b16 %v6756, %v6755
  %v6774 = vpack.c.b16 %v6758, %v6757
  %6791 = vmatpush.bf16.msra.mxu0 %v6766
  %6792 = vmatpush.bf16.msra.mxu0 %v6765
  %6793 = vmatpush.bf16.msra.mxu0 %v6764
  %6794 = vmatpush.bf16.msra.mxu0 %v6763
  %6795 = vmatpush.bf16.msra.mxu0 %v6762
  %6796 = vmatpush.bf16.msra.mxu0 %v6761
  %6797 = vmatpush.bf16.msra.mxu0 %v6760
  %6798 = vmatpush.bf16.msra.mxu0 %v6759
  %6799 = vmatmul.bf16.gmra.mxu0 %v6660
  %v6800 = vpop.f32.mrf.mxu0
  %v6801 = vadd.f32 0.0, %v6800
  %v6802 = vpop.f32.mrf.mxu0
  %v6803 = vadd.f32 0.0, %v6802
  %6804 = vdwg.mxu0
  %6805 = vmatpush.bf16.msra.mxu0 %v6774
  %6806 = vmatpush.bf16.msra.mxu0 %v6773
  %6807 = vmatpush.bf16.msra.mxu0 %v6772
  %6808 = vmatpush.bf16.msra.mxu0 %v6771
  %6809 = vmatpush.bf16.msra.mxu0 %v6770
  %6810 = vmatpush.bf16.msra.mxu0 %v6769
  %6811 = vmatpush.bf16.msra.mxu0 %v6768
  %6812 = vmatpush.bf16.msra.mxu0 %v6767
  %6813 = vmatmul.bf16.gmra.mxu0 %v6661
  %v6814 = vpop.f32.mrf.mxu0
  %v6815 = vadd.f32 %v6801, %v6814
  %v6816 = vpop.f32.mrf.mxu0
  %v6817 = vadd.f32 %v6803, %v6816
  %6818 = vdwg.mxu0
  %v6819 = vadd.f32 %v6658, %v6815
  %v6820 = vadd.f32 %v6659, %v6817
  %v6821 = vpack.c.bf16 %v6180, %v6178
  %v6822 = vpack.c.bf16 %v6181, %v6179
  %s6823 = scalar_lea.vmem %s5, 512
  %v6824 = vld [vmem:[%s6823] sm:$0xf]
  %v6825 = vld [vmem:[%s6823 + $0x4] sm:$0xf]
  %v6826 = vld [vmem:[%s6823 + $0x8] sm:$0xf]
  %v6827 = vld [vmem:[%s6823 + $0xc] sm:$0xf]
  %v6828 = vld [vmem:[%s6823 + $0x10] sm:$0xf]
  %v6829 = vld [vmem:[%s6823 + $0x14] sm:$0xf]
  %v6830 = vld [vmem:[%s6823 + $0x18] sm:$0xf]
  %v6831 = vld [vmem:[%s6823 + $0x1c] sm:$0xf]
  %v6832 = vld [vmem:[%s6823 + $0x20] sm:$0xf]
  %v6833 = vld [vmem:[%s6823 + $0x24] sm:$0xf]
  %v6834 = vld [vmem:[%s6823 + $0x28] sm:$0xf]
  %v6835 = vld [vmem:[%s6823 + $0x2c] sm:$0xf]
  %v6836 = vld [vmem:[%s6823 + $0x30] sm:$0xf]
  %v6837 = vld [vmem:[%s6823 + $0x34] sm:$0xf]
  %v6838 = vld [vmem:[%s6823 + $0x38] sm:$0xf]
  %v6839 = vld [vmem:[%s6823 + $0x3c] sm:$0xf]
  %v6840 = vld [vmem:[%s6823 + $0x40] sm:$0xf]
  %v6841 = vld [vmem:[%s6823 + $0x44] sm:$0xf]
  %v6842 = vld [vmem:[%s6823 + $0x48] sm:$0xf]
  %v6843 = vld [vmem:[%s6823 + $0x4c] sm:$0xf]
  %v6844 = vld [vmem:[%s6823 + $0x50] sm:$0xf]
  %v6845 = vld [vmem:[%s6823 + $0x54] sm:$0xf]
  %v6846 = vld [vmem:[%s6823 + $0x58] sm:$0xf]
  %v6847 = vld [vmem:[%s6823 + $0x5c] sm:$0xf]
  %v6848 = vld [vmem:[%s6823 + $0x60] sm:$0xf]
  %v6849 = vld [vmem:[%s6823 + $0x64] sm:$0xf]
  %v6850 = vld [vmem:[%s6823 + $0x68] sm:$0xf]
  %v6851 = vld [vmem:[%s6823 + $0x6c] sm:$0xf]
  %v6852 = vld [vmem:[%s6823 + $0x70] sm:$0xf]
  %v6853 = vld [vmem:[%s6823 + $0x74] sm:$0xf]
  %v6854 = vld [vmem:[%s6823 + $0x78] sm:$0xf]
  %v6855 = vld [vmem:[%s6823 + $0x7c] sm:$0xf]
  %v6888 = vunpack.c.l.b16 %v6824
  %v6889 = vunpack.c.l.b16 %v6825
  %v6890 = vunpack.c.l.b16 %v6826
  %v6891 = vunpack.c.l.b16 %v6827
  %v6892 = vunpack.c.l.b16 %v6828
  %v6893 = vunpack.c.l.b16 %v6829
  %v6894 = vunpack.c.l.b16 %v6830
  %v6895 = vunpack.c.l.b16 %v6831
  %v6896 = vunpack.c.l.b16 %v6832
  %v6897 = vunpack.c.l.b16 %v6833
  %v6898 = vunpack.c.l.b16 %v6834
  %v6899 = vunpack.c.l.b16 %v6835
  %v6900 = vunpack.c.l.b16 %v6836
  %v6901 = vunpack.c.l.b16 %v6837
  %v6902 = vunpack.c.l.b16 %v6838
  %v6903 = vunpack.c.l.b16 %v6839
  %v6904 = vunpack.c.l.b16 %v6840
  %v6905 = vunpack.c.l.b16 %v6841
  %v6906 = vunpack.c.l.b16 %v6842
  %v6907 = vunpack.c.l.b16 %v6843
  %v6908 = vunpack.c.l.b16 %v6844
  %v6909 = vunpack.c.l.b16 %v6845
  %v6910 = vunpack.c.l.b16 %v6846
  %v6911 = vunpack.c.l.b16 %v6847
  %v6912 = vunpack.c.l.b16 %v6848
  %v6913 = vunpack.c.l.b16 %v6849
  %v6914 = vunpack.c.l.b16 %v6850
  %v6915 = vunpack.c.l.b16 %v6851
  %v6916 = vunpack.c.l.b16 %v6852
  %v6917 = vunpack.c.l.b16 %v6853
  %v6918 = vunpack.c.l.b16 %v6854
  %v6919 = vunpack.c.l.b16 %v6855
  %v6920 = vpack.c.b16 %v6889, %v6888
  %v6921 = vpack.c.b16 %v6891, %v6890
  %v6922 = vpack.c.b16 %v6893, %v6892
  %v6923 = vpack.c.b16 %v6895, %v6894
  %v6924 = vpack.c.b16 %v6897, %v6896
  %v6925 = vpack.c.b16 %v6899, %v6898
  %v6926 = vpack.c.b16 %v6901, %v6900
  %v6927 = vpack.c.b16 %v6903, %v6902
  %v6928 = vpack.c.b16 %v6905, %v6904
  %v6929 = vpack.c.b16 %v6907, %v6906
  %v6930 = vpack.c.b16 %v6909, %v6908
  %v6931 = vpack.c.b16 %v6911, %v6910
  %v6932 = vpack.c.b16 %v6913, %v6912
  %v6933 = vpack.c.b16 %v6915, %v6914
  %v6934 = vpack.c.b16 %v6917, %v6916
  %v6935 = vpack.c.b16 %v6919, %v6918
  %6952 = vmatpush.bf16.msra.mxu0 %v6927
  %6953 = vmatpush.bf16.msra.mxu0 %v6926
  %6954 = vmatpush.bf16.msra.mxu0 %v6925
  %6955 = vmatpush.bf16.msra.mxu0 %v6924
  %6956 = vmatpush.bf16.msra.mxu0 %v6923
  %6957 = vmatpush.bf16.msra.mxu0 %v6922
  %6958 = vmatpush.bf16.msra.mxu0 %v6921
  %6959 = vmatpush.bf16.msra.mxu0 %v6920
  %6960 = vmatmul.bf16.gmra.mxu0 %v6821
  %v6961 = vpop.f32.mrf.mxu0
  %v6962 = vadd.f32 0.0, %v6961
  %v6963 = vpop.f32.mrf.mxu0
  %v6964 = vadd.f32 0.0, %v6963
  %6965 = vdwg.mxu0
  %6966 = vmatpush.bf16.msra.mxu0 %v6935
  %6967 = vmatpush.bf16.msra.mxu0 %v6934
  %6968 = vmatpush.bf16.msra.mxu0 %v6933
  %6969 = vmatpush.bf16.msra.mxu0 %v6932
  %6970 = vmatpush.bf16.msra.mxu0 %v6931
  %6971 = vmatpush.bf16.msra.mxu0 %v6930
  %6972 = vmatpush.bf16.msra.mxu0 %v6929
  %6973 = vmatpush.bf16.msra.mxu0 %v6928
  %6974 = vmatmul.bf16.gmra.mxu0 %v6822
  %v6975 = vpop.f32.mrf.mxu0
  %v6976 = vadd.f32 %v6962, %v6975
  %v6977 = vpop.f32.mrf.mxu0
  %v6978 = vadd.f32 %v6964, %v6977
  %6979 = vdwg.mxu0
  %v6980 = vadd.f32 %v6819, %v6976
  %v6981 = vadd.f32 %v6820, %v6978
  %v6982 = vld [vmem:[%s6] sm:$0x1]
  %v6984 = vperm.slane %v6982, 0
  %v6986 = vadd.f32 %v6980, %v6984
  %v6987 = vadd.f32 %v6981, %v6984
  %v6988 = vmax.f32 %v6986, 0.0
  %v6989 = vmax.f32 %v6987, 0.0
  %v6990 = vpack.c.bf16 %v6989, %v6988
  %v6991 = vld [vmem:[%s7] sm:$0xf]
  %v6992 = vld [vmem:[%s7 + $0x4] sm:$0xf]
  %v6993 = vld [vmem:[%s7 + $0x8] sm:$0xf]
  %v6994 = vld [vmem:[%s7 + $0xc] sm:$0xf]
  %v6995 = vld [vmem:[%s7 + $0x10] sm:$0xf]
  %v6996 = vld [vmem:[%s7 + $0x14] sm:$0xf]
  %v6997 = vld [vmem:[%s7 + $0x18] sm:$0xf]
  %v6998 = vld [vmem:[%s7 + $0x1c] sm:$0xf]
  %v6999 = vld [vmem:[%s7 + $0x20] sm:$0xf]
  %v7000 = vld [vmem:[%s7 + $0x24] sm:$0xf]
  %v7001 = vld [vmem:[%s7 + $0x28] sm:$0xf]
  %v7002 = vld [vmem:[%s7 + $0x2c] sm:$0xf]
  %v7003 = vld [vmem:[%s7 + $0x30] sm:$0xf]
  %v7004 = vld [vmem:[%s7 + $0x34] sm:$0xf]
  %v7005 = vld [vmem:[%s7 + $0x38] sm:$0xf]
  %v7006 = vld [vmem:[%s7 + $0x3c] sm:$0xf]
  %v7007 = vld [vmem:[%s8] sm:$0x1]
  %v7009 = vperm.slane %v7007, 0
  %v7027 = vunpack.c.l.b16 %v6991
  %v7028 = vunpack.c.l.b16 %v6992
  %v7029 = vunpack.c.l.b16 %v6993
  %v7030 = vunpack.c.l.b16 %v6994
  %v7031 = vunpack.c.l.b16 %v6995
  %v7032 = vunpack.c.l.b16 %v6996
  %v7033 = vunpack.c.l.b16 %v6997
  %v7034 = vunpack.c.l.b16 %v6998
  %v7035 = vunpack.c.l.b16 %v6999
  %v7036 = vunpack.c.l.b16 %v7000
  %v7037 = vunpack.c.l.b16 %v7001
  %v7038 = vunpack.c.l.b16 %v7002
  %v7039 = vunpack.c.l.b16 %v7003
  %v7040 = vunpack.c.l.b16 %v7004
  %v7041 = vunpack.c.l.b16 %v7005
  %v7042 = vunpack.c.l.b16 %v7006
  %v7043 = vpack.c.b16 %v7028, %v7027
  %v7044 = vpack.c.b16 %v7030, %v7029
  %v7045 = vpack.c.b16 %v7032, %v7031
  %v7046 = vpack.c.b16 %v7034, %v7033
  %v7047 = vpack.c.b16 %v7036, %v7035
  %v7048 = vpack.c.b16 %v7038, %v7037
  %v7049 = vpack.c.b16 %v7040, %v7039
  %v7050 = vpack.c.b16 %v7042, %v7041
  %7059 = vmatpush.bf16.msra.mxu0 %v7050
  %7060 = vmatpush.bf16.msra.mxu0 %v7049
  %7061 = vmatpush.bf16.msra.mxu0 %v7048
  %7062 = vmatpush.bf16.msra.mxu0 %v7047
  %7063 = vmatpush.bf16.msra.mxu0 %v7046
  %7064 = vmatpush.bf16.msra.mxu0 %v7045
  %7065 = vmatpush.bf16.msra.mxu0 %v7044
  %7066 = vmatpush.bf16.msra.mxu0 %v7043
  %7067 = vmatmul.bf16.gmra.mxu0 %v6990
  %v7068 = vpop.f32.mrf.mxu0
  %v7069 = vadd.f32 %v7009, %v7068
  %v7070 = vpop.f32.mrf.mxu0
  %v7071 = vadd.f32 %v7009, %v7070
  %7072 = vdwg.mxu0
  %v7073 = vmax.f32 %v7069, 0.0
  %v7074 = vmax.f32 %v7071, 0.0
  %v7075 = vpack.c.bf16 %v7074, %v7073
  %v7076 = vld [vmem:[%s9] sm:$0xf]
  %v7077 = vld [vmem:[%s9 + $0x4] sm:$0xf]
  %v7078 = vld [vmem:[%s9 + $0x8] sm:$0xf]
  %v7079 = vld [vmem:[%s9 + $0xc] sm:$0xf]
  %v7080 = vld [vmem:[%s9 + $0x10] sm:$0xf]
  %v7081 = vld [vmem:[%s9 + $0x14] sm:$0xf]
  %v7082 = vld [vmem:[%s9 + $0x18] sm:$0xf]
  %v7083 = vld [vmem:[%s9 + $0x1c] sm:$0xf]
  %v7084 = vld [vmem:[%s9 + $0x20] sm:$0xf]
  %v7085 = vld [vmem:[%s9 + $0x24] sm:$0xf]
  %v7086 = vld [vmem:[%s9 + $0x28] sm:$0xf]
  %v7087 = vld [vmem:[%s9 + $0x2c] sm:$0xf]
  %v7088 = vld [vmem:[%s9 + $0x30] sm:$0xf]
  %v7089 = vld [vmem:[%s9 + $0x34] sm:$0xf]
  %v7090 = vld [vmem:[%s9 + $0x38] sm:$0xf]
  %v7091 = vld [vmem:[%s9 + $0x3c] sm:$0xf]
  %v7092 = vld [vmem:[%s10] sm:$0x1]
  %v7094 = vperm.slane %v7092, 0
  %v7112 = vunpack.c.l.b16 %v7076
  %v7113 = vunpack.c.l.b16 %v7077
  %v7114 = vunpack.c.l.b16 %v7078
  %v7115 = vunpack.c.l.b16 %v7079
  %v7116 = vunpack.c.l.b16 %v7080
  %v7117 = vunpack.c.l.b16 %v7081
  %v7118 = vunpack.c.l.b16 %v7082
  %v7119 = vunpack.c.l.b16 %v7083
  %v7120 = vunpack.c.l.b16 %v7084
  %v7121 = vunpack.c.l.b16 %v7085
  %v7122 = vunpack.c.l.b16 %v7086
  %v7123 = vunpack.c.l.b16 %v7087
  %v7124 = vunpack.c.l.b16 %v7088
  %v7125 = vunpack.c.l.b16 %v7089
  %v7126 = vunpack.c.l.b16 %v7090
  %v7127 = vunpack.c.l.b16 %v7091
  %v7128 = vpack.c.b16 %v7113, %v7112
  %v7129 = vpack.c.b16 %v7115, %v7114
  %v7130 = vpack.c.b16 %v7117, %v7116
  %v7131 = vpack.c.b16 %v7119, %v7118
  %v7132 = vpack.c.b16 %v7121, %v7120
  %v7133 = vpack.c.b16 %v7123, %v7122
  %v7134 = vpack.c.b16 %v7125, %v7124
  %v7135 = vpack.c.b16 %v7127, %v7126
  %7144 = vmatpush.bf16.msra.mxu0 %v7135
  %7145 = vmatpush.bf16.msra.mxu0 %v7134
  %7146 = vmatpush.bf16.msra.mxu0 %v7133
  %7147 = vmatpush.bf16.msra.mxu0 %v7132
  %7148 = vmatpush.bf16.msra.mxu0 %v7131
  %7149 = vmatpush.bf16.msra.mxu0 %v7130
  %7150 = vmatpush.bf16.msra.mxu0 %v7129
  %7151 = vmatpush.bf16.msra.mxu0 %v7128
  %7152 = vmatmul.bf16.gmra.mxu0 %v7075
  %v7153 = vpop.f32.mrf.mxu0
  %v7154 = vadd.f32 %v7094, %v7153
  %v7155 = vpop.f32.mrf.mxu0
  %v7156 = vadd.f32 %v7094, %v7155
  %7157 = vdwg.mxu0
  %7158 = vst [vmem:[%s11] sm:$0xff] %v7154
  %7159 = vst [vmem:[%s11 + $0x8] sm:$0xff] %v7156
  // Predicated region
  $region46: #{ln5_forward.1} parent=0 // pred_check
    _
  $region47: #{ln5_forward.1} parent=0 // pred_check_branch
    %7161 = sbr.rel (0) target = $region49
  $region48: #{ln5_forward.1} parent=0 // pred_region
    _
  $region49: #{ln5_forward.1} parent=0 // pred_fallthru
    _
  // Predicated region
  $region50: #{ln5_forward.1} parent=0 // pred_check
    _
  $region51: #{ln5_forward.1} parent=0 // pred_check_branch
    %7163 = sbr.rel (0) target = $region53
  $region52: #{ln5_forward.1} parent=0 // pred_region
    _
  $region53: #{ln5_forward.1} parent=0 // pred_fallthru
    _

</llo_original>
